<compile_context>
chip_gen: v7x
topology: tpu7x:2x2x1
jax: 0.10.0
libtpu: 0.0.40
codegen_flags: <defaults>
</compile_context>

<pallas_src>
import jax
import jax.numpy as jnp
from jax import lax
from jax.experimental import pallas as pl
from jax.experimental.pallas import tpu as pltpu

NEG_SLOPE = 0.2
EPS = 1e-5
COUTP = 128          # channel padding -> lane-dense stores + full MXU N width
SUBL = 16            # bf16 sublane packing: keep hpad offsets 16-row aligned


def _round_up(x, m):
    return ((x + m - 1) // m) * m


def style_affine(style_vec, sw, sb, lscale):
    """AdaIN's EqualLinear: (B, n_style) @ (n_style, 2*Cout) + bias, in f32."""
    return jnp.dot(style_vec, (sw * lscale).T,
                   precision=lax.Precision.HIGHEST) + sb


def _gblock_pallas(slab, w1_aug, w2_aug, c2, aff, *, H, W, Cin):
    B, HPWP, Cslab = slab.shape
    Wp = W + 2                                   # padded row width
    HWp = H * Wp                                 # output rows incl. garbage cols
    OFF = _round_up(Wp + 1, SUBL)                # aligned start of h inside hpad
    PADROWS = _round_up(OFF + HWp + Wp + 1, SUBL)  # covers all 9 shifted reads
    TAIL = PADROWS - OFF - HWp                   # bottom halo rows
    inv_n = 1.0 / float(H * W)

    # VMEM budget: double-buffered ins/outs + weights + scratch + generous
    # headroom for live f32 values (acc / h / temporaries).  Review item #5.
    est = (2 * HPWP * Cslab * 2                       # bf16 input slab  x2
           + 2 * HWp * COUTP * 4                      # f32 output       x2
           + 2 * 9 * (Cslab + COUTP) * COUTP * 2      # bf16 conv weights x2
           + 2 * 6 * COUTP * 4                        # c2 + aff         x2
           + PADROWS * COUTP * 2                      # bf16 hpad scratch
           + 8 * HWp * COUTP * 4)                     # live f32 values
    vmem_limit = int(min(max(2 * est, 32 * 2**20), 64 * 2**20))

    def kernel(x_ref, w1_ref, w2_ref, c2_ref, aff_ref, o_ref, hpad_ref):
        xall = x_ref[0]                              # (HPWP, Cslab) bf16 slab
        aff_b = aff_ref[0]                           # (4, COUTP) f32
        g1, be1 = aff_b[0:1, :], aff_b[1:2, :]
        g2, be2 = aff_b[2:3, :], aff_b[3:4, :]
        c2v = c2_ref[...]
        b2, nw2 = c2v[0:1, :], c2v[1:2, :]

        # Centre-tap rows line up with output pixels: row r = y*Wp + x.
        xc = xall[Wp + 1:Wp + 1 + HWp, :]
        mask = xc[:, Cin:Cin + 1].astype(jnp.float32)    # 1.0 where x < W
        noise2 = xc[:, Cin + 2:Cin + 3].astype(jnp.float32)

        def lrelu_in_adain(acc, gamma, beta):
            acc = jnp.maximum(acc, NEG_SLOPE * acc)            # LeakyReLU(0.2)
            mean = jnp.sum(acc * mask, axis=0, keepdims=True) * inv_n
            cent = acc - mean
            var = jnp.sum(cent * cent * mask, axis=0, keepdims=True) * inv_n
            return gamma * (cent * lax.rsqrt(var + EPS)) + beta

        # ---- stage 1: 3x3 conv (+ folded bias & noise1) as 9 shifted
        #      bf16 x bf16 matmuls with f32 accumulation.
        acc = jnp.zeros((HWp, COUTP), jnp.float32)
        for t in range(9):
            dy, dx = t // 3, t % 3
            s = dy * Wp + dx
            acc = acc + jnp.dot(xall[s:s + HWp, :], w1_ref[t],
                                preferred_element_type=jnp.float32)
        h = lrelu_in_adain(acc, g1, be1)

        # ---- stage-2 input: bf16 zero-padded copy of h kept entirely in VMEM.
        # Only the halo rows are re-zeroed (every step: the batch axis is
        # "parallel", so a program_id==0 one-time init is NOT megacore-safe);
        # the interior -- including the garbage columns -- is fully
        # overwritten by the masked store below.
        hpad_ref[0:OFF, :] = jnp.zeros((OFF, COUTP), jnp.bfloat16)
        hpad_ref[OFF + HWp:PADROWS, :] = jnp.zeros((TAIL, COUTP), jnp.bfloat16)
        hpad_ref[OFF:OFF + HWp, :] = (h * mask).astype(jnp.bfloat16)

        # ---- stage 2: native bf16 x bf16, f32 accumulation.
        base = OFF - (Wp + 1)
        acc = jnp.zeros((HWp, COUTP), jnp.float32)
        for t in range(9):
            dy, dx = t // 3, t % 3
            s = base + dy * Wp + dx
            acc = acc + jnp.dot(hpad_ref[s:s + HWp, :], w2_ref[t],
                                preferred_element_type=jnp.float32)
        acc = acc + b2 + nw2 * noise2
        o_ref[0] = lrelu_in_adain(acc, g2, be2)

    return pl.pallas_call(
        kernel,
        out_shape=jax.ShapeDtypeStruct((B, HWp, COUTP), jnp.float32),
        grid_spec=pltpu.PrefetchScalarGridSpec(
            num_scalar_prefetch=0,
            grid=(B,),
            in_specs=[
                pl.BlockSpec((1, HPWP, Cslab), lambda i: (i, 0, 0)),   # bf16 slab
                pl.BlockSpec((9, Cslab, COUTP), lambda i: (0, 0, 0)),  # conv1 W (bf16)
                pl.BlockSpec((9, COUTP, COUTP), lambda i: (0, 0, 0)),  # conv2 W (bf16)
                pl.BlockSpec((2, COUTP), lambda i: (0, 0)),            # [b2, nw2] f32
                pl.BlockSpec((1, 4, COUTP), lambda i: (i, 0, 0)),      # AdaIN affine
            ],
            out_specs=pl.BlockSpec((1, HWp, COUTP), lambda i: (i, 0, 0)),
            scratch_shapes=[pltpu.VMEM((PADROWS, COUTP), jnp.bfloat16)],
        ),
        compiler_params=pltpu.CompilerParams(
            dimension_semantics=("parallel",),
            vmem_limit_bytes=vmem_limit),
    )(slab, w1_aug, w2_aug, c2, aff)


def gblock_forward(x_nchw, style_code, params, noise1_hw, noise2_hw):
    B, Cin, H, W = x_nchw.shape
    Cout, _, K, _ = params["w1"].shape
    assert K == 3, "only the 3x3 / stride 1 / pad 1 GBlock config is implemented"
    Wp, Hp = W + 2, H + 3                  # one extra bottom row for shifted reads
    HPWP = Hp * Wp
    Cslab = _round_up(Cin + 3, 8)          # x | indicator | noise1 | noise2 | pad

    x = jnp.transpose(x_nchw, (0, 2, 3, 1)).astype(jnp.float32)

    # Flattened zero-padded input slab with folded auxiliary channels.
    # Stored as bf16 in HBM (halves slab DMA, matches the bf16 MXU path).
    slab = jnp.zeros((B, Hp, Wp, Cslab), jnp.float32)
    slab = slab.at[:, 1:H + 1, 1:W + 1, :Cin].set(x)
    slab = slab.at[:, 1:H + 1, 1:W + 1, Cin].set(1.0)   # bias carrier + valid mask
    slab = slab.at[:, 1:H + 1, 1:W + 1, Cin + 1].set(noise1_hw)
    slab = slab.at[:, 1:H + 1, 1:W + 1, Cin + 2].set(noise2_hw)
    slab = slab.reshape(B, HPWP, Cslab).astype(jnp.bfloat16)

    # conv1 weights with bias / noise-weight rows folded onto the centre tap.
    w1_taps = jnp.transpose(params["w1"] * params["scale1"], (2, 3, 1, 0))
    w1_aug = jnp.zeros((9, Cslab, COUTP), jnp.float32)
    w1_aug = w1_aug.at[:, :Cin, :Cout].set(w1_taps.reshape(9, Cin, Cout))
    w1_aug = w1_aug.at[4, Cin, :Cout].set(params["b1"])
    w1_aug = w1_aug.at[4, Cin + 1, :Cout].set(params["nw1"])
    w1_aug = w1_aug.astype(jnp.bfloat16)

    w2_taps = jnp.transpose(params["w2"] * params["scale2"], (2, 3, 1, 0))
    w2_aug = jnp.zeros((9, COUTP, COUTP), jnp.float32)
    w2_aug = w2_aug.at[:, :Cout, :Cout].set(w2_taps.reshape(9, Cout, Cout))
    w2_aug = w2_aug.astype(jnp.bfloat16)

    # stage-2 bias / noise weight, lane-padded to 128 (kept f32).
    c2 = jnp.zeros((2, COUTP), jnp.float32)
    c2 = c2.at[0, :Cout].set(params["b2"])
    c2 = c2.at[1, :Cout].set(params["nw2"])

    # AdaIN style linear hoisted out of the kernel (gamma/beta per batch/stage).
    s1 = style_affine(style_code[:, 0], params["sw1"], params["sb1"], params["lscale"])
    s2 = style_affine(style_code[:, 1], params["sw2"], params["sb2"], params["lscale"])
    aff = jnp.zeros((B, 4, COUTP), jnp.float32)
    aff = aff.at[:, 0, :Cout].set(s1[:, :Cout])
    aff = aff.at[:, 1, :Cout].set(s1[:, Cout:])
    aff = aff.at[:, 2, :Cout].set(s2[:, :Cout])
    aff = aff.at[:, 3, :Cout].set(s2[:, Cout:])

    out = _gblock_pallas(slab, w1_aug, w2_aug, c2, aff, H=H, W=W, Cin=Cin)
    # (B, H*Wp, 128) -> trim garbage columns and channel padding -> NCHW.
    out = out.reshape(B, H, Wp, COUTP)[:, :, :W, :Cout]
    return jnp.transpose(out, (0, 3, 1, 2))


def reference_forward(x_nchw, style_code, params, noise1, noise2):
    """Pure-JAX reference mirroring the kernel's precision choices."""
    bf = lambda a: jnp.asarray(a, jnp.float32).astype(jnp.bfloat16).astype(jnp.float32)
    Cout = params["w1"].shape[0]
    x = jnp.transpose(x_nchw, (0, 2, 3, 1))

    def conv(inp, w_oikk, scale):
        return lax.conv_general_dilated(
            inp, jnp.transpose(bf(w_oikk * scale), (2, 3, 1, 0)),
            window_strides=(1, 1), padding=((1, 1), (1, 1)),
            dimension_numbers=("NHWC", "HWIO", "NHWC"),
            precision=lax.Precision.HIGHEST)

    def lrelu_in_adain(y, s):
        y = jnp.maximum(y, NEG_SLOPE * y)
        mean = jnp.mean(y, axis=(1, 2), keepdims=True)
        cent = y - mean
        var = jnp.mean(cent * cent, axis=(1, 2), keepdims=True)
        yn = cent * lax.rsqrt(var + EPS)
        return s[:, None, None, :Cout] * yn + s[:, None, None, Cout:]

    s1 = style_affine(style_code[:, 0], params["sw1"], params["sb1"], params["lscale"])
    s2 = style_affine(style_code[:, 1], params["sw2"], params["sb2"], params["lscale"])

    # stage 1 (bf16 x / weights / bias / noise1, f32 accumulation)
    y = conv(bf(x), params["w1"], params["scale1"])
    y = y + bf(params["b1"]) + bf(params["nw1"]) * bf(noise1)[..., None]
    h = lrelu_in_adain(y, s1)

    # stage 2 (bf16 LHS + weights + noise2, f32 accumulation / bias / AdaIN)
    y = conv(bf(h), params["w2"], params["scale2"])
    y = y + params["b2"] + params["nw2"] * bf(noise2)[..., None]
    o = lrelu_in_adain(y, s2)
    return jnp.transpose(o, (0, 3, 1, 2))


if __name__ == "__main__":
    B, Cin, Cout, H, W, K, n_style = 2, 4, 8, 16, 16, 3, 32
    key = jax.random.PRNGKey(0)
    ks = jax.random.split(key, 12)

    x = jax.random.normal(ks[0], (B, Cin, H, W), jnp.float32)
    style_code = jax.random.normal(ks[1], (B, 2, n_style), jnp.float32)
    # torch NoiseInjection(noise=None) draws randn(B, 1, H, W); drawn host-side.
    noise1 = jax.random.normal(ks[2], (B, H, W), jnp.float32)
    noise2 = jax.random.normal(ks[3], (B, H, W), jnp.float32)

    params = dict(
        w1=jax.random.normal(ks[4], (Cout, Cin, K, K), jnp.float32),
        w2=jax.random.normal(ks[5], (Cout, Cout, K, K), jnp.float32),
        # torch inits conv bias / noise weights to zero; use small nonzero values
        # so the folded bias / noise paths are actually exercised.
        b1=0.1 * jax.random.normal(ks[6], (Cout,), jnp.float32),
        b2=0.1 * jax.random.normal(ks[7], (Cout,), jnp.float32),
        nw1=0.1 * jax.random.normal(ks[8], (Cout,), jnp.float32),
        nw2=0.1 * jax.random.normal(ks[9], (Cout,), jnp.float32),
        sw1=jax.random.normal(ks[10], (2 * Cout, n_style), jnp.float32),
        sb1=jnp.concatenate([jnp.ones((Cout,)), jnp.zeros((Cout,))]).astype(jnp.float32),
        sw2=jax.random.normal(ks[11], (2 * Cout, n_style), jnp.float32),
        sb2=jnp.concatenate([jnp.ones((Cout,)), jnp.zeros((Cout,))]).astype(jnp.float32),
        scale1=(2.0 / (Cin * K * K)) ** 0.5,   # EqualConv2d equal-lr scale
        scale2=(2.0 / (Cout * K * K)) ** 0.5,
        lscale=(2.0 / n_style) ** 0.5,         # EqualLinear equal-lr scale
    )

    out = gblock_forward(x, style_code, params, noise1, noise2)
    out = jax.block_until_ready(out)

    ref = reference_forward(x, style_code, params, noise1, noise2)
    assert out.shape == (B, Cout, H, W)
    # Tolerance: the kernel and the reference are two independent f32 pipelines
    # that both re-round the stage-1 activation to bf16 before conv2; a 1-ulp
    # bf16 rounding flip between them (plus instance-norm gain) can reach ~1e-2.
    max_diff = float(jnp.max(jnp.abs(out - ref)))
    assert bool(jnp.allclose(out, ref, atol=1e-2, rtol=1e-2)), (
        "mismatch vs reference, max abs diff = %e" % max_diff)

    print("KERNEL_OK")
</pallas_src>

<mosaic_0001>
module attributes {stable_mosaic.version = 11 : i64} {
  func.func @kernel(%arg0: i32, %arg1: memref<1x342x8xbf16, #tpu.memory_space<vmem>>, %arg2: memref<9x8x128xbf16, #tpu.memory_space<vmem>>, %arg3: memref<9x128x128xbf16, #tpu.memory_space<vmem>>, %arg4: memref<2x128xf32, #tpu.memory_space<vmem>>, %arg5: memref<1x4x128xf32, #tpu.memory_space<vmem>>, %arg6: memref<1x288x128xf32, #tpu.memory_space<vmem>>, %arg7: memref<352x128xbf16, #tpu.memory_space<vmem>>) attributes {dimension_semantics = [#tpu.dimension_semantics<parallel>], iteration_bounds = array<i64: 2>, scalar_prefetch = 0 : i64, scratch_operands = 1 : i64, tpu.core_type = #tpu.core_type<tc>, window_params = [{transform_indices = @transform_0, window_bounds = array<i64: 1, 342, 8>}, {pipeline_mode = #tpu.pipeline_mode<synchronous>, transform_indices = @transform_1, window_bounds = array<i64: 9, 8, 128>}, {pipeline_mode = #tpu.pipeline_mode<synchronous>, transform_indices = @transform_2, window_bounds = array<i64: 9, 128, 128>}, {pipeline_mode = #tpu.pipeline_mode<synchronous>, transform_indices = @transform_3, window_bounds = array<i64: 2, 128>}, {transform_indices = @transform_4, window_bounds = array<i64: 1, 4, 128>}, {transform_indices = @transform_5, window_bounds = array<i64: 1, 288, 128>}]} {
    %c0 = arith.constant 0 : index
    %c0_0 = arith.constant 0 : index
    %c0_1 = arith.constant 0 : index
    %0 = vector.load %arg1[%c0, %c0_0, %c0_1] : memref<1x342x8xbf16, #tpu.memory_space<vmem>>, vector<1x342x8xbf16>
    %1 = vector.shape_cast %0 : vector<1x342x8xbf16> to vector<342x8xbf16>
    %c0_2 = arith.constant 0 : index
    %c0_3 = arith.constant 0 : index
    %c0_4 = arith.constant 0 : index
    %2 = vector.load %arg5[%c0_2, %c0_3, %c0_4] : memref<1x4x128xf32, #tpu.memory_space<vmem>>, vector<1x4x128xf32>
    %3 = vector.shape_cast %2 : vector<1x4x128xf32> to vector<4x128xf32>
    %4 = vector.extract_strided_slice %3 {offsets = [0, 0], sizes = [1, 128], strides = [1, 1]} : vector<4x128xf32> to vector<1x128xf32>
    %5 = vector.extract_strided_slice %3 {offsets = [1, 0], sizes = [1, 128], strides = [1, 1]} : vector<4x128xf32> to vector<1x128xf32>
    %6 = vector.extract_strided_slice %3 {offsets = [2, 0], sizes = [1, 128], strides = [1, 1]} : vector<4x128xf32> to vector<1x128xf32>
    %7 = vector.extract_strided_slice %3 {offsets = [3, 0], sizes = [1, 128], strides = [1, 1]} : vector<4x128xf32> to vector<1x128xf32>
    %c0_5 = arith.constant 0 : index
    %c0_6 = arith.constant 0 : index
    %8 = vector.load %arg4[%c0_5, %c0_6] : memref<2x128xf32, #tpu.memory_space<vmem>>, vector<2x128xf32>
    %9 = vector.extract_strided_slice %8 {offsets = [0, 0], sizes = [1, 128], strides = [1, 1]} : vector<2x128xf32> to vector<1x128xf32>
    %10 = vector.extract_strided_slice %8 {offsets = [1, 0], sizes = [1, 128], strides = [1, 1]} : vector<2x128xf32> to vector<1x128xf32>
    %11 = vector.extract_strided_slice %1 {offsets = [19, 0], sizes = [288, 8], strides = [1, 1]} : vector<342x8xbf16> to vector<288x8xbf16>
    %12 = vector.extract_strided_slice %11 {offsets = [0, 4], sizes = [288, 1], strides = [1, 1]} : vector<288x8xbf16> to vector<288x1xbf16>
    %13 = arith.extf %12 : vector<288x1xbf16> to vector<288x1xf32>
    %14 = vector.extract_strided_slice %11 {offsets = [0, 6], sizes = [288, 1], strides = [1, 1]} : vector<288x8xbf16> to vector<288x1xbf16>
    %15 = arith.extf %14 : vector<288x1xbf16> to vector<288x1xf32>
    %cst = arith.constant 0.000000e+00 : f32
    %16 = vector.broadcast %cst : f32 to vector<288x128xf32>
    %17 = vector.extract_strided_slice %1 {offsets = [0, 0], sizes = [288, 8], strides = [1, 1]} : vector<342x8xbf16> to vector<288x8xbf16>
    %c0_7 = arith.constant 0 : index
    %c0_8 = arith.constant 0 : index
    %c0_9 = arith.constant 0 : index
    %18 = vector.load %arg2[%c0_7, %c0_8, %c0_9] : memref<9x8x128xbf16, #tpu.memory_space<vmem>>, vector<1x8x128xbf16>
    %19 = vector.shape_cast %18 : vector<1x8x128xbf16> to vector<8x128xbf16>
    %cst_10 = arith.constant dense<0.000000e+00> : vector<288x128xf32>
    %20 = tpu.matmul %17, %19, %cst_10 {dimension_numbers = #tpu.dot_dimension_numbers<[1], [0], [0], [1], [0, 0, 1, 1], [], []>} : vector<288x8xbf16>, vector<8x128xbf16>, vector<288x128xf32> -> vector<288x128xf32>
    %21 = arith.addf %16, %20 : vector<288x128xf32>
    %22 = vector.extract_strided_slice %1 {offsets = [1, 0], sizes = [288, 8], strides = [1, 1]} : vector<342x8xbf16> to vector<288x8xbf16>
    %c1 = arith.constant 1 : index
    %c0_11 = arith.constant 0 : index
    %c0_12 = arith.constant 0 : index
    %23 = vector.load %arg2[%c1, %c0_11, %c0_12] : memref<9x8x128xbf16, #tpu.memory_space<vmem>>, vector<1x8x128xbf16>
    %24 = vector.shape_cast %23 : vector<1x8x128xbf16> to vector<8x128xbf16>
    %cst_13 = arith.constant dense<0.000000e+00> : vector<288x128xf32>
    %25 = tpu.matmul %22, %24, %cst_13 {dimension_numbers = #tpu.dot_dimension_numbers<[1], [0], [0], [1], [0, 0, 1, 1], [], []>} : vector<288x8xbf16>, vector<8x128xbf16>, vector<288x128xf32> -> vector<288x128xf32>
    %26 = arith.addf %21, %25 : vector<288x128xf32>
    %27 = vector.extract_strided_slice %1 {offsets = [2, 0], sizes = [288, 8], strides = [1, 1]} : vector<342x8xbf16> to vector<288x8xbf16>
    %c2 = arith.constant 2 : index
    %c0_14 = arith.constant 0 : index
    %c0_15 = arith.constant 0 : index
    %28 = vector.load %arg2[%c2, %c0_14, %c0_15] : memref<9x8x128xbf16, #tpu.memory_space<vmem>>, vector<1x8x128xbf16>
    %29 = vector.shape_cast %28 : vector<1x8x128xbf16> to vector<8x128xbf16>
    %cst_16 = arith.constant dense<0.000000e+00> : vector<288x128xf32>
    %30 = tpu.matmul %27, %29, %cst_16 {dimension_numbers = #tpu.dot_dimension_numbers<[1], [0], [0], [1], [0, 0, 1, 1], [], []>} : vector<288x8xbf16>, vector<8x128xbf16>, vector<288x128xf32> -> vector<288x128xf32>
    %31 = arith.addf %26, %30 : vector<288x128xf32>
    %32 = vector.extract_strided_slice %1 {offsets = [18, 0], sizes = [288, 8], strides = [1, 1]} : vector<342x8xbf16> to vector<288x8xbf16>
    %c3 = arith.constant 3 : index
    %c0_17 = arith.constant 0 : index
    %c0_18 = arith.constant 0 : index
    %33 = vector.load %arg2[%c3, %c0_17, %c0_18] : memref<9x8x128xbf16, #tpu.memory_space<vmem>>, vector<1x8x128xbf16>
    %34 = vector.shape_cast %33 : vector<1x8x128xbf16> to vector<8x128xbf16>
    %cst_19 = arith.constant dense<0.000000e+00> : vector<288x128xf32>
    %35 = tpu.matmul %32, %34, %cst_19 {dimension_numbers = #tpu.dot_dimension_numbers<[1], [0], [0], [1], [0, 0, 1, 1], [], []>} : vector<288x8xbf16>, vector<8x128xbf16>, vector<288x128xf32> -> vector<288x128xf32>
    %36 = arith.addf %31, %35 : vector<288x128xf32>
    %37 = vector.extract_strided_slice %1 {offsets = [19, 0], sizes = [288, 8], strides = [1, 1]} : vector<342x8xbf16> to vector<288x8xbf16>
    %c4 = arith.constant 4 : index
    %c0_20 = arith.constant 0 : index
    %c0_21 = arith.constant 0 : index
    %38 = vector.load %arg2[%c4, %c0_20, %c0_21] : memref<9x8x128xbf16, #tpu.memory_space<vmem>>, vector<1x8x128xbf16>
    %39 = vector.shape_cast %38 : vector<1x8x128xbf16> to vector<8x128xbf16>
    %cst_22 = arith.constant dense<0.000000e+00> : vector<288x128xf32>
    %40 = tpu.matmul %37, %39, %cst_22 {dimension_numbers = #tpu.dot_dimension_numbers<[1], [0], [0], [1], [0, 0, 1, 1], [], []>} : vector<288x8xbf16>, vector<8x128xbf16>, vector<288x128xf32> -> vector<288x128xf32>
    %41 = arith.addf %36, %40 : vector<288x128xf32>
    %42 = vector.extract_strided_slice %1 {offsets = [20, 0], sizes = [288, 8], strides = [1, 1]} : vector<342x8xbf16> to vector<288x8xbf16>
    %c5 = arith.constant 5 : index
    %c0_23 = arith.constant 0 : index
    %c0_24 = arith.constant 0 : index
    %43 = vector.load %arg2[%c5, %c0_23, %c0_24] : memref<9x8x128xbf16, #tpu.memory_space<vmem>>, vector<1x8x128xbf16>
    %44 = vector.shape_cast %43 : vector<1x8x128xbf16> to vector<8x128xbf16>
    %cst_25 = arith.constant dense<0.000000e+00> : vector<288x128xf32>
    %45 = tpu.matmul %42, %44, %cst_25 {dimension_numbers = #tpu.dot_dimension_numbers<[1], [0], [0], [1], [0, 0, 1, 1], [], []>} : vector<288x8xbf16>, vector<8x128xbf16>, vector<288x128xf32> -> vector<288x128xf32>
    %46 = arith.addf %41, %45 : vector<288x128xf32>
    %47 = vector.extract_strided_slice %1 {offsets = [36, 0], sizes = [288, 8], strides = [1, 1]} : vector<342x8xbf16> to vector<288x8xbf16>
    %c6 = arith.constant 6 : index
    %c0_26 = arith.constant 0 : index
    %c0_27 = arith.constant 0 : index
    %48 = vector.load %arg2[%c6, %c0_26, %c0_27] : memref<9x8x128xbf16, #tpu.memory_space<vmem>>, vector<1x8x128xbf16>
    %49 = vector.shape_cast %48 : vector<1x8x128xbf16> to vector<8x128xbf16>
    %cst_28 = arith.constant dense<0.000000e+00> : vector<288x128xf32>
    %50 = tpu.matmul %47, %49, %cst_28 {dimension_numbers = #tpu.dot_dimension_numbers<[1], [0], [0], [1], [0, 0, 1, 1], [], []>} : vector<288x8xbf16>, vector<8x128xbf16>, vector<288x128xf32> -> vector<288x128xf32>
    %51 = arith.addf %46, %50 : vector<288x128xf32>
    %52 = vector.extract_strided_slice %1 {offsets = [37, 0], sizes = [288, 8], strides = [1, 1]} : vector<342x8xbf16> to vector<288x8xbf16>
    %c7 = arith.constant 7 : index
    %c0_29 = arith.constant 0 : index
    %c0_30 = arith.constant 0 : index
    %53 = vector.load %arg2[%c7, %c0_29, %c0_30] : memref<9x8x128xbf16, #tpu.memory_space<vmem>>, vector<1x8x128xbf16>
    %54 = vector.shape_cast %53 : vector<1x8x128xbf16> to vector<8x128xbf16>
    %cst_31 = arith.constant dense<0.000000e+00> : vector<288x128xf32>
    %55 = tpu.matmul %52, %54, %cst_31 {dimension_numbers = #tpu.dot_dimension_numbers<[1], [0], [0], [1], [0, 0, 1, 1], [], []>} : vector<288x8xbf16>, vector<8x128xbf16>, vector<288x128xf32> -> vector<288x128xf32>
    %56 = arith.addf %51, %55 : vector<288x128xf32>
    %57 = vector.extract_strided_slice %1 {offsets = [38, 0], sizes = [288, 8], strides = [1, 1]} : vector<342x8xbf16> to vector<288x8xbf16>
    %c8 = arith.constant 8 : index
    %c0_32 = arith.constant 0 : index
    %c0_33 = arith.constant 0 : index
    %58 = vector.load %arg2[%c8, %c0_32, %c0_33] : memref<9x8x128xbf16, #tpu.memory_space<vmem>>, vector<1x8x128xbf16>
    %59 = vector.shape_cast %58 : vector<1x8x128xbf16> to vector<8x128xbf16>
    %cst_34 = arith.constant dense<0.000000e+00> : vector<288x128xf32>
    %60 = tpu.matmul %57, %59, %cst_34 {dimension_numbers = #tpu.dot_dimension_numbers<[1], [0], [0], [1], [0, 0, 1, 1], [], []>} : vector<288x8xbf16>, vector<8x128xbf16>, vector<288x128xf32> -> vector<288x128xf32>
    %61 = arith.addf %56, %60 : vector<288x128xf32>
    %cst_35 = arith.constant 2.000000e-01 : f32
    %62 = vector.broadcast %cst_35 : f32 to vector<288x128xf32>
    %63 = arith.mulf %62, %61 : vector<288x128xf32>
    %64 = arith.maximumf %61, %63 : vector<288x128xf32>
    %65 = vector.broadcast %13 : vector<288x1xf32> to vector<288x128xf32>
    %66 = arith.mulf %64, %65 : vector<288x128xf32>
    %cst_36 = arith.constant dense<0.000000e+00> : vector<128xf32>
    %67 = vector.multi_reduction <add>, %66, %cst_36 [0] : vector<288x128xf32> to vector<128xf32>
    %68 = vector.shape_cast %67 : vector<128xf32> to vector<1x128xf32>
    %cst_37 = arith.constant 3.906250e-03 : f32
    %69 = vector.broadcast %cst_37 : f32 to vector<1x128xf32>
    %70 = arith.mulf %68, %69 : vector<1x128xf32>
    %71 = vector.broadcast %70 : vector<1x128xf32> to vector<288x128xf32>
    %72 = arith.subf %64, %71 : vector<288x128xf32>
    %73 = arith.mulf %72, %72 : vector<288x128xf32>
    %74 = vector.broadcast %13 : vector<288x1xf32> to vector<288x128xf32>
    %75 = arith.mulf %73, %74 : vector<288x128xf32>
    %cst_38 = arith.constant dense<0.000000e+00> : vector<128xf32>
    %76 = vector.multi_reduction <add>, %75, %cst_38 [0] : vector<288x128xf32> to vector<128xf32>
    %77 = vector.shape_cast %76 : vector<128xf32> to vector<1x128xf32>
    %cst_39 = arith.constant 3.906250e-03 : f32
    %78 = vector.broadcast %cst_39 : f32 to vector<1x128xf32>
    %79 = arith.mulf %77, %78 : vector<1x128xf32>
    %cst_40 = arith.constant 9.99999974E-6 : f32
    %80 = vector.broadcast %cst_40 : f32 to vector<1x128xf32>
    %81 = arith.addf %79, %80 : vector<1x128xf32>
    %82 = math.rsqrt %81 : vector<1x128xf32>
    %83 = vector.broadcast %82 : vector<1x128xf32> to vector<288x128xf32>
    %84 = arith.mulf %72, %83 : vector<288x128xf32>
    %85 = vector.broadcast %4 : vector<1x128xf32> to vector<288x128xf32>
    %86 = arith.mulf %85, %84 : vector<288x128xf32>
    %87 = vector.broadcast %5 : vector<1x128xf32> to vector<288x128xf32>
    %88 = arith.addf %86, %87 : vector<288x128xf32>
    %cst_41 = arith.constant 0.000000e+00 : bf16
    %89 = vector.broadcast %cst_41 : bf16 to vector<32x128xbf16>
    %c0_42 = arith.constant 0 : index
    %c0_43 = arith.constant 0 : index
    %90 = vector.load %arg7[%c0_42, %c0_43] : memref<352x128xbf16, #tpu.memory_space<vmem>>, vector<32x128xbf16>
    tpu.vector_store %arg7[%c0_42, %c0_43], %89 {strides = array<i32>} : memref<352x128xbf16, #tpu.memory_space<vmem>>, vector<32x128xbf16>,
    %cst_44 = arith.constant 0.000000e+00 : bf16
    %91 = vector.broadcast %cst_44 : bf16 to vector<32x128xbf16>
    %c320 = arith.constant 320 : index
    %c0_45 = arith.constant 0 : index
    %92 = vector.load %arg7[%c320, %c0_45] : memref<352x128xbf16, #tpu.memory_space<vmem>>, vector<32x128xbf16>
    tpu.vector_store %arg7[%c320, %c0_45], %91 {strides = array<i32>} : memref<352x128xbf16, #tpu.memory_space<vmem>>, vector<32x128xbf16>,
    %93 = vector.broadcast %13 : vector<288x1xf32> to vector<288x128xf32>
    %94 = arith.mulf %88, %93 : vector<288x128xf32>
    %95 = arith.truncf %94 : vector<288x128xf32> to vector<288x128xbf16>
    %c32 = arith.constant 32 : index
    %c0_46 = arith.constant 0 : index
    %96 = vector.load %arg7[%c32, %c0_46] : memref<352x128xbf16, #tpu.memory_space<vmem>>, vector<288x128xbf16>
    tpu.vector_store %arg7[%c32, %c0_46], %95 {strides = array<i32>} : memref<352x128xbf16, #tpu.memory_space<vmem>>, vector<288x128xbf16>,
    %cst_47 = arith.constant 0.000000e+00 : f32
    %97 = vector.broadcast %cst_47 : f32 to vector<288x128xf32>
    %c13 = arith.constant 13 : index
    %c0_48 = arith.constant 0 : index
    %98 = vector.load %arg7[%c13, %c0_48] : memref<352x128xbf16, #tpu.memory_space<vmem>>, vector<288x128xbf16>
    %c0_49 = arith.constant 0 : index
    %c0_50 = arith.constant 0 : index
    %c0_51 = arith.constant 0 : index
    %99 = vector.load %arg3[%c0_49, %c0_50, %c0_51] : memref<9x128x128xbf16, #tpu.memory_space<vmem>>, vector<1x128x128xbf16>
    %100 = vector.shape_cast %99 : vector<1x128x128xbf16> to vector<128x128xbf16>
    %cst_52 = arith.constant dense<0.000000e+00> : vector<288x128xf32>
    %101 = tpu.matmul %98, %100, %cst_52 {dimension_numbers = #tpu.dot_dimension_numbers<[1], [0], [0], [1], [0, 0, 1, 1], [], []>} : vector<288x128xbf16>, vector<128x128xbf16>, vector<288x128xf32> -> vector<288x128xf32>
    %102 = arith.addf %97, %101 : vector<288x128xf32>
    %c14 = arith.constant 14 : index
    %c0_53 = arith.constant 0 : index
    %103 = vector.load %arg7[%c14, %c0_53] : memref<352x128xbf16, #tpu.memory_space<vmem>>, vector<288x128xbf16>
    %c1_54 = arith.constant 1 : index
    %c0_55 = arith.constant 0 : index
    %c0_56 = arith.constant 0 : index
    %104 = vector.load %arg3[%c1_54, %c0_55, %c0_56] : memref<9x128x128xbf16, #tpu.memory_space<vmem>>, vector<1x128x128xbf16>
    %105 = vector.shape_cast %104 : vector<1x128x128xbf16> to vector<128x128xbf16>
    %cst_57 = arith.constant dense<0.000000e+00> : vector<288x128xf32>
    %106 = tpu.matmul %103, %105, %cst_57 {dimension_numbers = #tpu.dot_dimension_numbers<[1], [0], [0], [1], [0, 0, 1, 1], [], []>} : vector<288x128xbf16>, vector<128x128xbf16>, vector<288x128xf32> -> vector<288x128xf32>
    %107 = arith.addf %102, %106 : vector<288x128xf32>
    %c15 = arith.constant 15 : index
    %c0_58 = arith.constant 0 : index
    %108 = vector.load %arg7[%c15, %c0_58] : memref<352x128xbf16, #tpu.memory_space<vmem>>, vector<288x128xbf16>
    %c2_59 = arith.constant 2 : index
    %c0_60 = arith.constant 0 : index
    %c0_61 = arith.constant 0 : index
    %109 = vector.load %arg3[%c2_59, %c0_60, %c0_61] : memref<9x128x128xbf16, #tpu.memory_space<vmem>>, vector<1x128x128xbf16>
    %110 = vector.shape_cast %109 : vector<1x128x128xbf16> to vector<128x128xbf16>
    %cst_62 = arith.constant dense<0.000000e+00> : vector<288x128xf32>
    %111 = tpu.matmul %108, %110, %cst_62 {dimension_numbers = #tpu.dot_dimension_numbers<[1], [0], [0], [1], [0, 0, 1, 1], [], []>} : vector<288x128xbf16>, vector<128x128xbf16>, vector<288x128xf32> -> vector<288x128xf32>
    %112 = arith.addf %107, %111 : vector<288x128xf32>
    %c31 = arith.constant 31 : index
    %c0_63 = arith.constant 0 : index
    %113 = vector.load %arg7[%c31, %c0_63] : memref<352x128xbf16, #tpu.memory_space<vmem>>, vector<288x128xbf16>
    %c3_64 = arith.constant 3 : index
    %c0_65 = arith.constant 0 : index
    %c0_66 = arith.constant 0 : index
    %114 = vector.load %arg3[%c3_64, %c0_65, %c0_66] : memref<9x128x128xbf16, #tpu.memory_space<vmem>>, vector<1x128x128xbf16>
    %115 = vector.shape_cast %114 : vector<1x128x128xbf16> to vector<128x128xbf16>
    %cst_67 = arith.constant dense<0.000000e+00> : vector<288x128xf32>
    %116 = tpu.matmul %113, %115, %cst_67 {dimension_numbers = #tpu.dot_dimension_numbers<[1], [0], [0], [1], [0, 0, 1, 1], [], []>} : vector<288x128xbf16>, vector<128x128xbf16>, vector<288x128xf32> -> vector<288x128xf32>
    %117 = arith.addf %112, %116 : vector<288x128xf32>
    %c32_68 = arith.constant 32 : index
    %c0_69 = arith.constant 0 : index
    %118 = vector.load %arg7[%c32_68, %c0_69] : memref<352x128xbf16, #tpu.memory_space<vmem>>, vector<288x128xbf16>
    %c4_70 = arith.constant 4 : index
    %c0_71 = arith.constant 0 : index
    %c0_72 = arith.constant 0 : index
    %119 = vector.load %arg3[%c4_70, %c0_71, %c0_72] : memref<9x128x128xbf16, #tpu.memory_space<vmem>>, vector<1x128x128xbf16>
    %120 = vector.shape_cast %119 : vector<1x128x128xbf16> to vector<128x128xbf16>
    %cst_73 = arith.constant dense<0.000000e+00> : vector<288x128xf32>
    %121 = tpu.matmul %118, %120, %cst_73 {dimension_numbers = #tpu.dot_dimension_numbers<[1], [0], [0], [1], [0, 0, 1, 1], [], []>} : vector<288x128xbf16>, vector<128x128xbf16>, vector<288x128xf32> -> vector<288x128xf32>
    %122 = arith.addf %117, %121 : vector<288x128xf32>
    %c33 = arith.constant 33 : index
    %c0_74 = arith.constant 0 : index
    %123 = vector.load %arg7[%c33, %c0_74] : memref<352x128xbf16, #tpu.memory_space<vmem>>, vector<288x128xbf16>
    %c5_75 = arith.constant 5 : index
    %c0_76 = arith.constant 0 : index
    %c0_77 = arith.constant 0 : index
    %124 = vector.load %arg3[%c5_75, %c0_76, %c0_77] : memref<9x128x128xbf16, #tpu.memory_space<vmem>>, vector<1x128x128xbf16>
    %125 = vector.shape_cast %124 : vector<1x128x128xbf16> to vector<128x128xbf16>
    %cst_78 = arith.constant dense<0.000000e+00> : vector<288x128xf32>
    %126 = tpu.matmul %123, %125, %cst_78 {dimension_numbers = #tpu.dot_dimension_numbers<[1], [0], [0], [1], [0, 0, 1, 1], [], []>} : vector<288x128xbf16>, vector<128x128xbf16>, vector<288x128xf32> -> vector<288x128xf32>
    %127 = arith.addf %122, %126 : vector<288x128xf32>
    %c49 = arith.constant 49 : index
    %c0_79 = arith.constant 0 : index
    %128 = vector.load %arg7[%c49, %c0_79] : memref<352x128xbf16, #tpu.memory_space<vmem>>, vector<288x128xbf16>
    %c6_80 = arith.constant 6 : index
    %c0_81 = arith.constant 0 : index
    %c0_82 = arith.constant 0 : index
    %129 = vector.load %arg3[%c6_80, %c0_81, %c0_82] : memref<9x128x128xbf16, #tpu.memory_space<vmem>>, vector<1x128x128xbf16>
    %130 = vector.shape_cast %129 : vector<1x128x128xbf16> to vector<128x128xbf16>
    %cst_83 = arith.constant dense<0.000000e+00> : vector<288x128xf32>
    %131 = tpu.matmul %128, %130, %cst_83 {dimension_numbers = #tpu.dot_dimension_numbers<[1], [0], [0], [1], [0, 0, 1, 1], [], []>} : vector<288x128xbf16>, vector<128x128xbf16>, vector<288x128xf32> -> vector<288x128xf32>
    %132 = arith.addf %127, %131 : vector<288x128xf32>
    %c50 = arith.constant 50 : index
    %c0_84 = arith.constant 0 : index
    %133 = vector.load %arg7[%c50, %c0_84] : memref<352x128xbf16, #tpu.memory_space<vmem>>, vector<288x128xbf16>
    %c7_85 = arith.constant 7 : index
    %c0_86 = arith.constant 0 : index
    %c0_87 = arith.constant 0 : index
    %134 = vector.load %arg3[%c7_85, %c0_86, %c0_87] : memref<9x128x128xbf16, #tpu.memory_space<vmem>>, vector<1x128x128xbf16>
    %135 = vector.shape_cast %134 : vector<1x128x128xbf16> to vector<128x128xbf16>
    %cst_88 = arith.constant dense<0.000000e+00> : vector<288x128xf32>
    %136 = tpu.matmul %133, %135, %cst_88 {dimension_numbers = #tpu.dot_dimension_numbers<[1], [0], [0], [1], [0, 0, 1, 1], [], []>} : vector<288x128xbf16>, vector<128x128xbf16>, vector<288x128xf32> -> vector<288x128xf32>
    %137 = arith.addf %132, %136 : vector<288x128xf32>
    %c51 = arith.constant 51 : index
    %c0_89 = arith.constant 0 : index
    %138 = vector.load %arg7[%c51, %c0_89] : memref<352x128xbf16, #tpu.memory_space<vmem>>, vector<288x128xbf16>
    %c8_90 = arith.constant 8 : index
    %c0_91 = arith.constant 0 : index
    %c0_92 = arith.constant 0 : index
    %139 = vector.load %arg3[%c8_90, %c0_91, %c0_92] : memref<9x128x128xbf16, #tpu.memory_space<vmem>>, vector<1x128x128xbf16>
    %140 = vector.shape_cast %139 : vector<1x128x128xbf16> to vector<128x128xbf16>
    %cst_93 = arith.constant dense<0.000000e+00> : vector<288x128xf32>
    %141 = tpu.matmul %138, %140, %cst_93 {dimension_numbers = #tpu.dot_dimension_numbers<[1], [0], [0], [1], [0, 0, 1, 1], [], []>} : vector<288x128xbf16>, vector<128x128xbf16>, vector<288x128xf32> -> vector<288x128xf32>
    %142 = arith.addf %137, %141 : vector<288x128xf32>
    %143 = vector.broadcast %9 : vector<1x128xf32> to vector<288x128xf32>
    %144 = arith.addf %142, %143 : vector<288x128xf32>
    %145 = vector.broadcast %10 : vector<1x128xf32> to vector<288x128xf32>
    %146 = vector.broadcast %15 : vector<288x1xf32> to vector<288x128xf32>
    %147 = arith.mulf %145, %146 : vector<288x128xf32>
    %148 = arith.addf %144, %147 : vector<288x128xf32>
    %cst_94 = arith.constant 2.000000e-01 : f32
    %149 = vector.broadcast %cst_94 : f32 to vector<288x128xf32>
    %150 = arith.mulf %149, %148 : vector<288x128xf32>
    %151 = arith.maximumf %148, %150 : vector<288x128xf32>
    %152 = vector.broadcast %13 : vector<288x1xf32> to vector<288x128xf32>
    %153 = arith.mulf %151, %152 : vector<288x128xf32>
    %cst_95 = arith.constant dense<0.000000e+00> : vector<128xf32>
    %154 = vector.multi_reduction <add>, %153, %cst_95 [0] : vector<288x128xf32> to vector<128xf32>
    %155 = vector.shape_cast %154 : vector<128xf32> to vector<1x128xf32>
    %cst_96 = arith.constant 3.906250e-03 : f32
    %156 = vector.broadcast %cst_96 : f32 to vector<1x128xf32>
    %157 = arith.mulf %155, %156 : vector<1x128xf32>
    %158 = vector.broadcast %157 : vector<1x128xf32> to vector<288x128xf32>
    %159 = arith.subf %151, %158 : vector<288x128xf32>
    %160 = arith.mulf %159, %159 : vector<288x128xf32>
    %161 = vector.broadcast %13 : vector<288x1xf32> to vector<288x128xf32>
    %162 = arith.mulf %160, %161 : vector<288x128xf32>
    %cst_97 = arith.constant dense<0.000000e+00> : vector<128xf32>
    %163 = vector.multi_reduction <add>, %162, %cst_97 [0] : vector<288x128xf32> to vector<128xf32>
    %164 = vector.shape_cast %163 : vector<128xf32> to vector<1x128xf32>
    %cst_98 = arith.constant 3.906250e-03 : f32
    %165 = vector.broadcast %cst_98 : f32 to vector<1x128xf32>
    %166 = arith.mulf %164, %165 : vector<1x128xf32>
    %cst_99 = arith.constant 9.99999974E-6 : f32
    %167 = vector.broadcast %cst_99 : f32 to vector<1x128xf32>
    %168 = arith.addf %166, %167 : vector<1x128xf32>
    %169 = math.rsqrt %168 : vector<1x128xf32>
    %170 = vector.broadcast %169 : vector<1x128xf32> to vector<288x128xf32>
    %171 = arith.mulf %159, %170 : vector<288x128xf32>
    %172 = vector.broadcast %6 : vector<1x128xf32> to vector<288x128xf32>
    %173 = arith.mulf %172, %171 : vector<288x128xf32>
    %174 = vector.broadcast %7 : vector<1x128xf32> to vector<288x128xf32>
    %175 = arith.addf %173, %174 : vector<288x128xf32>
    %c0_100 = arith.constant 0 : index
    %c0_101 = arith.constant 0 : index
    %c0_102 = arith.constant 0 : index
    %176 = vector.load %arg6[%c0_100, %c0_101, %c0_102] : memref<1x288x128xf32, #tpu.memory_space<vmem>>, vector<1x288x128xf32>
    %177 = vector.shape_cast %176 : vector<1x288x128xf32> to vector<288x128xf32>
    %178 = vector.shape_cast %175 : vector<288x128xf32> to vector<1x288x128xf32>
    tpu.vector_store %arg6[%c0_100, %c0_101, %c0_102], %178 {strides = array<i32>} : memref<1x288x128xf32, #tpu.memory_space<vmem>>, vector<1x288x128xf32>,
    return
  }
  func.func @transform_0(%arg0: i32) -> (i32, i32, i32) {
    %c0_i32 = arith.constant 0 : i32
    %c0_i32_0 = arith.constant 0 : i32
    %c0_i32_1 = arith.constant 0 : i32
    return %arg0, %c0_i32, %c0_i32_0 : i32, i32, i32
  }
  func.func @transform_1(%arg0: i32) -> (i32, i32, i32) {
    %c0_i32 = arith.constant 0 : i32
    %c0_i32_0 = arith.constant 0 : i32
    %c0_i32_1 = arith.constant 0 : i32
    %c0_i32_2 = arith.constant 0 : i32
    return %c0_i32, %c0_i32_0, %c0_i32_1 : i32, i32, i32
  }
  func.func @transform_2(%arg0: i32) -> (i32, i32, i32) {
    %c0_i32 = arith.constant 0 : i32
    %c0_i32_0 = arith.constant 0 : i32
    %c0_i32_1 = arith.constant 0 : i32
    %c0_i32_2 = arith.constant 0 : i32
    return %c0_i32, %c0_i32_0, %c0_i32_1 : i32, i32, i32
  }
  func.func @transform_3(%arg0: i32) -> (i32, i32) {
    %c0_i32 = arith.constant 0 : i32
    %c0_i32_0 = arith.constant 0 : i32
    %c0_i32_1 = arith.constant 0 : i32
    return %c0_i32, %c0_i32_0 : i32, i32
  }
  func.func @transform_4(%arg0: i32) -> (i32, i32, i32) {
    %c0_i32 = arith.constant 0 : i32
    %c0_i32_0 = arith.constant 0 : i32
    %c0_i32_1 = arith.constant 0 : i32
    return %arg0, %c0_i32, %c0_i32_0 : i32, i32, i32
  }
  func.func @transform_5(%arg0: i32) -> (i32, i32, i32) {
    %c0_i32 = arith.constant 0 : i32
    %c0_i32_0 = arith.constant 0 : i32
    %c0_i32_1 = arith.constant 0 : i32
    return %arg0, %c0_i32, %c0_i32_0 : i32, i32, i32
  }
}

</mosaic_0001>

<llo_original>
// kernel: tpu_custom_call.1
$region0: #{tpu_custom_call.1}
  #allocation0 [shape = 'u32[]', space=smem, size = 0x4, offset = 0x4, fixed_abs, tag = 'smem constant byte address 0x4 - core index']
  #allocation1 [shape = 'u32[144,128]{1,0:T(1,128)}', space=vmem, size = 0x12000, scoped, tag = 'internal scratch']
  #allocation2 [shape = 'bf16[352,128]{1,0:T(16,128)(2,1)}', space=vmem, size = 0x16000, scoped, tag = 'scratch operand']
  %s0 = inlined_call_operand.vmem [shape: bf16[2,342,8], index: 0, kind: input, shape index: {}]
  %s1 = inlined_call_operand.vmem [shape: bf16[9,8,128], index: 1, kind: input, shape index: {}]
  %s2 = inlined_call_operand.hbm [shape: bf16[9,128,128], index: 2, kind: input, shape index: {}]
  %s3 = inlined_call_operand.vmem [shape: f32[2,128], index: 3, kind: input, shape index: {}]
  %s4 = inlined_call_operand.vmem [shape: f32[2,4,128], index: 4, kind: input, shape index: {}]
  %s5 = inlined_call_operand.hbm [shape: f32[2,288,128], index: 5, kind: output, shape index: {}]
  %s6 = sld [smem:[#allocation0]]
  $region57: #{tpu_custom_call.1} parent=0
    _
  %s8 = ssub.s32 1, %s6
  %s9 = scalar_select 0, %s8, %s6
  $region1: #{tpu_custom_call.1} parent=0
    #allocation3 [shape = 'u8[294912]{0}', space=vmem, size = 0x48000, scoped, tag = 'input window, operand 2, single buffered']
    #allocation4 [shape = 's32[2]{0}', space=sflag, size = 0x8, scoped, tag = 'scoped memory for tpu_custom_call.1']
    #allocation5 [shape = 's32[2]{0}', space=sflag, size = 0x8, scoped, tag = 'scoped memory for tpu_custom_call.1']
    #allocation6 [shape = 'u8[294912]{0}', space=vmem, size = 0x48000, scoped, tag = 'output window, operand 0']
    %10 = vsyncpa [#allocation4], 0
    %11 = vsyncpa [#allocation5], 0
    %s12 = scalar_lea.sflag [#allocation5], 1
    %13 = vsyncpa %s12, 0
    loop: start=0, step=1, limit=4
    $region2: #{tpu_custom_call.1} parent=1 // loop_pre_header
      _
    $region3: #{tpu_custom_call.1} parent=1 // loop_header
      %s15 = sphi 0, %s19
      %p16 = scmp.ge.s32.totalorder %s15, 4
      %s25 = sphi 0, %s27
      %s28 = sphi 0, %s25
      %s29 = sphi 0, %s28
      %s45 = sphi 0, %s29
      %s49 = sphi 0, %s49
      %s51 = sphi 0, %s49
      %s52 = sphi 0, %s51
      %s66 = sphi 0, %s52
      %s70 = sphi 0, %s70
      %s72 = sphi 0, %s70
      %s73 = sphi 0, %s72
      %s87 = sphi 0, %s73
      %s91 = sphi 0, %s91
      %s93 = sphi 0, %s91
      %s94 = sphi 0, %s93
      %s108 = sphi 0, %s94
      %s114 = sphi 0, %s116
      %s117 = sphi 0, %s114
      %s118 = sphi 0, %s117
      %s134 = sphi 0, %s118
      %s140 = sphi 0, %s142
      %s143 = sphi 0, %s140
      %s144 = sphi 0, %s143
      %s160 = sphi 0, %s144
    $region4: #{tpu_custom_call.1} parent=1 // loop_header_branch
      %18 = sbr.rel (%p16) target = $region8
    $region5: #{tpu_custom_call.1} parent=1 // loop_body
      %s20 = ssub.s32 %s15, 1
      %s21 = ssub.s32 %s15, 2
      %s22 = sadd.s32 %s15, 1
      %s23 = ssub.s32 %s15, %s22
      %p24 = scmp.eq.s32.totalorder %s23, 0
      %s26 = sadd.s32 %s25, 1
      %s27 = scalar_select %p24, %s25, %s26
      %p30 = pneg %p24
      %p31 = scmp.eq.s32.totalorder %s15, 1
      %p32 = por %p30, %p31
      %p33 = scmp.ne.s32.totalorder %s25, %s28
      %p34 = scmp.eq.s32.totalorder %s15, 0
      %p35 = por %p33, %p34
      %p36 = scmp.ne.s32.totalorder %s25, %s28
      %p37 = scmp.eq.s32.totalorder %s20, 1
      %p38 = por %p36, %p37
      %p39 = scmp.ne.s32.totalorder %s28, %s29
      %p40 = scmp.eq.s32.totalorder %s20, 0
      %p41 = por %p39, %p40
      %p42 = scmp.ne.s32.totalorder %s28, %s29
      %p43 = scmp.eq.s32.totalorder %s21, 1
      %p44 = por %p42, %p43
      %p46 = scmp.ne.s32.totalorder %s29, %s45
      %p47 = scmp.eq.s32.totalorder %s21, 0
      %p48 = por %p46, %p47
      %s50 = sadd.s32 %s49, 1
      %p53 = scmp.eq.s32.totalorder %s15, 1
      %p54 = scmp.ne.s32.totalorder %s49, %s51
      %p55 = scmp.eq.s32.totalorder %s15, 0
      %p56 = por %p54, %p55
      %p57 = scmp.ne.s32.totalorder %s49, %s51
      %p58 = scmp.eq.s32.totalorder %s20, 1
      %p59 = por %p57, %p58
      %p60 = scmp.ne.s32.totalorder %s51, %s52
      %p61 = scmp.eq.s32.totalorder %s20, 0
      %p62 = por %p60, %p61
      %p63 = scmp.ne.s32.totalorder %s51, %s52
      %p64 = scmp.eq.s32.totalorder %s21, 1
      %p65 = por %p63, %p64
      %p67 = scmp.ne.s32.totalorder %s52, %s66
      %p68 = scmp.eq.s32.totalorder %s21, 0
      %p69 = por %p67, %p68
      %s71 = sadd.s32 %s70, 1
      %p74 = scmp.eq.s32.totalorder %s15, 1
      %p75 = scmp.ne.s32.totalorder %s70, %s72
      %p76 = scmp.eq.s32.totalorder %s15, 0
      %p77 = por %p75, %p76
      %p78 = scmp.ne.s32.totalorder %s70, %s72
      %p79 = scmp.eq.s32.totalorder %s20, 1
      %p80 = por %p78, %p79
      %p81 = scmp.ne.s32.totalorder %s72, %s73
      %p82 = scmp.eq.s32.totalorder %s20, 0
      %p83 = por %p81, %p82
      %p84 = scmp.ne.s32.totalorder %s72, %s73
      %p85 = scmp.eq.s32.totalorder %s21, 1
      %p86 = por %p84, %p85
      %p88 = scmp.ne.s32.totalorder %s73, %s87
      %p89 = scmp.eq.s32.totalorder %s21, 0
      %p90 = por %p88, %p89
      %s92 = sadd.s32 %s91, 1
      %p95 = scmp.eq.s32.totalorder %s15, 1
      %p96 = scmp.ne.s32.totalorder %s91, %s93
      %p97 = scmp.eq.s32.totalorder %s15, 0
      %p98 = por %p96, %p97
      %p99 = scmp.ne.s32.totalorder %s91, %s93
      %p100 = scmp.eq.s32.totalorder %s20, 1
      %p101 = por %p99, %p100
      %p102 = scmp.ne.s32.totalorder %s93, %s94
      %p103 = scmp.eq.s32.totalorder %s20, 0
      %p104 = por %p102, %p103
      %p105 = scmp.ne.s32.totalorder %s93, %s94
      %p106 = scmp.eq.s32.totalorder %s21, 1
      %p107 = por %p105, %p106
      %p109 = scmp.ne.s32.totalorder %s94, %s108
      %p110 = scmp.eq.s32.totalorder %s21, 0
      %p111 = por %p109, %p110
      %s112 = ssub.s32 %s15, %s22
      %p113 = scmp.eq.s32.totalorder %s112, 0
      %s115 = sadd.s32 %s114, 1
      %s116 = scalar_select %p113, %s114, %s115
      %p119 = pneg %p113
      %p120 = scmp.eq.s32.totalorder %s15, 1
      %p121 = por %p119, %p120
      %p122 = scmp.ne.s32.totalorder %s114, %s117
      %p123 = scmp.eq.s32.totalorder %s15, 0
      %p124 = por %p122, %p123
      %p125 = scmp.ne.s32.totalorder %s114, %s117
      %p126 = scmp.eq.s32.totalorder %s20, 1
      %p127 = por %p125, %p126
      %p128 = scmp.ne.s32.totalorder %s117, %s118
      %p129 = scmp.eq.s32.totalorder %s20, 0
      %p130 = por %p128, %p129
      %p131 = scmp.ne.s32.totalorder %s117, %s118
      %p132 = scmp.eq.s32.totalorder %s21, 1
      %p133 = por %p131, %p132
      %p135 = scmp.ne.s32.totalorder %s118, %s134
      %p136 = scmp.eq.s32.totalorder %s21, 0
      %p137 = por %p135, %p136
      %s138 = ssub.s32 %s15, %s22
      %p139 = scmp.eq.s32.totalorder %s138, 0
      %s141 = sadd.s32 %s140, 1
      %s142 = scalar_select %p139, %s140, %s141
      %p145 = pneg %p139
      %p146 = scmp.eq.s32.totalorder %s15, 1
      %p147 = por %p145, %p146
      %p148 = scmp.ne.s32.totalorder %s140, %s143
      %p149 = scmp.eq.s32.totalorder %s15, 0
      %p150 = por %p148, %p149
      %p151 = scmp.ne.s32.totalorder %s140, %s143
      %p152 = scmp.eq.s32.totalorder %s20, 1
      %p153 = por %p151, %p152
      %p154 = scmp.ne.s32.totalorder %s143, %s144
      %p155 = scmp.eq.s32.totalorder %s20, 0
      %p156 = por %p154, %p155
      %p157 = scmp.ne.s32.totalorder %s143, %s144
      %p158 = scmp.eq.s32.totalorder %s21, 1
      %p159 = por %p157, %p158
      %p161 = scmp.ne.s32.totalorder %s144, %s160
      %p162 = scmp.eq.s32.totalorder %s21, 0
      %p163 = por %p161, %p162
      %p164 = scmp.le.s32.totalorder 1, %s15
      %p165 = scmp.lt.s32.totalorder %s15, 3
      %p166 = pnand %p164, %p165
      %p167 = pneg %p166
      // Predicated region
      $region9: #{tpu_custom_call.1} parent=5 // pred_check
        _
      $region10: #{tpu_custom_call.1} parent=5 // pred_check_branch
        %169 = sbr.rel (%p166) target = $region12
      $region11: #{tpu_custom_call.1} parent=5 // pred_region
        %s170 = ssub.s32 %s15, 1
        // Predicated region
        $region13: #{tpu_custom_call.1} parent=11 // pred_check
          %p171 = pneg %p62
        $region14: #{tpu_custom_call.1} parent=11 // pred_check_branch
          %173 = sbr.rel (%p171) target = $region16
        $region15: #{tpu_custom_call.1} parent=11 // pred_region
          _
        $region16: #{tpu_custom_call.1} parent=11 // pred_fallthru
          _
        // Predicated region
        $region17: #{tpu_custom_call.1} parent=11 // pred_check
          %p174 = pneg %p83
        $region18: #{tpu_custom_call.1} parent=11 // pred_check_branch
          %176 = sbr.rel (%p174) target = $region20
        $region19: #{tpu_custom_call.1} parent=11 // pred_region
          %s178 = ssub.s32 9216, 9216
          %179 = vsyncadd [#allocation4], %s178
          %s180 = sshll.u32 [#allocation3], 4
          %s181 = int_to_ptr.vmem [resolvable:$true] %s180
          %186 = dma.hbm_to_vmem [thread:$0]  %s2, 9216, %s181, [#allocation4], 64, 64, 4
        $region20: #{tpu_custom_call.1} parent=11 // pred_fallthru
          _
        // Predicated region
        $region21: #{tpu_custom_call.1} parent=11 // pred_check
          %p187 = pneg %p104
        $region22: #{tpu_custom_call.1} parent=11 // pred_check_branch
          %189 = sbr.rel (%p187) target = $region24
        $region23: #{tpu_custom_call.1} parent=11 // pred_region
          _
        $region24: #{tpu_custom_call.1} parent=11 // pred_fallthru
          _
      $region12: #{tpu_custom_call.1} parent=5 // pred_fallthru
        _
      %p190 = scmp.lt.s32.totalorder %s15, 2
      // Predicated region
      $region25: #{tpu_custom_call.1} parent=5 // pred_check
        %p191 = pneg %p190
      $region26: #{tpu_custom_call.1} parent=5 // pred_check_branch
        %193 = sbr.rel (%p191) target = $region28
      $region27: #{tpu_custom_call.1} parent=5 // pred_region
        // Predicated region
        $region29: #{tpu_custom_call.1} parent=27 // pred_check
          %p194 = pneg %p35
        $region30: #{tpu_custom_call.1} parent=27 // pred_check_branch
          %196 = sbr.rel (%p194) target = $region32
        $region31: #{tpu_custom_call.1} parent=27 // pred_region
          %p197 = scmp.lt.s32.totalorder %s15, 1
          %s198 = scalar_select %p197, %s15, 1
          %s199 = smul.addr %s198, 43
          %s200 = smul.addr %s199, 4
          %s201 = scalar_lea.vmem %s0, %s200
        $region32: #{tpu_custom_call.1} parent=27 // pred_fallthru
          _
        // Predicated region
        $region33: #{tpu_custom_call.1} parent=27 // pred_check
          %p202 = pneg %p124
        $region34: #{tpu_custom_call.1} parent=27 // pred_check_branch
          %204 = sbr.rel (%p202) target = $region36
        $region35: #{tpu_custom_call.1} parent=27 // pred_region
          %p205 = scmp.lt.s32.totalorder %s15, 1
          %s206 = scalar_select %p205, %s15, 1
          %s207 = smul.addr %s206, 4
          %s208 = scalar_lea.vmem %s4, %s207
        $region36: #{tpu_custom_call.1} parent=27 // pred_fallthru
          _
      $region28: #{tpu_custom_call.1} parent=5 // pred_fallthru
        _
      %p209 = scmp.le.s32.totalorder 1, %s15
      %p210 = scmp.lt.s32.totalorder %s15, 3
      %p211 = pnand %p209, %p210
      %p212 = pneg %p211
      // Predicated region
      $region37: #{tpu_custom_call.1} parent=5 // pred_check
        _
      $region38: #{tpu_custom_call.1} parent=5 // pred_check_branch
        %214 = sbr.rel (%p211) target = $region40
      $region39: #{tpu_custom_call.1} parent=5 // pred_region
        %s215 = ssub.s32 %s15, 1
        // Predicated region
        $region41: #{tpu_custom_call.1} parent=39 // pred_check
          %p216 = pneg %p83
        $region42: #{tpu_custom_call.1} parent=39 // pred_check_branch
          %218 = sbr.rel (%p216) target = $region44
        $region43: #{tpu_custom_call.1} parent=39 // pred_region
          %219 = dma.done [#allocation4], 9216
        $region44: #{tpu_custom_call.1} parent=39 // pred_fallthru
          _
        %p220 = scmp.lt.s32.totalorder %s20, 1
        %s221 = scalar_select %p220, %s20, 1
        %s222 = smul.addr %s221, 43
        %s223 = smul.addr %s222, 4
        %s224 = scalar_lea.vmem %s0, %s223
        %p225 = pneg %p41
        %p226 = pneg %p38
        %p227 = pneg %p62
        %p228 = pneg %p59
        %p229 = pneg %p83
        %p230 = pneg %p80
        %p231 = pneg %p104
        %p232 = pneg %p101
        %p233 = scmp.lt.s32.totalorder %s20, 1
        %s234 = scalar_select %p233, %s20, 1
        %s235 = smul.addr %s234, 4
        %s236 = scalar_lea.vmem %s4, %s235
        %p237 = pneg %p130
        %p238 = pneg %p127
        %p239 = pneg %p156
        %p240 = pneg %p153
        %s241 = sand.u32 %s143, 1
        %s242 = scalar_lea.sflag [#allocation5], %s241
        %s243 = sand.u32 %s143, 1
        %s244 = smul.addr %s243, 288
        %s245 = scalar_lea.vmem [#allocation6], %s244
        %p246 = scmp.lt.s32.totalorder %s20, 1
        %s247 = scalar_select %p246, %s20, 1
        %s248 = smul.addr %s247, 43
        %s249 = smul.addr %s248, 4
        %s250 = scalar_lea.vmem %s0, %s249
        %p251 = scmp.lt.s32.totalorder %s20, 1
        %s252 = scalar_select %p251, %s20, 1
        %s253 = smul.addr %s252, 4
        %s254 = scalar_lea.vmem %s4, %s253
        %v256 = vld [vmem:[%s250] sm:$0xf]
        %v257 = vld [vmem:[%s250 + $0x4] sm:$0xf]
        %v258 = vld [vmem:[%s250 + $0x8] sm:$0xf]
        %v259 = vld [vmem:[%s250 + $0xc] sm:$0xf]
        %v260 = vld [vmem:[%s250 + $0x10] sm:$0xf]
        %v261 = vld [vmem:[%s250 + $0x14] sm:$0xf]
        %v262 = vld [vmem:[%s250 + $0x18] sm:$0xf]
        %v263 = vld [vmem:[%s250 + $0x1c] sm:$0xf]
        %v264 = vld [vmem:[%s250 + $0x20] sm:$0xf]
        %v265 = vld [vmem:[%s250 + $0x24] sm:$0xf]
        %v266 = vld [vmem:[%s250 + $0x28] sm:$0xf]
        %v267 = vld [vmem:[%s250 + $0x2c] sm:$0xf]
        %v268 = vld [vmem:[%s250 + $0x30] sm:$0xf]
        %v269 = vld [vmem:[%s250 + $0x34] sm:$0xf]
        %v270 = vld [vmem:[%s250 + $0x38] sm:$0xf]
        %v271 = vld [vmem:[%s250 + $0x3c] sm:$0xf]
        %v272 = vld [vmem:[%s250 + $0x40] sm:$0xf]
        %v273 = vld [vmem:[%s250 + $0x44] sm:$0xf]
        %v274 = vld [vmem:[%s250 + $0x48] sm:$0xf]
        %v275 = vld [vmem:[%s250 + $0x4c] sm:$0xf]
        %v276 = vld [vmem:[%s250 + $0x50] sm:$0xf]
        %v277 = vld [vmem:[%s250 + $0x54] sm:$0xf]
        %v278 = vld [vmem:[%s250 + $0x58] sm:$0xf]
        %v279 = vld [vmem:[%s250 + $0x5c] sm:$0xf]
        %v280 = vld [vmem:[%s250 + $0x60] sm:$0xf]
        %v281 = vld [vmem:[%s250 + $0x64] sm:$0xf]
        %v282 = vld [vmem:[%s250 + $0x68] sm:$0xf]
        %v283 = vld [vmem:[%s250 + $0x6c] sm:$0xf]
        %v284 = vld [vmem:[%s250 + $0x70] sm:$0xf]
        %v285 = vld [vmem:[%s250 + $0x74] sm:$0xf]
        %v286 = vld [vmem:[%s250 + $0x78] sm:$0xf]
        %v287 = vld [vmem:[%s250 + $0x7c] sm:$0xf]
        %v288 = vld [vmem:[%s250 + $0x80] sm:$0xf]
        %v289 = vld [vmem:[%s250 + $0x84] sm:$0xf]
        %v290 = vld [vmem:[%s250 + $0x88] sm:$0xf]
        %v291 = vld [vmem:[%s250 + $0x8c] sm:$0xf]
        %v292 = vld [vmem:[%s250 + $0x90] sm:$0xf]
        %v293 = vld [vmem:[%s250 + $0x94] sm:$0xf]
        %v294 = vld [vmem:[%s250 + $0x98] sm:$0xf]
        %v295 = vld [vmem:[%s250 + $0x9c] sm:$0xf]
        %v296 = vld [vmem:[%s250 + $0xa0] sm:$0xf]
        %v297 = vld [vmem:[%s254] sm:$0xf]
        %v298 = vld [vmem:[%s3] sm:$0x3]
        %v299 = vunpack.c.l.bf16 %v258
        %v300 = vunpack.c.l.bf16 %v259
        %v301 = vunpack.c.l.bf16 %v260
        %v302 = vunpack.c.l.bf16 %v261
        %v303 = vunpack.c.l.bf16 %v262
        %v304 = vunpack.c.l.bf16 %v263
        %v305 = vunpack.c.l.bf16 %v264
        %v306 = vunpack.c.l.bf16 %v265
        %v307 = vunpack.c.l.bf16 %v266
        %v308 = vunpack.c.l.bf16 %v267
        %v309 = vunpack.c.l.bf16 %v268
        %v310 = vunpack.c.l.bf16 %v269
        %v311 = vunpack.c.l.bf16 %v270
        %v312 = vunpack.c.l.bf16 %v271
        %v313 = vunpack.c.l.bf16 %v272
        %v314 = vunpack.c.l.bf16 %v273
        %v315 = vunpack.c.l.bf16 %v274
        %v316 = vunpack.c.l.bf16 %v275
        %v317 = vunpack.c.l.bf16 %v276
        %v318 = vunpack.c.l.bf16 %v277
        %v319 = vunpack.c.l.bf16 %v278
        %v320 = vunpack.c.l.bf16 %v279
        %v321 = vunpack.c.l.bf16 %v280
        %v322 = vunpack.c.l.bf16 %v281
        %v323 = vunpack.c.l.bf16 %v282
        %v324 = vunpack.c.l.bf16 %v283
        %v325 = vunpack.c.l.bf16 %v284
        %v326 = vunpack.c.l.bf16 %v285
        %v327 = vunpack.c.l.bf16 %v286
        %v328 = vunpack.c.l.bf16 %v287
        %v329 = vunpack.c.l.bf16 %v288
        %v330 = vunpack.c.l.bf16 %v289
        %v331 = vunpack.c.l.bf16 %v290
        %v332 = vunpack.c.l.bf16 %v291
        %v333 = vunpack.c.l.bf16 %v292
        %v334 = vunpack.c.l.bf16 %v293
        %v335 = vunpack.c.l.bf16 %v294
        %v336 = vld [vmem:[%s1] sm:$0xf]
        %s337 = scalar_lea.vmem %s1, 4
        %v338 = vld [vmem:[%s337] sm:$0xf]
        %v376 = vunpack.c.l.b16 %v256
        %v377 = vunpack.c.l.b16 %v257
        %v378 = vunpack.c.l.b16 %v258
        %v379 = vunpack.c.l.b16 %v259
        %v380 = vunpack.c.l.b16 %v260
        %v381 = vunpack.c.l.b16 %v261
        %v382 = vunpack.c.l.b16 %v262
        %v383 = vunpack.c.l.b16 %v263
        %v384 = vunpack.c.l.b16 %v264
        %v385 = vunpack.c.l.b16 %v265
        %v386 = vunpack.c.l.b16 %v266
        %v387 = vunpack.c.l.b16 %v267
        %v388 = vunpack.c.l.b16 %v268
        %v389 = vunpack.c.l.b16 %v269
        %v390 = vunpack.c.l.b16 %v270
        %v391 = vunpack.c.l.b16 %v271
        %v392 = vunpack.c.l.b16 %v272
        %v393 = vunpack.c.l.b16 %v273
        %v394 = vunpack.c.l.b16 %v274
        %v395 = vunpack.c.l.b16 %v275
        %v396 = vunpack.c.l.b16 %v276
        %v397 = vunpack.c.l.b16 %v277
        %v398 = vunpack.c.l.b16 %v278
        %v399 = vunpack.c.l.b16 %v279
        %v400 = vunpack.c.l.b16 %v280
        %v401 = vunpack.c.l.b16 %v281
        %v402 = vunpack.c.l.b16 %v282
        %v403 = vunpack.c.l.b16 %v283
        %v404 = vunpack.c.l.b16 %v284
        %v405 = vunpack.c.l.b16 %v285
        %v406 = vunpack.c.l.b16 %v286
        %v407 = vunpack.c.l.b16 %v287
        %v408 = vunpack.c.l.b16 %v288
        %v409 = vunpack.c.l.b16 %v289
        %v410 = vunpack.c.l.b16 %v290
        %v411 = vunpack.c.l.b16 %v291
        %v412 = vunpack.c.l.b16 %v292
        %v413 = vpack.c.b16 %v377, %v376
        %v414 = vpack.c.b16 %v379, %v378
        %v415 = vpack.c.b16 %v381, %v380
        %v416 = vpack.c.b16 %v383, %v382
        %v417 = vpack.c.b16 %v385, %v384
        %v418 = vpack.c.b16 %v387, %v386
        %v419 = vpack.c.b16 %v389, %v388
        %v420 = vpack.c.b16 %v391, %v390
        %v421 = vpack.c.b16 %v393, %v392
        %v422 = vpack.c.b16 %v395, %v394
        %v423 = vpack.c.b16 %v397, %v396
        %v424 = vpack.c.b16 %v399, %v398
        %v425 = vpack.c.b16 %v401, %v400
        %v426 = vpack.c.b16 %v403, %v402
        %v427 = vpack.c.b16 %v405, %v404
        %v428 = vpack.c.b16 %v407, %v406
        %v429 = vpack.c.b16 %v409, %v408
        %v430 = vpack.c.b16 %v411, %v410
        %v431 = vpack.c.b16 %v412, %v412
        %vm432 = vsmask.f32 7424
        %v434 = vshrl.u32 %v413, 16
        %v436 = vshll.u32 %v413, 16
        %v438 = vrot.slane %v436, 1
        %v439 = vor.u32 %v434, %v438
        %v441 = vshll.u32 %v414, 16
        %v443 = vrot.slane %v441, 1
        %v444 = vsel %vm432, %v439, %v443
        %v445 = vshrl.u32 %v414, 16
        %v447 = vor.u32 %v445, %v443
        %v449 = vshll.u32 %v415, 16
        %v451 = vrot.slane %v449, 1
        %v452 = vsel %vm432, %v447, %v451
        %v453 = vshrl.u32 %v415, 16
        %v455 = vor.u32 %v453, %v451
        %v457 = vshll.u32 %v416, 16
        %v459 = vrot.slane %v457, 1
        %v460 = vsel %vm432, %v455, %v459
        %v461 = vshrl.u32 %v416, 16
        %v463 = vor.u32 %v461, %v459
        %v465 = vshll.u32 %v417, 16
        %v467 = vrot.slane %v465, 1
        %v468 = vsel %vm432, %v463, %v467
        %v469 = vshrl.u32 %v417, 16
        %v471 = vor.u32 %v469, %v467
        %v473 = vshll.u32 %v418, 16
        %v475 = vrot.slane %v473, 1
        %v476 = vsel %vm432, %v471, %v475
        %v477 = vshrl.u32 %v418, 16
        %v479 = vor.u32 %v477, %v475
        %v481 = vshll.u32 %v419, 16
        %v483 = vrot.slane %v481, 1
        %v484 = vsel %vm432, %v479, %v483
        %v485 = vshrl.u32 %v419, 16
        %v487 = vor.u32 %v485, %v483
        %v489 = vshll.u32 %v420, 16
        %v491 = vrot.slane %v489, 1
        %v492 = vsel %vm432, %v487, %v491
        %v493 = vshrl.u32 %v420, 16
        %v495 = vor.u32 %v493, %v491
        %v497 = vshll.u32 %v421, 16
        %v499 = vrot.slane %v497, 1
        %v500 = vsel %vm432, %v495, %v499
        %v501 = vshrl.u32 %v421, 16
        %v503 = vor.u32 %v501, %v499
        %v505 = vshll.u32 %v422, 16
        %v507 = vrot.slane %v505, 1
        %v508 = vsel %vm432, %v503, %v507
        %v509 = vshrl.u32 %v422, 16
        %v511 = vor.u32 %v509, %v507
        %v513 = vshll.u32 %v423, 16
        %v515 = vrot.slane %v513, 1
        %v516 = vsel %vm432, %v511, %v515
        %v517 = vshrl.u32 %v423, 16
        %v519 = vor.u32 %v517, %v515
        %v521 = vshll.u32 %v424, 16
        %v523 = vrot.slane %v521, 1
        %v524 = vsel %vm432, %v519, %v523
        %v525 = vshrl.u32 %v424, 16
        %v527 = vor.u32 %v525, %v523
        %v529 = vshll.u32 %v425, 16
        %v531 = vrot.slane %v529, 1
        %v532 = vsel %vm432, %v527, %v531
        %v533 = vshrl.u32 %v425, 16
        %v535 = vor.u32 %v533, %v531
        %v537 = vshll.u32 %v426, 16
        %v539 = vrot.slane %v537, 1
        %v540 = vsel %vm432, %v535, %v539
        %v541 = vshrl.u32 %v426, 16
        %v543 = vor.u32 %v541, %v539
        %v545 = vshll.u32 %v427, 16
        %v547 = vrot.slane %v545, 1
        %v548 = vsel %vm432, %v543, %v547
        %v549 = vshrl.u32 %v427, 16
        %v551 = vor.u32 %v549, %v547
        %v553 = vshll.u32 %v428, 16
        %v555 = vrot.slane %v553, 1
        %v556 = vsel %vm432, %v551, %v555
        %v557 = vshrl.u32 %v428, 16
        %v559 = vor.u32 %v557, %v555
        %v561 = vshll.u32 %v429, 16
        %v563 = vrot.slane %v561, 1
        %v564 = vsel %vm432, %v559, %v563
        %v565 = vshrl.u32 %v429, 16
        %v567 = vor.u32 %v565, %v563
        %v569 = vshll.u32 %v430, 16
        %v571 = vrot.slane %v569, 1
        %v572 = vsel %vm432, %v567, %v571
        %v573 = vshrl.u32 %v430, 16
        %v575 = vor.u32 %v573, %v571
        %v577 = vshll.u32 %v431, 16
        %v579 = vrot.slane %v577, 1
        %v580 = vsel %vm432, %v575, %v579
        %vm581 = vcmask 64512
        %v583 = vsel %vm581, %v444, 0
        %v586 = vsel %vm581, %v452, 0
        %v589 = vsel %vm581, %v460, 0
        %v592 = vsel %vm581, %v468, 0
        %v595 = vsel %vm581, %v476, 0
        %v598 = vsel %vm581, %v484, 0
        %v601 = vsel %vm581, %v492, 0
        %v604 = vsel %vm581, %v500, 0
        %v607 = vsel %vm581, %v508, 0
        %v610 = vsel %vm581, %v516, 0
        %v613 = vsel %vm581, %v524, 0
        %v616 = vsel %vm581, %v532, 0
        %v619 = vsel %vm581, %v540, 0
        %v622 = vsel %vm581, %v548, 0
        %v625 = vsel %vm581, %v556, 0
        %v628 = vsel %vm581, %v564, 0
        %v631 = vsel %vm581, %v572, 0
        %v634 = vsel %vm581, %v580, 0
        %vm636 = vcmask 1043456
        %v638 = vsel %vm636, %v338, 0
        %640 = vmatprep.subr.bf16.mxu0 0
        %641 = vmatpush1.bf16.msra.mxu0 %v638
        %642 = vmatprep.subr.bf16.mxu0 0
        %643 = vmatpush1.bf16.msra.mxu0 0
        %644 = vmatprep.subr.bf16.mxu0 0
        %645 = vmatpush1.bf16.msra.mxu0 0
        %646 = vmatprep.subr.bf16.mxu0 0
        %647 = vmatpush1.bf16.msra.mxu0 0
        %648 = vmatprep.subr.bf16.mxu0 0
        %649 = vmatpush1.bf16.msra.mxu0 0
        %650 = vmatprep.subr.bf16.mxu0 0
        %651 = vmatpush1.bf16.msra.mxu0 0
        %652 = vmatprep.subr.bf16.mxu0 0
        %653 = vmatpush1.bf16.msra.mxu0 0
        %654 = vmatprep.subr.bf16.mxu0 0
        %655 = vmatpush1.bf16.msra.mxu0 0
        %656 = vmatprep.subr.bf16.mxu0 0
        %657 = vmatpush1.bf16.msra.mxu0 0
        %658 = vmatprep.subr.bf16.mxu0 0
        %659 = vmatpush1.bf16.msra.mxu0 0
        %660 = vmatprep.subr.bf16.mxu0 0
        %661 = vmatpush1.bf16.msra.mxu0 0
        %662 = vmatprep.subr.bf16.mxu0 0
        %663 = vmatpush1.bf16.msra.mxu0 0
        %664 = vmatprep.subr.bf16.mxu0 0
        %665 = vmatpush1.bf16.msra.mxu0 0
        %666 = vmatprep.subr.bf16.mxu0 0
        %667 = vmatpush1.bf16.msra.mxu0 0
        %668 = vmatprep.subr.bf16.mxu0 0
        %669 = vmatpush1.bf16.msra.mxu0 0
        %670 = vmatprep.subr.bf16.mxu0 0
        %671 = vmatpush1.bf16.msra.mxu0 0
        %672 = vmatprep.mubr.bf16.mxu0 0
        %673 = vmatmul.mubr.bf16.gmra.mrb[0].mxu0 %v583
        %v674 = vpop.f32.mrb[0].mxu0
        %v675 = vadd.f32 0.0, %v674
        %v676 = vpop.f32.mrb[0].mxu0
        %v677 = vpop.f32.mrb[0].mxu0
        %v678 = vadd.f32 0.0, %v677
        %v679 = vpop.f32.mrb[0].mxu0
        %680 = vmatprep.mubr.bf16.mxu0 0
        %681 = vmatmul.mubr.bf16.gmra.mrb[0].mxu0 %v586
        %v682 = vpop.f32.mrb[0].mxu0
        %v683 = vadd.f32 0.0, %v682
        %v684 = vpop.f32.mrb[0].mxu0
        %v685 = vpop.f32.mrb[0].mxu0
        %v686 = vadd.f32 0.0, %v685
        %v687 = vpop.f32.mrb[0].mxu0
        %688 = vmatprep.mubr.bf16.mxu0 0
        %689 = vmatmul.mubr.bf16.gmra.mrb[0].mxu0 %v589
        %v690 = vpop.f32.mrb[0].mxu0
        %v691 = vadd.f32 0.0, %v690
        %v692 = vpop.f32.mrb[0].mxu0
        %v693 = vpop.f32.mrb[0].mxu0
        %v694 = vadd.f32 0.0, %v693
        %v695 = vpop.f32.mrb[0].mxu0
        %696 = vmatprep.mubr.bf16.mxu0 0
        %697 = vmatmul.mubr.bf16.gmra.mrb[0].mxu0 %v592
        %v698 = vpop.f32.mrb[0].mxu0
        %v699 = vadd.f32 0.0, %v698
        %v700 = vpop.f32.mrb[0].mxu0
        %v701 = vpop.f32.mrb[0].mxu0
        %v702 = vadd.f32 0.0, %v701
        %v703 = vpop.f32.mrb[0].mxu0
        %704 = vmatprep.mubr.bf16.mxu0 0
        %705 = vmatmul.mubr.bf16.gmra.mrb[0].mxu0 %v595
        %v706 = vpop.f32.mrb[0].mxu0
        %v707 = vadd.f32 0.0, %v706
        %v708 = vpop.f32.mrb[0].mxu0
        %v709 = vpop.f32.mrb[0].mxu0
        %v710 = vadd.f32 0.0, %v709
        %v711 = vpop.f32.mrb[0].mxu0
        %712 = vmatprep.mubr.bf16.mxu0 0
        %713 = vmatmul.mubr.bf16.gmra.mrb[0].mxu0 %v598
        %v714 = vpop.f32.mrb[0].mxu0
        %v715 = vadd.f32 0.0, %v714
        %v716 = vpop.f32.mrb[0].mxu0
        %v717 = vpop.f32.mrb[0].mxu0
        %v718 = vadd.f32 0.0, %v717
        %v719 = vpop.f32.mrb[0].mxu0
        %720 = vmatprep.mubr.bf16.mxu0 0
        %721 = vmatmul.mubr.bf16.gmra.mrb[0].mxu0 %v601
        %v722 = vpop.f32.mrb[0].mxu0
        %v723 = vadd.f32 0.0, %v722
        %v724 = vpop.f32.mrb[0].mxu0
        %v725 = vpop.f32.mrb[0].mxu0
        %v726 = vadd.f32 0.0, %v725
        %v727 = vpop.f32.mrb[0].mxu0
        %728 = vmatprep.mubr.bf16.mxu0 0
        %729 = vmatmul.mubr.bf16.gmra.mrb[0].mxu0 %v604
        %v730 = vpop.f32.mrb[0].mxu0
        %v731 = vadd.f32 0.0, %v730
        %v732 = vpop.f32.mrb[0].mxu0
        %v733 = vpop.f32.mrb[0].mxu0
        %v734 = vadd.f32 0.0, %v733
        %v735 = vpop.f32.mrb[0].mxu0
        %736 = vmatprep.mubr.bf16.mxu0 0
        %737 = vmatmul.mubr.bf16.gmra.mrb[0].mxu0 %v607
        %v738 = vpop.f32.mrb[0].mxu0
        %v739 = vadd.f32 0.0, %v738
        %v740 = vpop.f32.mrb[0].mxu0
        %v741 = vpop.f32.mrb[0].mxu0
        %v742 = vadd.f32 0.0, %v741
        %v743 = vpop.f32.mrb[0].mxu0
        %744 = vmatprep.mubr.bf16.mxu0 0
        %745 = vmatmul.mubr.bf16.gmra.mrb[0].mxu0 %v610
        %v746 = vpop.f32.mrb[0].mxu0
        %v747 = vadd.f32 0.0, %v746
        %v748 = vpop.f32.mrb[0].mxu0
        %v749 = vpop.f32.mrb[0].mxu0
        %v750 = vadd.f32 0.0, %v749
        %v751 = vpop.f32.mrb[0].mxu0
        %752 = vmatprep.mubr.bf16.mxu0 0
        %753 = vmatmul.mubr.bf16.gmra.mrb[0].mxu0 %v613
        %v754 = vpop.f32.mrb[0].mxu0
        %v755 = vadd.f32 0.0, %v754
        %v756 = vpop.f32.mrb[0].mxu0
        %v757 = vpop.f32.mrb[0].mxu0
        %v758 = vadd.f32 0.0, %v757
        %v759 = vpop.f32.mrb[0].mxu0
        %760 = vmatprep.mubr.bf16.mxu0 0
        %761 = vmatmul.mubr.bf16.gmra.mrb[0].mxu0 %v616
        %v762 = vpop.f32.mrb[0].mxu0
        %v763 = vadd.f32 0.0, %v762
        %v764 = vpop.f32.mrb[0].mxu0
        %v765 = vpop.f32.mrb[0].mxu0
        %v766 = vadd.f32 0.0, %v765
        %v767 = vpop.f32.mrb[0].mxu0
        %768 = vmatprep.mubr.bf16.mxu0 0
        %769 = vmatmul.mubr.bf16.gmra.mrb[0].mxu0 %v619
        %v770 = vpop.f32.mrb[0].mxu0
        %v771 = vadd.f32 0.0, %v770
        %v772 = vpop.f32.mrb[0].mxu0
        %v773 = vpop.f32.mrb[0].mxu0
        %v774 = vadd.f32 0.0, %v773
        %v775 = vpop.f32.mrb[0].mxu0
        %776 = vmatprep.mubr.bf16.mxu0 0
        %777 = vmatmul.mubr.bf16.gmra.mrb[0].mxu0 %v622
        %v778 = vpop.f32.mrb[0].mxu0
        %v779 = vadd.f32 0.0, %v778
        %v780 = vpop.f32.mrb[0].mxu0
        %v781 = vpop.f32.mrb[0].mxu0
        %v782 = vadd.f32 0.0, %v781
        %v783 = vpop.f32.mrb[0].mxu0
        %784 = vmatprep.mubr.bf16.mxu0 0
        %785 = vmatmul.mubr.bf16.gmra.mrb[0].mxu0 %v625
        %v786 = vpop.f32.mrb[0].mxu0
        %v787 = vadd.f32 0.0, %v786
        %v788 = vpop.f32.mrb[0].mxu0
        %v789 = vpop.f32.mrb[0].mxu0
        %v790 = vadd.f32 0.0, %v789
        %v791 = vpop.f32.mrb[0].mxu0
        %792 = vmatprep.mubr.bf16.mxu0 0
        %793 = vmatmul.mubr.bf16.gmra.mrb[0].mxu0 %v628
        %v794 = vpop.f32.mrb[0].mxu0
        %v795 = vadd.f32 0.0, %v794
        %v796 = vpop.f32.mrb[0].mxu0
        %v797 = vpop.f32.mrb[0].mxu0
        %v798 = vadd.f32 0.0, %v797
        %v799 = vpop.f32.mrb[0].mxu0
        %800 = vmatprep.mubr.bf16.mxu0 0
        %801 = vmatmul.mubr.bf16.gmra.mrb[0].mxu0 %v631
        %v802 = vpop.f32.mrb[0].mxu0
        %v803 = vadd.f32 0.0, %v802
        %v804 = vpop.f32.mrb[0].mxu0
        %v805 = vpop.f32.mrb[0].mxu0
        %v806 = vadd.f32 0.0, %v805
        %v807 = vpop.f32.mrb[0].mxu0
        %808 = vmatprep.mubr.bf16.mxu0 0
        %809 = vmatmul.mubr.bf16.gmra.mrb[0].mxu0 %v634
        %v810 = vpop.f32.mrb[0].mxu0
        %v811 = vadd.f32 0.0, %v810
        %v812 = vpop.f32.mrb[0].mxu0
        %v813 = vpop.f32.mrb[0].mxu0
        %v814 = vadd.f32 0.0, %v813
        %v815 = vpop.f32.mrb[0].mxu0
        %816 = vdwg.mxu0
        %v817 = vsel %vm581, %v413, 0
        %v819 = vsel %vm581, %v414, 0
        %v821 = vsel %vm581, %v415, 0
        %v823 = vsel %vm581, %v416, 0
        %v825 = vsel %vm581, %v417, 0
        %v827 = vsel %vm581, %v418, 0
        %v829 = vsel %vm581, %v419, 0
        %v831 = vsel %vm581, %v420, 0
        %v833 = vsel %vm581, %v421, 0
        %v835 = vsel %vm581, %v422, 0
        %v837 = vsel %vm581, %v423, 0
        %v839 = vsel %vm581, %v424, 0
        %v841 = vsel %vm581, %v425, 0
        %v843 = vsel %vm581, %v426, 0
        %v845 = vsel %vm581, %v427, 0
        %v847 = vsel %vm581, %v428, 0
        %v849 = vsel %vm581, %v429, 0
        %v851 = vsel %vm581, %v430, 0
        %v854 = vsel %vm636, %v336, 0
        %856 = vmatprep.subr.bf16.mxu0 0
        %857 = vmatpush1.bf16.msra.mxu0 %v854
        %858 = vmatprep.subr.bf16.mxu0 0
        %859 = vmatpush1.bf16.msra.mxu0 0
        %860 = vmatprep.subr.bf16.mxu0 0
        %861 = vmatpush1.bf16.msra.mxu0 0
        %862 = vmatprep.subr.bf16.mxu0 0
        %863 = vmatpush1.bf16.msra.mxu0 0
        %864 = vmatprep.subr.bf16.mxu0 0
        %865 = vmatpush1.bf16.msra.mxu0 0
        %866 = vmatprep.subr.bf16.mxu0 0
        %867 = vmatpush1.bf16.msra.mxu0 0
        %868 = vmatprep.subr.bf16.mxu0 0
        %869 = vmatpush1.bf16.msra.mxu0 0
        %870 = vmatprep.subr.bf16.mxu0 0
        %871 = vmatpush1.bf16.msra.mxu0 0
        %872 = vmatprep.subr.bf16.mxu0 0
        %873 = vmatpush1.bf16.msra.mxu0 0
        %874 = vmatprep.subr.bf16.mxu0 0
        %875 = vmatpush1.bf16.msra.mxu0 0
        %876 = vmatprep.subr.bf16.mxu0 0
        %877 = vmatpush1.bf16.msra.mxu0 0
        %878 = vmatprep.subr.bf16.mxu0 0
        %879 = vmatpush1.bf16.msra.mxu0 0
        %880 = vmatprep.subr.bf16.mxu0 0
        %881 = vmatpush1.bf16.msra.mxu0 0
        %882 = vmatprep.subr.bf16.mxu0 0
        %883 = vmatpush1.bf16.msra.mxu0 0
        %884 = vmatprep.subr.bf16.mxu0 0
        %885 = vmatpush1.bf16.msra.mxu0 0
        %886 = vmatprep.subr.bf16.mxu0 0
        %887 = vmatpush1.bf16.msra.mxu0 0
        %888 = vmatprep.mubr.bf16.mxu0 0
        %889 = vmatmul.mubr.bf16.gmra.mrb[0].mxu0 %v817
        %v890 = vpop.f32.mrb[0].mxu0
        %v891 = vadd.f32 %v675, %v890
        %v892 = vpop.f32.mrb[0].mxu0
        %v893 = vpop.f32.mrb[0].mxu0
        %v894 = vadd.f32 %v678, %v893
        %v895 = vpop.f32.mrb[0].mxu0
        %896 = vmatprep.mubr.bf16.mxu0 0
        %897 = vmatmul.mubr.bf16.gmra.mrb[0].mxu0 %v819
        %v898 = vpop.f32.mrb[0].mxu0
        %v899 = vadd.f32 %v683, %v898
        %v900 = vpop.f32.mrb[0].mxu0
        %v901 = vpop.f32.mrb[0].mxu0
        %v902 = vadd.f32 %v686, %v901
        %v903 = vpop.f32.mrb[0].mxu0
        %904 = vmatprep.mubr.bf16.mxu0 0
        %905 = vmatmul.mubr.bf16.gmra.mrb[0].mxu0 %v821
        %v906 = vpop.f32.mrb[0].mxu0
        %v907 = vadd.f32 %v691, %v906
        %v908 = vpop.f32.mrb[0].mxu0
        %v909 = vpop.f32.mrb[0].mxu0
        %v910 = vadd.f32 %v694, %v909
        %v911 = vpop.f32.mrb[0].mxu0
        %912 = vmatprep.mubr.bf16.mxu0 0
        %913 = vmatmul.mubr.bf16.gmra.mrb[0].mxu0 %v823
        %v914 = vpop.f32.mrb[0].mxu0
        %v915 = vadd.f32 %v699, %v914
        %v916 = vpop.f32.mrb[0].mxu0
        %v917 = vpop.f32.mrb[0].mxu0
        %v918 = vadd.f32 %v702, %v917
        %v919 = vpop.f32.mrb[0].mxu0
        %920 = vmatprep.mubr.bf16.mxu0 0
        %921 = vmatmul.mubr.bf16.gmra.mrb[0].mxu0 %v825
        %v922 = vpop.f32.mrb[0].mxu0
        %v923 = vadd.f32 %v707, %v922
        %v924 = vpop.f32.mrb[0].mxu0
        %v925 = vpop.f32.mrb[0].mxu0
        %v926 = vadd.f32 %v710, %v925
        %v927 = vpop.f32.mrb[0].mxu0
        %928 = vmatprep.mubr.bf16.mxu0 0
        %929 = vmatmul.mubr.bf16.gmra.mrb[0].mxu0 %v827
        %v930 = vpop.f32.mrb[0].mxu0
        %v931 = vadd.f32 %v715, %v930
        %v932 = vpop.f32.mrb[0].mxu0
        %v933 = vpop.f32.mrb[0].mxu0
        %v934 = vadd.f32 %v718, %v933
        %v935 = vpop.f32.mrb[0].mxu0
        %936 = vmatprep.mubr.bf16.mxu0 0
        %937 = vmatmul.mubr.bf16.gmra.mrb[0].mxu0 %v829
        %v938 = vpop.f32.mrb[0].mxu0
        %v939 = vadd.f32 %v723, %v938
        %v940 = vpop.f32.mrb[0].mxu0
        %v941 = vpop.f32.mrb[0].mxu0
        %v942 = vadd.f32 %v726, %v941
        %v943 = vpop.f32.mrb[0].mxu0
        %944 = vmatprep.mubr.bf16.mxu0 0
        %945 = vmatmul.mubr.bf16.gmra.mrb[0].mxu0 %v831
        %v946 = vpop.f32.mrb[0].mxu0
        %v947 = vadd.f32 %v731, %v946
        %v948 = vpop.f32.mrb[0].mxu0
        %v949 = vpop.f32.mrb[0].mxu0
        %v950 = vadd.f32 %v734, %v949
        %v951 = vpop.f32.mrb[0].mxu0
        %952 = vmatprep.mubr.bf16.mxu0 0
        %953 = vmatmul.mubr.bf16.gmra.mrb[0].mxu0 %v833
        %v954 = vpop.f32.mrb[0].mxu0
        %v955 = vadd.f32 %v739, %v954
        %v956 = vpop.f32.mrb[0].mxu0
        %v957 = vpop.f32.mrb[0].mxu0
        %v958 = vadd.f32 %v742, %v957
        %v959 = vpop.f32.mrb[0].mxu0
        %960 = vmatprep.mubr.bf16.mxu0 0
        %961 = vmatmul.mubr.bf16.gmra.mrb[0].mxu0 %v835
        %v962 = vpop.f32.mrb[0].mxu0
        %v963 = vadd.f32 %v747, %v962
        %v964 = vpop.f32.mrb[0].mxu0
        %v965 = vpop.f32.mrb[0].mxu0
        %v966 = vadd.f32 %v750, %v965
        %v967 = vpop.f32.mrb[0].mxu0
        %968 = vmatprep.mubr.bf16.mxu0 0
        %969 = vmatmul.mubr.bf16.gmra.mrb[0].mxu0 %v837
        %v970 = vpop.f32.mrb[0].mxu0
        %v971 = vadd.f32 %v755, %v970
        %v972 = vpop.f32.mrb[0].mxu0
        %v973 = vpop.f32.mrb[0].mxu0
        %v974 = vadd.f32 %v758, %v973
        %v975 = vpop.f32.mrb[0].mxu0
        %976 = vmatprep.mubr.bf16.mxu0 0
        %977 = vmatmul.mubr.bf16.gmra.mrb[0].mxu0 %v839
        %v978 = vpop.f32.mrb[0].mxu0
        %v979 = vadd.f32 %v763, %v978
        %v980 = vpop.f32.mrb[0].mxu0
        %v981 = vpop.f32.mrb[0].mxu0
        %v982 = vadd.f32 %v766, %v981
        %v983 = vpop.f32.mrb[0].mxu0
        %984 = vmatprep.mubr.bf16.mxu0 0
        %985 = vmatmul.mubr.bf16.gmra.mrb[0].mxu0 %v841
        %v986 = vpop.f32.mrb[0].mxu0
        %v987 = vadd.f32 %v771, %v986
        %v988 = vpop.f32.mrb[0].mxu0
        %v989 = vpop.f32.mrb[0].mxu0
        %v990 = vadd.f32 %v774, %v989
        %v991 = vpop.f32.mrb[0].mxu0
        %992 = vmatprep.mubr.bf16.mxu0 0
        %993 = vmatmul.mubr.bf16.gmra.mrb[0].mxu0 %v843
        %v994 = vpop.f32.mrb[0].mxu0
        %v995 = vadd.f32 %v779, %v994
        %v996 = vpop.f32.mrb[0].mxu0
        %v997 = vpop.f32.mrb[0].mxu0
        %v998 = vadd.f32 %v782, %v997
        %v999 = vpop.f32.mrb[0].mxu0
        %1000 = vmatprep.mubr.bf16.mxu0 0
        %1001 = vmatmul.mubr.bf16.gmra.mrb[0].mxu0 %v845
        %v1002 = vpop.f32.mrb[0].mxu0
        %v1003 = vadd.f32 %v787, %v1002
        %v1004 = vpop.f32.mrb[0].mxu0
        %v1005 = vpop.f32.mrb[0].mxu0
        %v1006 = vadd.f32 %v790, %v1005
        %v1007 = vpop.f32.mrb[0].mxu0
        %1008 = vmatprep.mubr.bf16.mxu0 0
        %1009 = vmatmul.mubr.bf16.gmra.mrb[0].mxu0 %v847
        %v1010 = vpop.f32.mrb[0].mxu0
        %v1011 = vadd.f32 %v795, %v1010
        %v1012 = vpop.f32.mrb[0].mxu0
        %v1013 = vpop.f32.mrb[0].mxu0
        %v1014 = vadd.f32 %v798, %v1013
        %v1015 = vpop.f32.mrb[0].mxu0
        %1016 = vmatprep.mubr.bf16.mxu0 0
        %1017 = vmatmul.mubr.bf16.gmra.mrb[0].mxu0 %v849
        %v1018 = vpop.f32.mrb[0].mxu0
        %v1019 = vadd.f32 %v803, %v1018
        %v1020 = vpop.f32.mrb[0].mxu0
        %v1021 = vpop.f32.mrb[0].mxu0
        %v1022 = vadd.f32 %v806, %v1021
        %v1023 = vpop.f32.mrb[0].mxu0
        %1024 = vmatprep.mubr.bf16.mxu0 0
        %1025 = vmatmul.mubr.bf16.gmra.mrb[0].mxu0 %v851
        %v1026 = vpop.f32.mrb[0].mxu0
        %v1027 = vadd.f32 %v811, %v1026
        %v1028 = vpop.f32.mrb[0].mxu0
        %v1029 = vpop.f32.mrb[0].mxu0
        %v1030 = vadd.f32 %v814, %v1029
        %v1031 = vpop.f32.mrb[0].mxu0
        %1032 = vdwg.mxu0
        %s1033 = scalar_lea.vmem %s1, 8
        %v1034 = vld [vmem:[%s1033] sm:$0xf]
        %vm1035 = vcmask 1046528
        %v1036 = vrot.slane %v413, 1
        %v1037 = vrot.slane %v414, 1
        %v1038 = vsel %vm1035, %v1036, %v1037
        %v1039 = vrot.slane %v415, 1
        %v1040 = vsel %vm1035, %v1037, %v1039
        %v1041 = vrot.slane %v416, 1
        %v1042 = vsel %vm1035, %v1039, %v1041
        %v1043 = vrot.slane %v417, 1
        %v1044 = vsel %vm1035, %v1041, %v1043
        %v1045 = vrot.slane %v418, 1
        %v1046 = vsel %vm1035, %v1043, %v1045
        %v1047 = vrot.slane %v419, 1
        %v1048 = vsel %vm1035, %v1045, %v1047
        %v1049 = vrot.slane %v420, 1
        %v1050 = vsel %vm1035, %v1047, %v1049
        %v1051 = vrot.slane %v421, 1
        %v1052 = vsel %vm1035, %v1049, %v1051
        %v1053 = vrot.slane %v422, 1
        %v1054 = vsel %vm1035, %v1051, %v1053
        %v1055 = vrot.slane %v423, 1
        %v1056 = vsel %vm1035, %v1053, %v1055
        %v1057 = vrot.slane %v424, 1
        %v1058 = vsel %vm1035, %v1055, %v1057
        %v1059 = vrot.slane %v425, 1
        %v1060 = vsel %vm1035, %v1057, %v1059
        %v1061 = vrot.slane %v426, 1
        %v1062 = vsel %vm1035, %v1059, %v1061
        %v1063 = vrot.slane %v427, 1
        %v1064 = vsel %vm1035, %v1061, %v1063
        %v1065 = vrot.slane %v428, 1
        %v1066 = vsel %vm1035, %v1063, %v1065
        %v1067 = vrot.slane %v429, 1
        %v1068 = vsel %vm1035, %v1065, %v1067
        %v1069 = vrot.slane %v430, 1
        %v1070 = vsel %vm1035, %v1067, %v1069
        %v1071 = vrot.slane %v431, 1
        %v1072 = vsel %vm1035, %v1069, %v1071
        %v1074 = vsel %vm581, %v1038, 0
        %v1077 = vsel %vm581, %v1040, 0
        %v1080 = vsel %vm581, %v1042, 0
        %v1083 = vsel %vm581, %v1044, 0
        %v1086 = vsel %vm581, %v1046, 0
        %v1089 = vsel %vm581, %v1048, 0
        %v1092 = vsel %vm581, %v1050, 0
        %v1095 = vsel %vm581, %v1052, 0
        %v1098 = vsel %vm581, %v1054, 0
        %v1101 = vsel %vm581, %v1056, 0
        %v1104 = vsel %vm581, %v1058, 0
        %v1107 = vsel %vm581, %v1060, 0
        %v1110 = vsel %vm581, %v1062, 0
        %v1113 = vsel %vm581, %v1064, 0
        %v1116 = vsel %vm581, %v1066, 0
        %v1119 = vsel %vm581, %v1068, 0
        %v1122 = vsel %vm581, %v1070, 0
        %v1125 = vsel %vm581, %v1072, 0
        %v1128 = vsel %vm636, %v1034, 0
        %1130 = vmatprep.subr.bf16.mxu0 0
        %1131 = vmatpush1.bf16.msra.mxu0 %v1128
        %1132 = vmatprep.subr.bf16.mxu0 0
        %1133 = vmatpush1.bf16.msra.mxu0 0
        %1134 = vmatprep.subr.bf16.mxu0 0
        %1135 = vmatpush1.bf16.msra.mxu0 0
        %1136 = vmatprep.subr.bf16.mxu0 0
        %1137 = vmatpush1.bf16.msra.mxu0 0
        %1138 = vmatprep.subr.bf16.mxu0 0
        %1139 = vmatpush1.bf16.msra.mxu0 0
        %1140 = vmatprep.subr.bf16.mxu0 0
        %1141 = vmatpush1.bf16.msra.mxu0 0
        %1142 = vmatprep.subr.bf16.mxu0 0
        %1143 = vmatpush1.bf16.msra.mxu0 0
        %1144 = vmatprep.subr.bf16.mxu0 0
        %1145 = vmatpush1.bf16.msra.mxu0 0
        %1146 = vmatprep.subr.bf16.mxu0 0
        %1147 = vmatpush1.bf16.msra.mxu0 0
        %1148 = vmatprep.subr.bf16.mxu0 0
        %1149 = vmatpush1.bf16.msra.mxu0 0
        %1150 = vmatprep.subr.bf16.mxu0 0
        %1151 = vmatpush1.bf16.msra.mxu0 0
        %1152 = vmatprep.subr.bf16.mxu0 0
        %1153 = vmatpush1.bf16.msra.mxu0 0
        %1154 = vmatprep.subr.bf16.mxu0 0
        %1155 = vmatpush1.bf16.msra.mxu0 0
        %1156 = vmatprep.subr.bf16.mxu0 0
        %1157 = vmatpush1.bf16.msra.mxu0 0
        %1158 = vmatprep.subr.bf16.mxu0 0
        %1159 = vmatpush1.bf16.msra.mxu0 0
        %1160 = vmatprep.subr.bf16.mxu0 0
        %1161 = vmatpush1.bf16.msra.mxu0 0
        %1162 = vmatprep.mubr.bf16.mxu0 0
        %1163 = vmatmul.mubr.bf16.gmra.mrb[0].mxu0 %v1074
        %v1164 = vpop.f32.mrb[0].mxu0
        %v1165 = vadd.f32 0.0, %v1164
        %v1166 = vpop.f32.mrb[0].mxu0
        %v1167 = vpop.f32.mrb[0].mxu0
        %v1168 = vadd.f32 0.0, %v1167
        %v1169 = vpop.f32.mrb[0].mxu0
        %1170 = vmatprep.mubr.bf16.mxu0 0
        %1171 = vmatmul.mubr.bf16.gmra.mrb[0].mxu0 %v1077
        %v1172 = vpop.f32.mrb[0].mxu0
        %v1173 = vadd.f32 0.0, %v1172
        %v1174 = vpop.f32.mrb[0].mxu0
        %v1175 = vpop.f32.mrb[0].mxu0
        %v1176 = vadd.f32 0.0, %v1175
        %v1177 = vpop.f32.mrb[0].mxu0
        %1178 = vmatprep.mubr.bf16.mxu0 0
        %1179 = vmatmul.mubr.bf16.gmra.mrb[0].mxu0 %v1080
        %v1180 = vpop.f32.mrb[0].mxu0
        %v1181 = vadd.f32 0.0, %v1180
        %v1182 = vpop.f32.mrb[0].mxu0
        %v1183 = vpop.f32.mrb[0].mxu0
        %v1184 = vadd.f32 0.0, %v1183
        %v1185 = vpop.f32.mrb[0].mxu0
        %1186 = vmatprep.mubr.bf16.mxu0 0
        %1187 = vmatmul.mubr.bf16.gmra.mrb[0].mxu0 %v1083
        %v1188 = vpop.f32.mrb[0].mxu0
        %v1189 = vadd.f32 0.0, %v1188
        %v1190 = vpop.f32.mrb[0].mxu0
        %v1191 = vpop.f32.mrb[0].mxu0
        %v1192 = vadd.f32 0.0, %v1191
        %v1193 = vpop.f32.mrb[0].mxu0
        %1194 = vmatprep.mubr.bf16.mxu0 0
        %1195 = vmatmul.mubr.bf16.gmra.mrb[0].mxu0 %v1086
        %v1196 = vpop.f32.mrb[0].mxu0
        %v1197 = vadd.f32 0.0, %v1196
        %v1198 = vpop.f32.mrb[0].mxu0
        %v1199 = vpop.f32.mrb[0].mxu0
        %v1200 = vadd.f32 0.0, %v1199
        %v1201 = vpop.f32.mrb[0].mxu0
        %1202 = vmatprep.mubr.bf16.mxu0 0
        %1203 = vmatmul.mubr.bf16.gmra.mrb[0].mxu0 %v1089
        %v1204 = vpop.f32.mrb[0].mxu0
        %v1205 = vadd.f32 0.0, %v1204
        %v1206 = vpop.f32.mrb[0].mxu0
        %v1207 = vpop.f32.mrb[0].mxu0
        %v1208 = vadd.f32 0.0, %v1207
        %v1209 = vpop.f32.mrb[0].mxu0
        %1210 = vmatprep.mubr.bf16.mxu0 0
        %1211 = vmatmul.mubr.bf16.gmra.mrb[0].mxu0 %v1092
        %v1212 = vpop.f32.mrb[0].mxu0
        %v1213 = vadd.f32 0.0, %v1212
        %v1214 = vpop.f32.mrb[0].mxu0
        %v1215 = vpop.f32.mrb[0].mxu0
        %v1216 = vadd.f32 0.0, %v1215
        %v1217 = vpop.f32.mrb[0].mxu0
        %1218 = vmatprep.mubr.bf16.mxu0 0
        %1219 = vmatmul.mubr.bf16.gmra.mrb[0].mxu0 %v1095
        %v1220 = vpop.f32.mrb[0].mxu0
        %v1221 = vadd.f32 0.0, %v1220
        %v1222 = vpop.f32.mrb[0].mxu0
        %v1223 = vpop.f32.mrb[0].mxu0
        %v1224 = vadd.f32 0.0, %v1223
        %v1225 = vpop.f32.mrb[0].mxu0
        %1226 = vmatprep.mubr.bf16.mxu0 0
        %1227 = vmatmul.mubr.bf16.gmra.mrb[0].mxu0 %v1098
        %v1228 = vpop.f32.mrb[0].mxu0
        %v1229 = vadd.f32 0.0, %v1228
        %v1230 = vpop.f32.mrb[0].mxu0
        %v1231 = vpop.f32.mrb[0].mxu0
        %v1232 = vadd.f32 0.0, %v1231
        %v1233 = vpop.f32.mrb[0].mxu0
        %1234 = vmatprep.mubr.bf16.mxu0 0
        %1235 = vmatmul.mubr.bf16.gmra.mrb[0].mxu0 %v1101
        %v1236 = vpop.f32.mrb[0].mxu0
        %v1237 = vadd.f32 0.0, %v1236
        %v1238 = vpop.f32.mrb[0].mxu0
        %v1239 = vpop.f32.mrb[0].mxu0
        %v1240 = vadd.f32 0.0, %v1239
        %v1241 = vpop.f32.mrb[0].mxu0
        %1242 = vmatprep.mubr.bf16.mxu0 0
        %1243 = vmatmul.mubr.bf16.gmra.mrb[0].mxu0 %v1104
        %v1244 = vpop.f32.mrb[0].mxu0
        %v1245 = vadd.f32 0.0, %v1244
        %v1246 = vpop.f32.mrb[0].mxu0
        %v1247 = vpop.f32.mrb[0].mxu0
        %v1248 = vadd.f32 0.0, %v1247
        %v1249 = vpop.f32.mrb[0].mxu0
        %1250 = vmatprep.mubr.bf16.mxu0 0
        %1251 = vmatmul.mubr.bf16.gmra.mrb[0].mxu0 %v1107
        %v1252 = vpop.f32.mrb[0].mxu0
        %v1253 = vadd.f32 0.0, %v1252
        %v1254 = vpop.f32.mrb[0].mxu0
        %v1255 = vpop.f32.mrb[0].mxu0
        %v1256 = vadd.f32 0.0, %v1255
        %v1257 = vpop.f32.mrb[0].mxu0
        %1258 = vmatprep.mubr.bf16.mxu0 0
        %1259 = vmatmul.mubr.bf16.gmra.mrb[0].mxu0 %v1110
        %v1260 = vpop.f32.mrb[0].mxu0
        %v1261 = vadd.f32 0.0, %v1260
        %v1262 = vpop.f32.mrb[0].mxu0
        %v1263 = vpop.f32.mrb[0].mxu0
        %v1264 = vadd.f32 0.0, %v1263
        %v1265 = vpop.f32.mrb[0].mxu0
        %1266 = vmatprep.mubr.bf16.mxu0 0
        %1267 = vmatmul.mubr.bf16.gmra.mrb[0].mxu0 %v1113
        %v1268 = vpop.f32.mrb[0].mxu0
        %v1269 = vadd.f32 0.0, %v1268
        %v1270 = vpop.f32.mrb[0].mxu0
        %v1271 = vpop.f32.mrb[0].mxu0
        %v1272 = vadd.f32 0.0, %v1271
        %v1273 = vpop.f32.mrb[0].mxu0
        %1274 = vmatprep.mubr.bf16.mxu0 0
        %1275 = vmatmul.mubr.bf16.gmra.mrb[0].mxu0 %v1116
        %v1276 = vpop.f32.mrb[0].mxu0
        %v1277 = vadd.f32 0.0, %v1276
        %v1278 = vpop.f32.mrb[0].mxu0
        %v1279 = vpop.f32.mrb[0].mxu0
        %v1280 = vadd.f32 0.0, %v1279
        %v1281 = vpop.f32.mrb[0].mxu0
        %1282 = vmatprep.mubr.bf16.mxu0 0
        %1283 = vmatmul.mubr.bf16.gmra.mrb[0].mxu0 %v1119
        %v1284 = vpop.f32.mrb[0].mxu0
        %v1285 = vadd.f32 0.0, %v1284
        %v1286 = vpop.f32.mrb[0].mxu0
        %v1287 = vpop.f32.mrb[0].mxu0
        %v1288 = vadd.f32 0.0, %v1287
        %v1289 = vpop.f32.mrb[0].mxu0
        %1290 = vmatprep.mubr.bf16.mxu0 0
        %1291 = vmatmul.mubr.bf16.gmra.mrb[0].mxu0 %v1122
        %v1292 = vpop.f32.mrb[0].mxu0
        %v1293 = vadd.f32 0.0, %v1292
        %v1294 = vpop.f32.mrb[0].mxu0
        %v1295 = vpop.f32.mrb[0].mxu0
        %v1296 = vadd.f32 0.0, %v1295
        %v1297 = vpop.f32.mrb[0].mxu0
        %1298 = vmatprep.mubr.bf16.mxu0 0
        %1299 = vmatmul.mubr.bf16.gmra.mrb[0].mxu0 %v1125
        %v1300 = vpop.f32.mrb[0].mxu0
        %v1301 = vadd.f32 0.0, %v1300
        %v1302 = vpop.f32.mrb[0].mxu0
        %v1303 = vpop.f32.mrb[0].mxu0
        %v1304 = vadd.f32 0.0, %v1303
        %v1305 = vpop.f32.mrb[0].mxu0
        %1306 = vdwg.mxu0
        %v1307 = vadd.f32 %v891, %v1165
        %v1308 = vadd.f32 %v894, %v1168
        %v1309 = vadd.f32 %v899, %v1173
        %v1310 = vadd.f32 %v902, %v1176
        %v1311 = vadd.f32 %v907, %v1181
        %v1312 = vadd.f32 %v910, %v1184
        %v1313 = vadd.f32 %v915, %v1189
        %v1314 = vadd.f32 %v918, %v1192
        %v1315 = vadd.f32 %v923, %v1197
        %v1316 = vadd.f32 %v926, %v1200
        %v1317 = vadd.f32 %v931, %v1205
        %v1318 = vadd.f32 %v934, %v1208
        %v1319 = vadd.f32 %v939, %v1213
        %v1320 = vadd.f32 %v942, %v1216
        %v1321 = vadd.f32 %v947, %v1221
        %v1322 = vadd.f32 %v950, %v1224
        %v1323 = vadd.f32 %v955, %v1229
        %v1324 = vadd.f32 %v958, %v1232
        %v1325 = vadd.f32 %v963, %v1237
        %v1326 = vadd.f32 %v966, %v1240
        %v1327 = vadd.f32 %v971, %v1245
        %v1328 = vadd.f32 %v974, %v1248
        %v1329 = vadd.f32 %v979, %v1253
        %v1330 = vadd.f32 %v982, %v1256
        %v1331 = vadd.f32 %v987, %v1261
        %v1332 = vadd.f32 %v990, %v1264
        %v1333 = vadd.f32 %v995, %v1269
        %v1334 = vadd.f32 %v998, %v1272
        %v1335 = vadd.f32 %v1003, %v1277
        %v1336 = vadd.f32 %v1006, %v1280
        %v1337 = vadd.f32 %v1011, %v1285
        %v1338 = vadd.f32 %v1014, %v1288
        %v1339 = vadd.f32 %v1019, %v1293
        %v1340 = vadd.f32 %v1022, %v1296
        %v1341 = vadd.f32 %v1027, %v1301
        %v1342 = vadd.f32 %v1030, %v1304
        %s1343 = scalar_lea.vmem %s1, 12
        %v1344 = vld [vmem:[%s1343] sm:$0xf]
        %v1347 = vunpack.c.l.b16 %v293
        %v1348 = vunpack.c.l.b16 %v294
        %v1349 = vpack.c.b16 %v1347, %v412
        %v1350 = vpack.c.b16 %v1348, %v1348
        %v1351 = vrot.slane %v1349, 1
        %v1352 = vsel %vm1035, %v1069, %v1351
        %v1353 = vrot.slane %v1350, 1
        %v1354 = vsel %vm1035, %v1351, %v1353
        %v1356 = vsel %vm581, %v1352, 0
        %v1359 = vsel %vm581, %v1354, 0
        %v1362 = vsel %vm636, %v1344, 0
        %1364 = vmatprep.subr.bf16.mxu0 0
        %1365 = vmatpush1.bf16.msra.mxu0 %v1362
        %1366 = vmatprep.subr.bf16.mxu0 0
        %1367 = vmatpush1.bf16.msra.mxu0 0
        %1368 = vmatprep.subr.bf16.mxu0 0
        %1369 = vmatpush1.bf16.msra.mxu0 0
        %1370 = vmatprep.subr.bf16.mxu0 0
        %1371 = vmatpush1.bf16.msra.mxu0 0
        %1372 = vmatprep.subr.bf16.mxu0 0
        %1373 = vmatpush1.bf16.msra.mxu0 0
        %1374 = vmatprep.subr.bf16.mxu0 0
        %1375 = vmatpush1.bf16.msra.mxu0 0
        %1376 = vmatprep.subr.bf16.mxu0 0
        %1377 = vmatpush1.bf16.msra.mxu0 0
        %1378 = vmatprep.subr.bf16.mxu0 0
        %1379 = vmatpush1.bf16.msra.mxu0 0
        %1380 = vmatprep.subr.bf16.mxu0 0
        %1381 = vmatpush1.bf16.msra.mxu0 0
        %1382 = vmatprep.subr.bf16.mxu0 0
        %1383 = vmatpush1.bf16.msra.mxu0 0
        %1384 = vmatprep.subr.bf16.mxu0 0
        %1385 = vmatpush1.bf16.msra.mxu0 0
        %1386 = vmatprep.subr.bf16.mxu0 0
        %1387 = vmatpush1.bf16.msra.mxu0 0
        %1388 = vmatprep.subr.bf16.mxu0 0
        %1389 = vmatpush1.bf16.msra.mxu0 0
        %1390 = vmatprep.subr.bf16.mxu0 0
        %1391 = vmatpush1.bf16.msra.mxu0 0
        %1392 = vmatprep.subr.bf16.mxu0 0
        %1393 = vmatpush1.bf16.msra.mxu0 0
        %1394 = vmatprep.subr.bf16.mxu0 0
        %1395 = vmatpush1.bf16.msra.mxu0 0
        %1396 = vmatprep.mubr.bf16.mxu0 0
        %1397 = vmatmul.mubr.bf16.gmra.mrb[0].mxu0 %v1077
        %v1398 = vpop.f32.mrb[0].mxu0
        %v1399 = vadd.f32 0.0, %v1398
        %v1400 = vpop.f32.mrb[0].mxu0
        %v1401 = vpop.f32.mrb[0].mxu0
        %v1402 = vadd.f32 0.0, %v1401
        %v1403 = vpop.f32.mrb[0].mxu0
        %1404 = vmatprep.mubr.bf16.mxu0 0
        %1405 = vmatmul.mubr.bf16.gmra.mrb[0].mxu0 %v1080
        %v1406 = vpop.f32.mrb[0].mxu0
        %v1407 = vadd.f32 0.0, %v1406
        %v1408 = vpop.f32.mrb[0].mxu0
        %v1409 = vpop.f32.mrb[0].mxu0
        %v1410 = vadd.f32 0.0, %v1409
        %v1411 = vpop.f32.mrb[0].mxu0
        %1412 = vmatprep.mubr.bf16.mxu0 0
        %1413 = vmatmul.mubr.bf16.gmra.mrb[0].mxu0 %v1083
        %v1414 = vpop.f32.mrb[0].mxu0
        %v1415 = vadd.f32 0.0, %v1414
        %v1416 = vpop.f32.mrb[0].mxu0
        %v1417 = vpop.f32.mrb[0].mxu0
        %v1418 = vadd.f32 0.0, %v1417
        %v1419 = vpop.f32.mrb[0].mxu0
        %1420 = vmatprep.mubr.bf16.mxu0 0
        %1421 = vmatmul.mubr.bf16.gmra.mrb[0].mxu0 %v1086
        %v1422 = vpop.f32.mrb[0].mxu0
        %v1423 = vadd.f32 0.0, %v1422
        %v1424 = vpop.f32.mrb[0].mxu0
        %v1425 = vpop.f32.mrb[0].mxu0
        %v1426 = vadd.f32 0.0, %v1425
        %v1427 = vpop.f32.mrb[0].mxu0
        %1428 = vmatprep.mubr.bf16.mxu0 0
        %1429 = vmatmul.mubr.bf16.gmra.mrb[0].mxu0 %v1089
        %v1430 = vpop.f32.mrb[0].mxu0
        %v1431 = vadd.f32 0.0, %v1430
        %v1432 = vpop.f32.mrb[0].mxu0
        %v1433 = vpop.f32.mrb[0].mxu0
        %v1434 = vadd.f32 0.0, %v1433
        %v1435 = vpop.f32.mrb[0].mxu0
        %1436 = vmatprep.mubr.bf16.mxu0 0
        %1437 = vmatmul.mubr.bf16.gmra.mrb[0].mxu0 %v1092
        %v1438 = vpop.f32.mrb[0].mxu0
        %v1439 = vadd.f32 0.0, %v1438
        %v1440 = vpop.f32.mrb[0].mxu0
        %v1441 = vpop.f32.mrb[0].mxu0
        %v1442 = vadd.f32 0.0, %v1441
        %v1443 = vpop.f32.mrb[0].mxu0
        %1444 = vmatprep.mubr.bf16.mxu0 0
        %1445 = vmatmul.mubr.bf16.gmra.mrb[0].mxu0 %v1095
        %v1446 = vpop.f32.mrb[0].mxu0
        %v1447 = vadd.f32 0.0, %v1446
        %v1448 = vpop.f32.mrb[0].mxu0
        %v1449 = vpop.f32.mrb[0].mxu0
        %v1450 = vadd.f32 0.0, %v1449
        %v1451 = vpop.f32.mrb[0].mxu0
        %1452 = vmatprep.mubr.bf16.mxu0 0
        %1453 = vmatmul.mubr.bf16.gmra.mrb[0].mxu0 %v1098
        %v1454 = vpop.f32.mrb[0].mxu0
        %v1455 = vadd.f32 0.0, %v1454
        %v1456 = vpop.f32.mrb[0].mxu0
        %v1457 = vpop.f32.mrb[0].mxu0
        %v1458 = vadd.f32 0.0, %v1457
        %v1459 = vpop.f32.mrb[0].mxu0
        %1460 = vmatprep.mubr.bf16.mxu0 0
        %1461 = vmatmul.mubr.bf16.gmra.mrb[0].mxu0 %v1101
        %v1462 = vpop.f32.mrb[0].mxu0
        %v1463 = vadd.f32 0.0, %v1462
        %v1464 = vpop.f32.mrb[0].mxu0
        %v1465 = vpop.f32.mrb[0].mxu0
        %v1466 = vadd.f32 0.0, %v1465
        %v1467 = vpop.f32.mrb[0].mxu0
        %1468 = vmatprep.mubr.bf16.mxu0 0
        %1469 = vmatmul.mubr.bf16.gmra.mrb[0].mxu0 %v1104
        %v1470 = vpop.f32.mrb[0].mxu0
        %v1471 = vadd.f32 0.0, %v1470
        %v1472 = vpop.f32.mrb[0].mxu0
        %v1473 = vpop.f32.mrb[0].mxu0
        %v1474 = vadd.f32 0.0, %v1473
        %v1475 = vpop.f32.mrb[0].mxu0
        %1476 = vmatprep.mubr.bf16.mxu0 0
        %1477 = vmatmul.mubr.bf16.gmra.mrb[0].mxu0 %v1107
        %v1478 = vpop.f32.mrb[0].mxu0
        %v1479 = vadd.f32 0.0, %v1478
        %v1480 = vpop.f32.mrb[0].mxu0
        %v1481 = vpop.f32.mrb[0].mxu0
        %v1482 = vadd.f32 0.0, %v1481
        %v1483 = vpop.f32.mrb[0].mxu0
        %1484 = vmatprep.mubr.bf16.mxu0 0
        %1485 = vmatmul.mubr.bf16.gmra.mrb[0].mxu0 %v1110
        %v1486 = vpop.f32.mrb[0].mxu0
        %v1487 = vadd.f32 0.0, %v1486
        %v1488 = vpop.f32.mrb[0].mxu0
        %v1489 = vpop.f32.mrb[0].mxu0
        %v1490 = vadd.f32 0.0, %v1489
        %v1491 = vpop.f32.mrb[0].mxu0
        %1492 = vmatprep.mubr.bf16.mxu0 0
        %1493 = vmatmul.mubr.bf16.gmra.mrb[0].mxu0 %v1113
        %v1494 = vpop.f32.mrb[0].mxu0
        %v1495 = vadd.f32 0.0, %v1494
        %v1496 = vpop.f32.mrb[0].mxu0
        %v1497 = vpop.f32.mrb[0].mxu0
        %v1498 = vadd.f32 0.0, %v1497
        %v1499 = vpop.f32.mrb[0].mxu0
        %1500 = vmatprep.mubr.bf16.mxu0 0
        %1501 = vmatmul.mubr.bf16.gmra.mrb[0].mxu0 %v1116
        %v1502 = vpop.f32.mrb[0].mxu0
        %v1503 = vadd.f32 0.0, %v1502
        %v1504 = vpop.f32.mrb[0].mxu0
        %v1505 = vpop.f32.mrb[0].mxu0
        %v1506 = vadd.f32 0.0, %v1505
        %v1507 = vpop.f32.mrb[0].mxu0
        %1508 = vmatprep.mubr.bf16.mxu0 0
        %1509 = vmatmul.mubr.bf16.gmra.mrb[0].mxu0 %v1119
        %v1510 = vpop.f32.mrb[0].mxu0
        %v1511 = vadd.f32 0.0, %v1510
        %v1512 = vpop.f32.mrb[0].mxu0
        %v1513 = vpop.f32.mrb[0].mxu0
        %v1514 = vadd.f32 0.0, %v1513
        %v1515 = vpop.f32.mrb[0].mxu0
        %1516 = vmatprep.mubr.bf16.mxu0 0
        %1517 = vmatmul.mubr.bf16.gmra.mrb[0].mxu0 %v1122
        %v1518 = vpop.f32.mrb[0].mxu0
        %v1519 = vadd.f32 0.0, %v1518
        %v1520 = vpop.f32.mrb[0].mxu0
        %v1521 = vpop.f32.mrb[0].mxu0
        %v1522 = vadd.f32 0.0, %v1521
        %v1523 = vpop.f32.mrb[0].mxu0
        %1524 = vmatprep.mubr.bf16.mxu0 0
        %1525 = vmatmul.mubr.bf16.gmra.mrb[0].mxu0 %v1356
        %v1526 = vpop.f32.mrb[0].mxu0
        %v1527 = vadd.f32 0.0, %v1526
        %v1528 = vpop.f32.mrb[0].mxu0
        %v1529 = vpop.f32.mrb[0].mxu0
        %v1530 = vadd.f32 0.0, %v1529
        %v1531 = vpop.f32.mrb[0].mxu0
        %1532 = vmatprep.mubr.bf16.mxu0 0
        %1533 = vmatmul.mubr.bf16.gmra.mrb[0].mxu0 %v1359
        %v1534 = vpop.f32.mrb[0].mxu0
        %v1535 = vadd.f32 0.0, %v1534
        %v1536 = vpop.f32.mrb[0].mxu0
        %v1537 = vpop.f32.mrb[0].mxu0
        %v1538 = vadd.f32 0.0, %v1537
        %v1539 = vpop.f32.mrb[0].mxu0
        %1540 = vdwg.mxu0
        %v1541 = vadd.f32 %v1307, %v1399
        %v1542 = vadd.f32 %v1308, %v1402
        %v1543 = vadd.f32 %v1309, %v1407
        %v1544 = vadd.f32 %v1310, %v1410
        %v1545 = vadd.f32 %v1311, %v1415
        %v1546 = vadd.f32 %v1312, %v1418
        %v1547 = vadd.f32 %v1313, %v1423
        %v1548 = vadd.f32 %v1314, %v1426
        %v1549 = vadd.f32 %v1315, %v1431
        %v1550 = vadd.f32 %v1316, %v1434
        %v1551 = vadd.f32 %v1317, %v1439
        %v1552 = vadd.f32 %v1318, %v1442
        %v1553 = vadd.f32 %v1319, %v1447
        %v1554 = vadd.f32 %v1320, %v1450
        %v1555 = vadd.f32 %v1321, %v1455
        %v1556 = vadd.f32 %v1322, %v1458
        %v1557 = vadd.f32 %v1323, %v1463
        %v1558 = vadd.f32 %v1324, %v1466
        %v1559 = vadd.f32 %v1325, %v1471
        %v1560 = vadd.f32 %v1326, %v1474
        %v1561 = vadd.f32 %v1327, %v1479
        %v1562 = vadd.f32 %v1328, %v1482
        %v1563 = vadd.f32 %v1329, %v1487
        %v1564 = vadd.f32 %v1330, %v1490
        %v1565 = vadd.f32 %v1331, %v1495
        %v1566 = vadd.f32 %v1332, %v1498
        %v1567 = vadd.f32 %v1333, %v1503
        %v1568 = vadd.f32 %v1334, %v1506
        %v1569 = vadd.f32 %v1335, %v1511
        %v1570 = vadd.f32 %v1336, %v1514
        %v1571 = vadd.f32 %v1337, %v1519
        %v1572 = vadd.f32 %v1338, %v1522
        %v1573 = vadd.f32 %v1339, %v1527
        %v1574 = vadd.f32 %v1340, %v1530
        %v1575 = vadd.f32 %v1341, %v1535
        %v1576 = vadd.f32 %v1342, %v1538
        %s1577 = scalar_lea.vmem %s1, 16
        %v1578 = vld [vmem:[%s1577] sm:$0xf]
        %vm1579 = vsmask.f32 6400
        %v1580 = vrot.slane %v445, 1
        %v1581 = vrot.slane %v441, 2
        %v1582 = vor.u32 %v1580, %v1581
        %v1583 = vrot.slane %v453, 1
        %v1584 = vrot.slane %v449, 2
        %v1585 = vor.u32 %v1583, %v1584
        %v1586 = vsel %vm1579, %v1582, %v1585
        %v1587 = vrot.slane %v461, 1
        %v1588 = vrot.slane %v457, 2
        %v1589 = vor.u32 %v1587, %v1588
        %v1590 = vsel %vm1579, %v1585, %v1589
        %v1591 = vrot.slane %v469, 1
        %v1592 = vrot.slane %v465, 2
        %v1593 = vor.u32 %v1591, %v1592
        %v1594 = vsel %vm1579, %v1589, %v1593
        %v1595 = vrot.slane %v477, 1
        %v1596 = vrot.slane %v473, 2
        %v1597 = vor.u32 %v1595, %v1596
        %v1598 = vsel %vm1579, %v1593, %v1597
        %v1599 = vrot.slane %v485, 1
        %v1600 = vrot.slane %v481, 2
        %v1601 = vor.u32 %v1599, %v1600
        %v1602 = vsel %vm1579, %v1597, %v1601
        %v1603 = vrot.slane %v493, 1
        %v1604 = vrot.slane %v489, 2
        %v1605 = vor.u32 %v1603, %v1604
        %v1606 = vsel %vm1579, %v1601, %v1605
        %v1607 = vrot.slane %v501, 1
        %v1608 = vrot.slane %v497, 2
        %v1609 = vor.u32 %v1607, %v1608
        %v1610 = vsel %vm1579, %v1605, %v1609
        %v1611 = vrot.slane %v509, 1
        %v1612 = vrot.slane %v505, 2
        %v1613 = vor.u32 %v1611, %v1612
        %v1614 = vsel %vm1579, %v1609, %v1613
        %v1615 = vrot.slane %v517, 1
        %v1616 = vrot.slane %v513, 2
        %v1617 = vor.u32 %v1615, %v1616
        %v1618 = vsel %vm1579, %v1613, %v1617
        %v1619 = vrot.slane %v525, 1
        %v1620 = vrot.slane %v521, 2
        %v1621 = vor.u32 %v1619, %v1620
        %v1622 = vsel %vm1579, %v1617, %v1621
        %v1623 = vrot.slane %v533, 1
        %v1624 = vrot.slane %v529, 2
        %v1625 = vor.u32 %v1623, %v1624
        %v1626 = vsel %vm1579, %v1621, %v1625
        %v1627 = vrot.slane %v541, 1
        %v1628 = vrot.slane %v537, 2
        %v1629 = vor.u32 %v1627, %v1628
        %v1630 = vsel %vm1579, %v1625, %v1629
        %v1631 = vrot.slane %v549, 1
        %v1632 = vrot.slane %v545, 2
        %v1633 = vor.u32 %v1631, %v1632
        %v1634 = vsel %vm1579, %v1629, %v1633
        %v1635 = vrot.slane %v557, 1
        %v1636 = vrot.slane %v553, 2
        %v1637 = vor.u32 %v1635, %v1636
        %v1638 = vsel %vm1579, %v1633, %v1637
        %v1639 = vrot.slane %v565, 1
        %v1640 = vrot.slane %v561, 2
        %v1641 = vor.u32 %v1639, %v1640
        %v1642 = vsel %vm1579, %v1637, %v1641
        %v1643 = vrot.slane %v573, 1
        %v1644 = vrot.slane %v569, 2
        %v1645 = vor.u32 %v1643, %v1644
        %v1646 = vsel %vm1579, %v1641, %v1645
        %v1648 = vshrl.u32 %v1349, 16
        %v1650 = vrot.slane %v1648, 1
        %v1651 = vshll.u32 %v1349, 16
        %v1653 = vrot.slane %v1651, 2
        %v1654 = vor.u32 %v1650, %v1653
        %v1655 = vsel %vm1579, %v1645, %v1654
        %v1657 = vshrl.u32 %v1350, 16
        %v1659 = vrot.slane %v1657, 1
        %v1660 = vshll.u32 %v1350, 16
        %v1662 = vrot.slane %v1660, 2
        %v1663 = vor.u32 %v1659, %v1662
        %v1664 = vsel %vm1579, %v1654, %v1663
        %v1666 = vsel %vm581, %v1586, 0
        %v1669 = vsel %vm581, %v1590, 0
        %v1672 = vsel %vm581, %v1594, 0
        %v1675 = vsel %vm581, %v1598, 0
        %v1678 = vsel %vm581, %v1602, 0
        %v1681 = vsel %vm581, %v1606, 0
        %v1684 = vsel %vm581, %v1610, 0
        %v1687 = vsel %vm581, %v1614, 0
        %v1690 = vsel %vm581, %v1618, 0
        %v1693 = vsel %vm581, %v1622, 0
        %v1696 = vsel %vm581, %v1626, 0
        %v1699 = vsel %vm581, %v1630, 0
        %v1702 = vsel %vm581, %v1634, 0
        %v1705 = vsel %vm581, %v1638, 0
        %v1708 = vsel %vm581, %v1642, 0
        %v1711 = vsel %vm581, %v1646, 0
        %v1714 = vsel %vm581, %v1655, 0
        %v1717 = vsel %vm581, %v1664, 0
        %v1720 = vsel %vm636, %v1578, 0
        %1722 = vmatprep.subr.bf16.mxu0 0
        %1723 = vmatpush1.bf16.msra.mxu0 %v1720
        %1724 = vmatprep.subr.bf16.mxu0 0
        %1725 = vmatpush1.bf16.msra.mxu0 0
        %1726 = vmatprep.subr.bf16.mxu0 0
        %1727 = vmatpush1.bf16.msra.mxu0 0
        %1728 = vmatprep.subr.bf16.mxu0 0
        %1729 = vmatpush1.bf16.msra.mxu0 0
        %1730 = vmatprep.subr.bf16.mxu0 0
        %1731 = vmatpush1.bf16.msra.mxu0 0
        %1732 = vmatprep.subr.bf16.mxu0 0
        %1733 = vmatpush1.bf16.msra.mxu0 0
        %1734 = vmatprep.subr.bf16.mxu0 0
        %1735 = vmatpush1.bf16.msra.mxu0 0
        %1736 = vmatprep.subr.bf16.mxu0 0
        %1737 = vmatpush1.bf16.msra.mxu0 0
        %1738 = vmatprep.subr.bf16.mxu0 0
        %1739 = vmatpush1.bf16.msra.mxu0 0
        %1740 = vmatprep.subr.bf16.mxu0 0
        %1741 = vmatpush1.bf16.msra.mxu0 0
        %1742 = vmatprep.subr.bf16.mxu0 0
        %1743 = vmatpush1.bf16.msra.mxu0 0
        %1744 = vmatprep.subr.bf16.mxu0 0
        %1745 = vmatpush1.bf16.msra.mxu0 0
        %1746 = vmatprep.subr.bf16.mxu0 0
        %1747 = vmatpush1.bf16.msra.mxu0 0
        %1748 = vmatprep.subr.bf16.mxu0 0
        %1749 = vmatpush1.bf16.msra.mxu0 0
        %1750 = vmatprep.subr.bf16.mxu0 0
        %1751 = vmatpush1.bf16.msra.mxu0 0
        %1752 = vmatprep.subr.bf16.mxu0 0
        %1753 = vmatpush1.bf16.msra.mxu0 0
        %1754 = vmatprep.mubr.bf16.mxu0 0
        %1755 = vmatmul.mubr.bf16.gmra.mrb[0].mxu0 %v1666
        %v1756 = vpop.f32.mrb[0].mxu0
        %v1757 = vadd.f32 0.0, %v1756
        %v1758 = vpop.f32.mrb[0].mxu0
        %v1759 = vpop.f32.mrb[0].mxu0
        %v1760 = vadd.f32 0.0, %v1759
        %v1761 = vpop.f32.mrb[0].mxu0
        %1762 = vmatprep.mubr.bf16.mxu0 0
        %1763 = vmatmul.mubr.bf16.gmra.mrb[0].mxu0 %v1669
        %v1764 = vpop.f32.mrb[0].mxu0
        %v1765 = vadd.f32 0.0, %v1764
        %v1766 = vpop.f32.mrb[0].mxu0
        %v1767 = vpop.f32.mrb[0].mxu0
        %v1768 = vadd.f32 0.0, %v1767
        %v1769 = vpop.f32.mrb[0].mxu0
        %1770 = vmatprep.mubr.bf16.mxu0 0
        %1771 = vmatmul.mubr.bf16.gmra.mrb[0].mxu0 %v1672
        %v1772 = vpop.f32.mrb[0].mxu0
        %v1773 = vadd.f32 0.0, %v1772
        %v1774 = vpop.f32.mrb[0].mxu0
        %v1775 = vpop.f32.mrb[0].mxu0
        %v1776 = vadd.f32 0.0, %v1775
        %v1777 = vpop.f32.mrb[0].mxu0
        %1778 = vmatprep.mubr.bf16.mxu0 0
        %1779 = vmatmul.mubr.bf16.gmra.mrb[0].mxu0 %v1675
        %v1780 = vpop.f32.mrb[0].mxu0
        %v1781 = vadd.f32 0.0, %v1780
        %v1782 = vpop.f32.mrb[0].mxu0
        %v1783 = vpop.f32.mrb[0].mxu0
        %v1784 = vadd.f32 0.0, %v1783
        %v1785 = vpop.f32.mrb[0].mxu0
        %1786 = vmatprep.mubr.bf16.mxu0 0
        %1787 = vmatmul.mubr.bf16.gmra.mrb[0].mxu0 %v1678
        %v1788 = vpop.f32.mrb[0].mxu0
        %v1789 = vadd.f32 0.0, %v1788
        %v1790 = vpop.f32.mrb[0].mxu0
        %v1791 = vpop.f32.mrb[0].mxu0
        %v1792 = vadd.f32 0.0, %v1791
        %v1793 = vpop.f32.mrb[0].mxu0
        %1794 = vmatprep.mubr.bf16.mxu0 0
        %1795 = vmatmul.mubr.bf16.gmra.mrb[0].mxu0 %v1681
        %v1796 = vpop.f32.mrb[0].mxu0
        %v1797 = vadd.f32 0.0, %v1796
        %v1798 = vpop.f32.mrb[0].mxu0
        %v1799 = vpop.f32.mrb[0].mxu0
        %v1800 = vadd.f32 0.0, %v1799
        %v1801 = vpop.f32.mrb[0].mxu0
        %1802 = vmatprep.mubr.bf16.mxu0 0
        %1803 = vmatmul.mubr.bf16.gmra.mrb[0].mxu0 %v1684
        %v1804 = vpop.f32.mrb[0].mxu0
        %v1805 = vadd.f32 0.0, %v1804
        %v1806 = vpop.f32.mrb[0].mxu0
        %v1807 = vpop.f32.mrb[0].mxu0
        %v1808 = vadd.f32 0.0, %v1807
        %v1809 = vpop.f32.mrb[0].mxu0
        %1810 = vmatprep.mubr.bf16.mxu0 0
        %1811 = vmatmul.mubr.bf16.gmra.mrb[0].mxu0 %v1687
        %v1812 = vpop.f32.mrb[0].mxu0
        %v1813 = vadd.f32 0.0, %v1812
        %v1814 = vpop.f32.mrb[0].mxu0
        %v1815 = vpop.f32.mrb[0].mxu0
        %v1816 = vadd.f32 0.0, %v1815
        %v1817 = vpop.f32.mrb[0].mxu0
        %1818 = vmatprep.mubr.bf16.mxu0 0
        %1819 = vmatmul.mubr.bf16.gmra.mrb[0].mxu0 %v1690
        %v1820 = vpop.f32.mrb[0].mxu0
        %v1821 = vadd.f32 0.0, %v1820
        %v1822 = vpop.f32.mrb[0].mxu0
        %v1823 = vpop.f32.mrb[0].mxu0
        %v1824 = vadd.f32 0.0, %v1823
        %v1825 = vpop.f32.mrb[0].mxu0
        %1826 = vmatprep.mubr.bf16.mxu0 0
        %1827 = vmatmul.mubr.bf16.gmra.mrb[0].mxu0 %v1693
        %v1828 = vpop.f32.mrb[0].mxu0
        %v1829 = vadd.f32 0.0, %v1828
        %v1830 = vpop.f32.mrb[0].mxu0
        %v1831 = vpop.f32.mrb[0].mxu0
        %v1832 = vadd.f32 0.0, %v1831
        %v1833 = vpop.f32.mrb[0].mxu0
        %1834 = vmatprep.mubr.bf16.mxu0 0
        %1835 = vmatmul.mubr.bf16.gmra.mrb[0].mxu0 %v1696
        %v1836 = vpop.f32.mrb[0].mxu0
        %v1837 = vadd.f32 0.0, %v1836
        %v1838 = vpop.f32.mrb[0].mxu0
        %v1839 = vpop.f32.mrb[0].mxu0
        %v1840 = vadd.f32 0.0, %v1839
        %v1841 = vpop.f32.mrb[0].mxu0
        %1842 = vmatprep.mubr.bf16.mxu0 0
        %1843 = vmatmul.mubr.bf16.gmra.mrb[0].mxu0 %v1699
        %v1844 = vpop.f32.mrb[0].mxu0
        %v1845 = vadd.f32 0.0, %v1844
        %v1846 = vpop.f32.mrb[0].mxu0
        %v1847 = vpop.f32.mrb[0].mxu0
        %v1848 = vadd.f32 0.0, %v1847
        %v1849 = vpop.f32.mrb[0].mxu0
        %1850 = vmatprep.mubr.bf16.mxu0 0
        %1851 = vmatmul.mubr.bf16.gmra.mrb[0].mxu0 %v1702
        %v1852 = vpop.f32.mrb[0].mxu0
        %v1853 = vadd.f32 0.0, %v1852
        %v1854 = vpop.f32.mrb[0].mxu0
        %v1855 = vpop.f32.mrb[0].mxu0
        %v1856 = vadd.f32 0.0, %v1855
        %v1857 = vpop.f32.mrb[0].mxu0
        %1858 = vmatprep.mubr.bf16.mxu0 0
        %1859 = vmatmul.mubr.bf16.gmra.mrb[0].mxu0 %v1705
        %v1860 = vpop.f32.mrb[0].mxu0
        %v1861 = vadd.f32 0.0, %v1860
        %v1862 = vpop.f32.mrb[0].mxu0
        %v1863 = vpop.f32.mrb[0].mxu0
        %v1864 = vadd.f32 0.0, %v1863
        %v1865 = vpop.f32.mrb[0].mxu0
        %1866 = vmatprep.mubr.bf16.mxu0 0
        %1867 = vmatmul.mubr.bf16.gmra.mrb[0].mxu0 %v1708
        %v1868 = vpop.f32.mrb[0].mxu0
        %v1869 = vadd.f32 0.0, %v1868
        %v1870 = vpop.f32.mrb[0].mxu0
        %v1871 = vpop.f32.mrb[0].mxu0
        %v1872 = vadd.f32 0.0, %v1871
        %v1873 = vpop.f32.mrb[0].mxu0
        %1874 = vmatprep.mubr.bf16.mxu0 0
        %1875 = vmatmul.mubr.bf16.gmra.mrb[0].mxu0 %v1711
        %v1876 = vpop.f32.mrb[0].mxu0
        %v1877 = vadd.f32 0.0, %v1876
        %v1878 = vpop.f32.mrb[0].mxu0
        %v1879 = vpop.f32.mrb[0].mxu0
        %v1880 = vadd.f32 0.0, %v1879
        %v1881 = vpop.f32.mrb[0].mxu0
        %1882 = vmatprep.mubr.bf16.mxu0 0
        %1883 = vmatmul.mubr.bf16.gmra.mrb[0].mxu0 %v1714
        %v1884 = vpop.f32.mrb[0].mxu0
        %v1885 = vadd.f32 0.0, %v1884
        %v1886 = vpop.f32.mrb[0].mxu0
        %v1887 = vpop.f32.mrb[0].mxu0
        %v1888 = vadd.f32 0.0, %v1887
        %v1889 = vpop.f32.mrb[0].mxu0
        %1890 = vmatprep.mubr.bf16.mxu0 0
        %1891 = vmatmul.mubr.bf16.gmra.mrb[0].mxu0 %v1717
        %v1892 = vpop.f32.mrb[0].mxu0
        %v1893 = vadd.f32 0.0, %v1892
        %v1894 = vpop.f32.mrb[0].mxu0
        %v1895 = vpop.f32.mrb[0].mxu0
        %v1896 = vadd.f32 0.0, %v1895
        %v1897 = vpop.f32.mrb[0].mxu0
        %1898 = vdwg.mxu0
        %v1899 = vadd.f32 %v1541, %v1757
        %v1900 = vadd.f32 %v1542, %v1760
        %v1901 = vadd.f32 %v1543, %v1765
        %v1902 = vadd.f32 %v1544, %v1768
        %v1903 = vadd.f32 %v1545, %v1773
        %v1904 = vadd.f32 %v1546, %v1776
        %v1905 = vadd.f32 %v1547, %v1781
        %v1906 = vadd.f32 %v1548, %v1784
        %v1907 = vadd.f32 %v1549, %v1789
        %v1908 = vadd.f32 %v1550, %v1792
        %v1909 = vadd.f32 %v1551, %v1797
        %v1910 = vadd.f32 %v1552, %v1800
        %v1911 = vadd.f32 %v1553, %v1805
        %v1912 = vadd.f32 %v1554, %v1808
        %v1913 = vadd.f32 %v1555, %v1813
        %v1914 = vadd.f32 %v1556, %v1816
        %v1915 = vadd.f32 %v1557, %v1821
        %v1916 = vadd.f32 %v1558, %v1824
        %v1917 = vadd.f32 %v1559, %v1829
        %v1918 = vadd.f32 %v1560, %v1832
        %v1919 = vadd.f32 %v1561, %v1837
        %v1920 = vadd.f32 %v1562, %v1840
        %v1921 = vadd.f32 %v1563, %v1845
        %v1922 = vadd.f32 %v1564, %v1848
        %v1923 = vadd.f32 %v1565, %v1853
        %v1924 = vadd.f32 %v1566, %v1856
        %v1925 = vadd.f32 %v1567, %v1861
        %v1926 = vadd.f32 %v1568, %v1864
        %v1927 = vadd.f32 %v1569, %v1869
        %v1928 = vadd.f32 %v1570, %v1872
        %v1929 = vadd.f32 %v1571, %v1877
        %v1930 = vadd.f32 %v1572, %v1880
        %v1931 = vadd.f32 %v1573, %v1885
        %v1932 = vadd.f32 %v1574, %v1888
        %v1933 = vadd.f32 %v1575, %v1893
        %v1934 = vadd.f32 %v1576, %v1896
        %s1935 = scalar_lea.vmem %s1, 20
        %v1936 = vld [vmem:[%s1935] sm:$0xf]
        %vm1937 = vcmask 1045504
        %v1938 = vrot.slane %v414, 2
        %v1939 = vrot.slane %v415, 2
        %v1940 = vsel %vm1937, %v1938, %v1939
        %v1941 = vrot.slane %v416, 2
        %v1942 = vsel %vm1937, %v1939, %v1941
        %v1943 = vrot.slane %v417, 2
        %v1944 = vsel %vm1937, %v1941, %v1943
        %v1945 = vrot.slane %v418, 2
        %v1946 = vsel %vm1937, %v1943, %v1945
        %v1947 = vrot.slane %v419, 2
        %v1948 = vsel %vm1937, %v1945, %v1947
        %v1949 = vrot.slane %v420, 2
        %v1950 = vsel %vm1937, %v1947, %v1949
        %v1951 = vrot.slane %v421, 2
        %v1952 = vsel %vm1937, %v1949, %v1951
        %v1953 = vrot.slane %v422, 2
        %v1954 = vsel %vm1937, %v1951, %v1953
        %v1955 = vrot.slane %v423, 2
        %v1956 = vsel %vm1937, %v1953, %v1955
        %v1957 = vrot.slane %v424, 2
        %v1958 = vsel %vm1937, %v1955, %v1957
        %v1959 = vrot.slane %v425, 2
        %v1960 = vsel %vm1937, %v1957, %v1959
        %v1961 = vrot.slane %v426, 2
        %v1962 = vsel %vm1937, %v1959, %v1961
        %v1963 = vrot.slane %v427, 2
        %v1964 = vsel %vm1937, %v1961, %v1963
        %v1965 = vrot.slane %v428, 2
        %v1966 = vsel %vm1937, %v1963, %v1965
        %v1967 = vrot.slane %v429, 2
        %v1968 = vsel %vm1937, %v1965, %v1967
        %v1969 = vrot.slane %v430, 2
        %v1970 = vsel %vm1937, %v1967, %v1969
        %v1971 = vrot.slane %v1349, 2
        %v1972 = vsel %vm1937, %v1969, %v1971
        %v1973 = vrot.slane %v1350, 2
        %v1974 = vsel %vm1937, %v1971, %v1973
        %v1976 = vsel %vm581, %v1940, 0
        %v1979 = vsel %vm581, %v1942, 0
        %v1982 = vsel %vm581, %v1944, 0
        %v1985 = vsel %vm581, %v1946, 0
        %v1988 = vsel %vm581, %v1948, 0
        %v1991 = vsel %vm581, %v1950, 0
        %v1994 = vsel %vm581, %v1952, 0
        %v1997 = vsel %vm581, %v1954, 0
        %v2000 = vsel %vm581, %v1956, 0
        %v2003 = vsel %vm581, %v1958, 0
        %v2006 = vsel %vm581, %v1960, 0
        %v2009 = vsel %vm581, %v1962, 0
        %v2012 = vsel %vm581, %v1964, 0
        %v2015 = vsel %vm581, %v1966, 0
        %v2018 = vsel %vm581, %v1968, 0
        %v2021 = vsel %vm581, %v1970, 0
        %v2024 = vsel %vm581, %v1972, 0
        %v2027 = vsel %vm581, %v1974, 0
        %v2030 = vsel %vm636, %v1936, 0
        %2032 = vmatprep.subr.bf16.mxu0 0
        %2033 = vmatpush1.bf16.msra.mxu0 %v2030
        %2034 = vmatprep.subr.bf16.mxu0 0
        %2035 = vmatpush1.bf16.msra.mxu0 0
        %2036 = vmatprep.subr.bf16.mxu0 0
        %2037 = vmatpush1.bf16.msra.mxu0 0
        %2038 = vmatprep.subr.bf16.mxu0 0
        %2039 = vmatpush1.bf16.msra.mxu0 0
        %2040 = vmatprep.subr.bf16.mxu0 0
        %2041 = vmatpush1.bf16.msra.mxu0 0
        %2042 = vmatprep.subr.bf16.mxu0 0
        %2043 = vmatpush1.bf16.msra.mxu0 0
        %2044 = vmatprep.subr.bf16.mxu0 0
        %2045 = vmatpush1.bf16.msra.mxu0 0
        %2046 = vmatprep.subr.bf16.mxu0 0
        %2047 = vmatpush1.bf16.msra.mxu0 0
        %2048 = vmatprep.subr.bf16.mxu0 0
        %2049 = vmatpush1.bf16.msra.mxu0 0
        %2050 = vmatprep.subr.bf16.mxu0 0
        %2051 = vmatpush1.bf16.msra.mxu0 0
        %2052 = vmatprep.subr.bf16.mxu0 0
        %2053 = vmatpush1.bf16.msra.mxu0 0
        %2054 = vmatprep.subr.bf16.mxu0 0
        %2055 = vmatpush1.bf16.msra.mxu0 0
        %2056 = vmatprep.subr.bf16.mxu0 0
        %2057 = vmatpush1.bf16.msra.mxu0 0
        %2058 = vmatprep.subr.bf16.mxu0 0
        %2059 = vmatpush1.bf16.msra.mxu0 0
        %2060 = vmatprep.subr.bf16.mxu0 0
        %2061 = vmatpush1.bf16.msra.mxu0 0
        %2062 = vmatprep.subr.bf16.mxu0 0
        %2063 = vmatpush1.bf16.msra.mxu0 0
        %2064 = vmatprep.mubr.bf16.mxu0 0
        %2065 = vmatmul.mubr.bf16.gmra.mrb[0].mxu0 %v1976
        %v2066 = vpop.f32.mrb[0].mxu0
        %v2067 = vadd.f32 0.0, %v2066
        %v2068 = vpop.f32.mrb[0].mxu0
        %v2069 = vpop.f32.mrb[0].mxu0
        %v2070 = vadd.f32 0.0, %v2069
        %v2071 = vpop.f32.mrb[0].mxu0
        %2072 = vmatprep.mubr.bf16.mxu0 0
        %2073 = vmatmul.mubr.bf16.gmra.mrb[0].mxu0 %v1979
        %v2074 = vpop.f32.mrb[0].mxu0
        %v2075 = vadd.f32 0.0, %v2074
        %v2076 = vpop.f32.mrb[0].mxu0
        %v2077 = vpop.f32.mrb[0].mxu0
        %v2078 = vadd.f32 0.0, %v2077
        %v2079 = vpop.f32.mrb[0].mxu0
        %2080 = vmatprep.mubr.bf16.mxu0 0
        %2081 = vmatmul.mubr.bf16.gmra.mrb[0].mxu0 %v1982
        %v2082 = vpop.f32.mrb[0].mxu0
        %v2083 = vadd.f32 0.0, %v2082
        %v2084 = vpop.f32.mrb[0].mxu0
        %v2085 = vpop.f32.mrb[0].mxu0
        %v2086 = vadd.f32 0.0, %v2085
        %v2087 = vpop.f32.mrb[0].mxu0
        %2088 = vmatprep.mubr.bf16.mxu0 0
        %2089 = vmatmul.mubr.bf16.gmra.mrb[0].mxu0 %v1985
        %v2090 = vpop.f32.mrb[0].mxu0
        %v2091 = vadd.f32 0.0, %v2090
        %v2092 = vpop.f32.mrb[0].mxu0
        %v2093 = vpop.f32.mrb[0].mxu0
        %v2094 = vadd.f32 0.0, %v2093
        %v2095 = vpop.f32.mrb[0].mxu0
        %2096 = vmatprep.mubr.bf16.mxu0 0
        %2097 = vmatmul.mubr.bf16.gmra.mrb[0].mxu0 %v1988
        %v2098 = vpop.f32.mrb[0].mxu0
        %v2099 = vadd.f32 0.0, %v2098
        %v2100 = vpop.f32.mrb[0].mxu0
        %v2101 = vpop.f32.mrb[0].mxu0
        %v2102 = vadd.f32 0.0, %v2101
        %v2103 = vpop.f32.mrb[0].mxu0
        %2104 = vmatprep.mubr.bf16.mxu0 0
        %2105 = vmatmul.mubr.bf16.gmra.mrb[0].mxu0 %v1991
        %v2106 = vpop.f32.mrb[0].mxu0
        %v2107 = vadd.f32 0.0, %v2106
        %v2108 = vpop.f32.mrb[0].mxu0
        %v2109 = vpop.f32.mrb[0].mxu0
        %v2110 = vadd.f32 0.0, %v2109
        %v2111 = vpop.f32.mrb[0].mxu0
        %2112 = vmatprep.mubr.bf16.mxu0 0
        %2113 = vmatmul.mubr.bf16.gmra.mrb[0].mxu0 %v1994
        %v2114 = vpop.f32.mrb[0].mxu0
        %v2115 = vadd.f32 0.0, %v2114
        %v2116 = vpop.f32.mrb[0].mxu0
        %v2117 = vpop.f32.mrb[0].mxu0
        %v2118 = vadd.f32 0.0, %v2117
        %v2119 = vpop.f32.mrb[0].mxu0
        %2120 = vmatprep.mubr.bf16.mxu0 0
        %2121 = vmatmul.mubr.bf16.gmra.mrb[0].mxu0 %v1997
        %v2122 = vpop.f32.mrb[0].mxu0
        %v2123 = vadd.f32 0.0, %v2122
        %v2124 = vpop.f32.mrb[0].mxu0
        %v2125 = vpop.f32.mrb[0].mxu0
        %v2126 = vadd.f32 0.0, %v2125
        %v2127 = vpop.f32.mrb[0].mxu0
        %2128 = vmatprep.mubr.bf16.mxu0 0
        %2129 = vmatmul.mubr.bf16.gmra.mrb[0].mxu0 %v2000
        %v2130 = vpop.f32.mrb[0].mxu0
        %v2131 = vadd.f32 0.0, %v2130
        %v2132 = vpop.f32.mrb[0].mxu0
        %v2133 = vpop.f32.mrb[0].mxu0
        %v2134 = vadd.f32 0.0, %v2133
        %v2135 = vpop.f32.mrb[0].mxu0
        %2136 = vmatprep.mubr.bf16.mxu0 0
        %2137 = vmatmul.mubr.bf16.gmra.mrb[0].mxu0 %v2003
        %v2138 = vpop.f32.mrb[0].mxu0
        %v2139 = vadd.f32 0.0, %v2138
        %v2140 = vpop.f32.mrb[0].mxu0
        %v2141 = vpop.f32.mrb[0].mxu0
        %v2142 = vadd.f32 0.0, %v2141
        %v2143 = vpop.f32.mrb[0].mxu0
        %2144 = vmatprep.mubr.bf16.mxu0 0
        %2145 = vmatmul.mubr.bf16.gmra.mrb[0].mxu0 %v2006
        %v2146 = vpop.f32.mrb[0].mxu0
        %v2147 = vadd.f32 0.0, %v2146
        %v2148 = vpop.f32.mrb[0].mxu0
        %v2149 = vpop.f32.mrb[0].mxu0
        %v2150 = vadd.f32 0.0, %v2149
        %v2151 = vpop.f32.mrb[0].mxu0
        %2152 = vmatprep.mubr.bf16.mxu0 0
        %2153 = vmatmul.mubr.bf16.gmra.mrb[0].mxu0 %v2009
        %v2154 = vpop.f32.mrb[0].mxu0
        %v2155 = vadd.f32 0.0, %v2154
        %v2156 = vpop.f32.mrb[0].mxu0
        %v2157 = vpop.f32.mrb[0].mxu0
        %v2158 = vadd.f32 0.0, %v2157
        %v2159 = vpop.f32.mrb[0].mxu0
        %2160 = vmatprep.mubr.bf16.mxu0 0
        %2161 = vmatmul.mubr.bf16.gmra.mrb[0].mxu0 %v2012
        %v2162 = vpop.f32.mrb[0].mxu0
        %v2163 = vadd.f32 0.0, %v2162
        %v2164 = vpop.f32.mrb[0].mxu0
        %v2165 = vpop.f32.mrb[0].mxu0
        %v2166 = vadd.f32 0.0, %v2165
        %v2167 = vpop.f32.mrb[0].mxu0
        %2168 = vmatprep.mubr.bf16.mxu0 0
        %2169 = vmatmul.mubr.bf16.gmra.mrb[0].mxu0 %v2015
        %v2170 = vpop.f32.mrb[0].mxu0
        %v2171 = vadd.f32 0.0, %v2170
        %v2172 = vpop.f32.mrb[0].mxu0
        %v2173 = vpop.f32.mrb[0].mxu0
        %v2174 = vadd.f32 0.0, %v2173
        %v2175 = vpop.f32.mrb[0].mxu0
        %2176 = vmatprep.mubr.bf16.mxu0 0
        %2177 = vmatmul.mubr.bf16.gmra.mrb[0].mxu0 %v2018
        %v2178 = vpop.f32.mrb[0].mxu0
        %v2179 = vadd.f32 0.0, %v2178
        %v2180 = vpop.f32.mrb[0].mxu0
        %v2181 = vpop.f32.mrb[0].mxu0
        %v2182 = vadd.f32 0.0, %v2181
        %v2183 = vpop.f32.mrb[0].mxu0
        %2184 = vmatprep.mubr.bf16.mxu0 0
        %2185 = vmatmul.mubr.bf16.gmra.mrb[0].mxu0 %v2021
        %v2186 = vpop.f32.mrb[0].mxu0
        %v2187 = vadd.f32 0.0, %v2186
        %v2188 = vpop.f32.mrb[0].mxu0
        %v2189 = vpop.f32.mrb[0].mxu0
        %v2190 = vadd.f32 0.0, %v2189
        %v2191 = vpop.f32.mrb[0].mxu0
        %2192 = vmatprep.mubr.bf16.mxu0 0
        %2193 = vmatmul.mubr.bf16.gmra.mrb[0].mxu0 %v2024
        %v2194 = vpop.f32.mrb[0].mxu0
        %v2195 = vadd.f32 0.0, %v2194
        %v2196 = vpop.f32.mrb[0].mxu0
        %v2197 = vpop.f32.mrb[0].mxu0
        %v2198 = vadd.f32 0.0, %v2197
        %v2199 = vpop.f32.mrb[0].mxu0
        %2200 = vmatprep.mubr.bf16.mxu0 0
        %2201 = vmatmul.mubr.bf16.gmra.mrb[0].mxu0 %v2027
        %v2202 = vpop.f32.mrb[0].mxu0
        %v2203 = vadd.f32 0.0, %v2202
        %v2204 = vpop.f32.mrb[0].mxu0
        %v2205 = vpop.f32.mrb[0].mxu0
        %v2206 = vadd.f32 0.0, %v2205
        %v2207 = vpop.f32.mrb[0].mxu0
        %2208 = vdwg.mxu0
        %v2209 = vadd.f32 %v1899, %v2067
        %v2210 = vadd.f32 %v1900, %v2070
        %v2211 = vadd.f32 %v1901, %v2075
        %v2212 = vadd.f32 %v1902, %v2078
        %v2213 = vadd.f32 %v1903, %v2083
        %v2214 = vadd.f32 %v1904, %v2086
        %v2215 = vadd.f32 %v1905, %v2091
        %v2216 = vadd.f32 %v1906, %v2094
        %v2217 = vadd.f32 %v1907, %v2099
        %v2218 = vadd.f32 %v1908, %v2102
        %v2219 = vadd.f32 %v1909, %v2107
        %v2220 = vadd.f32 %v1910, %v2110
        %v2221 = vadd.f32 %v1911, %v2115
        %v2222 = vadd.f32 %v1912, %v2118
        %v2223 = vadd.f32 %v1913, %v2123
        %v2224 = vadd.f32 %v1914, %v2126
        %v2225 = vadd.f32 %v1915, %v2131
        %v2226 = vadd.f32 %v1916, %v2134
        %v2227 = vadd.f32 %v1917, %v2139
        %v2228 = vadd.f32 %v1918, %v2142
        %v2229 = vadd.f32 %v1919, %v2147
        %v2230 = vadd.f32 %v1920, %v2150
        %v2231 = vadd.f32 %v1921, %v2155
        %v2232 = vadd.f32 %v1922, %v2158
        %v2233 = vadd.f32 %v1923, %v2163
        %v2234 = vadd.f32 %v1924, %v2166
        %v2235 = vadd.f32 %v1925, %v2171
        %v2236 = vadd.f32 %v1926, %v2174
        %v2237 = vadd.f32 %v1927, %v2179
        %v2238 = vadd.f32 %v1928, %v2182
        %v2239 = vadd.f32 %v1929, %v2187
        %v2240 = vadd.f32 %v1930, %v2190
        %v2241 = vadd.f32 %v1931, %v2195
        %v2242 = vadd.f32 %v1932, %v2198
        %v2243 = vadd.f32 %v1933, %v2203
        %v2244 = vadd.f32 %v1934, %v2206
        %s2245 = scalar_lea.vmem %s1, 24
        %v2246 = vld [vmem:[%s2245] sm:$0xf]
        %v2249 = vunpack.c.l.b16 %v295
        %v2250 = vunpack.c.l.b16 %v296
        %v2251 = vpack.c.b16 %v2249, %v1348
        %v2252 = vpack.c.b16 %v2250, %v2250
        %v2253 = vrot.slane %v2251, 2
        %v2254 = vsel %vm1937, %v1971, %v2253
        %v2255 = vrot.slane %v2252, 2
        %v2256 = vsel %vm1937, %v2253, %v2255
        %v2258 = vsel %vm581, %v2254, 0
        %v2261 = vsel %vm581, %v2256, 0
        %v2264 = vsel %vm636, %v2246, 0
        %2266 = vmatprep.subr.bf16.mxu0 0
        %2267 = vmatpush1.bf16.msra.mxu0 %v2264
        %2268 = vmatprep.subr.bf16.mxu0 0
        %2269 = vmatpush1.bf16.msra.mxu0 0
        %2270 = vmatprep.subr.bf16.mxu0 0
        %2271 = vmatpush1.bf16.msra.mxu0 0
        %2272 = vmatprep.subr.bf16.mxu0 0
        %2273 = vmatpush1.bf16.msra.mxu0 0
        %2274 = vmatprep.subr.bf16.mxu0 0
        %2275 = vmatpush1.bf16.msra.mxu0 0
        %2276 = vmatprep.subr.bf16.mxu0 0
        %2277 = vmatpush1.bf16.msra.mxu0 0
        %2278 = vmatprep.subr.bf16.mxu0 0
        %2279 = vmatpush1.bf16.msra.mxu0 0
        %2280 = vmatprep.subr.bf16.mxu0 0
        %2281 = vmatpush1.bf16.msra.mxu0 0
        %2282 = vmatprep.subr.bf16.mxu0 0
        %2283 = vmatpush1.bf16.msra.mxu0 0
        %2284 = vmatprep.subr.bf16.mxu0 0
        %2285 = vmatpush1.bf16.msra.mxu0 0
        %2286 = vmatprep.subr.bf16.mxu0 0
        %2287 = vmatpush1.bf16.msra.mxu0 0
        %2288 = vmatprep.subr.bf16.mxu0 0
        %2289 = vmatpush1.bf16.msra.mxu0 0
        %2290 = vmatprep.subr.bf16.mxu0 0
        %2291 = vmatpush1.bf16.msra.mxu0 0
        %2292 = vmatprep.subr.bf16.mxu0 0
        %2293 = vmatpush1.bf16.msra.mxu0 0
        %2294 = vmatprep.subr.bf16.mxu0 0
        %2295 = vmatpush1.bf16.msra.mxu0 0
        %2296 = vmatprep.subr.bf16.mxu0 0
        %2297 = vmatpush1.bf16.msra.mxu0 0
        %2298 = vmatprep.mubr.bf16.mxu0 0
        %2299 = vmatmul.mubr.bf16.gmra.mrb[0].mxu0 %v1979
        %v2300 = vpop.f32.mrb[0].mxu0
        %v2301 = vadd.f32 0.0, %v2300
        %v2302 = vpop.f32.mrb[0].mxu0
        %v2303 = vpop.f32.mrb[0].mxu0
        %v2304 = vadd.f32 0.0, %v2303
        %v2305 = vpop.f32.mrb[0].mxu0
        %2306 = vmatprep.mubr.bf16.mxu0 0
        %2307 = vmatmul.mubr.bf16.gmra.mrb[0].mxu0 %v1982
        %v2308 = vpop.f32.mrb[0].mxu0
        %v2309 = vadd.f32 0.0, %v2308
        %v2310 = vpop.f32.mrb[0].mxu0
        %v2311 = vpop.f32.mrb[0].mxu0
        %v2312 = vadd.f32 0.0, %v2311
        %v2313 = vpop.f32.mrb[0].mxu0
        %2314 = vmatprep.mubr.bf16.mxu0 0
        %2315 = vmatmul.mubr.bf16.gmra.mrb[0].mxu0 %v1985
        %v2316 = vpop.f32.mrb[0].mxu0
        %v2317 = vadd.f32 0.0, %v2316
        %v2318 = vpop.f32.mrb[0].mxu0
        %v2319 = vpop.f32.mrb[0].mxu0
        %v2320 = vadd.f32 0.0, %v2319
        %v2321 = vpop.f32.mrb[0].mxu0
        %2322 = vmatprep.mubr.bf16.mxu0 0
        %2323 = vmatmul.mubr.bf16.gmra.mrb[0].mxu0 %v1988
        %v2324 = vpop.f32.mrb[0].mxu0
        %v2325 = vadd.f32 0.0, %v2324
        %v2326 = vpop.f32.mrb[0].mxu0
        %v2327 = vpop.f32.mrb[0].mxu0
        %v2328 = vadd.f32 0.0, %v2327
        %v2329 = vpop.f32.mrb[0].mxu0
        %2330 = vmatprep.mubr.bf16.mxu0 0
        %2331 = vmatmul.mubr.bf16.gmra.mrb[0].mxu0 %v1991
        %v2332 = vpop.f32.mrb[0].mxu0
        %v2333 = vadd.f32 0.0, %v2332
        %v2334 = vpop.f32.mrb[0].mxu0
        %v2335 = vpop.f32.mrb[0].mxu0
        %v2336 = vadd.f32 0.0, %v2335
        %v2337 = vpop.f32.mrb[0].mxu0
        %2338 = vmatprep.mubr.bf16.mxu0 0
        %2339 = vmatmul.mubr.bf16.gmra.mrb[0].mxu0 %v1994
        %v2340 = vpop.f32.mrb[0].mxu0
        %v2341 = vadd.f32 0.0, %v2340
        %v2342 = vpop.f32.mrb[0].mxu0
        %v2343 = vpop.f32.mrb[0].mxu0
        %v2344 = vadd.f32 0.0, %v2343
        %v2345 = vpop.f32.mrb[0].mxu0
        %2346 = vmatprep.mubr.bf16.mxu0 0
        %2347 = vmatmul.mubr.bf16.gmra.mrb[0].mxu0 %v1997
        %v2348 = vpop.f32.mrb[0].mxu0
        %v2349 = vadd.f32 0.0, %v2348
        %v2350 = vpop.f32.mrb[0].mxu0
        %v2351 = vpop.f32.mrb[0].mxu0
        %v2352 = vadd.f32 0.0, %v2351
        %v2353 = vpop.f32.mrb[0].mxu0
        %2354 = vmatprep.mubr.bf16.mxu0 0
        %2355 = vmatmul.mubr.bf16.gmra.mrb[0].mxu0 %v2000
        %v2356 = vpop.f32.mrb[0].mxu0
        %v2357 = vadd.f32 0.0, %v2356
        %v2358 = vpop.f32.mrb[0].mxu0
        %v2359 = vpop.f32.mrb[0].mxu0
        %v2360 = vadd.f32 0.0, %v2359
        %v2361 = vpop.f32.mrb[0].mxu0
        %2362 = vmatprep.mubr.bf16.mxu0 0
        %2363 = vmatmul.mubr.bf16.gmra.mrb[0].mxu0 %v2003
        %v2364 = vpop.f32.mrb[0].mxu0
        %v2365 = vadd.f32 0.0, %v2364
        %v2366 = vpop.f32.mrb[0].mxu0
        %v2367 = vpop.f32.mrb[0].mxu0
        %v2368 = vadd.f32 0.0, %v2367
        %v2369 = vpop.f32.mrb[0].mxu0
        %2370 = vmatprep.mubr.bf16.mxu0 0
        %2371 = vmatmul.mubr.bf16.gmra.mrb[0].mxu0 %v2006
        %v2372 = vpop.f32.mrb[0].mxu0
        %v2373 = vadd.f32 0.0, %v2372
        %v2374 = vpop.f32.mrb[0].mxu0
        %v2375 = vpop.f32.mrb[0].mxu0
        %v2376 = vadd.f32 0.0, %v2375
        %v2377 = vpop.f32.mrb[0].mxu0
        %2378 = vmatprep.mubr.bf16.mxu0 0
        %2379 = vmatmul.mubr.bf16.gmra.mrb[0].mxu0 %v2009
        %v2380 = vpop.f32.mrb[0].mxu0
        %v2381 = vadd.f32 0.0, %v2380
        %v2382 = vpop.f32.mrb[0].mxu0
        %v2383 = vpop.f32.mrb[0].mxu0
        %v2384 = vadd.f32 0.0, %v2383
        %v2385 = vpop.f32.mrb[0].mxu0
        %2386 = vmatprep.mubr.bf16.mxu0 0
        %2387 = vmatmul.mubr.bf16.gmra.mrb[0].mxu0 %v2012
        %v2388 = vpop.f32.mrb[0].mxu0
        %v2389 = vadd.f32 0.0, %v2388
        %v2390 = vpop.f32.mrb[0].mxu0
        %v2391 = vpop.f32.mrb[0].mxu0
        %v2392 = vadd.f32 0.0, %v2391
        %v2393 = vpop.f32.mrb[0].mxu0
        %2394 = vmatprep.mubr.bf16.mxu0 0
        %2395 = vmatmul.mubr.bf16.gmra.mrb[0].mxu0 %v2015
        %v2396 = vpop.f32.mrb[0].mxu0
        %v2397 = vadd.f32 0.0, %v2396
        %v2398 = vpop.f32.mrb[0].mxu0
        %v2399 = vpop.f32.mrb[0].mxu0
        %v2400 = vadd.f32 0.0, %v2399
        %v2401 = vpop.f32.mrb[0].mxu0
        %2402 = vmatprep.mubr.bf16.mxu0 0
        %2403 = vmatmul.mubr.bf16.gmra.mrb[0].mxu0 %v2018
        %v2404 = vpop.f32.mrb[0].mxu0
        %v2405 = vadd.f32 0.0, %v2404
        %v2406 = vpop.f32.mrb[0].mxu0
        %v2407 = vpop.f32.mrb[0].mxu0
        %v2408 = vadd.f32 0.0, %v2407
        %v2409 = vpop.f32.mrb[0].mxu0
        %2410 = vmatprep.mubr.bf16.mxu0 0
        %2411 = vmatmul.mubr.bf16.gmra.mrb[0].mxu0 %v2021
        %v2412 = vpop.f32.mrb[0].mxu0
        %v2413 = vadd.f32 0.0, %v2412
        %v2414 = vpop.f32.mrb[0].mxu0
        %v2415 = vpop.f32.mrb[0].mxu0
        %v2416 = vadd.f32 0.0, %v2415
        %v2417 = vpop.f32.mrb[0].mxu0
        %2418 = vmatprep.mubr.bf16.mxu0 0
        %2419 = vmatmul.mubr.bf16.gmra.mrb[0].mxu0 %v2024
        %v2420 = vpop.f32.mrb[0].mxu0
        %v2421 = vadd.f32 0.0, %v2420
        %v2422 = vpop.f32.mrb[0].mxu0
        %v2423 = vpop.f32.mrb[0].mxu0
        %v2424 = vadd.f32 0.0, %v2423
        %v2425 = vpop.f32.mrb[0].mxu0
        %2426 = vmatprep.mubr.bf16.mxu0 0
        %2427 = vmatmul.mubr.bf16.gmra.mrb[0].mxu0 %v2258
        %v2428 = vpop.f32.mrb[0].mxu0
        %v2429 = vadd.f32 0.0, %v2428
        %v2430 = vpop.f32.mrb[0].mxu0
        %v2431 = vpop.f32.mrb[0].mxu0
        %v2432 = vadd.f32 0.0, %v2431
        %v2433 = vpop.f32.mrb[0].mxu0
        %2434 = vmatprep.mubr.bf16.mxu0 0
        %2435 = vmatmul.mubr.bf16.gmra.mrb[0].mxu0 %v2261
        %v2436 = vpop.f32.mrb[0].mxu0
        %v2437 = vadd.f32 0.0, %v2436
        %v2438 = vpop.f32.mrb[0].mxu0
        %v2439 = vpop.f32.mrb[0].mxu0
        %v2440 = vadd.f32 0.0, %v2439
        %v2441 = vpop.f32.mrb[0].mxu0
        %2442 = vdwg.mxu0
        %v2443 = vadd.f32 %v2209, %v2301
        %v2444 = vadd.f32 %v2210, %v2304
        %v2445 = vadd.f32 %v2211, %v2309
        %v2446 = vadd.f32 %v2212, %v2312
        %v2447 = vadd.f32 %v2213, %v2317
        %v2448 = vadd.f32 %v2214, %v2320
        %v2449 = vadd.f32 %v2215, %v2325
        %v2450 = vadd.f32 %v2216, %v2328
        %v2451 = vadd.f32 %v2217, %v2333
        %v2452 = vadd.f32 %v2218, %v2336
        %v2453 = vadd.f32 %v2219, %v2341
        %v2454 = vadd.f32 %v2220, %v2344
        %v2455 = vadd.f32 %v2221, %v2349
        %v2456 = vadd.f32 %v2222, %v2352
        %v2457 = vadd.f32 %v2223, %v2357
        %v2458 = vadd.f32 %v2224, %v2360
        %v2459 = vadd.f32 %v2225, %v2365
        %v2460 = vadd.f32 %v2226, %v2368
        %v2461 = vadd.f32 %v2227, %v2373
        %v2462 = vadd.f32 %v2228, %v2376
        %v2463 = vadd.f32 %v2229, %v2381
        %v2464 = vadd.f32 %v2230, %v2384
        %v2465 = vadd.f32 %v2231, %v2389
        %v2466 = vadd.f32 %v2232, %v2392
        %v2467 = vadd.f32 %v2233, %v2397
        %v2468 = vadd.f32 %v2234, %v2400
        %v2469 = vadd.f32 %v2235, %v2405
        %v2470 = vadd.f32 %v2236, %v2408
        %v2471 = vadd.f32 %v2237, %v2413
        %v2472 = vadd.f32 %v2238, %v2416
        %v2473 = vadd.f32 %v2239, %v2421
        %v2474 = vadd.f32 %v2240, %v2424
        %v2475 = vadd.f32 %v2241, %v2429
        %v2476 = vadd.f32 %v2242, %v2432
        %v2477 = vadd.f32 %v2243, %v2437
        %v2478 = vadd.f32 %v2244, %v2440
        %s2479 = scalar_lea.vmem %s1, 28
        %v2480 = vld [vmem:[%s2479] sm:$0xf]
        %vm2481 = vsmask.f32 5376
        %v2482 = vrot.slane %v453, 2
        %v2483 = vrot.slane %v449, 3
        %v2484 = vor.u32 %v2482, %v2483
        %v2485 = vrot.slane %v461, 2
        %v2486 = vrot.slane %v457, 3
        %v2487 = vor.u32 %v2485, %v2486
        %v2488 = vsel %vm2481, %v2484, %v2487
        %v2489 = vrot.slane %v469, 2
        %v2490 = vrot.slane %v465, 3
        %v2491 = vor.u32 %v2489, %v2490
        %v2492 = vsel %vm2481, %v2487, %v2491
        %v2493 = vrot.slane %v477, 2
        %v2494 = vrot.slane %v473, 3
        %v2495 = vor.u32 %v2493, %v2494
        %v2496 = vsel %vm2481, %v2491, %v2495
        %v2497 = vrot.slane %v485, 2
        %v2498 = vrot.slane %v481, 3
        %v2499 = vor.u32 %v2497, %v2498
        %v2500 = vsel %vm2481, %v2495, %v2499
        %v2501 = vrot.slane %v493, 2
        %v2502 = vrot.slane %v489, 3
        %v2503 = vor.u32 %v2501, %v2502
        %v2504 = vsel %vm2481, %v2499, %v2503
        %v2505 = vrot.slane %v501, 2
        %v2506 = vrot.slane %v497, 3
        %v2507 = vor.u32 %v2505, %v2506
        %v2508 = vsel %vm2481, %v2503, %v2507
        %v2509 = vrot.slane %v509, 2
        %v2510 = vrot.slane %v505, 3
        %v2511 = vor.u32 %v2509, %v2510
        %v2512 = vsel %vm2481, %v2507, %v2511
        %v2513 = vrot.slane %v517, 2
        %v2514 = vrot.slane %v513, 3
        %v2515 = vor.u32 %v2513, %v2514
        %v2516 = vsel %vm2481, %v2511, %v2515
        %v2517 = vrot.slane %v525, 2
        %v2518 = vrot.slane %v521, 3
        %v2519 = vor.u32 %v2517, %v2518
        %v2520 = vsel %vm2481, %v2515, %v2519
        %v2521 = vrot.slane %v533, 2
        %v2522 = vrot.slane %v529, 3
        %v2523 = vor.u32 %v2521, %v2522
        %v2524 = vsel %vm2481, %v2519, %v2523
        %v2525 = vrot.slane %v541, 2
        %v2526 = vrot.slane %v537, 3
        %v2527 = vor.u32 %v2525, %v2526
        %v2528 = vsel %vm2481, %v2523, %v2527
        %v2529 = vrot.slane %v549, 2
        %v2530 = vrot.slane %v545, 3
        %v2531 = vor.u32 %v2529, %v2530
        %v2532 = vsel %vm2481, %v2527, %v2531
        %v2533 = vrot.slane %v557, 2
        %v2534 = vrot.slane %v553, 3
        %v2535 = vor.u32 %v2533, %v2534
        %v2536 = vsel %vm2481, %v2531, %v2535
        %v2537 = vrot.slane %v565, 2
        %v2538 = vrot.slane %v561, 3
        %v2539 = vor.u32 %v2537, %v2538
        %v2540 = vsel %vm2481, %v2535, %v2539
        %v2541 = vrot.slane %v573, 2
        %v2542 = vrot.slane %v569, 3
        %v2543 = vor.u32 %v2541, %v2542
        %v2544 = vsel %vm2481, %v2539, %v2543
        %v2545 = vrot.slane %v1648, 2
        %v2546 = vrot.slane %v1651, 3
        %v2547 = vor.u32 %v2545, %v2546
        %v2548 = vsel %vm2481, %v2543, %v2547
        %v2550 = vshrl.u32 %v2251, 16
        %v2552 = vrot.slane %v2550, 2
        %v2553 = vshll.u32 %v2251, 16
        %v2555 = vrot.slane %v2553, 3
        %v2556 = vor.u32 %v2552, %v2555
        %v2557 = vsel %vm2481, %v2547, %v2556
        %v2559 = vshrl.u32 %v2252, 16
        %v2561 = vrot.slane %v2559, 2
        %v2562 = vshll.u32 %v2252, 16
        %v2564 = vrot.slane %v2562, 3
        %v2565 = vor.u32 %v2561, %v2564
        %v2566 = vsel %vm2481, %v2556, %v2565
        %v2568 = vsel %vm581, %v2488, 0
        %v2571 = vsel %vm581, %v2492, 0
        %v2574 = vsel %vm581, %v2496, 0
        %v2577 = vsel %vm581, %v2500, 0
        %v2580 = vsel %vm581, %v2504, 0
        %v2583 = vsel %vm581, %v2508, 0
        %v2586 = vsel %vm581, %v2512, 0
        %v2589 = vsel %vm581, %v2516, 0
        %v2592 = vsel %vm581, %v2520, 0
        %v2595 = vsel %vm581, %v2524, 0
        %v2598 = vsel %vm581, %v2528, 0
        %v2601 = vsel %vm581, %v2532, 0
        %v2604 = vsel %vm581, %v2536, 0
        %v2607 = vsel %vm581, %v2540, 0
        %v2610 = vsel %vm581, %v2544, 0
        %v2613 = vsel %vm581, %v2548, 0
        %v2616 = vsel %vm581, %v2557, 0
        %v2619 = vsel %vm581, %v2566, 0
        %v2622 = vsel %vm636, %v2480, 0
        %2624 = vmatprep.subr.bf16.mxu0 0
        %2625 = vmatpush1.bf16.msra.mxu0 %v2622
        %2626 = vmatprep.subr.bf16.mxu0 0
        %2627 = vmatpush1.bf16.msra.mxu0 0
        %2628 = vmatprep.subr.bf16.mxu0 0
        %2629 = vmatpush1.bf16.msra.mxu0 0
        %2630 = vmatprep.subr.bf16.mxu0 0
        %2631 = vmatpush1.bf16.msra.mxu0 0
        %2632 = vmatprep.subr.bf16.mxu0 0
        %2633 = vmatpush1.bf16.msra.mxu0 0
        %2634 = vmatprep.subr.bf16.mxu0 0
        %2635 = vmatpush1.bf16.msra.mxu0 0
        %2636 = vmatprep.subr.bf16.mxu0 0
        %2637 = vmatpush1.bf16.msra.mxu0 0
        %2638 = vmatprep.subr.bf16.mxu0 0
        %2639 = vmatpush1.bf16.msra.mxu0 0
        %2640 = vmatprep.subr.bf16.mxu0 0
        %2641 = vmatpush1.bf16.msra.mxu0 0
        %2642 = vmatprep.subr.bf16.mxu0 0
        %2643 = vmatpush1.bf16.msra.mxu0 0
        %2644 = vmatprep.subr.bf16.mxu0 0
        %2645 = vmatpush1.bf16.msra.mxu0 0
        %2646 = vmatprep.subr.bf16.mxu0 0
        %2647 = vmatpush1.bf16.msra.mxu0 0
        %2648 = vmatprep.subr.bf16.mxu0 0
        %2649 = vmatpush1.bf16.msra.mxu0 0
        %2650 = vmatprep.subr.bf16.mxu0 0
        %2651 = vmatpush1.bf16.msra.mxu0 0
        %2652 = vmatprep.subr.bf16.mxu0 0
        %2653 = vmatpush1.bf16.msra.mxu0 0
        %2654 = vmatprep.subr.bf16.mxu0 0
        %2655 = vmatpush1.bf16.msra.mxu0 0
        %2656 = vmatprep.mubr.bf16.mxu0 0
        %2657 = vmatmul.mubr.bf16.gmra.mrb[0].mxu0 %v2568
        %v2658 = vpop.f32.mrb[0].mxu0
        %v2659 = vadd.f32 0.0, %v2658
        %v2660 = vpop.f32.mrb[0].mxu0
        %v2661 = vpop.f32.mrb[0].mxu0
        %v2662 = vadd.f32 0.0, %v2661
        %v2663 = vpop.f32.mrb[0].mxu0
        %2664 = vmatprep.mubr.bf16.mxu0 0
        %2665 = vmatmul.mubr.bf16.gmra.mrb[0].mxu0 %v2571
        %v2666 = vpop.f32.mrb[0].mxu0
        %v2667 = vadd.f32 0.0, %v2666
        %v2668 = vpop.f32.mrb[0].mxu0
        %v2669 = vpop.f32.mrb[0].mxu0
        %v2670 = vadd.f32 0.0, %v2669
        %v2671 = vpop.f32.mrb[0].mxu0
        %2672 = vmatprep.mubr.bf16.mxu0 0
        %2673 = vmatmul.mubr.bf16.gmra.mrb[0].mxu0 %v2574
        %v2674 = vpop.f32.mrb[0].mxu0
        %v2675 = vadd.f32 0.0, %v2674
        %v2676 = vpop.f32.mrb[0].mxu0
        %v2677 = vpop.f32.mrb[0].mxu0
        %v2678 = vadd.f32 0.0, %v2677
        %v2679 = vpop.f32.mrb[0].mxu0
        %2680 = vmatprep.mubr.bf16.mxu0 0
        %2681 = vmatmul.mubr.bf16.gmra.mrb[0].mxu0 %v2577
        %v2682 = vpop.f32.mrb[0].mxu0
        %v2683 = vadd.f32 0.0, %v2682
        %v2684 = vpop.f32.mrb[0].mxu0
        %v2685 = vpop.f32.mrb[0].mxu0
        %v2686 = vadd.f32 0.0, %v2685
        %v2687 = vpop.f32.mrb[0].mxu0
        %2688 = vmatprep.mubr.bf16.mxu0 0
        %2689 = vmatmul.mubr.bf16.gmra.mrb[0].mxu0 %v2580
        %v2690 = vpop.f32.mrb[0].mxu0
        %v2691 = vadd.f32 0.0, %v2690
        %v2692 = vpop.f32.mrb[0].mxu0
        %v2693 = vpop.f32.mrb[0].mxu0
        %v2694 = vadd.f32 0.0, %v2693
        %v2695 = vpop.f32.mrb[0].mxu0
        %2696 = vmatprep.mubr.bf16.mxu0 0
        %2697 = vmatmul.mubr.bf16.gmra.mrb[0].mxu0 %v2583
        %v2698 = vpop.f32.mrb[0].mxu0
        %v2699 = vadd.f32 0.0, %v2698
        %v2700 = vpop.f32.mrb[0].mxu0
        %v2701 = vpop.f32.mrb[0].mxu0
        %v2702 = vadd.f32 0.0, %v2701
        %v2703 = vpop.f32.mrb[0].mxu0
        %2704 = vmatprep.mubr.bf16.mxu0 0
        %2705 = vmatmul.mubr.bf16.gmra.mrb[0].mxu0 %v2586
        %v2706 = vpop.f32.mrb[0].mxu0
        %v2707 = vadd.f32 0.0, %v2706
        %v2708 = vpop.f32.mrb[0].mxu0
        %v2709 = vpop.f32.mrb[0].mxu0
        %v2710 = vadd.f32 0.0, %v2709
        %v2711 = vpop.f32.mrb[0].mxu0
        %2712 = vmatprep.mubr.bf16.mxu0 0
        %2713 = vmatmul.mubr.bf16.gmra.mrb[0].mxu0 %v2589
        %v2714 = vpop.f32.mrb[0].mxu0
        %v2715 = vadd.f32 0.0, %v2714
        %v2716 = vpop.f32.mrb[0].mxu0
        %v2717 = vpop.f32.mrb[0].mxu0
        %v2718 = vadd.f32 0.0, %v2717
        %v2719 = vpop.f32.mrb[0].mxu0
        %2720 = vmatprep.mubr.bf16.mxu0 0
        %2721 = vmatmul.mubr.bf16.gmra.mrb[0].mxu0 %v2592
        %v2722 = vpop.f32.mrb[0].mxu0
        %v2723 = vadd.f32 0.0, %v2722
        %v2724 = vpop.f32.mrb[0].mxu0
        %v2725 = vpop.f32.mrb[0].mxu0
        %v2726 = vadd.f32 0.0, %v2725
        %v2727 = vpop.f32.mrb[0].mxu0
        %2728 = vmatprep.mubr.bf16.mxu0 0
        %2729 = vmatmul.mubr.bf16.gmra.mrb[0].mxu0 %v2595
        %v2730 = vpop.f32.mrb[0].mxu0
        %v2731 = vadd.f32 0.0, %v2730
        %v2732 = vpop.f32.mrb[0].mxu0
        %v2733 = vpop.f32.mrb[0].mxu0
        %v2734 = vadd.f32 0.0, %v2733
        %v2735 = vpop.f32.mrb[0].mxu0
        %2736 = vmatprep.mubr.bf16.mxu0 0
        %2737 = vmatmul.mubr.bf16.gmra.mrb[0].mxu0 %v2598
        %v2738 = vpop.f32.mrb[0].mxu0
        %v2739 = vadd.f32 0.0, %v2738
        %v2740 = vpop.f32.mrb[0].mxu0
        %v2741 = vpop.f32.mrb[0].mxu0
        %v2742 = vadd.f32 0.0, %v2741
        %v2743 = vpop.f32.mrb[0].mxu0
        %2744 = vmatprep.mubr.bf16.mxu0 0
        %2745 = vmatmul.mubr.bf16.gmra.mrb[0].mxu0 %v2601
        %v2746 = vpop.f32.mrb[0].mxu0
        %v2747 = vadd.f32 0.0, %v2746
        %v2748 = vpop.f32.mrb[0].mxu0
        %v2749 = vpop.f32.mrb[0].mxu0
        %v2750 = vadd.f32 0.0, %v2749
        %v2751 = vpop.f32.mrb[0].mxu0
        %2752 = vmatprep.mubr.bf16.mxu0 0
        %2753 = vmatmul.mubr.bf16.gmra.mrb[0].mxu0 %v2604
        %v2754 = vpop.f32.mrb[0].mxu0
        %v2755 = vadd.f32 0.0, %v2754
        %v2756 = vpop.f32.mrb[0].mxu0
        %v2757 = vpop.f32.mrb[0].mxu0
        %v2758 = vadd.f32 0.0, %v2757
        %v2759 = vpop.f32.mrb[0].mxu0
        %2760 = vmatprep.mubr.bf16.mxu0 0
        %2761 = vmatmul.mubr.bf16.gmra.mrb[0].mxu0 %v2607
        %v2762 = vpop.f32.mrb[0].mxu0
        %v2763 = vadd.f32 0.0, %v2762
        %v2764 = vpop.f32.mrb[0].mxu0
        %v2765 = vpop.f32.mrb[0].mxu0
        %v2766 = vadd.f32 0.0, %v2765
        %v2767 = vpop.f32.mrb[0].mxu0
        %2768 = vmatprep.mubr.bf16.mxu0 0
        %2769 = vmatmul.mubr.bf16.gmra.mrb[0].mxu0 %v2610
        %v2770 = vpop.f32.mrb[0].mxu0
        %v2771 = vadd.f32 0.0, %v2770
        %v2772 = vpop.f32.mrb[0].mxu0
        %v2773 = vpop.f32.mrb[0].mxu0
        %v2774 = vadd.f32 0.0, %v2773
        %v2775 = vpop.f32.mrb[0].mxu0
        %2776 = vmatprep.mubr.bf16.mxu0 0
        %2777 = vmatmul.mubr.bf16.gmra.mrb[0].mxu0 %v2613
        %v2778 = vpop.f32.mrb[0].mxu0
        %v2779 = vadd.f32 0.0, %v2778
        %v2780 = vpop.f32.mrb[0].mxu0
        %v2781 = vpop.f32.mrb[0].mxu0
        %v2782 = vadd.f32 0.0, %v2781
        %v2783 = vpop.f32.mrb[0].mxu0
        %2784 = vmatprep.mubr.bf16.mxu0 0
        %2785 = vmatmul.mubr.bf16.gmra.mrb[0].mxu0 %v2616
        %v2786 = vpop.f32.mrb[0].mxu0
        %v2787 = vadd.f32 0.0, %v2786
        %v2788 = vpop.f32.mrb[0].mxu0
        %v2789 = vpop.f32.mrb[0].mxu0
        %v2790 = vadd.f32 0.0, %v2789
        %v2791 = vpop.f32.mrb[0].mxu0
        %2792 = vmatprep.mubr.bf16.mxu0 0
        %2793 = vmatmul.mubr.bf16.gmra.mrb[0].mxu0 %v2619
        %v2794 = vpop.f32.mrb[0].mxu0
        %v2795 = vadd.f32 0.0, %v2794
        %v2796 = vpop.f32.mrb[0].mxu0
        %v2797 = vpop.f32.mrb[0].mxu0
        %v2798 = vadd.f32 0.0, %v2797
        %v2799 = vpop.f32.mrb[0].mxu0
        %2800 = vdwg.mxu0
        %v2801 = vadd.f32 %v2443, %v2659
        %v2802 = vadd.f32 %v2444, %v2662
        %v2803 = vadd.f32 %v2445, %v2667
        %v2804 = vadd.f32 %v2446, %v2670
        %v2805 = vadd.f32 %v2447, %v2675
        %v2806 = vadd.f32 %v2448, %v2678
        %v2807 = vadd.f32 %v2449, %v2683
        %v2808 = vadd.f32 %v2450, %v2686
        %v2809 = vadd.f32 %v2451, %v2691
        %v2810 = vadd.f32 %v2452, %v2694
        %v2811 = vadd.f32 %v2453, %v2699
        %v2812 = vadd.f32 %v2454, %v2702
        %v2813 = vadd.f32 %v2455, %v2707
        %v2814 = vadd.f32 %v2456, %v2710
        %v2815 = vadd.f32 %v2457, %v2715
        %v2816 = vadd.f32 %v2458, %v2718
        %v2817 = vadd.f32 %v2459, %v2723
        %v2818 = vadd.f32 %v2460, %v2726
        %v2819 = vadd.f32 %v2461, %v2731
        %v2820 = vadd.f32 %v2462, %v2734
        %v2821 = vadd.f32 %v2463, %v2739
        %v2822 = vadd.f32 %v2464, %v2742
        %v2823 = vadd.f32 %v2465, %v2747
        %v2824 = vadd.f32 %v2466, %v2750
        %v2825 = vadd.f32 %v2467, %v2755
        %v2826 = vadd.f32 %v2468, %v2758
        %v2827 = vadd.f32 %v2469, %v2763
        %v2828 = vadd.f32 %v2470, %v2766
        %v2829 = vadd.f32 %v2471, %v2771
        %v2830 = vadd.f32 %v2472, %v2774
        %v2831 = vadd.f32 %v2473, %v2779
        %v2832 = vadd.f32 %v2474, %v2782
        %v2833 = vadd.f32 %v2475, %v2787
        %v2834 = vadd.f32 %v2476, %v2790
        %v2835 = vadd.f32 %v2477, %v2795
        %v2836 = vadd.f32 %v2478, %v2798
        %s2837 = scalar_lea.vmem %s1, 32
        %v2838 = vld [vmem:[%s2837] sm:$0xf]
        %vm2839 = vcmask 1044480
        %v2840 = vrot.slane %v415, 3
        %v2841 = vrot.slane %v416, 3
        %v2842 = vsel %vm2839, %v2840, %v2841
        %v2843 = vrot.slane %v417, 3
        %v2844 = vsel %vm2839, %v2841, %v2843
        %v2845 = vrot.slane %v418, 3
        %v2846 = vsel %vm2839, %v2843, %v2845
        %v2847 = vrot.slane %v419, 3
        %v2848 = vsel %vm2839, %v2845, %v2847
        %v2849 = vrot.slane %v420, 3
        %v2850 = vsel %vm2839, %v2847, %v2849
        %v2851 = vrot.slane %v421, 3
        %v2852 = vsel %vm2839, %v2849, %v2851
        %v2853 = vrot.slane %v422, 3
        %v2854 = vsel %vm2839, %v2851, %v2853
        %v2855 = vrot.slane %v423, 3
        %v2856 = vsel %vm2839, %v2853, %v2855
        %v2857 = vrot.slane %v424, 3
        %v2858 = vsel %vm2839, %v2855, %v2857
        %v2859 = vrot.slane %v425, 3
        %v2860 = vsel %vm2839, %v2857, %v2859
        %v2861 = vrot.slane %v426, 3
        %v2862 = vsel %vm2839, %v2859, %v2861
        %v2863 = vrot.slane %v427, 3
        %v2864 = vsel %vm2839, %v2861, %v2863
        %v2865 = vrot.slane %v428, 3
        %v2866 = vsel %vm2839, %v2863, %v2865
        %v2867 = vrot.slane %v429, 3
        %v2868 = vsel %vm2839, %v2865, %v2867
        %v2869 = vrot.slane %v430, 3
        %v2870 = vsel %vm2839, %v2867, %v2869
        %v2871 = vrot.slane %v1349, 3
        %v2872 = vsel %vm2839, %v2869, %v2871
        %v2873 = vrot.slane %v2251, 3
        %v2874 = vsel %vm2839, %v2871, %v2873
        %v2875 = vrot.slane %v2252, 3
        %v2876 = vsel %vm2839, %v2873, %v2875
        %v2878 = vsel %vm581, %v2842, 0
        %v2881 = vsel %vm581, %v2844, 0
        %v2884 = vsel %vm581, %v2846, 0
        %v2887 = vsel %vm581, %v2848, 0
        %v2890 = vsel %vm581, %v2850, 0
        %v2893 = vsel %vm581, %v2852, 0
        %v2896 = vsel %vm581, %v2854, 0
        %v2899 = vsel %vm581, %v2856, 0
        %v2902 = vsel %vm581, %v2858, 0
        %v2905 = vsel %vm581, %v2860, 0
        %v2908 = vsel %vm581, %v2862, 0
        %v2911 = vsel %vm581, %v2864, 0
        %v2914 = vsel %vm581, %v2866, 0
        %v2917 = vsel %vm581, %v2868, 0
        %v2920 = vsel %vm581, %v2870, 0
        %v2923 = vsel %vm581, %v2872, 0
        %v2926 = vsel %vm581, %v2874, 0
        %v2929 = vsel %vm581, %v2876, 0
        %v2932 = vsel %vm636, %v2838, 0
        %2934 = vmatprep.subr.bf16.mxu0 0
        %2935 = vmatpush1.bf16.msra.mxu0 %v2932
        %2936 = vmatprep.subr.bf16.mxu0 0
        %2937 = vmatpush1.bf16.msra.mxu0 0
        %2938 = vmatprep.subr.bf16.mxu0 0
        %2939 = vmatpush1.bf16.msra.mxu0 0
        %2940 = vmatprep.subr.bf16.mxu0 0
        %2941 = vmatpush1.bf16.msra.mxu0 0
        %2942 = vmatprep.subr.bf16.mxu0 0
        %2943 = vmatpush1.bf16.msra.mxu0 0
        %2944 = vmatprep.subr.bf16.mxu0 0
        %2945 = vmatpush1.bf16.msra.mxu0 0
        %2946 = vmatprep.subr.bf16.mxu0 0
        %2947 = vmatpush1.bf16.msra.mxu0 0
        %2948 = vmatprep.subr.bf16.mxu0 0
        %2949 = vmatpush1.bf16.msra.mxu0 0
        %2950 = vmatprep.subr.bf16.mxu0 0
        %2951 = vmatpush1.bf16.msra.mxu0 0
        %2952 = vmatprep.subr.bf16.mxu0 0
        %2953 = vmatpush1.bf16.msra.mxu0 0
        %2954 = vmatprep.subr.bf16.mxu0 0
        %2955 = vmatpush1.bf16.msra.mxu0 0
        %2956 = vmatprep.subr.bf16.mxu0 0
        %2957 = vmatpush1.bf16.msra.mxu0 0
        %2958 = vmatprep.subr.bf16.mxu0 0
        %2959 = vmatpush1.bf16.msra.mxu0 0
        %2960 = vmatprep.subr.bf16.mxu0 0
        %2961 = vmatpush1.bf16.msra.mxu0 0
        %2962 = vmatprep.subr.bf16.mxu0 0
        %2963 = vmatpush1.bf16.msra.mxu0 0
        %2964 = vmatprep.subr.bf16.mxu0 0
        %2965 = vmatpush1.bf16.msra.mxu0 0
        %2966 = vmatprep.mubr.bf16.mxu0 0
        %2967 = vmatmul.mubr.bf16.gmra.mrb[0].mxu0 %v2878
        %v2968 = vpop.f32.mrb[0].mxu0
        %v2969 = vadd.f32 0.0, %v2968
        %v2970 = vpop.f32.mrb[0].mxu0
        %v2971 = vpop.f32.mrb[0].mxu0
        %v2972 = vadd.f32 0.0, %v2971
        %v2973 = vpop.f32.mrb[0].mxu0
        %2974 = vmatprep.mubr.bf16.mxu0 0
        %2975 = vmatmul.mubr.bf16.gmra.mrb[0].mxu0 %v2881
        %v2976 = vpop.f32.mrb[0].mxu0
        %v2977 = vadd.f32 0.0, %v2976
        %v2978 = vpop.f32.mrb[0].mxu0
        %v2979 = vpop.f32.mrb[0].mxu0
        %v2980 = vadd.f32 0.0, %v2979
        %v2981 = vpop.f32.mrb[0].mxu0
        %2982 = vmatprep.mubr.bf16.mxu0 0
        %2983 = vmatmul.mubr.bf16.gmra.mrb[0].mxu0 %v2884
        %v2984 = vpop.f32.mrb[0].mxu0
        %v2985 = vadd.f32 0.0, %v2984
        %v2986 = vpop.f32.mrb[0].mxu0
        %v2987 = vpop.f32.mrb[0].mxu0
        %v2988 = vadd.f32 0.0, %v2987
        %v2989 = vpop.f32.mrb[0].mxu0
        %2990 = vmatprep.mubr.bf16.mxu0 0
        %2991 = vmatmul.mubr.bf16.gmra.mrb[0].mxu0 %v2887
        %v2992 = vpop.f32.mrb[0].mxu0
        %v2993 = vadd.f32 0.0, %v2992
        %v2994 = vpop.f32.mrb[0].mxu0
        %v2995 = vpop.f32.mrb[0].mxu0
        %v2996 = vadd.f32 0.0, %v2995
        %v2997 = vpop.f32.mrb[0].mxu0
        %2998 = vmatprep.mubr.bf16.mxu0 0
        %2999 = vmatmul.mubr.bf16.gmra.mrb[0].mxu0 %v2890
        %v3000 = vpop.f32.mrb[0].mxu0
        %v3001 = vadd.f32 0.0, %v3000
        %v3002 = vpop.f32.mrb[0].mxu0
        %v3003 = vpop.f32.mrb[0].mxu0
        %v3004 = vadd.f32 0.0, %v3003
        %v3005 = vpop.f32.mrb[0].mxu0
        %3006 = vmatprep.mubr.bf16.mxu0 0
        %3007 = vmatmul.mubr.bf16.gmra.mrb[0].mxu0 %v2893
        %v3008 = vpop.f32.mrb[0].mxu0
        %v3009 = vadd.f32 0.0, %v3008
        %v3010 = vpop.f32.mrb[0].mxu0
        %v3011 = vpop.f32.mrb[0].mxu0
        %v3012 = vadd.f32 0.0, %v3011
        %v3013 = vpop.f32.mrb[0].mxu0
        %3014 = vmatprep.mubr.bf16.mxu0 0
        %3015 = vmatmul.mubr.bf16.gmra.mrb[0].mxu0 %v2896
        %v3016 = vpop.f32.mrb[0].mxu0
        %v3017 = vadd.f32 0.0, %v3016
        %v3018 = vpop.f32.mrb[0].mxu0
        %v3019 = vpop.f32.mrb[0].mxu0
        %v3020 = vadd.f32 0.0, %v3019
        %v3021 = vpop.f32.mrb[0].mxu0
        %3022 = vmatprep.mubr.bf16.mxu0 0
        %3023 = vmatmul.mubr.bf16.gmra.mrb[0].mxu0 %v2899
        %v3024 = vpop.f32.mrb[0].mxu0
        %v3025 = vadd.f32 0.0, %v3024
        %v3026 = vpop.f32.mrb[0].mxu0
        %v3027 = vpop.f32.mrb[0].mxu0
        %v3028 = vadd.f32 0.0, %v3027
        %v3029 = vpop.f32.mrb[0].mxu0
        %3030 = vmatprep.mubr.bf16.mxu0 0
        %3031 = vmatmul.mubr.bf16.gmra.mrb[0].mxu0 %v2902
        %v3032 = vpop.f32.mrb[0].mxu0
        %v3033 = vadd.f32 0.0, %v3032
        %v3034 = vpop.f32.mrb[0].mxu0
        %v3035 = vpop.f32.mrb[0].mxu0
        %v3036 = vadd.f32 0.0, %v3035
        %v3037 = vpop.f32.mrb[0].mxu0
        %3038 = vmatprep.mubr.bf16.mxu0 0
        %3039 = vmatmul.mubr.bf16.gmra.mrb[0].mxu0 %v2905
        %v3040 = vpop.f32.mrb[0].mxu0
        %v3041 = vadd.f32 0.0, %v3040
        %v3042 = vpop.f32.mrb[0].mxu0
        %v3043 = vpop.f32.mrb[0].mxu0
        %v3044 = vadd.f32 0.0, %v3043
        %v3045 = vpop.f32.mrb[0].mxu0
        %3046 = vmatprep.mubr.bf16.mxu0 0
        %3047 = vmatmul.mubr.bf16.gmra.mrb[0].mxu0 %v2908
        %v3048 = vpop.f32.mrb[0].mxu0
        %v3049 = vadd.f32 0.0, %v3048
        %v3050 = vpop.f32.mrb[0].mxu0
        %v3051 = vpop.f32.mrb[0].mxu0
        %v3052 = vadd.f32 0.0, %v3051
        %v3053 = vpop.f32.mrb[0].mxu0
        %3054 = vmatprep.mubr.bf16.mxu0 0
        %3055 = vmatmul.mubr.bf16.gmra.mrb[0].mxu0 %v2911
        %v3056 = vpop.f32.mrb[0].mxu0
        %v3057 = vadd.f32 0.0, %v3056
        %v3058 = vpop.f32.mrb[0].mxu0
        %v3059 = vpop.f32.mrb[0].mxu0
        %v3060 = vadd.f32 0.0, %v3059
        %v3061 = vpop.f32.mrb[0].mxu0
        %3062 = vmatprep.mubr.bf16.mxu0 0
        %3063 = vmatmul.mubr.bf16.gmra.mrb[0].mxu0 %v2914
        %v3064 = vpop.f32.mrb[0].mxu0
        %v3065 = vadd.f32 0.0, %v3064
        %v3066 = vpop.f32.mrb[0].mxu0
        %v3067 = vpop.f32.mrb[0].mxu0
        %v3068 = vadd.f32 0.0, %v3067
        %v3069 = vpop.f32.mrb[0].mxu0
        %3070 = vmatprep.mubr.bf16.mxu0 0
        %3071 = vmatmul.mubr.bf16.gmra.mrb[0].mxu0 %v2917
        %v3072 = vpop.f32.mrb[0].mxu0
        %v3073 = vadd.f32 0.0, %v3072
        %v3074 = vpop.f32.mrb[0].mxu0
        %v3075 = vpop.f32.mrb[0].mxu0
        %v3076 = vadd.f32 0.0, %v3075
        %v3077 = vpop.f32.mrb[0].mxu0
        %3078 = vmatprep.mubr.bf16.mxu0 0
        %3079 = vmatmul.mubr.bf16.gmra.mrb[0].mxu0 %v2920
        %v3080 = vpop.f32.mrb[0].mxu0
        %v3081 = vadd.f32 0.0, %v3080
        %v3082 = vpop.f32.mrb[0].mxu0
        %v3083 = vpop.f32.mrb[0].mxu0
        %v3084 = vadd.f32 0.0, %v3083
        %v3085 = vpop.f32.mrb[0].mxu0
        %3086 = vmatprep.mubr.bf16.mxu0 0
        %3087 = vmatmul.mubr.bf16.gmra.mrb[0].mxu0 %v2923
        %v3088 = vpop.f32.mrb[0].mxu0
        %v3089 = vadd.f32 0.0, %v3088
        %v3090 = vpop.f32.mrb[0].mxu0
        %v3091 = vpop.f32.mrb[0].mxu0
        %v3092 = vadd.f32 0.0, %v3091
        %v3093 = vpop.f32.mrb[0].mxu0
        %3094 = vmatprep.mubr.bf16.mxu0 0
        %3095 = vmatmul.mubr.bf16.gmra.mrb[0].mxu0 %v2926
        %v3096 = vpop.f32.mrb[0].mxu0
        %v3097 = vadd.f32 0.0, %v3096
        %v3098 = vpop.f32.mrb[0].mxu0
        %v3099 = vpop.f32.mrb[0].mxu0
        %v3100 = vadd.f32 0.0, %v3099
        %v3101 = vpop.f32.mrb[0].mxu0
        %3102 = vmatprep.mubr.bf16.mxu0 0
        %3103 = vmatmul.mubr.bf16.gmra.mrb[0].mxu0 %v2929
        %v3104 = vpop.f32.mrb[0].mxu0
        %v3105 = vadd.f32 0.0, %v3104
        %v3106 = vpop.f32.mrb[0].mxu0
        %v3107 = vpop.f32.mrb[0].mxu0
        %v3108 = vadd.f32 0.0, %v3107
        %v3109 = vpop.f32.mrb[0].mxu0
        %3110 = vdwg.mxu0
        %v3111 = vadd.f32 %v2801, %v2969
        %v3112 = vadd.f32 %v2802, %v2972
        %v3113 = vadd.f32 %v2803, %v2977
        %v3114 = vadd.f32 %v2804, %v2980
        %v3115 = vadd.f32 %v2805, %v2985
        %v3116 = vadd.f32 %v2806, %v2988
        %v3117 = vadd.f32 %v2807, %v2993
        %v3118 = vadd.f32 %v2808, %v2996
        %v3119 = vadd.f32 %v2809, %v3001
        %v3120 = vadd.f32 %v2810, %v3004
        %v3121 = vadd.f32 %v2811, %v3009
        %v3122 = vadd.f32 %v2812, %v3012
        %v3123 = vadd.f32 %v2813, %v3017
        %v3124 = vadd.f32 %v2814, %v3020
        %v3125 = vadd.f32 %v2815, %v3025
        %v3126 = vadd.f32 %v2816, %v3028
        %v3127 = vadd.f32 %v2817, %v3033
        %v3128 = vadd.f32 %v2818, %v3036
        %v3129 = vadd.f32 %v2819, %v3041
        %v3130 = vadd.f32 %v2820, %v3044
        %v3131 = vadd.f32 %v2821, %v3049
        %v3132 = vadd.f32 %v2822, %v3052
        %v3133 = vadd.f32 %v2823, %v3057
        %v3134 = vadd.f32 %v2824, %v3060
        %v3135 = vadd.f32 %v2825, %v3065
        %v3136 = vadd.f32 %v2826, %v3068
        %v3137 = vadd.f32 %v2827, %v3073
        %v3138 = vadd.f32 %v2828, %v3076
        %v3139 = vadd.f32 %v2829, %v3081
        %v3140 = vadd.f32 %v2830, %v3084
        %v3141 = vadd.f32 %v2831, %v3089
        %v3142 = vadd.f32 %v2832, %v3092
        %v3143 = vadd.f32 %v2833, %v3097
        %v3144 = vadd.f32 %v2834, %v3100
        %v3145 = vadd.f32 %v2835, %v3105
        %v3146 = vadd.f32 %v2836, %v3108
        %v3147 = vmul.f32 %v3111, 0.2
        %v3148 = vmul.f32 %v3112, 0.2
        %v3149 = vmul.f32 %v3113, 0.2
        %v3150 = vmul.f32 %v3114, 0.2
        %v3151 = vmul.f32 %v3115, 0.2
        %v3152 = vmul.f32 %v3116, 0.2
        %v3153 = vmul.f32 %v3117, 0.2
        %v3154 = vmul.f32 %v3118, 0.2
        %v3155 = vmul.f32 %v3119, 0.2
        %v3156 = vmul.f32 %v3120, 0.2
        %v3157 = vmul.f32 %v3121, 0.2
        %v3158 = vmul.f32 %v3122, 0.2
        %v3159 = vmul.f32 %v3123, 0.2
        %v3160 = vmul.f32 %v3124, 0.2
        %v3161 = vmul.f32 %v3125, 0.2
        %v3162 = vmul.f32 %v3126, 0.2
        %v3163 = vmul.f32 %v3127, 0.2
        %v3164 = vmul.f32 %v3128, 0.2
        %v3165 = vmul.f32 %v3129, 0.2
        %v3166 = vmul.f32 %v3130, 0.2
        %v3167 = vmul.f32 %v3131, 0.2
        %v3168 = vmul.f32 %v3132, 0.2
        %v3169 = vmul.f32 %v3133, 0.2
        %v3170 = vmul.f32 %v3134, 0.2
        %v3171 = vmul.f32 %v3135, 0.2
        %v3172 = vmul.f32 %v3136, 0.2
        %v3173 = vmul.f32 %v3137, 0.2
        %v3174 = vmul.f32 %v3138, 0.2
        %v3175 = vmul.f32 %v3139, 0.2
        %v3176 = vmul.f32 %v3140, 0.2
        %v3177 = vmul.f32 %v3141, 0.2
        %v3178 = vmul.f32 %v3142, 0.2
        %v3179 = vmul.f32 %v3143, 0.2
        %v3180 = vmul.f32 %v3144, 0.2
        %v3181 = vmul.f32 %v3145, 0.2
        %v3182 = vmul.f32 %v3146, 0.2
        %v3183 = vmax.f32 %v3111, %v3147
        %v3184 = vmax.f32 %v3112, %v3148
        %v3185 = vmax.f32 %v3113, %v3149
        %v3186 = vmax.f32 %v3114, %v3150
        %v3187 = vmax.f32 %v3115, %v3151
        %v3188 = vmax.f32 %v3116, %v3152
        %v3189 = vmax.f32 %v3117, %v3153
        %v3190 = vmax.f32 %v3118, %v3154
        %v3191 = vmax.f32 %v3119, %v3155
        %v3192 = vmax.f32 %v3120, %v3156
        %v3193 = vmax.f32 %v3121, %v3157
        %v3194 = vmax.f32 %v3122, %v3158
        %v3195 = vmax.f32 %v3123, %v3159
        %v3196 = vmax.f32 %v3124, %v3160
        %v3197 = vmax.f32 %v3125, %v3161
        %v3198 = vmax.f32 %v3126, %v3162
        %v3199 = vmax.f32 %v3127, %v3163
        %v3200 = vmax.f32 %v3128, %v3164
        %v3201 = vmax.f32 %v3129, %v3165
        %v3202 = vmax.f32 %v3130, %v3166
        %v3203 = vmax.f32 %v3131, %v3167
        %v3204 = vmax.f32 %v3132, %v3168
        %v3205 = vmax.f32 %v3133, %v3169
        %v3206 = vmax.f32 %v3134, %v3170
        %v3207 = vmax.f32 %v3135, %v3171
        %v3208 = vmax.f32 %v3136, %v3172
        %v3209 = vmax.f32 %v3137, %v3173
        %v3210 = vmax.f32 %v3138, %v3174
        %v3211 = vmax.f32 %v3139, %v3175
        %v3212 = vmax.f32 %v3140, %v3176
        %v3213 = vmax.f32 %v3141, %v3177
        %v3214 = vmax.f32 %v3142, %v3178
        %v3215 = vmax.f32 %v3143, %v3179
        %v3216 = vmax.f32 %v3144, %v3180
        %v3217 = vmax.f32 %v3145, %v3181
        %v3218 = vmax.f32 %v3146, %v3182
        %3220 = vset.pattern.permute.xlu0 4
        %3221 = vperm.xlu0 %3220, %v299
        %v3222 = vpop.permute.xlu0 %3221
        %3224 = vset.pattern.permute.xlu0 4
        %3225 = vperm.xlu0 %3224, %v300
        %v3226 = vpop.permute.xlu0 %3225
        %3228 = vset.pattern.permute.xlu0 4
        %3229 = vperm.xlu0 %3228, %v301
        %v3230 = vpop.permute.xlu0 %3229
        %3232 = vset.pattern.permute.xlu0 4
        %3233 = vperm.xlu0 %3232, %v302
        %v3234 = vpop.permute.xlu0 %3233
        %3236 = vset.pattern.permute.xlu0 4
        %3237 = vperm.xlu0 %3236, %v303
        %v3238 = vpop.permute.xlu0 %3237
        %3240 = vset.pattern.permute.xlu0 4
        %3241 = vperm.xlu0 %3240, %v304
        %v3242 = vpop.permute.xlu0 %3241
        %3244 = vset.pattern.permute.xlu0 4
        %3245 = vperm.xlu0 %3244, %v305
        %v3246 = vpop.permute.xlu0 %3245
        %3248 = vset.pattern.permute.xlu0 4
        %3249 = vperm.xlu0 %3248, %v306
        %v3250 = vpop.permute.xlu0 %3249
        %3252 = vset.pattern.permute.xlu0 4
        %3253 = vperm.xlu0 %3252, %v307
        %v3254 = vpop.permute.xlu0 %3253
        %3256 = vset.pattern.permute.xlu0 4
        %3257 = vperm.xlu0 %3256, %v308
        %v3258 = vpop.permute.xlu0 %3257
        %3260 = vset.pattern.permute.xlu0 4
        %3261 = vperm.xlu0 %3260, %v309
        %v3262 = vpop.permute.xlu0 %3261
        %3264 = vset.pattern.permute.xlu0 4
        %3265 = vperm.xlu0 %3264, %v310
        %v3266 = vpop.permute.xlu0 %3265
        %3268 = vset.pattern.permute.xlu0 4
        %3269 = vperm.xlu0 %3268, %v311
        %v3270 = vpop.permute.xlu0 %3269
        %3272 = vset.pattern.permute.xlu0 4
        %3273 = vperm.xlu0 %3272, %v312
        %v3274 = vpop.permute.xlu0 %3273
        %3276 = vset.pattern.permute.xlu0 4
        %3277 = vperm.xlu0 %3276, %v313
        %v3278 = vpop.permute.xlu0 %3277
        %3280 = vset.pattern.permute.xlu0 4
        %3281 = vperm.xlu0 %3280, %v314
        %v3282 = vpop.permute.xlu0 %3281
        %3284 = vset.pattern.permute.xlu0 4
        %3285 = vperm.xlu0 %3284, %v315
        %v3286 = vpop.permute.xlu0 %3285
        %3288 = vset.pattern.permute.xlu0 4
        %3289 = vperm.xlu0 %3288, %v316
        %v3290 = vpop.permute.xlu0 %3289
        %3292 = vset.pattern.permute.xlu0 4
        %3293 = vperm.xlu0 %3292, %v317
        %v3294 = vpop.permute.xlu0 %3293
        %3296 = vset.pattern.permute.xlu0 4
        %3297 = vperm.xlu0 %3296, %v318
        %v3298 = vpop.permute.xlu0 %3297
        %3300 = vset.pattern.permute.xlu0 4
        %3301 = vperm.xlu0 %3300, %v319
        %v3302 = vpop.permute.xlu0 %3301
        %3304 = vset.pattern.permute.xlu0 4
        %3305 = vperm.xlu0 %3304, %v320
        %v3306 = vpop.permute.xlu0 %3305
        %3308 = vset.pattern.permute.xlu0 4
        %3309 = vperm.xlu0 %3308, %v321
        %v3310 = vpop.permute.xlu0 %3309
        %3312 = vset.pattern.permute.xlu0 4
        %3313 = vperm.xlu0 %3312, %v322
        %v3314 = vpop.permute.xlu0 %3313
        %3316 = vset.pattern.permute.xlu0 4
        %3317 = vperm.xlu0 %3316, %v323
        %v3318 = vpop.permute.xlu0 %3317
        %3320 = vset.pattern.permute.xlu0 4
        %3321 = vperm.xlu0 %3320, %v324
        %v3322 = vpop.permute.xlu0 %3321
        %3324 = vset.pattern.permute.xlu0 4
        %3325 = vperm.xlu0 %3324, %v325
        %v3326 = vpop.permute.xlu0 %3325
        %3328 = vset.pattern.permute.xlu0 4
        %3329 = vperm.xlu0 %3328, %v326
        %v3330 = vpop.permute.xlu0 %3329
        %3332 = vset.pattern.permute.xlu0 4
        %3333 = vperm.xlu0 %3332, %v327
        %v3334 = vpop.permute.xlu0 %3333
        %3336 = vset.pattern.permute.xlu0 4
        %3337 = vperm.xlu0 %3336, %v328
        %v3338 = vpop.permute.xlu0 %3337
        %3340 = vset.pattern.permute.xlu0 4
        %3341 = vperm.xlu0 %3340, %v329
        %v3342 = vpop.permute.xlu0 %3341
        %3344 = vset.pattern.permute.xlu0 4
        %3345 = vperm.xlu0 %3344, %v330
        %v3346 = vpop.permute.xlu0 %3345
        %3348 = vset.pattern.permute.xlu0 4
        %3349 = vperm.xlu0 %3348, %v331
        %v3350 = vpop.permute.xlu0 %3349
        %3352 = vset.pattern.permute.xlu0 4
        %3353 = vperm.xlu0 %3352, %v332
        %v3354 = vpop.permute.xlu0 %3353
        %3356 = vset.pattern.permute.xlu0 4
        %3357 = vperm.xlu0 %3356, %v333
        %v3358 = vpop.permute.xlu0 %3357
        %3360 = vset.pattern.permute.xlu0 4
        %3361 = vperm.xlu0 %3360, %v334
        %v3362 = vpop.permute.xlu0 %3361
        %3364 = vset.pattern.permute.xlu0 4
        %3365 = vperm.xlu0 %3364, %v335
        %v3366 = vpop.permute.xlu0 %3365
        %vm3367 = vcmask 1044480
        %v3368 = vrot.slane %v3222, 3
        %v3369 = vrot.slane %v3226, 3
        %v3370 = vsel %vm3367, %v3368, %v3369
        %v3371 = vrot.slane %v3230, 3
        %v3372 = vsel %vm3367, %v3369, %v3371
        %v3373 = vrot.slane %v3234, 3
        %v3374 = vsel %vm3367, %v3371, %v3373
        %v3375 = vrot.slane %v3238, 3
        %v3376 = vsel %vm3367, %v3373, %v3375
        %v3377 = vrot.slane %v3242, 3
        %v3378 = vsel %vm3367, %v3375, %v3377
        %v3379 = vrot.slane %v3246, 3
        %v3380 = vsel %vm3367, %v3377, %v3379
        %v3381 = vrot.slane %v3250, 3
        %v3382 = vsel %vm3367, %v3379, %v3381
        %v3383 = vrot.slane %v3254, 3
        %v3384 = vsel %vm3367, %v3381, %v3383
        %v3385 = vrot.slane %v3258, 3
        %v3386 = vsel %vm3367, %v3383, %v3385
        %v3387 = vrot.slane %v3262, 3
        %v3388 = vsel %vm3367, %v3385, %v3387
        %v3389 = vrot.slane %v3266, 3
        %v3390 = vsel %vm3367, %v3387, %v3389
        %v3391 = vrot.slane %v3270, 3
        %v3392 = vsel %vm3367, %v3389, %v3391
        %v3393 = vrot.slane %v3274, 3
        %v3394 = vsel %vm3367, %v3391, %v3393
        %v3395 = vrot.slane %v3278, 3
        %v3396 = vsel %vm3367, %v3393, %v3395
        %v3397 = vrot.slane %v3282, 3
        %v3398 = vsel %vm3367, %v3395, %v3397
        %v3399 = vrot.slane %v3286, 3
        %v3400 = vsel %vm3367, %v3397, %v3399
        %v3401 = vrot.slane %v3290, 3
        %v3402 = vsel %vm3367, %v3399, %v3401
        %v3403 = vrot.slane %v3294, 3
        %v3404 = vsel %vm3367, %v3401, %v3403
        %v3405 = vrot.slane %v3298, 3
        %v3406 = vsel %vm3367, %v3403, %v3405
        %v3407 = vrot.slane %v3302, 3
        %v3408 = vsel %vm3367, %v3405, %v3407
        %v3409 = vrot.slane %v3306, 3
        %v3410 = vsel %vm3367, %v3407, %v3409
        %v3411 = vrot.slane %v3310, 3
        %v3412 = vsel %vm3367, %v3409, %v3411
        %v3413 = vrot.slane %v3314, 3
        %v3414 = vsel %vm3367, %v3411, %v3413
        %v3415 = vrot.slane %v3318, 3
        %v3416 = vsel %vm3367, %v3413, %v3415
        %v3417 = vrot.slane %v3322, 3
        %v3418 = vsel %vm3367, %v3415, %v3417
        %v3419 = vrot.slane %v3326, 3
        %v3420 = vsel %vm3367, %v3417, %v3419
        %v3421 = vrot.slane %v3330, 3
        %v3422 = vsel %vm3367, %v3419, %v3421
        %v3423 = vrot.slane %v3334, 3
        %v3424 = vsel %vm3367, %v3421, %v3423
        %v3425 = vrot.slane %v3338, 3
        %v3426 = vsel %vm3367, %v3423, %v3425
        %v3427 = vrot.slane %v3342, 3
        %v3428 = vsel %vm3367, %v3425, %v3427
        %v3429 = vrot.slane %v3346, 3
        %v3430 = vsel %vm3367, %v3427, %v3429
        %v3431 = vrot.slane %v3350, 3
        %v3432 = vsel %vm3367, %v3429, %v3431
        %v3433 = vrot.slane %v3354, 3
        %v3434 = vsel %vm3367, %v3431, %v3433
        %v3435 = vrot.slane %v3358, 3
        %v3436 = vsel %vm3367, %v3433, %v3435
        %v3437 = vrot.slane %v3362, 3
        %v3438 = vsel %vm3367, %v3435, %v3437
        %v3439 = vrot.slane %v3366, 3
        %v3440 = vsel %vm3367, %v3437, %v3439
        %v3477 = vmul.f32 %v3183, %v3370
        %v3478 = vmul.f32 %v3184, %v3372
        %v3479 = vmul.f32 %v3185, %v3374
        %v3480 = vmul.f32 %v3186, %v3376
        %v3481 = vmul.f32 %v3187, %v3378
        %v3482 = vmul.f32 %v3188, %v3380
        %v3483 = vmul.f32 %v3189, %v3382
        %v3484 = vmul.f32 %v3190, %v3384
        %v3485 = vmul.f32 %v3191, %v3386
        %v3486 = vmul.f32 %v3192, %v3388
        %v3487 = vmul.f32 %v3193, %v3390
        %v3488 = vmul.f32 %v3194, %v3392
        %v3489 = vmul.f32 %v3195, %v3394
        %v3490 = vmul.f32 %v3196, %v3396
        %v3491 = vmul.f32 %v3197, %v3398
        %v3492 = vmul.f32 %v3198, %v3400
        %v3493 = vmul.f32 %v3199, %v3402
        %v3494 = vmul.f32 %v3200, %v3404
        %v3495 = vmul.f32 %v3201, %v3406
        %v3496 = vmul.f32 %v3202, %v3408
        %v3497 = vmul.f32 %v3203, %v3410
        %v3498 = vmul.f32 %v3204, %v3412
        %v3499 = vmul.f32 %v3205, %v3414
        %v3500 = vmul.f32 %v3206, %v3416
        %v3501 = vmul.f32 %v3207, %v3418
        %v3502 = vmul.f32 %v3208, %v3420
        %v3503 = vmul.f32 %v3209, %v3422
        %v3504 = vmul.f32 %v3210, %v3424
        %v3505 = vmul.f32 %v3211, %v3426
        %v3506 = vmul.f32 %v3212, %v3428
        %v3507 = vmul.f32 %v3213, %v3430
        %v3508 = vmul.f32 %v3214, %v3432
        %v3509 = vmul.f32 %v3215, %v3434
        %v3510 = vmul.f32 %v3216, %v3436
        %v3511 = vmul.f32 %v3217, %v3438
        %v3512 = vmul.f32 %v3218, %v3440
        %v3513 = vadd.f32 %v3477, %v3478
        %v3514 = vadd.f32 %v3513, %v3479
        %v3515 = vadd.f32 %v3514, %v3480
        %v3516 = vadd.f32 %v3515, %v3481
        %v3517 = vadd.f32 %v3516, %v3482
        %v3518 = vadd.f32 %v3517, %v3483
        %v3519 = vadd.f32 %v3518, %v3484
        %v3520 = vadd.f32 %v3519, %v3485
        %v3521 = vadd.f32 %v3520, %v3486
        %v3522 = vadd.f32 %v3521, %v3487
        %v3523 = vadd.f32 %v3522, %v3488
        %v3524 = vadd.f32 %v3523, %v3489
        %v3525 = vadd.f32 %v3524, %v3490
        %v3526 = vadd.f32 %v3525, %v3491
        %v3527 = vadd.f32 %v3526, %v3492
        %v3528 = vadd.f32 %v3527, %v3493
        %v3529 = vadd.f32 %v3528, %v3494
        %v3530 = vadd.f32 %v3529, %v3495
        %v3531 = vadd.f32 %v3530, %v3496
        %v3532 = vadd.f32 %v3531, %v3497
        %v3533 = vadd.f32 %v3532, %v3498
        %v3534 = vadd.f32 %v3533, %v3499
        %v3535 = vadd.f32 %v3534, %v3500
        %v3536 = vadd.f32 %v3535, %v3501
        %v3537 = vadd.f32 %v3536, %v3502
        %v3538 = vadd.f32 %v3537, %v3503
        %v3539 = vadd.f32 %v3538, %v3504
        %v3540 = vadd.f32 %v3539, %v3505
        %v3541 = vadd.f32 %v3540, %v3506
        %v3542 = vadd.f32 %v3541, %v3507
        %v3543 = vadd.f32 %v3542, %v3508
        %v3544 = vadd.f32 %v3543, %v3509
        %v3545 = vadd.f32 %v3544, %v3510
        %v3546 = vadd.f32 %v3545, %v3511
        %v3547 = vadd.f32 %v3546, %v3512
        %v3548 = vrot.slane %v3547, 4
        %v3549 = vadd.f32 %v3547, %v3548
        %v3550 = vrot.slane %v3549, 2
        %v3551 = vadd.f32 %v3549, %v3550
        %v3552 = vrot.slane %v3551, 1
        %v3553 = vadd.f32 %v3551, %v3552
        %v3554 = vmul.f32 %v3553, 0.00390625
        %v3555 = vsub.f32 %v3183, %v3554
        %v3556 = vsub.f32 %v3184, %v3554
        %v3557 = vsub.f32 %v3185, %v3554
        %v3558 = vsub.f32 %v3186, %v3554
        %v3559 = vsub.f32 %v3187, %v3554
        %v3560 = vsub.f32 %v3188, %v3554
        %v3561 = vsub.f32 %v3189, %v3554
        %v3562 = vsub.f32 %v3190, %v3554
        %v3563 = vsub.f32 %v3191, %v3554
        %v3564 = vsub.f32 %v3192, %v3554
        %v3565 = vsub.f32 %v3193, %v3554
        %v3566 = vsub.f32 %v3194, %v3554
        %v3567 = vsub.f32 %v3195, %v3554
        %v3568 = vsub.f32 %v3196, %v3554
        %v3569 = vsub.f32 %v3197, %v3554
        %v3570 = vsub.f32 %v3198, %v3554
        %v3571 = vsub.f32 %v3199, %v3554
        %v3572 = vsub.f32 %v3200, %v3554
        %v3573 = vsub.f32 %v3201, %v3554
        %v3574 = vsub.f32 %v3202, %v3554
        %v3575 = vsub.f32 %v3203, %v3554
        %v3576 = vsub.f32 %v3204, %v3554
        %v3577 = vsub.f32 %v3205, %v3554
        %v3578 = vsub.f32 %v3206, %v3554
        %v3579 = vsub.f32 %v3207, %v3554
        %v3580 = vsub.f32 %v3208, %v3554
        %v3581 = vsub.f32 %v3209, %v3554
        %v3582 = vsub.f32 %v3210, %v3554
        %v3583 = vsub.f32 %v3211, %v3554
        %v3584 = vsub.f32 %v3212, %v3554
        %v3585 = vsub.f32 %v3213, %v3554
        %v3586 = vsub.f32 %v3214, %v3554
        %v3587 = vsub.f32 %v3215, %v3554
        %v3588 = vsub.f32 %v3216, %v3554
        %v3589 = vsub.f32 %v3217, %v3554
        %v3590 = vsub.f32 %v3218, %v3554
        %v3591 = vmul.f32 %v3555, %v3555
        %v3592 = vmul.f32 %v3556, %v3556
        %v3593 = vmul.f32 %v3557, %v3557
        %v3594 = vmul.f32 %v3558, %v3558
        %v3595 = vmul.f32 %v3559, %v3559
        %v3596 = vmul.f32 %v3560, %v3560
        %v3597 = vmul.f32 %v3561, %v3561
        %v3598 = vmul.f32 %v3562, %v3562
        %v3599 = vmul.f32 %v3563, %v3563
        %v3600 = vmul.f32 %v3564, %v3564
        %v3601 = vmul.f32 %v3565, %v3565
        %v3602 = vmul.f32 %v3566, %v3566
        %v3603 = vmul.f32 %v3567, %v3567
        %v3604 = vmul.f32 %v3568, %v3568
        %v3605 = vmul.f32 %v3569, %v3569
        %v3606 = vmul.f32 %v3570, %v3570
        %v3607 = vmul.f32 %v3571, %v3571
        %v3608 = vmul.f32 %v3572, %v3572
        %v3609 = vmul.f32 %v3573, %v3573
        %v3610 = vmul.f32 %v3574, %v3574
        %v3611 = vmul.f32 %v3575, %v3575
        %v3612 = vmul.f32 %v3576, %v3576
        %v3613 = vmul.f32 %v3577, %v3577
        %v3614 = vmul.f32 %v3578, %v3578
        %v3615 = vmul.f32 %v3579, %v3579
        %v3616 = vmul.f32 %v3580, %v3580
        %v3617 = vmul.f32 %v3581, %v3581
        %v3618 = vmul.f32 %v3582, %v3582
        %v3619 = vmul.f32 %v3583, %v3583
        %v3620 = vmul.f32 %v3584, %v3584
        %v3621 = vmul.f32 %v3585, %v3585
        %v3622 = vmul.f32 %v3586, %v3586
        %v3623 = vmul.f32 %v3587, %v3587
        %v3624 = vmul.f32 %v3588, %v3588
        %v3625 = vmul.f32 %v3589, %v3589
        %v3626 = vmul.f32 %v3590, %v3590
        %v3627 = vmul.f32 %v3591, %v3370
        %v3628 = vmul.f32 %v3592, %v3372
        %v3629 = vmul.f32 %v3593, %v3374
        %v3630 = vmul.f32 %v3594, %v3376
        %v3631 = vmul.f32 %v3595, %v3378
        %v3632 = vmul.f32 %v3596, %v3380
        %v3633 = vmul.f32 %v3597, %v3382
        %v3634 = vmul.f32 %v3598, %v3384
        %v3635 = vmul.f32 %v3599, %v3386
        %v3636 = vmul.f32 %v3600, %v3388
        %v3637 = vmul.f32 %v3601, %v3390
        %v3638 = vmul.f32 %v3602, %v3392
        %v3639 = vmul.f32 %v3603, %v3394
        %v3640 = vmul.f32 %v3604, %v3396
        %v3641 = vmul.f32 %v3605, %v3398
        %v3642 = vmul.f32 %v3606, %v3400
        %v3643 = vmul.f32 %v3607, %v3402
        %v3644 = vmul.f32 %v3608, %v3404
        %v3645 = vmul.f32 %v3609, %v3406
        %v3646 = vmul.f32 %v3610, %v3408
        %v3647 = vmul.f32 %v3611, %v3410
        %v3648 = vmul.f32 %v3612, %v3412
        %v3649 = vmul.f32 %v3613, %v3414
        %v3650 = vmul.f32 %v3614, %v3416
        %v3651 = vmul.f32 %v3615, %v3418
        %v3652 = vmul.f32 %v3616, %v3420
        %v3653 = vmul.f32 %v3617, %v3422
        %v3654 = vmul.f32 %v3618, %v3424
        %v3655 = vmul.f32 %v3619, %v3426
        %v3656 = vmul.f32 %v3620, %v3428
        %v3657 = vmul.f32 %v3621, %v3430
        %v3658 = vmul.f32 %v3622, %v3432
        %v3659 = vmul.f32 %v3623, %v3434
        %v3660 = vmul.f32 %v3624, %v3436
        %v3661 = vmul.f32 %v3625, %v3438
        %v3662 = vmul.f32 %v3626, %v3440
        %v3663 = vadd.f32 %v3627, %v3628
        %v3664 = vadd.f32 %v3663, %v3629
        %v3665 = vadd.f32 %v3664, %v3630
        %v3666 = vadd.f32 %v3665, %v3631
        %v3667 = vadd.f32 %v3666, %v3632
        %v3668 = vadd.f32 %v3667, %v3633
        %v3669 = vadd.f32 %v3668, %v3634
        %v3670 = vadd.f32 %v3669, %v3635
        %v3671 = vadd.f32 %v3670, %v3636
        %v3672 = vadd.f32 %v3671, %v3637
        %v3673 = vadd.f32 %v3672, %v3638
        %v3674 = vadd.f32 %v3673, %v3639
        %v3675 = vadd.f32 %v3674, %v3640
        %v3676 = vadd.f32 %v3675, %v3641
        %v3677 = vadd.f32 %v3676, %v3642
        %v3678 = vadd.f32 %v3677, %v3643
        %v3679 = vadd.f32 %v3678, %v3644
        %v3680 = vadd.f32 %v3679, %v3645
        %v3681 = vadd.f32 %v3680, %v3646
        %v3682 = vadd.f32 %v3681, %v3647
        %v3683 = vadd.f32 %v3682, %v3648
        %v3684 = vadd.f32 %v3683, %v3649
        %v3685 = vadd.f32 %v3684, %v3650
        %v3686 = vadd.f32 %v3685, %v3651
        %v3687 = vadd.f32 %v3686, %v3652
        %v3688 = vadd.f32 %v3687, %v3653
        %v3689 = vadd.f32 %v3688, %v3654
        %v3690 = vadd.f32 %v3689, %v3655
        %v3691 = vadd.f32 %v3690, %v3656
        %v3692 = vadd.f32 %v3691, %v3657
        %v3693 = vadd.f32 %v3692, %v3658
        %v3694 = vadd.f32 %v3693, %v3659
        %v3695 = vadd.f32 %v3694, %v3660
        %v3696 = vadd.f32 %v3695, %v3661
        %v3697 = vadd.f32 %v3696, %v3662
        %v3698 = vrot.slane %v3697, 4
        %v3699 = vadd.f32 %v3697, %v3698
        %v3700 = vrot.slane %v3699, 2
        %v3701 = vadd.f32 %v3699, %v3700
        %v3702 = vrot.slane %v3701, 1
        %v3703 = vadd.f32 %v3701, %v3702
        %v3704 = vmul.f32 %v3703, 0.00390625
        %v3705 = vadd.f32 %v3704, 1e-05
        %v3706 = vrsqrt.pop %v3705
        %v3707 = vmul.f32 %v3555, %v3706
        %v3708 = vmul.f32 %v3556, %v3706
        %v3709 = vmul.f32 %v3557, %v3706
        %v3710 = vmul.f32 %v3558, %v3706
        %v3711 = vmul.f32 %v3559, %v3706
        %v3712 = vmul.f32 %v3560, %v3706
        %v3713 = vmul.f32 %v3561, %v3706
        %v3714 = vmul.f32 %v3562, %v3706
        %v3715 = vmul.f32 %v3563, %v3706
        %v3716 = vmul.f32 %v3564, %v3706
        %v3717 = vmul.f32 %v3565, %v3706
        %v3718 = vmul.f32 %v3566, %v3706
        %v3719 = vmul.f32 %v3567, %v3706
        %v3720 = vmul.f32 %v3568, %v3706
        %v3721 = vmul.f32 %v3569, %v3706
        %v3722 = vmul.f32 %v3570, %v3706
        %v3723 = vmul.f32 %v3571, %v3706
        %v3724 = vmul.f32 %v3572, %v3706
        %v3725 = vmul.f32 %v3573, %v3706
        %v3726 = vmul.f32 %v3574, %v3706
        %v3727 = vmul.f32 %v3575, %v3706
        %v3728 = vmul.f32 %v3576, %v3706
        %v3729 = vmul.f32 %v3577, %v3706
        %v3730 = vmul.f32 %v3578, %v3706
        %v3731 = vmul.f32 %v3579, %v3706
        %v3732 = vmul.f32 %v3580, %v3706
        %v3733 = vmul.f32 %v3581, %v3706
        %v3734 = vmul.f32 %v3582, %v3706
        %v3735 = vmul.f32 %v3583, %v3706
        %v3736 = vmul.f32 %v3584, %v3706
        %v3737 = vmul.f32 %v3585, %v3706
        %v3738 = vmul.f32 %v3586, %v3706
        %v3739 = vmul.f32 %v3587, %v3706
        %v3740 = vmul.f32 %v3588, %v3706
        %v3741 = vmul.f32 %v3589, %v3706
        %v3742 = vmul.f32 %v3590, %v3706
        %v3743 = vlaneseq
        %v3744 = vshrl.u32 %v3743, 7
        %v3745 = vsub.s32 0, %v3744
        %v3746 = vrot.slane %v297, %v3745
        %v3747 = vmul.f32 %v3746, %v3707
        %v3748 = vmul.f32 %v3746, %v3708
        %v3749 = vmul.f32 %v3746, %v3709
        %v3750 = vmul.f32 %v3746, %v3710
        %v3751 = vmul.f32 %v3746, %v3711
        %v3752 = vmul.f32 %v3746, %v3712
        %v3753 = vmul.f32 %v3746, %v3713
        %v3754 = vmul.f32 %v3746, %v3714
        %v3755 = vmul.f32 %v3746, %v3715
        %v3756 = vmul.f32 %v3746, %v3716
        %v3757 = vmul.f32 %v3746, %v3717
        %v3758 = vmul.f32 %v3746, %v3718
        %v3759 = vmul.f32 %v3746, %v3719
        %v3760 = vmul.f32 %v3746, %v3720
        %v3761 = vmul.f32 %v3746, %v3721
        %v3762 = vmul.f32 %v3746, %v3722
        %v3763 = vmul.f32 %v3746, %v3723
        %v3764 = vmul.f32 %v3746, %v3724
        %v3765 = vmul.f32 %v3746, %v3725
        %v3766 = vmul.f32 %v3746, %v3726
        %v3767 = vmul.f32 %v3746, %v3727
        %v3768 = vmul.f32 %v3746, %v3728
        %v3769 = vmul.f32 %v3746, %v3729
        %v3770 = vmul.f32 %v3746, %v3730
        %v3771 = vmul.f32 %v3746, %v3731
        %v3772 = vmul.f32 %v3746, %v3732
        %v3773 = vmul.f32 %v3746, %v3733
        %v3774 = vmul.f32 %v3746, %v3734
        %v3775 = vmul.f32 %v3746, %v3735
        %v3776 = vmul.f32 %v3746, %v3736
        %v3777 = vmul.f32 %v3746, %v3737
        %v3778 = vmul.f32 %v3746, %v3738
        %v3779 = vmul.f32 %v3746, %v3739
        %v3780 = vmul.f32 %v3746, %v3740
        %v3781 = vmul.f32 %v3746, %v3741
        %v3782 = vmul.f32 %v3746, %v3742
        %v3783 = vlaneseq
        %v3784 = vshrl.u32 %v3783, 7
        %v3785 = vsub.s32 1, %v3784
        %v3786 = vrot.slane %v297, %v3785
        %v3787 = vadd.f32 %v3747, %v3786
        %v3788 = vadd.f32 %v3748, %v3786
        %v3789 = vadd.f32 %v3749, %v3786
        %v3790 = vadd.f32 %v3750, %v3786
        %v3791 = vadd.f32 %v3751, %v3786
        %v3792 = vadd.f32 %v3752, %v3786
        %v3793 = vadd.f32 %v3753, %v3786
        %v3794 = vadd.f32 %v3754, %v3786
        %v3795 = vadd.f32 %v3755, %v3786
        %v3796 = vadd.f32 %v3756, %v3786
        %v3797 = vadd.f32 %v3757, %v3786
        %v3798 = vadd.f32 %v3758, %v3786
        %v3799 = vadd.f32 %v3759, %v3786
        %v3800 = vadd.f32 %v3760, %v3786
        %v3801 = vadd.f32 %v3761, %v3786
        %v3802 = vadd.f32 %v3762, %v3786
        %v3803 = vadd.f32 %v3763, %v3786
        %v3804 = vadd.f32 %v3764, %v3786
        %v3805 = vadd.f32 %v3765, %v3786
        %v3806 = vadd.f32 %v3766, %v3786
        %v3807 = vadd.f32 %v3767, %v3786
        %v3808 = vadd.f32 %v3768, %v3786
        %v3809 = vadd.f32 %v3769, %v3786
        %v3810 = vadd.f32 %v3770, %v3786
        %v3811 = vadd.f32 %v3771, %v3786
        %v3812 = vadd.f32 %v3772, %v3786
        %v3813 = vadd.f32 %v3773, %v3786
        %v3814 = vadd.f32 %v3774, %v3786
        %v3815 = vadd.f32 %v3775, %v3786
        %v3816 = vadd.f32 %v3776, %v3786
        %v3817 = vadd.f32 %v3777, %v3786
        %v3818 = vadd.f32 %v3778, %v3786
        %v3819 = vadd.f32 %v3779, %v3786
        %v3820 = vadd.f32 %v3780, %v3786
        %v3821 = vadd.f32 %v3781, %v3786
        %v3822 = vadd.f32 %v3782, %v3786
        %3823 = vst [vmem:[#allocation2] sm:$0xff] 0
        %3824 = vst [vmem:[#allocation2 + $0x8] sm:$0xff] 0
        %3825 = vst [vmem:[#allocation2 + $0xa0] sm:$0xff] 0
        %3826 = vst [vmem:[#allocation2 + $0xa8] sm:$0xff] 0
        %v3827 = vmul.f32 %v3787, %v3370
        %v3828 = vmul.f32 %v3788, %v3372
        %v3829 = vmul.f32 %v3789, %v3374
        %v3830 = vmul.f32 %v3790, %v3376
        %v3831 = vmul.f32 %v3791, %v3378
        %v3832 = vmul.f32 %v3792, %v3380
        %v3833 = vmul.f32 %v3793, %v3382
        %v3834 = vmul.f32 %v3794, %v3384
        %v3835 = vmul.f32 %v3795, %v3386
        %v3836 = vmul.f32 %v3796, %v3388
        %v3837 = vmul.f32 %v3797, %v3390
        %v3838 = vmul.f32 %v3798, %v3392
        %v3839 = vmul.f32 %v3799, %v3394
        %v3840 = vmul.f32 %v3800, %v3396
        %v3841 = vmul.f32 %v3801, %v3398
        %v3842 = vmul.f32 %v3802, %v3400
        %v3843 = vmul.f32 %v3803, %v3402
        %v3844 = vmul.f32 %v3804, %v3404
        %v3845 = vmul.f32 %v3805, %v3406
        %v3846 = vmul.f32 %v3806, %v3408
        %v3847 = vmul.f32 %v3807, %v3410
        %v3848 = vmul.f32 %v3808, %v3412
        %v3849 = vmul.f32 %v3809, %v3414
        %v3850 = vmul.f32 %v3810, %v3416
        %v3851 = vmul.f32 %v3811, %v3418
        %v3852 = vmul.f32 %v3812, %v3420
        %v3853 = vmul.f32 %v3813, %v3422
        %v3854 = vmul.f32 %v3814, %v3424
        %v3855 = vmul.f32 %v3815, %v3426
        %v3856 = vmul.f32 %v3816, %v3428
        %v3857 = vmul.f32 %v3817, %v3430
        %v3858 = vmul.f32 %v3818, %v3432
        %v3859 = vmul.f32 %v3819, %v3434
        %v3860 = vmul.f32 %v3820, %v3436
        %v3861 = vmul.f32 %v3821, %v3438
        %v3862 = vmul.f32 %v3822, %v3440
        %v3863 = vpack.c.bf16 %v3828, %v3827
        %v3864 = vpack.c.bf16 %v3830, %v3829
        %v3865 = vpack.c.bf16 %v3832, %v3831
        %v3866 = vpack.c.bf16 %v3834, %v3833
        %v3867 = vpack.c.bf16 %v3836, %v3835
        %v3868 = vpack.c.bf16 %v3838, %v3837
        %v3869 = vpack.c.bf16 %v3840, %v3839
        %v3870 = vpack.c.bf16 %v3842, %v3841
        %v3871 = vpack.c.bf16 %v3844, %v3843
        %v3872 = vpack.c.bf16 %v3846, %v3845
        %v3873 = vpack.c.bf16 %v3848, %v3847
        %v3874 = vpack.c.bf16 %v3850, %v3849
        %v3875 = vpack.c.bf16 %v3852, %v3851
        %v3876 = vpack.c.bf16 %v3854, %v3853
        %v3877 = vpack.c.bf16 %v3856, %v3855
        %v3878 = vpack.c.bf16 %v3858, %v3857
        %v3879 = vpack.c.bf16 %v3860, %v3859
        %v3880 = vpack.c.bf16 %v3862, %v3861
        %3881 = vst [vmem:[#allocation2 + $0x10] sm:$0xff] %v3863
        %3882 = vst [vmem:[#allocation2 + $0x18] sm:$0xff] %v3864
        %3883 = vst [vmem:[#allocation2 + $0x20] sm:$0xff] %v3865
        %3884 = vst [vmem:[#allocation2 + $0x28] sm:$0xff] %v3866
        %3885 = vst [vmem:[#allocation2 + $0x30] sm:$0xff] %v3867
        %3886 = vst [vmem:[#allocation2 + $0x38] sm:$0xff] %v3868
        %3887 = vst [vmem:[#allocation2 + $0x40] sm:$0xff] %v3869
        %3888 = vst [vmem:[#allocation2 + $0x48] sm:$0xff] %v3870
        %3889 = vst [vmem:[#allocation2 + $0x50] sm:$0xff] %v3871
        %3890 = vst [vmem:[#allocation2 + $0x58] sm:$0xff] %v3872
        %3891 = vst [vmem:[#allocation2 + $0x60] sm:$0xff] %v3873
        %3892 = vst [vmem:[#allocation2 + $0x68] sm:$0xff] %v3874
        %3893 = vst [vmem:[#allocation2 + $0x70] sm:$0xff] %v3875
        %3894 = vst [vmem:[#allocation2 + $0x78] sm:$0xff] %v3876
        %3895 = vst [vmem:[#allocation2 + $0x80] sm:$0xff] %v3877
        %3896 = vst [vmem:[#allocation2 + $0x88] sm:$0xff] %v3878
        %3897 = vst [vmem:[#allocation2 + $0x90] sm:$0xff] %v3879
        %3898 = vst [vmem:[#allocation2 + $0x98] sm:$0xff] %v3880
        %v3899 = vld [vmem:[#allocation2] sm:$0xc0]
        %v3900 = vld [vmem:[#allocation2 + $0x8] sm:$0xff]
        %v3901 = vld [vmem:[#allocation2 + $0x10] sm:$0xff]
        %v3902 = vld [vmem:[#allocation2 + $0x18] sm:$0xff]
        %v3903 = vld [vmem:[#allocation2 + $0x20] sm:$0xff]
        %v3904 = vld [vmem:[#allocation2 + $0x28] sm:$0xff]
        %v3905 = vld [vmem:[#allocation2 + $0x30] sm:$0xff]
        %v3906 = vld [vmem:[#allocation2 + $0x38] sm:$0xff]
        %v3907 = vld [vmem:[#allocation2 + $0x40] sm:$0xff]
        %v3908 = vld [vmem:[#allocation2 + $0x48] sm:$0xff]
        %v3909 = vld [vmem:[#allocation2 + $0x50] sm:$0xff]
        %v3910 = vld [vmem:[#allocation2 + $0x58] sm:$0xff]
        %v3911 = vld [vmem:[#allocation2 + $0x60] sm:$0xff]
        %v3912 = vld [vmem:[#allocation2 + $0x68] sm:$0xff]
        %v3913 = vld [vmem:[#allocation2 + $0x70] sm:$0xff]
        %v3914 = vld [vmem:[#allocation2 + $0x78] sm:$0xff]
        %v3915 = vld [vmem:[#allocation2 + $0x80] sm:$0xff]
        %v3916 = vld [vmem:[#allocation2 + $0x88] sm:$0xff]
        %v3917 = vld [vmem:[#allocation2 + $0x90] sm:$0x7f]
        %v3918 = vld [vmem:[#allocation3] sm:$0xf]
        %v3919 = vld [vmem:[#allocation3 + $0x4] sm:$0xf]
        %v3920 = vld [vmem:[#allocation3 + $0x8] sm:$0xf]
        %v3921 = vld [vmem:[#allocation3 + $0xc] sm:$0xf]
        %v3922 = vld [vmem:[#allocation3 + $0x10] sm:$0xf]
        %v3923 = vld [vmem:[#allocation3 + $0x14] sm:$0xf]
        %v3924 = vld [vmem:[#allocation3 + $0x18] sm:$0xf]
        %v3925 = vld [vmem:[#allocation3 + $0x1c] sm:$0xf]
        %v3926 = vld [vmem:[#allocation3 + $0x20] sm:$0xf]
        %v3927 = vld [vmem:[#allocation3 + $0x24] sm:$0xf]
        %v3928 = vld [vmem:[#allocation3 + $0x28] sm:$0xf]
        %v3929 = vld [vmem:[#allocation3 + $0x2c] sm:$0xf]
        %v3930 = vld [vmem:[#allocation3 + $0x30] sm:$0xf]
        %v3931 = vld [vmem:[#allocation3 + $0x34] sm:$0xf]
        %v3932 = vld [vmem:[#allocation3 + $0x38] sm:$0xf]
        %v3933 = vld [vmem:[#allocation3 + $0x3c] sm:$0xf]
        %v3934 = vld [vmem:[#allocation2] sm:$0x80]
        %s3935 = scalar_lea.vmem [#allocation3], 64
        %v3936 = vld [vmem:[%s3935] sm:$0xf]
        %v3937 = vld [vmem:[%s3935 + $0x4] sm:$0xf]
        %v3938 = vld [vmem:[%s3935 + $0x8] sm:$0xf]
        %v3939 = vld [vmem:[%s3935 + $0xc] sm:$0xf]
        %v3940 = vld [vmem:[%s3935 + $0x10] sm:$0xf]
        %v3941 = vld [vmem:[%s3935 + $0x14] sm:$0xf]
        %v3942 = vld [vmem:[%s3935 + $0x18] sm:$0xf]
        %v3943 = vld [vmem:[%s3935 + $0x1c] sm:$0xf]
        %v3944 = vld [vmem:[%s3935 + $0x20] sm:$0xf]
        %v3945 = vld [vmem:[%s3935 + $0x24] sm:$0xf]
        %v3946 = vld [vmem:[%s3935 + $0x28] sm:$0xf]
        %v3947 = vld [vmem:[%s3935 + $0x2c] sm:$0xf]
        %v3948 = vld [vmem:[%s3935 + $0x30] sm:$0xf]
        %v3949 = vld [vmem:[%s3935 + $0x34] sm:$0xf]
        %v3950 = vld [vmem:[%s3935 + $0x38] sm:$0xf]
        %v3951 = vld [vmem:[%s3935 + $0x3c] sm:$0xf]
        %vm3971 = vcmask 1040384
        %v3972 = vrot.slane %v3934, 7
        %v3973 = vrot.slane %v3900, 7
        %v3974 = vsel %vm3971, %v3972, %v3973
        %v3975 = vrot.slane %v3901, 7
        %v3976 = vsel %vm3971, %v3973, %v3975
        %v3977 = vrot.slane %v3902, 7
        %v3978 = vsel %vm3971, %v3975, %v3977
        %v3979 = vrot.slane %v3903, 7
        %v3980 = vsel %vm3971, %v3977, %v3979
        %v3981 = vrot.slane %v3904, 7
        %v3982 = vsel %vm3971, %v3979, %v3981
        %v3983 = vrot.slane %v3905, 7
        %v3984 = vsel %vm3971, %v3981, %v3983
        %v3985 = vrot.slane %v3906, 7
        %v3986 = vsel %vm3971, %v3983, %v3985
        %v3987 = vrot.slane %v3907, 7
        %v3988 = vsel %vm3971, %v3985, %v3987
        %v3989 = vrot.slane %v3908, 7
        %v3990 = vsel %vm3971, %v3987, %v3989
        %v3991 = vrot.slane %v3909, 7
        %v3992 = vsel %vm3971, %v3989, %v3991
        %v3993 = vrot.slane %v3910, 7
        %v3994 = vsel %vm3971, %v3991, %v3993
        %v3995 = vrot.slane %v3911, 7
        %v3996 = vsel %vm3971, %v3993, %v3995
        %v3997 = vrot.slane %v3912, 7
        %v3998 = vsel %vm3971, %v3995, %v3997
        %v3999 = vrot.slane %v3913, 7
        %v4000 = vsel %vm3971, %v3997, %v3999
        %v4001 = vrot.slane %v3914, 7
        %v4002 = vsel %vm3971, %v3999, %v4001
        %v4003 = vrot.slane %v3915, 7
        %v4004 = vsel %vm3971, %v4001, %v4003
        %v4005 = vrot.slane %v3916, 7
        %v4006 = vsel %vm3971, %v4003, %v4005
        %v4007 = vrot.slane %v3917, 7
        %v4008 = vsel %vm3971, %v4005, %v4007
        %v4043 = vunpack.c.l.b16 %v3936
        %v4044 = vunpack.c.l.b16 %v3937
        %v4045 = vunpack.c.l.b16 %v3938
        %v4046 = vunpack.c.l.b16 %v3939
        %v4047 = vunpack.c.l.b16 %v3940
        %v4048 = vunpack.c.l.b16 %v3941
        %v4049 = vunpack.c.l.b16 %v3942
        %v4050 = vunpack.c.l.b16 %v3943
        %v4051 = vunpack.c.l.b16 %v3944
        %v4052 = vunpack.c.l.b16 %v3945
        %v4053 = vunpack.c.l.b16 %v3946
        %v4054 = vunpack.c.l.b16 %v3947
        %v4055 = vunpack.c.l.b16 %v3948
        %v4056 = vunpack.c.l.b16 %v3949
        %v4057 = vunpack.c.l.b16 %v3950
        %v4058 = vunpack.c.l.b16 %v3951
        %v4059 = vpack.c.b16 %v4044, %v4043
        %v4060 = vpack.c.b16 %v4046, %v4045
        %v4061 = vpack.c.b16 %v4048, %v4047
        %v4062 = vpack.c.b16 %v4050, %v4049
        %v4063 = vpack.c.b16 %v4052, %v4051
        %v4064 = vpack.c.b16 %v4054, %v4053
        %v4065 = vpack.c.b16 %v4056, %v4055
        %v4066 = vpack.c.b16 %v4058, %v4057
        %4075 = vmatprep.subr.bf16.mxu0 0
        %4076 = vmatpush1.bf16.msra.mxu0 %v4059
        %4077 = vmatprep.subr.bf16.mxu0 0
        %4078 = vmatpush1.bf16.msra.mxu0 %v4060
        %4079 = vmatprep.subr.bf16.mxu0 0
        %4080 = vmatpush1.bf16.msra.mxu0 %v4061
        %4081 = vmatprep.subr.bf16.mxu0 0
        %4082 = vmatpush1.bf16.msra.mxu0 %v4062
        %4083 = vmatprep.subr.bf16.mxu0 0
        %4084 = vmatpush1.bf16.msra.mxu0 %v4063
        %4085 = vmatprep.subr.bf16.mxu0 0
        %4086 = vmatpush1.bf16.msra.mxu0 %v4064
        %4087 = vmatprep.subr.bf16.mxu0 0
        %4088 = vmatpush1.bf16.msra.mxu0 %v4065
        %4089 = vmatprep.subr.bf16.mxu0 0
        %4090 = vmatpush1.bf16.msra.mxu0 %v4066
        %4091 = vmatprep.subr.bf16.mxu0 0
        %4092 = vmatpush1.bf16.msra.mxu0 0
        %4093 = vmatprep.subr.bf16.mxu0 0
        %4094 = vmatpush1.bf16.msra.mxu0 0
        %4095 = vmatprep.subr.bf16.mxu0 0
        %4096 = vmatpush1.bf16.msra.mxu0 0
        %4097 = vmatprep.subr.bf16.mxu0 0
        %4098 = vmatpush1.bf16.msra.mxu0 0
        %4099 = vmatprep.subr.bf16.mxu0 0
        %4100 = vmatpush1.bf16.msra.mxu0 0
        %4101 = vmatprep.subr.bf16.mxu0 0
        %4102 = vmatpush1.bf16.msra.mxu0 0
        %4103 = vmatprep.subr.bf16.mxu0 0
        %4104 = vmatpush1.bf16.msra.mxu0 0
        %4105 = vmatprep.subr.bf16.mxu0 0
        %4106 = vmatpush1.bf16.msra.mxu0 0
        %4107 = vmatprep.mubr.bf16.mxu0 0
        %4108 = vmatmul.mubr.bf16.gmra.mrb[0].mxu0 %v3974
        %v4109 = vpop.f32.mrb[0].mxu0
        %v4110 = vadd.f32 0.0, %v4109
        %v4111 = vpop.f32.mrb[0].mxu0
        %v4112 = vpop.f32.mrb[0].mxu0
        %v4113 = vadd.f32 0.0, %v4112
        %v4114 = vpop.f32.mrb[0].mxu0
        %4115 = vmatprep.mubr.bf16.mxu0 0
        %4116 = vmatmul.mubr.bf16.gmra.mrb[0].mxu0 %v3976
        %v4117 = vpop.f32.mrb[0].mxu0
        %v4118 = vadd.f32 0.0, %v4117
        %v4119 = vpop.f32.mrb[0].mxu0
        %v4120 = vpop.f32.mrb[0].mxu0
        %v4121 = vadd.f32 0.0, %v4120
        %v4122 = vpop.f32.mrb[0].mxu0
        %4123 = vmatprep.mubr.bf16.mxu0 0
        %4124 = vmatmul.mubr.bf16.gmra.mrb[0].mxu0 %v3978
        %v4125 = vpop.f32.mrb[0].mxu0
        %v4126 = vadd.f32 0.0, %v4125
        %v4127 = vpop.f32.mrb[0].mxu0
        %v4128 = vpop.f32.mrb[0].mxu0
        %v4129 = vadd.f32 0.0, %v4128
        %v4130 = vpop.f32.mrb[0].mxu0
        %4131 = vmatprep.mubr.bf16.mxu0 0
        %4132 = vmatmul.mubr.bf16.gmra.mrb[0].mxu0 %v3980
        %v4133 = vpop.f32.mrb[0].mxu0
        %v4134 = vadd.f32 0.0, %v4133
        %v4135 = vpop.f32.mrb[0].mxu0
        %v4136 = vpop.f32.mrb[0].mxu0
        %v4137 = vadd.f32 0.0, %v4136
        %v4138 = vpop.f32.mrb[0].mxu0
        %4139 = vmatprep.mubr.bf16.mxu0 0
        %4140 = vmatmul.mubr.bf16.gmra.mrb[0].mxu0 %v3982
        %v4141 = vpop.f32.mrb[0].mxu0
        %v4142 = vadd.f32 0.0, %v4141
        %v4143 = vpop.f32.mrb[0].mxu0
        %v4144 = vpop.f32.mrb[0].mxu0
        %v4145 = vadd.f32 0.0, %v4144
        %v4146 = vpop.f32.mrb[0].mxu0
        %4147 = vmatprep.mubr.bf16.mxu0 0
        %4148 = vmatmul.mubr.bf16.gmra.mrb[0].mxu0 %v3984
        %v4149 = vpop.f32.mrb[0].mxu0
        %v4150 = vadd.f32 0.0, %v4149
        %v4151 = vpop.f32.mrb[0].mxu0
        %v4152 = vpop.f32.mrb[0].mxu0
        %v4153 = vadd.f32 0.0, %v4152
        %v4154 = vpop.f32.mrb[0].mxu0
        %4155 = vmatprep.mubr.bf16.mxu0 0
        %4156 = vmatmul.mubr.bf16.gmra.mrb[0].mxu0 %v3986
        %v4157 = vpop.f32.mrb[0].mxu0
        %v4158 = vadd.f32 0.0, %v4157
        %v4159 = vpop.f32.mrb[0].mxu0
        %v4160 = vpop.f32.mrb[0].mxu0
        %v4161 = vadd.f32 0.0, %v4160
        %v4162 = vpop.f32.mrb[0].mxu0
        %4163 = vmatprep.mubr.bf16.mxu0 0
        %4164 = vmatmul.mubr.bf16.gmra.mrb[0].mxu0 %v3988
        %v4165 = vpop.f32.mrb[0].mxu0
        %v4166 = vadd.f32 0.0, %v4165
        %v4167 = vpop.f32.mrb[0].mxu0
        %v4168 = vpop.f32.mrb[0].mxu0
        %v4169 = vadd.f32 0.0, %v4168
        %v4170 = vpop.f32.mrb[0].mxu0
        %4171 = vmatprep.mubr.bf16.mxu0 0
        %4172 = vmatmul.mubr.bf16.gmra.mrb[0].mxu0 %v3990
        %v4173 = vpop.f32.mrb[0].mxu0
        %v4174 = vadd.f32 0.0, %v4173
        %v4175 = vpop.f32.mrb[0].mxu0
        %v4176 = vpop.f32.mrb[0].mxu0
        %v4177 = vadd.f32 0.0, %v4176
        %v4178 = vpop.f32.mrb[0].mxu0
        %4179 = vmatprep.mubr.bf16.mxu0 0
        %4180 = vmatmul.mubr.bf16.gmra.mrb[0].mxu0 %v3992
        %v4181 = vpop.f32.mrb[0].mxu0
        %v4182 = vadd.f32 0.0, %v4181
        %v4183 = vpop.f32.mrb[0].mxu0
        %v4184 = vpop.f32.mrb[0].mxu0
        %v4185 = vadd.f32 0.0, %v4184
        %v4186 = vpop.f32.mrb[0].mxu0
        %4187 = vmatprep.mubr.bf16.mxu0 0
        %4188 = vmatmul.mubr.bf16.gmra.mrb[0].mxu0 %v3994
        %v4189 = vpop.f32.mrb[0].mxu0
        %v4190 = vadd.f32 0.0, %v4189
        %v4191 = vpop.f32.mrb[0].mxu0
        %v4192 = vpop.f32.mrb[0].mxu0
        %v4193 = vadd.f32 0.0, %v4192
        %v4194 = vpop.f32.mrb[0].mxu0
        %4195 = vmatprep.mubr.bf16.mxu0 0
        %4196 = vmatmul.mubr.bf16.gmra.mrb[0].mxu0 %v3996
        %v4197 = vpop.f32.mrb[0].mxu0
        %v4198 = vadd.f32 0.0, %v4197
        %v4199 = vpop.f32.mrb[0].mxu0
        %v4200 = vpop.f32.mrb[0].mxu0
        %v4201 = vadd.f32 0.0, %v4200
        %v4202 = vpop.f32.mrb[0].mxu0
        %4203 = vmatprep.mubr.bf16.mxu0 0
        %4204 = vmatmul.mubr.bf16.gmra.mrb[0].mxu0 %v3998
        %v4205 = vpop.f32.mrb[0].mxu0
        %v4206 = vadd.f32 0.0, %v4205
        %v4207 = vpop.f32.mrb[0].mxu0
        %v4208 = vpop.f32.mrb[0].mxu0
        %v4209 = vadd.f32 0.0, %v4208
        %v4210 = vpop.f32.mrb[0].mxu0
        %4211 = vmatprep.mubr.bf16.mxu0 0
        %4212 = vmatmul.mubr.bf16.gmra.mrb[0].mxu0 %v4000
        %v4213 = vpop.f32.mrb[0].mxu0
        %v4214 = vadd.f32 0.0, %v4213
        %v4215 = vpop.f32.mrb[0].mxu0
        %v4216 = vpop.f32.mrb[0].mxu0
        %v4217 = vadd.f32 0.0, %v4216
        %v4218 = vpop.f32.mrb[0].mxu0
        %4219 = vmatprep.mubr.bf16.mxu0 0
        %4220 = vmatmul.mubr.bf16.gmra.mrb[0].mxu0 %v4002
        %v4221 = vpop.f32.mrb[0].mxu0
        %v4222 = vadd.f32 0.0, %v4221
        %v4223 = vpop.f32.mrb[0].mxu0
        %v4224 = vpop.f32.mrb[0].mxu0
        %v4225 = vadd.f32 0.0, %v4224
        %v4226 = vpop.f32.mrb[0].mxu0
        %4227 = vmatprep.mubr.bf16.mxu0 0
        %4228 = vmatmul.mubr.bf16.gmra.mrb[0].mxu0 %v4004
        %v4229 = vpop.f32.mrb[0].mxu0
        %v4230 = vadd.f32 0.0, %v4229
        %v4231 = vpop.f32.mrb[0].mxu0
        %v4232 = vpop.f32.mrb[0].mxu0
        %v4233 = vadd.f32 0.0, %v4232
        %v4234 = vpop.f32.mrb[0].mxu0
        %4235 = vmatprep.mubr.bf16.mxu0 0
        %4236 = vmatmul.mubr.bf16.gmra.mrb[0].mxu0 %v4006
        %v4237 = vpop.f32.mrb[0].mxu0
        %v4238 = vadd.f32 0.0, %v4237
        %v4239 = vpop.f32.mrb[0].mxu0
        %v4240 = vpop.f32.mrb[0].mxu0
        %v4241 = vadd.f32 0.0, %v4240
        %v4242 = vpop.f32.mrb[0].mxu0
        %4243 = vmatprep.mubr.bf16.mxu0 0
        %4244 = vmatmul.mubr.bf16.gmra.mrb[0].mxu0 %v4008
        %v4245 = vpop.f32.mrb[0].mxu0
        %v4246 = vadd.f32 0.0, %v4245
        %v4247 = vpop.f32.mrb[0].mxu0
        %v4248 = vpop.f32.mrb[0].mxu0
        %v4249 = vadd.f32 0.0, %v4248
        %v4250 = vpop.f32.mrb[0].mxu0
        %4251 = vdwg.mxu0
        %vm4252 = vsmask.f32 1280
        %v4254 = vshrl.u32 %v3899, 16
        %v4256 = vrot.slane %v4254, 6
        %v4257 = vshll.u32 %v3899, 16
        %v4259 = vrot.slane %v4257, 7
        %v4260 = vor.u32 %v4256, %v4259
        %v4262 = vshrl.u32 %v3900, 16
        %v4264 = vrot.slane %v4262, 6
        %v4265 = vshll.u32 %v3900, 16
        %v4267 = vrot.slane %v4265, 7
        %v4268 = vor.u32 %v4264, %v4267
        %v4269 = vsel %vm4252, %v4260, %v4268
        %v4271 = vshrl.u32 %v3901, 16
        %v4273 = vrot.slane %v4271, 6
        %v4274 = vshll.u32 %v3901, 16
        %v4276 = vrot.slane %v4274, 7
        %v4277 = vor.u32 %v4273, %v4276
        %v4278 = vsel %vm4252, %v4268, %v4277
        %v4280 = vshrl.u32 %v3902, 16
        %v4282 = vrot.slane %v4280, 6
        %v4283 = vshll.u32 %v3902, 16
        %v4285 = vrot.slane %v4283, 7
        %v4286 = vor.u32 %v4282, %v4285
        %v4287 = vsel %vm4252, %v4277, %v4286
        %v4289 = vshrl.u32 %v3903, 16
        %v4291 = vrot.slane %v4289, 6
        %v4292 = vshll.u32 %v3903, 16
        %v4294 = vrot.slane %v4292, 7
        %v4295 = vor.u32 %v4291, %v4294
        %v4296 = vsel %vm4252, %v4286, %v4295
        %v4298 = vshrl.u32 %v3904, 16
        %v4300 = vrot.slane %v4298, 6
        %v4301 = vshll.u32 %v3904, 16
        %v4303 = vrot.slane %v4301, 7
        %v4304 = vor.u32 %v4300, %v4303
        %v4305 = vsel %vm4252, %v4295, %v4304
        %v4307 = vshrl.u32 %v3905, 16
        %v4309 = vrot.slane %v4307, 6
        %v4310 = vshll.u32 %v3905, 16
        %v4312 = vrot.slane %v4310, 7
        %v4313 = vor.u32 %v4309, %v4312
        %v4314 = vsel %vm4252, %v4304, %v4313
        %v4316 = vshrl.u32 %v3906, 16
        %v4318 = vrot.slane %v4316, 6
        %v4319 = vshll.u32 %v3906, 16
        %v4321 = vrot.slane %v4319, 7
        %v4322 = vor.u32 %v4318, %v4321
        %v4323 = vsel %vm4252, %v4313, %v4322
        %v4325 = vshrl.u32 %v3907, 16
        %v4327 = vrot.slane %v4325, 6
        %v4328 = vshll.u32 %v3907, 16
        %v4330 = vrot.slane %v4328, 7
        %v4331 = vor.u32 %v4327, %v4330
        %v4332 = vsel %vm4252, %v4322, %v4331
        %v4334 = vshrl.u32 %v3908, 16
        %v4336 = vrot.slane %v4334, 6
        %v4337 = vshll.u32 %v3908, 16
        %v4339 = vrot.slane %v4337, 7
        %v4340 = vor.u32 %v4336, %v4339
        %v4341 = vsel %vm4252, %v4331, %v4340
        %v4343 = vshrl.u32 %v3909, 16
        %v4345 = vrot.slane %v4343, 6
        %v4346 = vshll.u32 %v3909, 16
        %v4348 = vrot.slane %v4346, 7
        %v4349 = vor.u32 %v4345, %v4348
        %v4350 = vsel %vm4252, %v4340, %v4349
        %v4352 = vshrl.u32 %v3910, 16
        %v4354 = vrot.slane %v4352, 6
        %v4355 = vshll.u32 %v3910, 16
        %v4357 = vrot.slane %v4355, 7
        %v4358 = vor.u32 %v4354, %v4357
        %v4359 = vsel %vm4252, %v4349, %v4358
        %v4361 = vshrl.u32 %v3911, 16
        %v4363 = vrot.slane %v4361, 6
        %v4364 = vshll.u32 %v3911, 16
        %v4366 = vrot.slane %v4364, 7
        %v4367 = vor.u32 %v4363, %v4366
        %v4368 = vsel %vm4252, %v4358, %v4367
        %v4370 = vshrl.u32 %v3912, 16
        %v4372 = vrot.slane %v4370, 6
        %v4373 = vshll.u32 %v3912, 16
        %v4375 = vrot.slane %v4373, 7
        %v4376 = vor.u32 %v4372, %v4375
        %v4377 = vsel %vm4252, %v4367, %v4376
        %v4379 = vshrl.u32 %v3913, 16
        %v4381 = vrot.slane %v4379, 6
        %v4382 = vshll.u32 %v3913, 16
        %v4384 = vrot.slane %v4382, 7
        %v4385 = vor.u32 %v4381, %v4384
        %v4386 = vsel %vm4252, %v4376, %v4385
        %v4388 = vshrl.u32 %v3914, 16
        %v4390 = vrot.slane %v4388, 6
        %v4391 = vshll.u32 %v3914, 16
        %v4393 = vrot.slane %v4391, 7
        %v4394 = vor.u32 %v4390, %v4393
        %v4395 = vsel %vm4252, %v4385, %v4394
        %v4397 = vshrl.u32 %v3915, 16
        %v4399 = vrot.slane %v4397, 6
        %v4400 = vshll.u32 %v3915, 16
        %v4402 = vrot.slane %v4400, 7
        %v4403 = vor.u32 %v4399, %v4402
        %v4404 = vsel %vm4252, %v4394, %v4403
        %v4406 = vshrl.u32 %v3916, 16
        %v4408 = vrot.slane %v4406, 6
        %v4409 = vshll.u32 %v3916, 16
        %v4411 = vrot.slane %v4409, 7
        %v4412 = vor.u32 %v4408, %v4411
        %v4413 = vsel %vm4252, %v4403, %v4412
        %v4415 = vshrl.u32 %v3917, 16
        %v4417 = vrot.slane %v4415, 6
        %v4418 = vshll.u32 %v3917, 16
        %v4420 = vrot.slane %v4418, 7
        %v4421 = vor.u32 %v4417, %v4420
        %v4422 = vsel %vm4252, %v4412, %v4421
        %v4457 = vunpack.c.l.b16 %v3918
        %v4458 = vunpack.c.l.b16 %v3919
        %v4459 = vunpack.c.l.b16 %v3920
        %v4460 = vunpack.c.l.b16 %v3921
        %v4461 = vunpack.c.l.b16 %v3922
        %v4462 = vunpack.c.l.b16 %v3923
        %v4463 = vunpack.c.l.b16 %v3924
        %v4464 = vunpack.c.l.b16 %v3925
        %v4465 = vunpack.c.l.b16 %v3926
        %v4466 = vunpack.c.l.b16 %v3927
        %v4467 = vunpack.c.l.b16 %v3928
        %v4468 = vunpack.c.l.b16 %v3929
        %v4469 = vunpack.c.l.b16 %v3930
        %v4470 = vunpack.c.l.b16 %v3931
        %v4471 = vunpack.c.l.b16 %v3932
        %v4472 = vunpack.c.l.b16 %v3933
        %v4473 = vpack.c.b16 %v4458, %v4457
        %v4474 = vpack.c.b16 %v4460, %v4459
        %v4475 = vpack.c.b16 %v4462, %v4461
        %v4476 = vpack.c.b16 %v4464, %v4463
        %v4477 = vpack.c.b16 %v4466, %v4465
        %v4478 = vpack.c.b16 %v4468, %v4467
        %v4479 = vpack.c.b16 %v4470, %v4469
        %v4480 = vpack.c.b16 %v4472, %v4471
        %4489 = vmatprep.subr.bf16.mxu0 0
        %4490 = vmatpush1.bf16.msra.mxu0 %v4473
        %4491 = vmatprep.subr.bf16.mxu0 0
        %4492 = vmatpush1.bf16.msra.mxu0 %v4474
        %4493 = vmatprep.subr.bf16.mxu0 0
        %4494 = vmatpush1.bf16.msra.mxu0 %v4475
        %4495 = vmatprep.subr.bf16.mxu0 0
        %4496 = vmatpush1.bf16.msra.mxu0 %v4476
        %4497 = vmatprep.subr.bf16.mxu0 0
        %4498 = vmatpush1.bf16.msra.mxu0 %v4477
        %4499 = vmatprep.subr.bf16.mxu0 0
        %4500 = vmatpush1.bf16.msra.mxu0 %v4478
        %4501 = vmatprep.subr.bf16.mxu0 0
        %4502 = vmatpush1.bf16.msra.mxu0 %v4479
        %4503 = vmatprep.subr.bf16.mxu0 0
        %4504 = vmatpush1.bf16.msra.mxu0 %v4480
        %4505 = vmatprep.subr.bf16.mxu0 0
        %4506 = vmatpush1.bf16.msra.mxu0 0
        %4507 = vmatprep.subr.bf16.mxu0 0
        %4508 = vmatpush1.bf16.msra.mxu0 0
        %4509 = vmatprep.subr.bf16.mxu0 0
        %4510 = vmatpush1.bf16.msra.mxu0 0
        %4511 = vmatprep.subr.bf16.mxu0 0
        %4512 = vmatpush1.bf16.msra.mxu0 0
        %4513 = vmatprep.subr.bf16.mxu0 0
        %4514 = vmatpush1.bf16.msra.mxu0 0
        %4515 = vmatprep.subr.bf16.mxu0 0
        %4516 = vmatpush1.bf16.msra.mxu0 0
        %4517 = vmatprep.subr.bf16.mxu0 0
        %4518 = vmatpush1.bf16.msra.mxu0 0
        %4519 = vmatprep.subr.bf16.mxu0 0
        %4520 = vmatpush1.bf16.msra.mxu0 0
        %4521 = vmatprep.mubr.bf16.mxu0 0
        %4522 = vmatmul.mubr.bf16.gmra.mrb[0].mxu0 %v4269
        %v4523 = vpop.f32.mrb[0].mxu0
        %v4524 = vadd.f32 %v4110, %v4523
        %v4525 = vpop.f32.mrb[0].mxu0
        %v4526 = vpop.f32.mrb[0].mxu0
        %v4527 = vadd.f32 %v4113, %v4526
        %v4528 = vpop.f32.mrb[0].mxu0
        %4529 = vmatprep.mubr.bf16.mxu0 0
        %4530 = vmatmul.mubr.bf16.gmra.mrb[0].mxu0 %v4278
        %v4531 = vpop.f32.mrb[0].mxu0
        %v4532 = vadd.f32 %v4118, %v4531
        %v4533 = vpop.f32.mrb[0].mxu0
        %v4534 = vpop.f32.mrb[0].mxu0
        %v4535 = vadd.f32 %v4121, %v4534
        %v4536 = vpop.f32.mrb[0].mxu0
        %4537 = vmatprep.mubr.bf16.mxu0 0
        %4538 = vmatmul.mubr.bf16.gmra.mrb[0].mxu0 %v4287
        %v4539 = vpop.f32.mrb[0].mxu0
        %v4540 = vadd.f32 %v4126, %v4539
        %v4541 = vpop.f32.mrb[0].mxu0
        %v4542 = vpop.f32.mrb[0].mxu0
        %v4543 = vadd.f32 %v4129, %v4542
        %v4544 = vpop.f32.mrb[0].mxu0
        %4545 = vmatprep.mubr.bf16.mxu0 0
        %4546 = vmatmul.mubr.bf16.gmra.mrb[0].mxu0 %v4296
        %v4547 = vpop.f32.mrb[0].mxu0
        %v4548 = vadd.f32 %v4134, %v4547
        %v4549 = vpop.f32.mrb[0].mxu0
        %v4550 = vpop.f32.mrb[0].mxu0
        %v4551 = vadd.f32 %v4137, %v4550
        %v4552 = vpop.f32.mrb[0].mxu0
        %4553 = vmatprep.mubr.bf16.mxu0 0
        %4554 = vmatmul.mubr.bf16.gmra.mrb[0].mxu0 %v4305
        %v4555 = vpop.f32.mrb[0].mxu0
        %v4556 = vadd.f32 %v4142, %v4555
        %v4557 = vpop.f32.mrb[0].mxu0
        %v4558 = vpop.f32.mrb[0].mxu0
        %v4559 = vadd.f32 %v4145, %v4558
        %v4560 = vpop.f32.mrb[0].mxu0
        %4561 = vmatprep.mubr.bf16.mxu0 0
        %4562 = vmatmul.mubr.bf16.gmra.mrb[0].mxu0 %v4314
        %v4563 = vpop.f32.mrb[0].mxu0
        %v4564 = vadd.f32 %v4150, %v4563
        %v4565 = vpop.f32.mrb[0].mxu0
        %v4566 = vpop.f32.mrb[0].mxu0
        %v4567 = vadd.f32 %v4153, %v4566
        %v4568 = vpop.f32.mrb[0].mxu0
        %4569 = vmatprep.mubr.bf16.mxu0 0
        %4570 = vmatmul.mubr.bf16.gmra.mrb[0].mxu0 %v4323
        %v4571 = vpop.f32.mrb[0].mxu0
        %v4572 = vadd.f32 %v4158, %v4571
        %v4573 = vpop.f32.mrb[0].mxu0
        %v4574 = vpop.f32.mrb[0].mxu0
        %v4575 = vadd.f32 %v4161, %v4574
        %v4576 = vpop.f32.mrb[0].mxu0
        %4577 = vmatprep.mubr.bf16.mxu0 0
        %4578 = vmatmul.mubr.bf16.gmra.mrb[0].mxu0 %v4332
        %v4579 = vpop.f32.mrb[0].mxu0
        %v4580 = vadd.f32 %v4166, %v4579
        %v4581 = vpop.f32.mrb[0].mxu0
        %v4582 = vpop.f32.mrb[0].mxu0
        %v4583 = vadd.f32 %v4169, %v4582
        %v4584 = vpop.f32.mrb[0].mxu0
        %4585 = vmatprep.mubr.bf16.mxu0 0
        %4586 = vmatmul.mubr.bf16.gmra.mrb[0].mxu0 %v4341
        %v4587 = vpop.f32.mrb[0].mxu0
        %v4588 = vadd.f32 %v4174, %v4587
        %v4589 = vpop.f32.mrb[0].mxu0
        %v4590 = vpop.f32.mrb[0].mxu0
        %v4591 = vadd.f32 %v4177, %v4590
        %v4592 = vpop.f32.mrb[0].mxu0
        %4593 = vmatprep.mubr.bf16.mxu0 0
        %4594 = vmatmul.mubr.bf16.gmra.mrb[0].mxu0 %v4350
        %v4595 = vpop.f32.mrb[0].mxu0
        %v4596 = vadd.f32 %v4182, %v4595
        %v4597 = vpop.f32.mrb[0].mxu0
        %v4598 = vpop.f32.mrb[0].mxu0
        %v4599 = vadd.f32 %v4185, %v4598
        %v4600 = vpop.f32.mrb[0].mxu0
        %4601 = vmatprep.mubr.bf16.mxu0 0
        %4602 = vmatmul.mubr.bf16.gmra.mrb[0].mxu0 %v4359
        %v4603 = vpop.f32.mrb[0].mxu0
        %v4604 = vadd.f32 %v4190, %v4603
        %v4605 = vpop.f32.mrb[0].mxu0
        %v4606 = vpop.f32.mrb[0].mxu0
        %v4607 = vadd.f32 %v4193, %v4606
        %v4608 = vpop.f32.mrb[0].mxu0
        %4609 = vmatprep.mubr.bf16.mxu0 0
        %4610 = vmatmul.mubr.bf16.gmra.mrb[0].mxu0 %v4368
        %v4611 = vpop.f32.mrb[0].mxu0
        %v4612 = vadd.f32 %v4198, %v4611
        %v4613 = vpop.f32.mrb[0].mxu0
        %v4614 = vpop.f32.mrb[0].mxu0
        %v4615 = vadd.f32 %v4201, %v4614
        %v4616 = vpop.f32.mrb[0].mxu0
        %4617 = vmatprep.mubr.bf16.mxu0 0
        %4618 = vmatmul.mubr.bf16.gmra.mrb[0].mxu0 %v4377
        %v4619 = vpop.f32.mrb[0].mxu0
        %v4620 = vadd.f32 %v4206, %v4619
        %v4621 = vpop.f32.mrb[0].mxu0
        %v4622 = vpop.f32.mrb[0].mxu0
        %v4623 = vadd.f32 %v4209, %v4622
        %v4624 = vpop.f32.mrb[0].mxu0
        %4625 = vmatprep.mubr.bf16.mxu0 0
        %4626 = vmatmul.mubr.bf16.gmra.mrb[0].mxu0 %v4386
        %v4627 = vpop.f32.mrb[0].mxu0
        %v4628 = vadd.f32 %v4214, %v4627
        %v4629 = vpop.f32.mrb[0].mxu0
        %v4630 = vpop.f32.mrb[0].mxu0
        %v4631 = vadd.f32 %v4217, %v4630
        %v4632 = vpop.f32.mrb[0].mxu0
        %4633 = vmatprep.mubr.bf16.mxu0 0
        %4634 = vmatmul.mubr.bf16.gmra.mrb[0].mxu0 %v4395
        %v4635 = vpop.f32.mrb[0].mxu0
        %v4636 = vadd.f32 %v4222, %v4635
        %v4637 = vpop.f32.mrb[0].mxu0
        %v4638 = vpop.f32.mrb[0].mxu0
        %v4639 = vadd.f32 %v4225, %v4638
        %v4640 = vpop.f32.mrb[0].mxu0
        %4641 = vmatprep.mubr.bf16.mxu0 0
        %4642 = vmatmul.mubr.bf16.gmra.mrb[0].mxu0 %v4404
        %v4643 = vpop.f32.mrb[0].mxu0
        %v4644 = vadd.f32 %v4230, %v4643
        %v4645 = vpop.f32.mrb[0].mxu0
        %v4646 = vpop.f32.mrb[0].mxu0
        %v4647 = vadd.f32 %v4233, %v4646
        %v4648 = vpop.f32.mrb[0].mxu0
        %4649 = vmatprep.mubr.bf16.mxu0 0
        %4650 = vmatmul.mubr.bf16.gmra.mrb[0].mxu0 %v4413
        %v4651 = vpop.f32.mrb[0].mxu0
        %v4652 = vadd.f32 %v4238, %v4651
        %v4653 = vpop.f32.mrb[0].mxu0
        %v4654 = vpop.f32.mrb[0].mxu0
        %v4655 = vadd.f32 %v4241, %v4654
        %v4656 = vpop.f32.mrb[0].mxu0
        %4657 = vmatprep.mubr.bf16.mxu0 0
        %4658 = vmatmul.mubr.bf16.gmra.mrb[0].mxu0 %v4422
        %v4659 = vpop.f32.mrb[0].mxu0
        %v4660 = vadd.f32 %v4246, %v4659
        %v4661 = vpop.f32.mrb[0].mxu0
        %v4662 = vpop.f32.mrb[0].mxu0
        %v4663 = vadd.f32 %v4249, %v4662
        %v4664 = vpop.f32.mrb[0].mxu0
        %4665 = vdwg.mxu0
        %v4666 = vld [vmem:[#allocation2 + $0x90] sm:$0xff]
        %s4667 = scalar_lea.vmem [#allocation3], 128
        %v4668 = vld [vmem:[%s4667] sm:$0xf]
        %v4669 = vld [vmem:[%s4667 + $0x4] sm:$0xf]
        %v4670 = vld [vmem:[%s4667 + $0x8] sm:$0xf]
        %v4671 = vld [vmem:[%s4667 + $0xc] sm:$0xf]
        %v4672 = vld [vmem:[%s4667 + $0x10] sm:$0xf]
        %v4673 = vld [vmem:[%s4667 + $0x14] sm:$0xf]
        %v4674 = vld [vmem:[%s4667 + $0x18] sm:$0xf]
        %v4675 = vld [vmem:[%s4667 + $0x1c] sm:$0xf]
        %v4676 = vld [vmem:[%s4667 + $0x20] sm:$0xf]
        %v4677 = vld [vmem:[%s4667 + $0x24] sm:$0xf]
        %v4678 = vld [vmem:[%s4667 + $0x28] sm:$0xf]
        %v4679 = vld [vmem:[%s4667 + $0x2c] sm:$0xf]
        %v4680 = vld [vmem:[%s4667 + $0x30] sm:$0xf]
        %v4681 = vld [vmem:[%s4667 + $0x34] sm:$0xf]
        %v4682 = vld [vmem:[%s4667 + $0x38] sm:$0xf]
        %v4683 = vld [vmem:[%s4667 + $0x3c] sm:$0xf]
        %vm4684 = vsmask.f32 256
        %v4686 = vshrl.u32 %v3934, 16
        %v4688 = vrot.slane %v4686, 7
        %v4689 = vrot.slane %v4262, 7
        %v4690 = vor.u32 %v4689, %v4265
        %v4691 = vsel %vm4684, %v4688, %v4690
        %v4692 = vrot.slane %v4271, 7
        %v4693 = vor.u32 %v4692, %v4274
        %v4694 = vsel %vm4684, %v4689, %v4693
        %v4695 = vrot.slane %v4280, 7
        %v4696 = vor.u32 %v4695, %v4283
        %v4697 = vsel %vm4684, %v4692, %v4696
        %v4698 = vrot.slane %v4289, 7
        %v4699 = vor.u32 %v4698, %v4292
        %v4700 = vsel %vm4684, %v4695, %v4699
        %v4701 = vrot.slane %v4298, 7
        %v4702 = vor.u32 %v4701, %v4301
        %v4703 = vsel %vm4684, %v4698, %v4702
        %v4704 = vrot.slane %v4307, 7
        %v4705 = vor.u32 %v4704, %v4310
        %v4706 = vsel %vm4684, %v4701, %v4705
        %v4707 = vrot.slane %v4316, 7
        %v4708 = vor.u32 %v4707, %v4319
        %v4709 = vsel %vm4684, %v4704, %v4708
        %v4710 = vrot.slane %v4325, 7
        %v4711 = vor.u32 %v4710, %v4328
        %v4712 = vsel %vm4684, %v4707, %v4711
        %v4713 = vrot.slane %v4334, 7
        %v4714 = vor.u32 %v4713, %v4337
        %v4715 = vsel %vm4684, %v4710, %v4714
        %v4716 = vrot.slane %v4343, 7
        %v4717 = vor.u32 %v4716, %v4346
        %v4718 = vsel %vm4684, %v4713, %v4717
        %v4719 = vrot.slane %v4352, 7
        %v4720 = vor.u32 %v4719, %v4355
        %v4721 = vsel %vm4684, %v4716, %v4720
        %v4722 = vrot.slane %v4361, 7
        %v4723 = vor.u32 %v4722, %v4364
        %v4724 = vsel %vm4684, %v4719, %v4723
        %v4725 = vrot.slane %v4370, 7
        %v4726 = vor.u32 %v4725, %v4373
        %v4727 = vsel %vm4684, %v4722, %v4726
        %v4728 = vrot.slane %v4379, 7
        %v4729 = vor.u32 %v4728, %v4382
        %v4730 = vsel %vm4684, %v4725, %v4729
        %v4731 = vrot.slane %v4388, 7
        %v4732 = vor.u32 %v4731, %v4391
        %v4733 = vsel %vm4684, %v4728, %v4732
        %v4734 = vrot.slane %v4397, 7
        %v4735 = vor.u32 %v4734, %v4400
        %v4736 = vsel %vm4684, %v4731, %v4735
        %v4737 = vrot.slane %v4406, 7
        %v4738 = vor.u32 %v4737, %v4409
        %v4739 = vsel %vm4684, %v4734, %v4738
        %v4741 = vshrl.u32 %v4666, 16
        %v4743 = vrot.slane %v4741, 7
        %v4744 = vshll.u32 %v4666, 16
        %v4746 = vor.u32 %v4743, %v4744
        %v4747 = vsel %vm4684, %v4737, %v4746
        %v4782 = vunpack.c.l.b16 %v4668
        %v4783 = vunpack.c.l.b16 %v4669
        %v4784 = vunpack.c.l.b16 %v4670
        %v4785 = vunpack.c.l.b16 %v4671
        %v4786 = vunpack.c.l.b16 %v4672
        %v4787 = vunpack.c.l.b16 %v4673
        %v4788 = vunpack.c.l.b16 %v4674
        %v4789 = vunpack.c.l.b16 %v4675
        %v4790 = vunpack.c.l.b16 %v4676
        %v4791 = vunpack.c.l.b16 %v4677
        %v4792 = vunpack.c.l.b16 %v4678
        %v4793 = vunpack.c.l.b16 %v4679
        %v4794 = vunpack.c.l.b16 %v4680
        %v4795 = vunpack.c.l.b16 %v4681
        %v4796 = vunpack.c.l.b16 %v4682
        %v4797 = vunpack.c.l.b16 %v4683
        %v4798 = vpack.c.b16 %v4783, %v4782
        %v4799 = vpack.c.b16 %v4785, %v4784
        %v4800 = vpack.c.b16 %v4787, %v4786
        %v4801 = vpack.c.b16 %v4789, %v4788
        %v4802 = vpack.c.b16 %v4791, %v4790
        %v4803 = vpack.c.b16 %v4793, %v4792
        %v4804 = vpack.c.b16 %v4795, %v4794
        %v4805 = vpack.c.b16 %v4797, %v4796
        %4814 = vmatprep.subr.bf16.mxu0 0
        %4815 = vmatpush1.bf16.msra.mxu0 %v4798
        %4816 = vmatprep.subr.bf16.mxu0 0
        %4817 = vmatpush1.bf16.msra.mxu0 %v4799
        %4818 = vmatprep.subr.bf16.mxu0 0
        %4819 = vmatpush1.bf16.msra.mxu0 %v4800
        %4820 = vmatprep.subr.bf16.mxu0 0
        %4821 = vmatpush1.bf16.msra.mxu0 %v4801
        %4822 = vmatprep.subr.bf16.mxu0 0
        %4823 = vmatpush1.bf16.msra.mxu0 %v4802
        %4824 = vmatprep.subr.bf16.mxu0 0
        %4825 = vmatpush1.bf16.msra.mxu0 %v4803
        %4826 = vmatprep.subr.bf16.mxu0 0
        %4827 = vmatpush1.bf16.msra.mxu0 %v4804
        %4828 = vmatprep.subr.bf16.mxu0 0
        %4829 = vmatpush1.bf16.msra.mxu0 %v4805
        %4830 = vmatprep.subr.bf16.mxu0 0
        %4831 = vmatpush1.bf16.msra.mxu0 0
        %4832 = vmatprep.subr.bf16.mxu0 0
        %4833 = vmatpush1.bf16.msra.mxu0 0
        %4834 = vmatprep.subr.bf16.mxu0 0
        %4835 = vmatpush1.bf16.msra.mxu0 0
        %4836 = vmatprep.subr.bf16.mxu0 0
        %4837 = vmatpush1.bf16.msra.mxu0 0
        %4838 = vmatprep.subr.bf16.mxu0 0
        %4839 = vmatpush1.bf16.msra.mxu0 0
        %4840 = vmatprep.subr.bf16.mxu0 0
        %4841 = vmatpush1.bf16.msra.mxu0 0
        %4842 = vmatprep.subr.bf16.mxu0 0
        %4843 = vmatpush1.bf16.msra.mxu0 0
        %4844 = vmatprep.subr.bf16.mxu0 0
        %4845 = vmatpush1.bf16.msra.mxu0 0
        %4846 = vmatprep.mubr.bf16.mxu0 0
        %4847 = vmatmul.mubr.bf16.gmra.mrb[0].mxu0 %v4691
        %v4848 = vpop.f32.mrb[0].mxu0
        %v4849 = vadd.f32 0.0, %v4848
        %v4850 = vpop.f32.mrb[0].mxu0
        %v4851 = vpop.f32.mrb[0].mxu0
        %v4852 = vadd.f32 0.0, %v4851
        %v4853 = vpop.f32.mrb[0].mxu0
        %4854 = vmatprep.mubr.bf16.mxu0 0
        %4855 = vmatmul.mubr.bf16.gmra.mrb[0].mxu0 %v4694
        %v4856 = vpop.f32.mrb[0].mxu0
        %v4857 = vadd.f32 0.0, %v4856
        %v4858 = vpop.f32.mrb[0].mxu0
        %v4859 = vpop.f32.mrb[0].mxu0
        %v4860 = vadd.f32 0.0, %v4859
        %v4861 = vpop.f32.mrb[0].mxu0
        %4862 = vmatprep.mubr.bf16.mxu0 0
        %4863 = vmatmul.mubr.bf16.gmra.mrb[0].mxu0 %v4697
        %v4864 = vpop.f32.mrb[0].mxu0
        %v4865 = vadd.f32 0.0, %v4864
        %v4866 = vpop.f32.mrb[0].mxu0
        %v4867 = vpop.f32.mrb[0].mxu0
        %v4868 = vadd.f32 0.0, %v4867
        %v4869 = vpop.f32.mrb[0].mxu0
        %4870 = vmatprep.mubr.bf16.mxu0 0
        %4871 = vmatmul.mubr.bf16.gmra.mrb[0].mxu0 %v4700
        %v4872 = vpop.f32.mrb[0].mxu0
        %v4873 = vadd.f32 0.0, %v4872
        %v4874 = vpop.f32.mrb[0].mxu0
        %v4875 = vpop.f32.mrb[0].mxu0
        %v4876 = vadd.f32 0.0, %v4875
        %v4877 = vpop.f32.mrb[0].mxu0
        %4878 = vmatprep.mubr.bf16.mxu0 0
        %4879 = vmatmul.mubr.bf16.gmra.mrb[0].mxu0 %v4703
        %v4880 = vpop.f32.mrb[0].mxu0
        %v4881 = vadd.f32 0.0, %v4880
        %v4882 = vpop.f32.mrb[0].mxu0
        %v4883 = vpop.f32.mrb[0].mxu0
        %v4884 = vadd.f32 0.0, %v4883
        %v4885 = vpop.f32.mrb[0].mxu0
        %4886 = vmatprep.mubr.bf16.mxu0 0
        %4887 = vmatmul.mubr.bf16.gmra.mrb[0].mxu0 %v4706
        %v4888 = vpop.f32.mrb[0].mxu0
        %v4889 = vadd.f32 0.0, %v4888
        %v4890 = vpop.f32.mrb[0].mxu0
        %v4891 = vpop.f32.mrb[0].mxu0
        %v4892 = vadd.f32 0.0, %v4891
        %v4893 = vpop.f32.mrb[0].mxu0
        %4894 = vmatprep.mubr.bf16.mxu0 0
        %4895 = vmatmul.mubr.bf16.gmra.mrb[0].mxu0 %v4709
        %v4896 = vpop.f32.mrb[0].mxu0
        %v4897 = vadd.f32 0.0, %v4896
        %v4898 = vpop.f32.mrb[0].mxu0
        %v4899 = vpop.f32.mrb[0].mxu0
        %v4900 = vadd.f32 0.0, %v4899
        %v4901 = vpop.f32.mrb[0].mxu0
        %4902 = vmatprep.mubr.bf16.mxu0 0
        %4903 = vmatmul.mubr.bf16.gmra.mrb[0].mxu0 %v4712
        %v4904 = vpop.f32.mrb[0].mxu0
        %v4905 = vadd.f32 0.0, %v4904
        %v4906 = vpop.f32.mrb[0].mxu0
        %v4907 = vpop.f32.mrb[0].mxu0
        %v4908 = vadd.f32 0.0, %v4907
        %v4909 = vpop.f32.mrb[0].mxu0
        %4910 = vmatprep.mubr.bf16.mxu0 0
        %4911 = vmatmul.mubr.bf16.gmra.mrb[0].mxu0 %v4715
        %v4912 = vpop.f32.mrb[0].mxu0
        %v4913 = vadd.f32 0.0, %v4912
        %v4914 = vpop.f32.mrb[0].mxu0
        %v4915 = vpop.f32.mrb[0].mxu0
        %v4916 = vadd.f32 0.0, %v4915
        %v4917 = vpop.f32.mrb[0].mxu0
        %4918 = vmatprep.mubr.bf16.mxu0 0
        %4919 = vmatmul.mubr.bf16.gmra.mrb[0].mxu0 %v4718
        %v4920 = vpop.f32.mrb[0].mxu0
        %v4921 = vadd.f32 0.0, %v4920
        %v4922 = vpop.f32.mrb[0].mxu0
        %v4923 = vpop.f32.mrb[0].mxu0
        %v4924 = vadd.f32 0.0, %v4923
        %v4925 = vpop.f32.mrb[0].mxu0
        %4926 = vmatprep.mubr.bf16.mxu0 0
        %4927 = vmatmul.mubr.bf16.gmra.mrb[0].mxu0 %v4721
        %v4928 = vpop.f32.mrb[0].mxu0
        %v4929 = vadd.f32 0.0, %v4928
        %v4930 = vpop.f32.mrb[0].mxu0
        %v4931 = vpop.f32.mrb[0].mxu0
        %v4932 = vadd.f32 0.0, %v4931
        %v4933 = vpop.f32.mrb[0].mxu0
        %4934 = vmatprep.mubr.bf16.mxu0 0
        %4935 = vmatmul.mubr.bf16.gmra.mrb[0].mxu0 %v4724
        %v4936 = vpop.f32.mrb[0].mxu0
        %v4937 = vadd.f32 0.0, %v4936
        %v4938 = vpop.f32.mrb[0].mxu0
        %v4939 = vpop.f32.mrb[0].mxu0
        %v4940 = vadd.f32 0.0, %v4939
        %v4941 = vpop.f32.mrb[0].mxu0
        %4942 = vmatprep.mubr.bf16.mxu0 0
        %4943 = vmatmul.mubr.bf16.gmra.mrb[0].mxu0 %v4727
        %v4944 = vpop.f32.mrb[0].mxu0
        %v4945 = vadd.f32 0.0, %v4944
        %v4946 = vpop.f32.mrb[0].mxu0
        %v4947 = vpop.f32.mrb[0].mxu0
        %v4948 = vadd.f32 0.0, %v4947
        %v4949 = vpop.f32.mrb[0].mxu0
        %4950 = vmatprep.mubr.bf16.mxu0 0
        %4951 = vmatmul.mubr.bf16.gmra.mrb[0].mxu0 %v4730
        %v4952 = vpop.f32.mrb[0].mxu0
        %v4953 = vadd.f32 0.0, %v4952
        %v4954 = vpop.f32.mrb[0].mxu0
        %v4955 = vpop.f32.mrb[0].mxu0
        %v4956 = vadd.f32 0.0, %v4955
        %v4957 = vpop.f32.mrb[0].mxu0
        %4958 = vmatprep.mubr.bf16.mxu0 0
        %4959 = vmatmul.mubr.bf16.gmra.mrb[0].mxu0 %v4733
        %v4960 = vpop.f32.mrb[0].mxu0
        %v4961 = vadd.f32 0.0, %v4960
        %v4962 = vpop.f32.mrb[0].mxu0
        %v4963 = vpop.f32.mrb[0].mxu0
        %v4964 = vadd.f32 0.0, %v4963
        %v4965 = vpop.f32.mrb[0].mxu0
        %4966 = vmatprep.mubr.bf16.mxu0 0
        %4967 = vmatmul.mubr.bf16.gmra.mrb[0].mxu0 %v4736
        %v4968 = vpop.f32.mrb[0].mxu0
        %v4969 = vadd.f32 0.0, %v4968
        %v4970 = vpop.f32.mrb[0].mxu0
        %v4971 = vpop.f32.mrb[0].mxu0
        %v4972 = vadd.f32 0.0, %v4971
        %v4973 = vpop.f32.mrb[0].mxu0
        %4974 = vmatprep.mubr.bf16.mxu0 0
        %4975 = vmatmul.mubr.bf16.gmra.mrb[0].mxu0 %v4739
        %v4976 = vpop.f32.mrb[0].mxu0
        %v4977 = vadd.f32 0.0, %v4976
        %v4978 = vpop.f32.mrb[0].mxu0
        %v4979 = vpop.f32.mrb[0].mxu0
        %v4980 = vadd.f32 0.0, %v4979
        %v4981 = vpop.f32.mrb[0].mxu0
        %4982 = vmatprep.mubr.bf16.mxu0 0
        %4983 = vmatmul.mubr.bf16.gmra.mrb[0].mxu0 %v4747
        %v4984 = vpop.f32.mrb[0].mxu0
        %v4985 = vadd.f32 0.0, %v4984
        %v4986 = vpop.f32.mrb[0].mxu0
        %v4987 = vpop.f32.mrb[0].mxu0
        %v4988 = vadd.f32 0.0, %v4987
        %v4989 = vpop.f32.mrb[0].mxu0
        %4990 = vdwg.mxu0
        %v4991 = vadd.f32 %v4524, %v4849
        %v4992 = vadd.f32 %v4527, %v4852
        %v4993 = vadd.f32 %v4532, %v4857
        %v4994 = vadd.f32 %v4535, %v4860
        %v4995 = vadd.f32 %v4540, %v4865
        %v4996 = vadd.f32 %v4543, %v4868
        %v4997 = vadd.f32 %v4548, %v4873
        %v4998 = vadd.f32 %v4551, %v4876
        %v4999 = vadd.f32 %v4556, %v4881
        %v5000 = vadd.f32 %v4559, %v4884
        %v5001 = vadd.f32 %v4564, %v4889
        %v5002 = vadd.f32 %v4567, %v4892
        %v5003 = vadd.f32 %v4572, %v4897
        %v5004 = vadd.f32 %v4575, %v4900
        %v5005 = vadd.f32 %v4580, %v4905
        %v5006 = vadd.f32 %v4583, %v4908
        %v5007 = vadd.f32 %v4588, %v4913
        %v5008 = vadd.f32 %v4591, %v4916
        %v5009 = vadd.f32 %v4596, %v4921
        %v5010 = vadd.f32 %v4599, %v4924
        %v5011 = vadd.f32 %v4604, %v4929
        %v5012 = vadd.f32 %v4607, %v4932
        %v5013 = vadd.f32 %v4612, %v4937
        %v5014 = vadd.f32 %v4615, %v4940
        %v5015 = vadd.f32 %v4620, %v4945
        %v5016 = vadd.f32 %v4623, %v4948
        %v5017 = vadd.f32 %v4628, %v4953
        %v5018 = vadd.f32 %v4631, %v4956
        %v5019 = vadd.f32 %v4636, %v4961
        %v5020 = vadd.f32 %v4639, %v4964
        %v5021 = vadd.f32 %v4644, %v4969
        %v5022 = vadd.f32 %v4647, %v4972
        %v5023 = vadd.f32 %v4652, %v4977
        %v5024 = vadd.f32 %v4655, %v4980
        %v5025 = vadd.f32 %v4660, %v4985
        %v5026 = vadd.f32 %v4663, %v4988
        %v5027 = vld [vmem:[#allocation2 + $0x8] sm:$0x80]
        %v5028 = vld [vmem:[#allocation2 + $0x10] sm:$0xff]
        %v5029 = vld [vmem:[#allocation2 + $0x18] sm:$0xff]
        %v5030 = vld [vmem:[#allocation2 + $0x20] sm:$0xff]
        %v5031 = vld [vmem:[#allocation2 + $0x28] sm:$0xff]
        %v5032 = vld [vmem:[#allocation2 + $0x30] sm:$0xff]
        %v5033 = vld [vmem:[#allocation2 + $0x38] sm:$0xff]
        %v5034 = vld [vmem:[#allocation2 + $0x40] sm:$0xff]
        %v5035 = vld [vmem:[#allocation2 + $0x48] sm:$0xff]
        %v5036 = vld [vmem:[#allocation2 + $0x50] sm:$0xff]
        %v5037 = vld [vmem:[#allocation2 + $0x58] sm:$0xff]
        %v5038 = vld [vmem:[#allocation2 + $0x60] sm:$0xff]
        %v5039 = vld [vmem:[#allocation2 + $0x68] sm:$0xff]
        %v5040 = vld [vmem:[#allocation2 + $0x70] sm:$0xff]
        %v5041 = vld [vmem:[#allocation2 + $0x78] sm:$0xff]
        %v5042 = vld [vmem:[#allocation2 + $0x80] sm:$0xff]
        %v5043 = vld [vmem:[#allocation2 + $0x88] sm:$0xff]
        %v5044 = vld [vmem:[#allocation2 + $0x90] sm:$0xff]
        %v5045 = vld [vmem:[#allocation2 + $0x98] sm:$0xff]
        %s5046 = scalar_lea.vmem [#allocation3], 192
        %v5047 = vld [vmem:[%s5046] sm:$0xf]
        %v5048 = vld [vmem:[%s5046 + $0x4] sm:$0xf]
        %v5049 = vld [vmem:[%s5046 + $0x8] sm:$0xf]
        %v5050 = vld [vmem:[%s5046 + $0xc] sm:$0xf]
        %v5051 = vld [vmem:[%s5046 + $0x10] sm:$0xf]
        %v5052 = vld [vmem:[%s5046 + $0x14] sm:$0xf]
        %v5053 = vld [vmem:[%s5046 + $0x18] sm:$0xf]
        %v5054 = vld [vmem:[%s5046 + $0x1c] sm:$0xf]
        %v5055 = vld [vmem:[%s5046 + $0x20] sm:$0xf]
        %v5056 = vld [vmem:[%s5046 + $0x24] sm:$0xf]
        %v5057 = vld [vmem:[%s5046 + $0x28] sm:$0xf]
        %v5058 = vld [vmem:[%s5046 + $0x2c] sm:$0xf]
        %v5059 = vld [vmem:[%s5046 + $0x30] sm:$0xf]
        %v5060 = vld [vmem:[%s5046 + $0x34] sm:$0xf]
        %v5061 = vld [vmem:[%s5046 + $0x38] sm:$0xf]
        %v5062 = vld [vmem:[%s5046 + $0x3c] sm:$0xf]
        %v5064 = vshrl.u32 %v5027, 16
        %v5066 = vrot.slane %v5064, 7
        %v5068 = vshrl.u32 %v5028, 16
        %v5070 = vrot.slane %v5068, 7
        %v5071 = vshll.u32 %v5028, 16
        %v5073 = vor.u32 %v5070, %v5071
        %v5074 = vsel %vm4684, %v5066, %v5073
        %v5076 = vshrl.u32 %v5029, 16
        %v5078 = vrot.slane %v5076, 7
        %v5079 = vshll.u32 %v5029, 16
        %v5081 = vor.u32 %v5078, %v5079
        %v5082 = vsel %vm4684, %v5070, %v5081
        %v5084 = vshrl.u32 %v5030, 16
        %v5086 = vrot.slane %v5084, 7
        %v5087 = vshll.u32 %v5030, 16
        %v5089 = vor.u32 %v5086, %v5087
        %v5090 = vsel %vm4684, %v5078, %v5089
        %v5092 = vshrl.u32 %v5031, 16
        %v5094 = vrot.slane %v5092, 7
        %v5095 = vshll.u32 %v5031, 16
        %v5097 = vor.u32 %v5094, %v5095
        %v5098 = vsel %vm4684, %v5086, %v5097
        %v5100 = vshrl.u32 %v5032, 16
        %v5102 = vrot.slane %v5100, 7
        %v5103 = vshll.u32 %v5032, 16
        %v5105 = vor.u32 %v5102, %v5103
        %v5106 = vsel %vm4684, %v5094, %v5105
        %v5108 = vshrl.u32 %v5033, 16
        %v5110 = vrot.slane %v5108, 7
        %v5111 = vshll.u32 %v5033, 16
        %v5113 = vor.u32 %v5110, %v5111
        %v5114 = vsel %vm4684, %v5102, %v5113
        %v5116 = vshrl.u32 %v5034, 16
        %v5118 = vrot.slane %v5116, 7
        %v5119 = vshll.u32 %v5034, 16
        %v5121 = vor.u32 %v5118, %v5119
        %v5122 = vsel %vm4684, %v5110, %v5121
        %v5124 = vshrl.u32 %v5035, 16
        %v5126 = vrot.slane %v5124, 7
        %v5127 = vshll.u32 %v5035, 16
        %v5129 = vor.u32 %v5126, %v5127
        %v5130 = vsel %vm4684, %v5118, %v5129
        %v5132 = vshrl.u32 %v5036, 16
        %v5134 = vrot.slane %v5132, 7
        %v5135 = vshll.u32 %v5036, 16
        %v5137 = vor.u32 %v5134, %v5135
        %v5138 = vsel %vm4684, %v5126, %v5137
        %v5140 = vshrl.u32 %v5037, 16
        %v5142 = vrot.slane %v5140, 7
        %v5143 = vshll.u32 %v5037, 16
        %v5145 = vor.u32 %v5142, %v5143
        %v5146 = vsel %vm4684, %v5134, %v5145
        %v5148 = vshrl.u32 %v5038, 16
        %v5150 = vrot.slane %v5148, 7
        %v5151 = vshll.u32 %v5038, 16
        %v5153 = vor.u32 %v5150, %v5151
        %v5154 = vsel %vm4684, %v5142, %v5153
        %v5156 = vshrl.u32 %v5039, 16
        %v5158 = vrot.slane %v5156, 7
        %v5159 = vshll.u32 %v5039, 16
        %v5161 = vor.u32 %v5158, %v5159
        %v5162 = vsel %vm4684, %v5150, %v5161
        %v5164 = vshrl.u32 %v5040, 16
        %v5166 = vrot.slane %v5164, 7
        %v5167 = vshll.u32 %v5040, 16
        %v5169 = vor.u32 %v5166, %v5167
        %v5170 = vsel %vm4684, %v5158, %v5169
        %v5172 = vshrl.u32 %v5041, 16
        %v5174 = vrot.slane %v5172, 7
        %v5175 = vshll.u32 %v5041, 16
        %v5177 = vor.u32 %v5174, %v5175
        %v5178 = vsel %vm4684, %v5166, %v5177
        %v5180 = vshrl.u32 %v5042, 16
        %v5182 = vrot.slane %v5180, 7
        %v5183 = vshll.u32 %v5042, 16
        %v5185 = vor.u32 %v5182, %v5183
        %v5186 = vsel %vm4684, %v5174, %v5185
        %v5188 = vshrl.u32 %v5043, 16
        %v5190 = vrot.slane %v5188, 7
        %v5191 = vshll.u32 %v5043, 16
        %v5193 = vor.u32 %v5190, %v5191
        %v5194 = vsel %vm4684, %v5182, %v5193
        %v5196 = vshrl.u32 %v5044, 16
        %v5198 = vrot.slane %v5196, 7
        %v5199 = vshll.u32 %v5044, 16
        %v5201 = vor.u32 %v5198, %v5199
        %v5202 = vsel %vm4684, %v5190, %v5201
        %v5204 = vshrl.u32 %v5045, 16
        %v5206 = vrot.slane %v5204, 7
        %v5207 = vshll.u32 %v5045, 16
        %v5209 = vor.u32 %v5206, %v5207
        %v5210 = vsel %vm4684, %v5198, %v5209
        %v5245 = vunpack.c.l.b16 %v5047
        %v5246 = vunpack.c.l.b16 %v5048
        %v5247 = vunpack.c.l.b16 %v5049
        %v5248 = vunpack.c.l.b16 %v5050
        %v5249 = vunpack.c.l.b16 %v5051
        %v5250 = vunpack.c.l.b16 %v5052
        %v5251 = vunpack.c.l.b16 %v5053
        %v5252 = vunpack.c.l.b16 %v5054
        %v5253 = vunpack.c.l.b16 %v5055
        %v5254 = vunpack.c.l.b16 %v5056
        %v5255 = vunpack.c.l.b16 %v5057
        %v5256 = vunpack.c.l.b16 %v5058
        %v5257 = vunpack.c.l.b16 %v5059
        %v5258 = vunpack.c.l.b16 %v5060
        %v5259 = vunpack.c.l.b16 %v5061
        %v5260 = vunpack.c.l.b16 %v5062
        %v5261 = vpack.c.b16 %v5246, %v5245
        %v5262 = vpack.c.b16 %v5248, %v5247
        %v5263 = vpack.c.b16 %v5250, %v5249
        %v5264 = vpack.c.b16 %v5252, %v5251
        %v5265 = vpack.c.b16 %v5254, %v5253
        %v5266 = vpack.c.b16 %v5256, %v5255
        %v5267 = vpack.c.b16 %v5258, %v5257
        %v5268 = vpack.c.b16 %v5260, %v5259
        %5277 = vmatprep.subr.bf16.mxu0 0
        %5278 = vmatpush1.bf16.msra.mxu0 %v5261
        %5279 = vmatprep.subr.bf16.mxu0 0
        %5280 = vmatpush1.bf16.msra.mxu0 %v5262
        %5281 = vmatprep.subr.bf16.mxu0 0
        %5282 = vmatpush1.bf16.msra.mxu0 %v5263
        %5283 = vmatprep.subr.bf16.mxu0 0
        %5284 = vmatpush1.bf16.msra.mxu0 %v5264
        %5285 = vmatprep.subr.bf16.mxu0 0
        %5286 = vmatpush1.bf16.msra.mxu0 %v5265
        %5287 = vmatprep.subr.bf16.mxu0 0
        %5288 = vmatpush1.bf16.msra.mxu0 %v5266
        %5289 = vmatprep.subr.bf16.mxu0 0
        %5290 = vmatpush1.bf16.msra.mxu0 %v5267
        %5291 = vmatprep.subr.bf16.mxu0 0
        %5292 = vmatpush1.bf16.msra.mxu0 %v5268
        %5293 = vmatprep.subr.bf16.mxu0 0
        %5294 = vmatpush1.bf16.msra.mxu0 0
        %5295 = vmatprep.subr.bf16.mxu0 0
        %5296 = vmatpush1.bf16.msra.mxu0 0
        %5297 = vmatprep.subr.bf16.mxu0 0
        %5298 = vmatpush1.bf16.msra.mxu0 0
        %5299 = vmatprep.subr.bf16.mxu0 0
        %5300 = vmatpush1.bf16.msra.mxu0 0
        %5301 = vmatprep.subr.bf16.mxu0 0
        %5302 = vmatpush1.bf16.msra.mxu0 0
        %5303 = vmatprep.subr.bf16.mxu0 0
        %5304 = vmatpush1.bf16.msra.mxu0 0
        %5305 = vmatprep.subr.bf16.mxu0 0
        %5306 = vmatpush1.bf16.msra.mxu0 0
        %5307 = vmatprep.subr.bf16.mxu0 0
        %5308 = vmatpush1.bf16.msra.mxu0 0
        %5309 = vmatprep.mubr.bf16.mxu0 0
        %5310 = vmatmul.mubr.bf16.gmra.mrb[0].mxu0 %v5074
        %v5311 = vpop.f32.mrb[0].mxu0
        %v5312 = vadd.f32 0.0, %v5311
        %v5313 = vpop.f32.mrb[0].mxu0
        %v5314 = vpop.f32.mrb[0].mxu0
        %v5315 = vadd.f32 0.0, %v5314
        %v5316 = vpop.f32.mrb[0].mxu0
        %5317 = vmatprep.mubr.bf16.mxu0 0
        %5318 = vmatmul.mubr.bf16.gmra.mrb[0].mxu0 %v5082
        %v5319 = vpop.f32.mrb[0].mxu0
        %v5320 = vadd.f32 0.0, %v5319
        %v5321 = vpop.f32.mrb[0].mxu0
        %v5322 = vpop.f32.mrb[0].mxu0
        %v5323 = vadd.f32 0.0, %v5322
        %v5324 = vpop.f32.mrb[0].mxu0
        %5325 = vmatprep.mubr.bf16.mxu0 0
        %5326 = vmatmul.mubr.bf16.gmra.mrb[0].mxu0 %v5090
        %v5327 = vpop.f32.mrb[0].mxu0
        %v5328 = vadd.f32 0.0, %v5327
        %v5329 = vpop.f32.mrb[0].mxu0
        %v5330 = vpop.f32.mrb[0].mxu0
        %v5331 = vadd.f32 0.0, %v5330
        %v5332 = vpop.f32.mrb[0].mxu0
        %5333 = vmatprep.mubr.bf16.mxu0 0
        %5334 = vmatmul.mubr.bf16.gmra.mrb[0].mxu0 %v5098
        %v5335 = vpop.f32.mrb[0].mxu0
        %v5336 = vadd.f32 0.0, %v5335
        %v5337 = vpop.f32.mrb[0].mxu0
        %v5338 = vpop.f32.mrb[0].mxu0
        %v5339 = vadd.f32 0.0, %v5338
        %v5340 = vpop.f32.mrb[0].mxu0
        %5341 = vmatprep.mubr.bf16.mxu0 0
        %5342 = vmatmul.mubr.bf16.gmra.mrb[0].mxu0 %v5106
        %v5343 = vpop.f32.mrb[0].mxu0
        %v5344 = vadd.f32 0.0, %v5343
        %v5345 = vpop.f32.mrb[0].mxu0
        %v5346 = vpop.f32.mrb[0].mxu0
        %v5347 = vadd.f32 0.0, %v5346
        %v5348 = vpop.f32.mrb[0].mxu0
        %5349 = vmatprep.mubr.bf16.mxu0 0
        %5350 = vmatmul.mubr.bf16.gmra.mrb[0].mxu0 %v5114
        %v5351 = vpop.f32.mrb[0].mxu0
        %v5352 = vadd.f32 0.0, %v5351
        %v5353 = vpop.f32.mrb[0].mxu0
        %v5354 = vpop.f32.mrb[0].mxu0
        %v5355 = vadd.f32 0.0, %v5354
        %v5356 = vpop.f32.mrb[0].mxu0
        %5357 = vmatprep.mubr.bf16.mxu0 0
        %5358 = vmatmul.mubr.bf16.gmra.mrb[0].mxu0 %v5122
        %v5359 = vpop.f32.mrb[0].mxu0
        %v5360 = vadd.f32 0.0, %v5359
        %v5361 = vpop.f32.mrb[0].mxu0
        %v5362 = vpop.f32.mrb[0].mxu0
        %v5363 = vadd.f32 0.0, %v5362
        %v5364 = vpop.f32.mrb[0].mxu0
        %5365 = vmatprep.mubr.bf16.mxu0 0
        %5366 = vmatmul.mubr.bf16.gmra.mrb[0].mxu0 %v5130
        %v5367 = vpop.f32.mrb[0].mxu0
        %v5368 = vadd.f32 0.0, %v5367
        %v5369 = vpop.f32.mrb[0].mxu0
        %v5370 = vpop.f32.mrb[0].mxu0
        %v5371 = vadd.f32 0.0, %v5370
        %v5372 = vpop.f32.mrb[0].mxu0
        %5373 = vmatprep.mubr.bf16.mxu0 0
        %5374 = vmatmul.mubr.bf16.gmra.mrb[0].mxu0 %v5138
        %v5375 = vpop.f32.mrb[0].mxu0
        %v5376 = vadd.f32 0.0, %v5375
        %v5377 = vpop.f32.mrb[0].mxu0
        %v5378 = vpop.f32.mrb[0].mxu0
        %v5379 = vadd.f32 0.0, %v5378
        %v5380 = vpop.f32.mrb[0].mxu0
        %5381 = vmatprep.mubr.bf16.mxu0 0
        %5382 = vmatmul.mubr.bf16.gmra.mrb[0].mxu0 %v5146
        %v5383 = vpop.f32.mrb[0].mxu0
        %v5384 = vadd.f32 0.0, %v5383
        %v5385 = vpop.f32.mrb[0].mxu0
        %v5386 = vpop.f32.mrb[0].mxu0
        %v5387 = vadd.f32 0.0, %v5386
        %v5388 = vpop.f32.mrb[0].mxu0
        %5389 = vmatprep.mubr.bf16.mxu0 0
        %5390 = vmatmul.mubr.bf16.gmra.mrb[0].mxu0 %v5154
        %v5391 = vpop.f32.mrb[0].mxu0
        %v5392 = vadd.f32 0.0, %v5391
        %v5393 = vpop.f32.mrb[0].mxu0
        %v5394 = vpop.f32.mrb[0].mxu0
        %v5395 = vadd.f32 0.0, %v5394
        %v5396 = vpop.f32.mrb[0].mxu0
        %5397 = vmatprep.mubr.bf16.mxu0 0
        %5398 = vmatmul.mubr.bf16.gmra.mrb[0].mxu0 %v5162
        %v5399 = vpop.f32.mrb[0].mxu0
        %v5400 = vadd.f32 0.0, %v5399
        %v5401 = vpop.f32.mrb[0].mxu0
        %v5402 = vpop.f32.mrb[0].mxu0
        %v5403 = vadd.f32 0.0, %v5402
        %v5404 = vpop.f32.mrb[0].mxu0
        %5405 = vmatprep.mubr.bf16.mxu0 0
        %5406 = vmatmul.mubr.bf16.gmra.mrb[0].mxu0 %v5170
        %v5407 = vpop.f32.mrb[0].mxu0
        %v5408 = vadd.f32 0.0, %v5407
        %v5409 = vpop.f32.mrb[0].mxu0
        %v5410 = vpop.f32.mrb[0].mxu0
        %v5411 = vadd.f32 0.0, %v5410
        %v5412 = vpop.f32.mrb[0].mxu0
        %5413 = vmatprep.mubr.bf16.mxu0 0
        %5414 = vmatmul.mubr.bf16.gmra.mrb[0].mxu0 %v5178
        %v5415 = vpop.f32.mrb[0].mxu0
        %v5416 = vadd.f32 0.0, %v5415
        %v5417 = vpop.f32.mrb[0].mxu0
        %v5418 = vpop.f32.mrb[0].mxu0
        %v5419 = vadd.f32 0.0, %v5418
        %v5420 = vpop.f32.mrb[0].mxu0
        %5421 = vmatprep.mubr.bf16.mxu0 0
        %5422 = vmatmul.mubr.bf16.gmra.mrb[0].mxu0 %v5186
        %v5423 = vpop.f32.mrb[0].mxu0
        %v5424 = vadd.f32 0.0, %v5423
        %v5425 = vpop.f32.mrb[0].mxu0
        %v5426 = vpop.f32.mrb[0].mxu0
        %v5427 = vadd.f32 0.0, %v5426
        %v5428 = vpop.f32.mrb[0].mxu0
        %5429 = vmatprep.mubr.bf16.mxu0 0
        %5430 = vmatmul.mubr.bf16.gmra.mrb[0].mxu0 %v5194
        %v5431 = vpop.f32.mrb[0].mxu0
        %v5432 = vadd.f32 0.0, %v5431
        %v5433 = vpop.f32.mrb[0].mxu0
        %v5434 = vpop.f32.mrb[0].mxu0
        %v5435 = vadd.f32 0.0, %v5434
        %v5436 = vpop.f32.mrb[0].mxu0
        %5437 = vmatprep.mubr.bf16.mxu0 0
        %5438 = vmatmul.mubr.bf16.gmra.mrb[0].mxu0 %v5202
        %v5439 = vpop.f32.mrb[0].mxu0
        %v5440 = vadd.f32 0.0, %v5439
        %v5441 = vpop.f32.mrb[0].mxu0
        %v5442 = vpop.f32.mrb[0].mxu0
        %v5443 = vadd.f32 0.0, %v5442
        %v5444 = vpop.f32.mrb[0].mxu0
        %5445 = vmatprep.mubr.bf16.mxu0 0
        %5446 = vmatmul.mubr.bf16.gmra.mrb[0].mxu0 %v5210
        %v5447 = vpop.f32.mrb[0].mxu0
        %v5448 = vadd.f32 0.0, %v5447
        %v5449 = vpop.f32.mrb[0].mxu0
        %v5450 = vpop.f32.mrb[0].mxu0
        %v5451 = vadd.f32 0.0, %v5450
        %v5452 = vpop.f32.mrb[0].mxu0
        %5453 = vdwg.mxu0
        %v5454 = vadd.f32 %v4991, %v5312
        %v5455 = vadd.f32 %v4992, %v5315
        %v5456 = vadd.f32 %v4993, %v5320
        %v5457 = vadd.f32 %v4994, %v5323
        %v5458 = vadd.f32 %v4995, %v5328
        %v5459 = vadd.f32 %v4996, %v5331
        %v5460 = vadd.f32 %v4997, %v5336
        %v5461 = vadd.f32 %v4998, %v5339
        %v5462 = vadd.f32 %v4999, %v5344
        %v5463 = vadd.f32 %v5000, %v5347
        %v5464 = vadd.f32 %v5001, %v5352
        %v5465 = vadd.f32 %v5002, %v5355
        %v5466 = vadd.f32 %v5003, %v5360
        %v5467 = vadd.f32 %v5004, %v5363
        %v5468 = vadd.f32 %v5005, %v5368
        %v5469 = vadd.f32 %v5006, %v5371
        %v5470 = vadd.f32 %v5007, %v5376
        %v5471 = vadd.f32 %v5008, %v5379
        %v5472 = vadd.f32 %v5009, %v5384
        %v5473 = vadd.f32 %v5010, %v5387
        %v5474 = vadd.f32 %v5011, %v5392
        %v5475 = vadd.f32 %v5012, %v5395
        %v5476 = vadd.f32 %v5013, %v5400
        %v5477 = vadd.f32 %v5014, %v5403
        %v5478 = vadd.f32 %v5015, %v5408
        %v5479 = vadd.f32 %v5016, %v5411
        %v5480 = vadd.f32 %v5017, %v5416
        %v5481 = vadd.f32 %v5018, %v5419
        %v5482 = vadd.f32 %v5019, %v5424
        %v5483 = vadd.f32 %v5020, %v5427
        %v5484 = vadd.f32 %v5021, %v5432
        %v5485 = vadd.f32 %v5022, %v5435
        %v5486 = vadd.f32 %v5023, %v5440
        %v5487 = vadd.f32 %v5024, %v5443
        %v5488 = vadd.f32 %v5025, %v5448
        %v5489 = vadd.f32 %v5026, %v5451
        %s5490 = scalar_lea.vmem [#allocation3], 256
        %v5491 = vld [vmem:[%s5490] sm:$0xf]
        %v5492 = vld [vmem:[%s5490 + $0x4] sm:$0xf]
        %v5493 = vld [vmem:[%s5490 + $0x8] sm:$0xf]
        %v5494 = vld [vmem:[%s5490 + $0xc] sm:$0xf]
        %v5495 = vld [vmem:[%s5490 + $0x10] sm:$0xf]
        %v5496 = vld [vmem:[%s5490 + $0x14] sm:$0xf]
        %v5497 = vld [vmem:[%s5490 + $0x18] sm:$0xf]
        %v5498 = vld [vmem:[%s5490 + $0x1c] sm:$0xf]
        %v5499 = vld [vmem:[%s5490 + $0x20] sm:$0xf]
        %v5500 = vld [vmem:[%s5490 + $0x24] sm:$0xf]
        %v5501 = vld [vmem:[%s5490 + $0x28] sm:$0xf]
        %v5502 = vld [vmem:[%s5490 + $0x2c] sm:$0xf]
        %v5503 = vld [vmem:[%s5490 + $0x30] sm:$0xf]
        %v5504 = vld [vmem:[%s5490 + $0x34] sm:$0xf]
        %v5505 = vld [vmem:[%s5490 + $0x38] sm:$0xf]
        %v5506 = vld [vmem:[%s5490 + $0x3c] sm:$0xf]
        %v5523 = vunpack.c.l.b16 %v5491
        %v5524 = vunpack.c.l.b16 %v5492
        %v5525 = vunpack.c.l.b16 %v5493
        %v5526 = vunpack.c.l.b16 %v5494
        %v5527 = vunpack.c.l.b16 %v5495
        %v5528 = vunpack.c.l.b16 %v5496
        %v5529 = vunpack.c.l.b16 %v5497
        %v5530 = vunpack.c.l.b16 %v5498
        %v5531 = vunpack.c.l.b16 %v5499
        %v5532 = vunpack.c.l.b16 %v5500
        %v5533 = vunpack.c.l.b16 %v5501
        %v5534 = vunpack.c.l.b16 %v5502
        %v5535 = vunpack.c.l.b16 %v5503
        %v5536 = vunpack.c.l.b16 %v5504
        %v5537 = vunpack.c.l.b16 %v5505
        %v5538 = vunpack.c.l.b16 %v5506
        %v5539 = vpack.c.b16 %v5524, %v5523
        %v5540 = vpack.c.b16 %v5526, %v5525
        %v5541 = vpack.c.b16 %v5528, %v5527
        %v5542 = vpack.c.b16 %v5530, %v5529
        %v5543 = vpack.c.b16 %v5532, %v5531
        %v5544 = vpack.c.b16 %v5534, %v5533
        %v5545 = vpack.c.b16 %v5536, %v5535
        %v5546 = vpack.c.b16 %v5538, %v5537
        %5555 = vmatprep.subr.bf16.mxu0 0
        %5556 = vmatpush1.bf16.msra.mxu0 %v5539
        %5557 = vmatprep.subr.bf16.mxu0 0
        %5558 = vmatpush1.bf16.msra.mxu0 %v5540
        %5559 = vmatprep.subr.bf16.mxu0 0
        %5560 = vmatpush1.bf16.msra.mxu0 %v5541
        %5561 = vmatprep.subr.bf16.mxu0 0
        %5562 = vmatpush1.bf16.msra.mxu0 %v5542
        %5563 = vmatprep.subr.bf16.mxu0 0
        %5564 = vmatpush1.bf16.msra.mxu0 %v5543
        %5565 = vmatprep.subr.bf16.mxu0 0
        %5566 = vmatpush1.bf16.msra.mxu0 %v5544
        %5567 = vmatprep.subr.bf16.mxu0 0
        %5568 = vmatpush1.bf16.msra.mxu0 %v5545
        %5569 = vmatprep.subr.bf16.mxu0 0
        %5570 = vmatpush1.bf16.msra.mxu0 %v5546
        %5571 = vmatprep.subr.bf16.mxu0 0
        %5572 = vmatpush1.bf16.msra.mxu0 0
        %5573 = vmatprep.subr.bf16.mxu0 0
        %5574 = vmatpush1.bf16.msra.mxu0 0
        %5575 = vmatprep.subr.bf16.mxu0 0
        %5576 = vmatpush1.bf16.msra.mxu0 0
        %5577 = vmatprep.subr.bf16.mxu0 0
        %5578 = vmatpush1.bf16.msra.mxu0 0
        %5579 = vmatprep.subr.bf16.mxu0 0
        %5580 = vmatpush1.bf16.msra.mxu0 0
        %5581 = vmatprep.subr.bf16.mxu0 0
        %5582 = vmatpush1.bf16.msra.mxu0 0
        %5583 = vmatprep.subr.bf16.mxu0 0
        %5584 = vmatpush1.bf16.msra.mxu0 0
        %5585 = vmatprep.subr.bf16.mxu0 0
        %5586 = vmatpush1.bf16.msra.mxu0 0
        %5587 = vmatprep.mubr.bf16.mxu0 0
        %5588 = vmatmul.mubr.bf16.gmra.mrb[0].mxu0 %v5028
        %v5589 = vpop.f32.mrb[0].mxu0
        %v5590 = vadd.f32 0.0, %v5589
        %v5591 = vpop.f32.mrb[0].mxu0
        %v5592 = vpop.f32.mrb[0].mxu0
        %v5593 = vadd.f32 0.0, %v5592
        %v5594 = vpop.f32.mrb[0].mxu0
        %5595 = vmatprep.mubr.bf16.mxu0 0
        %5596 = vmatmul.mubr.bf16.gmra.mrb[0].mxu0 %v5029
        %v5597 = vpop.f32.mrb[0].mxu0
        %v5598 = vadd.f32 0.0, %v5597
        %v5599 = vpop.f32.mrb[0].mxu0
        %v5600 = vpop.f32.mrb[0].mxu0
        %v5601 = vadd.f32 0.0, %v5600
        %v5602 = vpop.f32.mrb[0].mxu0
        %5603 = vmatprep.mubr.bf16.mxu0 0
        %5604 = vmatmul.mubr.bf16.gmra.mrb[0].mxu0 %v5030
        %v5605 = vpop.f32.mrb[0].mxu0
        %v5606 = vadd.f32 0.0, %v5605
        %v5607 = vpop.f32.mrb[0].mxu0
        %v5608 = vpop.f32.mrb[0].mxu0
        %v5609 = vadd.f32 0.0, %v5608
        %v5610 = vpop.f32.mrb[0].mxu0
        %5611 = vmatprep.mubr.bf16.mxu0 0
        %5612 = vmatmul.mubr.bf16.gmra.mrb[0].mxu0 %v5031
        %v5613 = vpop.f32.mrb[0].mxu0
        %v5614 = vadd.f32 0.0, %v5613
        %v5615 = vpop.f32.mrb[0].mxu0
        %v5616 = vpop.f32.mrb[0].mxu0
        %v5617 = vadd.f32 0.0, %v5616
        %v5618 = vpop.f32.mrb[0].mxu0
        %5619 = vmatprep.mubr.bf16.mxu0 0
        %5620 = vmatmul.mubr.bf16.gmra.mrb[0].mxu0 %v5032
        %v5621 = vpop.f32.mrb[0].mxu0
        %v5622 = vadd.f32 0.0, %v5621
        %v5623 = vpop.f32.mrb[0].mxu0
        %v5624 = vpop.f32.mrb[0].mxu0
        %v5625 = vadd.f32 0.0, %v5624
        %v5626 = vpop.f32.mrb[0].mxu0
        %5627 = vmatprep.mubr.bf16.mxu0 0
        %5628 = vmatmul.mubr.bf16.gmra.mrb[0].mxu0 %v5033
        %v5629 = vpop.f32.mrb[0].mxu0
        %v5630 = vadd.f32 0.0, %v5629
        %v5631 = vpop.f32.mrb[0].mxu0
        %v5632 = vpop.f32.mrb[0].mxu0
        %v5633 = vadd.f32 0.0, %v5632
        %v5634 = vpop.f32.mrb[0].mxu0
        %5635 = vmatprep.mubr.bf16.mxu0 0
        %5636 = vmatmul.mubr.bf16.gmra.mrb[0].mxu0 %v5034
        %v5637 = vpop.f32.mrb[0].mxu0
        %v5638 = vadd.f32 0.0, %v5637
        %v5639 = vpop.f32.mrb[0].mxu0
        %v5640 = vpop.f32.mrb[0].mxu0
        %v5641 = vadd.f32 0.0, %v5640
        %v5642 = vpop.f32.mrb[0].mxu0
        %5643 = vmatprep.mubr.bf16.mxu0 0
        %5644 = vmatmul.mubr.bf16.gmra.mrb[0].mxu0 %v5035
        %v5645 = vpop.f32.mrb[0].mxu0
        %v5646 = vadd.f32 0.0, %v5645
        %v5647 = vpop.f32.mrb[0].mxu0
        %v5648 = vpop.f32.mrb[0].mxu0
        %v5649 = vadd.f32 0.0, %v5648
        %v5650 = vpop.f32.mrb[0].mxu0
        %5651 = vmatprep.mubr.bf16.mxu0 0
        %5652 = vmatmul.mubr.bf16.gmra.mrb[0].mxu0 %v5036
        %v5653 = vpop.f32.mrb[0].mxu0
        %v5654 = vadd.f32 0.0, %v5653
        %v5655 = vpop.f32.mrb[0].mxu0
        %v5656 = vpop.f32.mrb[0].mxu0
        %v5657 = vadd.f32 0.0, %v5656
        %v5658 = vpop.f32.mrb[0].mxu0
        %5659 = vmatprep.mubr.bf16.mxu0 0
        %5660 = vmatmul.mubr.bf16.gmra.mrb[0].mxu0 %v5037
        %v5661 = vpop.f32.mrb[0].mxu0
        %v5662 = vadd.f32 0.0, %v5661
        %v5663 = vpop.f32.mrb[0].mxu0
        %v5664 = vpop.f32.mrb[0].mxu0
        %v5665 = vadd.f32 0.0, %v5664
        %v5666 = vpop.f32.mrb[0].mxu0
        %5667 = vmatprep.mubr.bf16.mxu0 0
        %5668 = vmatmul.mubr.bf16.gmra.mrb[0].mxu0 %v5038
        %v5669 = vpop.f32.mrb[0].mxu0
        %v5670 = vadd.f32 0.0, %v5669
        %v5671 = vpop.f32.mrb[0].mxu0
        %v5672 = vpop.f32.mrb[0].mxu0
        %v5673 = vadd.f32 0.0, %v5672
        %v5674 = vpop.f32.mrb[0].mxu0
        %5675 = vmatprep.mubr.bf16.mxu0 0
        %5676 = vmatmul.mubr.bf16.gmra.mrb[0].mxu0 %v5039
        %v5677 = vpop.f32.mrb[0].mxu0
        %v5678 = vadd.f32 0.0, %v5677
        %v5679 = vpop.f32.mrb[0].mxu0
        %v5680 = vpop.f32.mrb[0].mxu0
        %v5681 = vadd.f32 0.0, %v5680
        %v5682 = vpop.f32.mrb[0].mxu0
        %5683 = vmatprep.mubr.bf16.mxu0 0
        %5684 = vmatmul.mubr.bf16.gmra.mrb[0].mxu0 %v5040
        %v5685 = vpop.f32.mrb[0].mxu0
        %v5686 = vadd.f32 0.0, %v5685
        %v5687 = vpop.f32.mrb[0].mxu0
        %v5688 = vpop.f32.mrb[0].mxu0
        %v5689 = vadd.f32 0.0, %v5688
        %v5690 = vpop.f32.mrb[0].mxu0
        %5691 = vmatprep.mubr.bf16.mxu0 0
        %5692 = vmatmul.mubr.bf16.gmra.mrb[0].mxu0 %v5041
        %v5693 = vpop.f32.mrb[0].mxu0
        %v5694 = vadd.f32 0.0, %v5693
        %v5695 = vpop.f32.mrb[0].mxu0
        %v5696 = vpop.f32.mrb[0].mxu0
        %v5697 = vadd.f32 0.0, %v5696
        %v5698 = vpop.f32.mrb[0].mxu0
        %5699 = vmatprep.mubr.bf16.mxu0 0
        %5700 = vmatmul.mubr.bf16.gmra.mrb[0].mxu0 %v5042
        %v5701 = vpop.f32.mrb[0].mxu0
        %v5702 = vadd.f32 0.0, %v5701
        %v5703 = vpop.f32.mrb[0].mxu0
        %v5704 = vpop.f32.mrb[0].mxu0
        %v5705 = vadd.f32 0.0, %v5704
        %v5706 = vpop.f32.mrb[0].mxu0
        %5707 = vmatprep.mubr.bf16.mxu0 0
        %5708 = vmatmul.mubr.bf16.gmra.mrb[0].mxu0 %v5043
        %v5709 = vpop.f32.mrb[0].mxu0
        %v5710 = vadd.f32 0.0, %v5709
        %v5711 = vpop.f32.mrb[0].mxu0
        %v5712 = vpop.f32.mrb[0].mxu0
        %v5713 = vadd.f32 0.0, %v5712
        %v5714 = vpop.f32.mrb[0].mxu0
        %5715 = vmatprep.mubr.bf16.mxu0 0
        %5716 = vmatmul.mubr.bf16.gmra.mrb[0].mxu0 %v5044
        %v5717 = vpop.f32.mrb[0].mxu0
        %v5718 = vadd.f32 0.0, %v5717
        %v5719 = vpop.f32.mrb[0].mxu0
        %v5720 = vpop.f32.mrb[0].mxu0
        %v5721 = vadd.f32 0.0, %v5720
        %v5722 = vpop.f32.mrb[0].mxu0
        %5723 = vmatprep.mubr.bf16.mxu0 0
        %5724 = vmatmul.mubr.bf16.gmra.mrb[0].mxu0 %v5045
        %v5725 = vpop.f32.mrb[0].mxu0
        %v5726 = vadd.f32 0.0, %v5725
        %v5727 = vpop.f32.mrb[0].mxu0
        %v5728 = vpop.f32.mrb[0].mxu0
        %v5729 = vadd.f32 0.0, %v5728
        %v5730 = vpop.f32.mrb[0].mxu0
        %5731 = vdwg.mxu0
        %v5732 = vadd.f32 %v5454, %v5590
        %v5733 = vadd.f32 %v5455, %v5593
        %v5734 = vadd.f32 %v5456, %v5598
        %v5735 = vadd.f32 %v5457, %v5601
        %v5736 = vadd.f32 %v5458, %v5606
        %v5737 = vadd.f32 %v5459, %v5609
        %v5738 = vadd.f32 %v5460, %v5614
        %v5739 = vadd.f32 %v5461, %v5617
        %v5740 = vadd.f32 %v5462, %v5622
        %v5741 = vadd.f32 %v5463, %v5625
        %v5742 = vadd.f32 %v5464, %v5630
        %v5743 = vadd.f32 %v5465, %v5633
        %v5744 = vadd.f32 %v5466, %v5638
        %v5745 = vadd.f32 %v5467, %v5641
        %v5746 = vadd.f32 %v5468, %v5646
        %v5747 = vadd.f32 %v5469, %v5649
        %v5748 = vadd.f32 %v5470, %v5654
        %v5749 = vadd.f32 %v5471, %v5657
        %v5750 = vadd.f32 %v5472, %v5662
        %v5751 = vadd.f32 %v5473, %v5665
        %v5752 = vadd.f32 %v5474, %v5670
        %v5753 = vadd.f32 %v5475, %v5673
        %v5754 = vadd.f32 %v5476, %v5678
        %v5755 = vadd.f32 %v5477, %v5681
        %v5756 = vadd.f32 %v5478, %v5686
        %v5757 = vadd.f32 %v5479, %v5689
        %v5758 = vadd.f32 %v5480, %v5694
        %v5759 = vadd.f32 %v5481, %v5697
        %v5760 = vadd.f32 %v5482, %v5702
        %v5761 = vadd.f32 %v5483, %v5705
        %v5762 = vadd.f32 %v5484, %v5710
        %v5763 = vadd.f32 %v5485, %v5713
        %v5764 = vadd.f32 %v5486, %v5718
        %v5765 = vadd.f32 %v5487, %v5721
        %v5766 = vadd.f32 %v5488, %v5726
        %v5767 = vadd.f32 %v5489, %v5729
        %v5768 = vld [vmem:[#allocation2 + $0x10] sm:$0xff]
        %v5769 = vld [vmem:[#allocation2 + $0x18] sm:$0xff]
        %v5770 = vld [vmem:[#allocation2 + $0x20] sm:$0xff]
        %v5771 = vld [vmem:[#allocation2 + $0x28] sm:$0xff]
        %v5772 = vld [vmem:[#allocation2 + $0x30] sm:$0xff]
        %v5773 = vld [vmem:[#allocation2 + $0x38] sm:$0xff]
        %v5774 = vld [vmem:[#allocation2 + $0x40] sm:$0xff]
        %v5775 = vld [vmem:[#allocation2 + $0x48] sm:$0xff]
        %v5776 = vld [vmem:[#allocation2 + $0x50] sm:$0xff]
        %v5777 = vld [vmem:[#allocation2 + $0x58] sm:$0xff]
        %v5778 = vld [vmem:[#allocation2 + $0x60] sm:$0xff]
        %v5779 = vld [vmem:[#allocation2 + $0x68] sm:$0xff]
        %v5780 = vld [vmem:[#allocation2 + $0x70] sm:$0xff]
        %v5781 = vld [vmem:[#allocation2 + $0x78] sm:$0xff]
        %v5782 = vld [vmem:[#allocation2 + $0x80] sm:$0xff]
        %v5783 = vld [vmem:[#allocation2 + $0x88] sm:$0xff]
        %v5784 = vld [vmem:[#allocation2 + $0x90] sm:$0xff]
        %v5785 = vld [vmem:[#allocation2 + $0x98] sm:$0xff]
        %v5786 = vld [vmem:[#allocation2 + $0xa0] sm:$0x1]
        %s5787 = scalar_lea.vmem [#allocation3], 320
        %v5788 = vld [vmem:[%s5787] sm:$0xf]
        %v5789 = vld [vmem:[%s5787 + $0x4] sm:$0xf]
        %v5790 = vld [vmem:[%s5787 + $0x8] sm:$0xf]
        %v5791 = vld [vmem:[%s5787 + $0xc] sm:$0xf]
        %v5792 = vld [vmem:[%s5787 + $0x10] sm:$0xf]
        %v5793 = vld [vmem:[%s5787 + $0x14] sm:$0xf]
        %v5794 = vld [vmem:[%s5787 + $0x18] sm:$0xf]
        %v5795 = vld [vmem:[%s5787 + $0x1c] sm:$0xf]
        %v5796 = vld [vmem:[%s5787 + $0x20] sm:$0xf]
        %v5797 = vld [vmem:[%s5787 + $0x24] sm:$0xf]
        %v5798 = vld [vmem:[%s5787 + $0x28] sm:$0xf]
        %v5799 = vld [vmem:[%s5787 + $0x2c] sm:$0xf]
        %v5800 = vld [vmem:[%s5787 + $0x30] sm:$0xf]
        %v5801 = vld [vmem:[%s5787 + $0x34] sm:$0xf]
        %v5802 = vld [vmem:[%s5787 + $0x38] sm:$0xf]
        %v5803 = vld [vmem:[%s5787 + $0x3c] sm:$0xf]
        %v5805 = vshrl.u32 %v5768, 16
        %v5807 = vshll.u32 %v5768, 16
        %v5809 = vrot.slane %v5807, 1
        %v5810 = vor.u32 %v5805, %v5809
        %v5812 = vshll.u32 %v5769, 16
        %v5814 = vrot.slane %v5812, 1
        %v5815 = vsel %vm432, %v5810, %v5814
        %v5816 = vshrl.u32 %v5769, 16
        %v5818 = vor.u32 %v5816, %v5814
        %v5820 = vshll.u32 %v5770, 16
        %v5822 = vrot.slane %v5820, 1
        %v5823 = vsel %vm432, %v5818, %v5822
        %v5824 = vshrl.u32 %v5770, 16
        %v5826 = vor.u32 %v5824, %v5822
        %v5828 = vshll.u32 %v5771, 16
        %v5830 = vrot.slane %v5828, 1
        %v5831 = vsel %vm432, %v5826, %v5830
        %v5832 = vshrl.u32 %v5771, 16
        %v5834 = vor.u32 %v5832, %v5830
        %v5836 = vshll.u32 %v5772, 16
        %v5838 = vrot.slane %v5836, 1
        %v5839 = vsel %vm432, %v5834, %v5838
        %v5840 = vshrl.u32 %v5772, 16
        %v5842 = vor.u32 %v5840, %v5838
        %v5844 = vshll.u32 %v5773, 16
        %v5846 = vrot.slane %v5844, 1
        %v5847 = vsel %vm432, %v5842, %v5846
        %v5848 = vshrl.u32 %v5773, 16
        %v5850 = vor.u32 %v5848, %v5846
        %v5852 = vshll.u32 %v5774, 16
        %v5854 = vrot.slane %v5852, 1
        %v5855 = vsel %vm432, %v5850, %v5854
        %v5856 = vshrl.u32 %v5774, 16
        %v5858 = vor.u32 %v5856, %v5854
        %v5860 = vshll.u32 %v5775, 16
        %v5862 = vrot.slane %v5860, 1
        %v5863 = vsel %vm432, %v5858, %v5862
        %v5864 = vshrl.u32 %v5775, 16
        %v5866 = vor.u32 %v5864, %v5862
        %v5868 = vshll.u32 %v5776, 16
        %v5870 = vrot.slane %v5868, 1
        %v5871 = vsel %vm432, %v5866, %v5870
        %v5872 = vshrl.u32 %v5776, 16
        %v5874 = vor.u32 %v5872, %v5870
        %v5876 = vshll.u32 %v5777, 16
        %v5878 = vrot.slane %v5876, 1
        %v5879 = vsel %vm432, %v5874, %v5878
        %v5880 = vshrl.u32 %v5777, 16
        %v5882 = vor.u32 %v5880, %v5878
        %v5884 = vshll.u32 %v5778, 16
        %v5886 = vrot.slane %v5884, 1
        %v5887 = vsel %vm432, %v5882, %v5886
        %v5888 = vshrl.u32 %v5778, 16
        %v5890 = vor.u32 %v5888, %v5886
        %v5892 = vshll.u32 %v5779, 16
        %v5894 = vrot.slane %v5892, 1
        %v5895 = vsel %vm432, %v5890, %v5894
        %v5896 = vshrl.u32 %v5779, 16
        %v5898 = vor.u32 %v5896, %v5894
        %v5900 = vshll.u32 %v5780, 16
        %v5902 = vrot.slane %v5900, 1
        %v5903 = vsel %vm432, %v5898, %v5902
        %v5904 = vshrl.u32 %v5780, 16
        %v5906 = vor.u32 %v5904, %v5902
        %v5908 = vshll.u32 %v5781, 16
        %v5910 = vrot.slane %v5908, 1
        %v5911 = vsel %vm432, %v5906, %v5910
        %v5912 = vshrl.u32 %v5781, 16
        %v5914 = vor.u32 %v5912, %v5910
        %v5916 = vshll.u32 %v5782, 16
        %v5918 = vrot.slane %v5916, 1
        %v5919 = vsel %vm432, %v5914, %v5918
        %v5920 = vshrl.u32 %v5782, 16
        %v5922 = vor.u32 %v5920, %v5918
        %v5924 = vshll.u32 %v5783, 16
        %v5926 = vrot.slane %v5924, 1
        %v5927 = vsel %vm432, %v5922, %v5926
        %v5928 = vshrl.u32 %v5783, 16
        %v5930 = vor.u32 %v5928, %v5926
        %v5932 = vshll.u32 %v5784, 16
        %v5934 = vrot.slane %v5932, 1
        %v5935 = vsel %vm432, %v5930, %v5934
        %v5936 = vshrl.u32 %v5784, 16
        %v5938 = vor.u32 %v5936, %v5934
        %v5940 = vshll.u32 %v5785, 16
        %v5942 = vrot.slane %v5940, 1
        %v5943 = vsel %vm432, %v5938, %v5942
        %v5944 = vshrl.u32 %v5785, 16
        %v5946 = vor.u32 %v5944, %v5942
        %v5948 = vshll.u32 %v5786, 16
        %v5950 = vrot.slane %v5948, 1
        %v5951 = vsel %vm432, %v5946, %v5950
        %v5986 = vunpack.c.l.b16 %v5788
        %v5987 = vunpack.c.l.b16 %v5789
        %v5988 = vunpack.c.l.b16 %v5790
        %v5989 = vunpack.c.l.b16 %v5791
        %v5990 = vunpack.c.l.b16 %v5792
        %v5991 = vunpack.c.l.b16 %v5793
        %v5992 = vunpack.c.l.b16 %v5794
        %v5993 = vunpack.c.l.b16 %v5795
        %v5994 = vunpack.c.l.b16 %v5796
        %v5995 = vunpack.c.l.b16 %v5797
        %v5996 = vunpack.c.l.b16 %v5798
        %v5997 = vunpack.c.l.b16 %v5799
        %v5998 = vunpack.c.l.b16 %v5800
        %v5999 = vunpack.c.l.b16 %v5801
        %v6000 = vunpack.c.l.b16 %v5802
        %v6001 = vunpack.c.l.b16 %v5803
        %v6002 = vpack.c.b16 %v5987, %v5986
        %v6003 = vpack.c.b16 %v5989, %v5988
        %v6004 = vpack.c.b16 %v5991, %v5990
        %v6005 = vpack.c.b16 %v5993, %v5992
        %v6006 = vpack.c.b16 %v5995, %v5994
        %v6007 = vpack.c.b16 %v5997, %v5996
        %v6008 = vpack.c.b16 %v5999, %v5998
        %v6009 = vpack.c.b16 %v6001, %v6000
        %6018 = vmatprep.subr.bf16.mxu0 0
        %6019 = vmatpush1.bf16.msra.mxu0 %v6002
        %6020 = vmatprep.subr.bf16.mxu0 0
        %6021 = vmatpush1.bf16.msra.mxu0 %v6003
        %6022 = vmatprep.subr.bf16.mxu0 0
        %6023 = vmatpush1.bf16.msra.mxu0 %v6004
        %6024 = vmatprep.subr.bf16.mxu0 0
        %6025 = vmatpush1.bf16.msra.mxu0 %v6005
        %6026 = vmatprep.subr.bf16.mxu0 0
        %6027 = vmatpush1.bf16.msra.mxu0 %v6006
        %6028 = vmatprep.subr.bf16.mxu0 0
        %6029 = vmatpush1.bf16.msra.mxu0 %v6007
        %6030 = vmatprep.subr.bf16.mxu0 0
        %6031 = vmatpush1.bf16.msra.mxu0 %v6008
        %6032 = vmatprep.subr.bf16.mxu0 0
        %6033 = vmatpush1.bf16.msra.mxu0 %v6009
        %6034 = vmatprep.subr.bf16.mxu0 0
        %6035 = vmatpush1.bf16.msra.mxu0 0
        %6036 = vmatprep.subr.bf16.mxu0 0
        %6037 = vmatpush1.bf16.msra.mxu0 0
        %6038 = vmatprep.subr.bf16.mxu0 0
        %6039 = vmatpush1.bf16.msra.mxu0 0
        %6040 = vmatprep.subr.bf16.mxu0 0
        %6041 = vmatpush1.bf16.msra.mxu0 0
        %6042 = vmatprep.subr.bf16.mxu0 0
        %6043 = vmatpush1.bf16.msra.mxu0 0
        %6044 = vmatprep.subr.bf16.mxu0 0
        %6045 = vmatpush1.bf16.msra.mxu0 0
        %6046 = vmatprep.subr.bf16.mxu0 0
        %6047 = vmatpush1.bf16.msra.mxu0 0
        %6048 = vmatprep.subr.bf16.mxu0 0
        %6049 = vmatpush1.bf16.msra.mxu0 0
        %6050 = vmatprep.mubr.bf16.mxu0 0
        %6051 = vmatmul.mubr.bf16.gmra.mrb[0].mxu0 %v5815
        %v6052 = vpop.f32.mrb[0].mxu0
        %v6053 = vadd.f32 0.0, %v6052
        %v6054 = vpop.f32.mrb[0].mxu0
        %v6055 = vpop.f32.mrb[0].mxu0
        %v6056 = vadd.f32 0.0, %v6055
        %v6057 = vpop.f32.mrb[0].mxu0
        %6058 = vmatprep.mubr.bf16.mxu0 0
        %6059 = vmatmul.mubr.bf16.gmra.mrb[0].mxu0 %v5823
        %v6060 = vpop.f32.mrb[0].mxu0
        %v6061 = vadd.f32 0.0, %v6060
        %v6062 = vpop.f32.mrb[0].mxu0
        %v6063 = vpop.f32.mrb[0].mxu0
        %v6064 = vadd.f32 0.0, %v6063
        %v6065 = vpop.f32.mrb[0].mxu0
        %6066 = vmatprep.mubr.bf16.mxu0 0
        %6067 = vmatmul.mubr.bf16.gmra.mrb[0].mxu0 %v5831
        %v6068 = vpop.f32.mrb[0].mxu0
        %v6069 = vadd.f32 0.0, %v6068
        %v6070 = vpop.f32.mrb[0].mxu0
        %v6071 = vpop.f32.mrb[0].mxu0
        %v6072 = vadd.f32 0.0, %v6071
        %v6073 = vpop.f32.mrb[0].mxu0
        %6074 = vmatprep.mubr.bf16.mxu0 0
        %6075 = vmatmul.mubr.bf16.gmra.mrb[0].mxu0 %v5839
        %v6076 = vpop.f32.mrb[0].mxu0
        %v6077 = vadd.f32 0.0, %v6076
        %v6078 = vpop.f32.mrb[0].mxu0
        %v6079 = vpop.f32.mrb[0].mxu0
        %v6080 = vadd.f32 0.0, %v6079
        %v6081 = vpop.f32.mrb[0].mxu0
        %6082 = vmatprep.mubr.bf16.mxu0 0
        %6083 = vmatmul.mubr.bf16.gmra.mrb[0].mxu0 %v5847
        %v6084 = vpop.f32.mrb[0].mxu0
        %v6085 = vadd.f32 0.0, %v6084
        %v6086 = vpop.f32.mrb[0].mxu0
        %v6087 = vpop.f32.mrb[0].mxu0
        %v6088 = vadd.f32 0.0, %v6087
        %v6089 = vpop.f32.mrb[0].mxu0
        %6090 = vmatprep.mubr.bf16.mxu0 0
        %6091 = vmatmul.mubr.bf16.gmra.mrb[0].mxu0 %v5855
        %v6092 = vpop.f32.mrb[0].mxu0
        %v6093 = vadd.f32 0.0, %v6092
        %v6094 = vpop.f32.mrb[0].mxu0
        %v6095 = vpop.f32.mrb[0].mxu0
        %v6096 = vadd.f32 0.0, %v6095
        %v6097 = vpop.f32.mrb[0].mxu0
        %6098 = vmatprep.mubr.bf16.mxu0 0
        %6099 = vmatmul.mubr.bf16.gmra.mrb[0].mxu0 %v5863
        %v6100 = vpop.f32.mrb[0].mxu0
        %v6101 = vadd.f32 0.0, %v6100
        %v6102 = vpop.f32.mrb[0].mxu0
        %v6103 = vpop.f32.mrb[0].mxu0
        %v6104 = vadd.f32 0.0, %v6103
        %v6105 = vpop.f32.mrb[0].mxu0
        %6106 = vmatprep.mubr.bf16.mxu0 0
        %6107 = vmatmul.mubr.bf16.gmra.mrb[0].mxu0 %v5871
        %v6108 = vpop.f32.mrb[0].mxu0
        %v6109 = vadd.f32 0.0, %v6108
        %v6110 = vpop.f32.mrb[0].mxu0
        %v6111 = vpop.f32.mrb[0].mxu0
        %v6112 = vadd.f32 0.0, %v6111
        %v6113 = vpop.f32.mrb[0].mxu0
        %6114 = vmatprep.mubr.bf16.mxu0 0
        %6115 = vmatmul.mubr.bf16.gmra.mrb[0].mxu0 %v5879
        %v6116 = vpop.f32.mrb[0].mxu0
        %v6117 = vadd.f32 0.0, %v6116
        %v6118 = vpop.f32.mrb[0].mxu0
        %v6119 = vpop.f32.mrb[0].mxu0
        %v6120 = vadd.f32 0.0, %v6119
        %v6121 = vpop.f32.mrb[0].mxu0
        %6122 = vmatprep.mubr.bf16.mxu0 0
        %6123 = vmatmul.mubr.bf16.gmra.mrb[0].mxu0 %v5887
        %v6124 = vpop.f32.mrb[0].mxu0
        %v6125 = vadd.f32 0.0, %v6124
        %v6126 = vpop.f32.mrb[0].mxu0
        %v6127 = vpop.f32.mrb[0].mxu0
        %v6128 = vadd.f32 0.0, %v6127
        %v6129 = vpop.f32.mrb[0].mxu0
        %6130 = vmatprep.mubr.bf16.mxu0 0
        %6131 = vmatmul.mubr.bf16.gmra.mrb[0].mxu0 %v5895
        %v6132 = vpop.f32.mrb[0].mxu0
        %v6133 = vadd.f32 0.0, %v6132
        %v6134 = vpop.f32.mrb[0].mxu0
        %v6135 = vpop.f32.mrb[0].mxu0
        %v6136 = vadd.f32 0.0, %v6135
        %v6137 = vpop.f32.mrb[0].mxu0
        %6138 = vmatprep.mubr.bf16.mxu0 0
        %6139 = vmatmul.mubr.bf16.gmra.mrb[0].mxu0 %v5903
        %v6140 = vpop.f32.mrb[0].mxu0
        %v6141 = vadd.f32 0.0, %v6140
        %v6142 = vpop.f32.mrb[0].mxu0
        %v6143 = vpop.f32.mrb[0].mxu0
        %v6144 = vadd.f32 0.0, %v6143
        %v6145 = vpop.f32.mrb[0].mxu0
        %6146 = vmatprep.mubr.bf16.mxu0 0
        %6147 = vmatmul.mubr.bf16.gmra.mrb[0].mxu0 %v5911
        %v6148 = vpop.f32.mrb[0].mxu0
        %v6149 = vadd.f32 0.0, %v6148
        %v6150 = vpop.f32.mrb[0].mxu0
        %v6151 = vpop.f32.mrb[0].mxu0
        %v6152 = vadd.f32 0.0, %v6151
        %v6153 = vpop.f32.mrb[0].mxu0
        %6154 = vmatprep.mubr.bf16.mxu0 0
        %6155 = vmatmul.mubr.bf16.gmra.mrb[0].mxu0 %v5919
        %v6156 = vpop.f32.mrb[0].mxu0
        %v6157 = vadd.f32 0.0, %v6156
        %v6158 = vpop.f32.mrb[0].mxu0
        %v6159 = vpop.f32.mrb[0].mxu0
        %v6160 = vadd.f32 0.0, %v6159
        %v6161 = vpop.f32.mrb[0].mxu0
        %6162 = vmatprep.mubr.bf16.mxu0 0
        %6163 = vmatmul.mubr.bf16.gmra.mrb[0].mxu0 %v5927
        %v6164 = vpop.f32.mrb[0].mxu0
        %v6165 = vadd.f32 0.0, %v6164
        %v6166 = vpop.f32.mrb[0].mxu0
        %v6167 = vpop.f32.mrb[0].mxu0
        %v6168 = vadd.f32 0.0, %v6167
        %v6169 = vpop.f32.mrb[0].mxu0
        %6170 = vmatprep.mubr.bf16.mxu0 0
        %6171 = vmatmul.mubr.bf16.gmra.mrb[0].mxu0 %v5935
        %v6172 = vpop.f32.mrb[0].mxu0
        %v6173 = vadd.f32 0.0, %v6172
        %v6174 = vpop.f32.mrb[0].mxu0
        %v6175 = vpop.f32.mrb[0].mxu0
        %v6176 = vadd.f32 0.0, %v6175
        %v6177 = vpop.f32.mrb[0].mxu0
        %6178 = vmatprep.mubr.bf16.mxu0 0
        %6179 = vmatmul.mubr.bf16.gmra.mrb[0].mxu0 %v5943
        %v6180 = vpop.f32.mrb[0].mxu0
        %v6181 = vadd.f32 0.0, %v6180
        %v6182 = vpop.f32.mrb[0].mxu0
        %v6183 = vpop.f32.mrb[0].mxu0
        %v6184 = vadd.f32 0.0, %v6183
        %v6185 = vpop.f32.mrb[0].mxu0
        %6186 = vmatprep.mubr.bf16.mxu0 0
        %6187 = vmatmul.mubr.bf16.gmra.mrb[0].mxu0 %v5951
        %v6188 = vpop.f32.mrb[0].mxu0
        %v6189 = vadd.f32 0.0, %v6188
        %v6190 = vpop.f32.mrb[0].mxu0
        %v6191 = vpop.f32.mrb[0].mxu0
        %v6192 = vadd.f32 0.0, %v6191
        %v6193 = vpop.f32.mrb[0].mxu0
        %6194 = vdwg.mxu0
        %v6195 = vadd.f32 %v5732, %v6053
        %v6196 = vadd.f32 %v5733, %v6056
        %v6197 = vadd.f32 %v5734, %v6061
        %v6198 = vadd.f32 %v5735, %v6064
        %v6199 = vadd.f32 %v5736, %v6069
        %v6200 = vadd.f32 %v5737, %v6072
        %v6201 = vadd.f32 %v5738, %v6077
        %v6202 = vadd.f32 %v5739, %v6080
        %v6203 = vadd.f32 %v5740, %v6085
        %v6204 = vadd.f32 %v5741, %v6088
        %v6205 = vadd.f32 %v5742, %v6093
        %v6206 = vadd.f32 %v5743, %v6096
        %v6207 = vadd.f32 %v5744, %v6101
        %v6208 = vadd.f32 %v5745, %v6104
        %v6209 = vadd.f32 %v5746, %v6109
        %v6210 = vadd.f32 %v5747, %v6112
        %v6211 = vadd.f32 %v5748, %v6117
        %v6212 = vadd.f32 %v5749, %v6120
        %v6213 = vadd.f32 %v5750, %v6125
        %v6214 = vadd.f32 %v5751, %v6128
        %v6215 = vadd.f32 %v5752, %v6133
        %v6216 = vadd.f32 %v5753, %v6136
        %v6217 = vadd.f32 %v5754, %v6141
        %v6218 = vadd.f32 %v5755, %v6144
        %v6219 = vadd.f32 %v5756, %v6149
        %v6220 = vadd.f32 %v5757, %v6152
        %v6221 = vadd.f32 %v5758, %v6157
        %v6222 = vadd.f32 %v5759, %v6160
        %v6223 = vadd.f32 %v5760, %v6165
        %v6224 = vadd.f32 %v5761, %v6168
        %v6225 = vadd.f32 %v5762, %v6173
        %v6226 = vadd.f32 %v5763, %v6176
        %v6227 = vadd.f32 %v5764, %v6181
        %v6228 = vadd.f32 %v5765, %v6184
        %v6229 = vadd.f32 %v5766, %v6189
        %v6230 = vadd.f32 %v5767, %v6192
        %v6231 = vld [vmem:[#allocation2 + $0x18] sm:$0xff]
        %v6232 = vld [vmem:[#allocation2 + $0x20] sm:$0xff]
        %v6233 = vld [vmem:[#allocation2 + $0x28] sm:$0xff]
        %v6234 = vld [vmem:[#allocation2 + $0x30] sm:$0xff]
        %v6235 = vld [vmem:[#allocation2 + $0x38] sm:$0xff]
        %v6236 = vld [vmem:[#allocation2 + $0x40] sm:$0xff]
        %v6237 = vld [vmem:[#allocation2 + $0x48] sm:$0xff]
        %v6238 = vld [vmem:[#allocation2 + $0x50] sm:$0xff]
        %v6239 = vld [vmem:[#allocation2 + $0x58] sm:$0xff]
        %v6240 = vld [vmem:[#allocation2 + $0x60] sm:$0xff]
        %v6241 = vld [vmem:[#allocation2 + $0x68] sm:$0xff]
        %v6242 = vld [vmem:[#allocation2 + $0x70] sm:$0xff]
        %v6243 = vld [vmem:[#allocation2 + $0x78] sm:$0xff]
        %v6244 = vld [vmem:[#allocation2 + $0x80] sm:$0xff]
        %v6245 = vld [vmem:[#allocation2 + $0x88] sm:$0xff]
        %v6246 = vld [vmem:[#allocation2 + $0x90] sm:$0xff]
        %v6247 = vld [vmem:[#allocation2 + $0x98] sm:$0xff]
        %v6248 = vld [vmem:[#allocation2 + $0xa0] sm:$0xff]
        %v6249 = vld [vmem:[#allocation2 + $0xa8] sm:$0x1]
        %s6250 = scalar_lea.vmem [#allocation3], 384
        %v6251 = vld [vmem:[%s6250] sm:$0xf]
        %v6252 = vld [vmem:[%s6250 + $0x4] sm:$0xf]
        %v6253 = vld [vmem:[%s6250 + $0x8] sm:$0xf]
        %v6254 = vld [vmem:[%s6250 + $0xc] sm:$0xf]
        %v6255 = vld [vmem:[%s6250 + $0x10] sm:$0xf]
        %v6256 = vld [vmem:[%s6250 + $0x14] sm:$0xf]
        %v6257 = vld [vmem:[%s6250 + $0x18] sm:$0xf]
        %v6258 = vld [vmem:[%s6250 + $0x1c] sm:$0xf]
        %v6259 = vld [vmem:[%s6250 + $0x20] sm:$0xf]
        %v6260 = vld [vmem:[%s6250 + $0x24] sm:$0xf]
        %v6261 = vld [vmem:[%s6250 + $0x28] sm:$0xf]
        %v6262 = vld [vmem:[%s6250 + $0x2c] sm:$0xf]
        %v6263 = vld [vmem:[%s6250 + $0x30] sm:$0xf]
        %v6264 = vld [vmem:[%s6250 + $0x34] sm:$0xf]
        %v6265 = vld [vmem:[%s6250 + $0x38] sm:$0xf]
        %v6266 = vld [vmem:[%s6250 + $0x3c] sm:$0xf]
        %v6268 = vshrl.u32 %v6231, 16
        %v6270 = vshll.u32 %v6231, 16
        %v6272 = vrot.slane %v6270, 1
        %v6273 = vor.u32 %v6268, %v6272
        %v6275 = vshll.u32 %v6232, 16
        %v6277 = vrot.slane %v6275, 1
        %v6278 = vsel %vm432, %v6273, %v6277
        %v6279 = vshrl.u32 %v6232, 16
        %v6281 = vor.u32 %v6279, %v6277
        %v6283 = vshll.u32 %v6233, 16
        %v6285 = vrot.slane %v6283, 1
        %v6286 = vsel %vm432, %v6281, %v6285
        %v6287 = vshrl.u32 %v6233, 16
        %v6289 = vor.u32 %v6287, %v6285
        %v6291 = vshll.u32 %v6234, 16
        %v6293 = vrot.slane %v6291, 1
        %v6294 = vsel %vm432, %v6289, %v6293
        %v6295 = vshrl.u32 %v6234, 16
        %v6297 = vor.u32 %v6295, %v6293
        %v6299 = vshll.u32 %v6235, 16
        %v6301 = vrot.slane %v6299, 1
        %v6302 = vsel %vm432, %v6297, %v6301
        %v6303 = vshrl.u32 %v6235, 16
        %v6305 = vor.u32 %v6303, %v6301
        %v6307 = vshll.u32 %v6236, 16
        %v6309 = vrot.slane %v6307, 1
        %v6310 = vsel %vm432, %v6305, %v6309
        %v6311 = vshrl.u32 %v6236, 16
        %v6313 = vor.u32 %v6311, %v6309
        %v6315 = vshll.u32 %v6237, 16
        %v6317 = vrot.slane %v6315, 1
        %v6318 = vsel %vm432, %v6313, %v6317
        %v6319 = vshrl.u32 %v6237, 16
        %v6321 = vor.u32 %v6319, %v6317
        %v6323 = vshll.u32 %v6238, 16
        %v6325 = vrot.slane %v6323, 1
        %v6326 = vsel %vm432, %v6321, %v6325
        %v6327 = vshrl.u32 %v6238, 16
        %v6329 = vor.u32 %v6327, %v6325
        %v6331 = vshll.u32 %v6239, 16
        %v6333 = vrot.slane %v6331, 1
        %v6334 = vsel %vm432, %v6329, %v6333
        %v6335 = vshrl.u32 %v6239, 16
        %v6337 = vor.u32 %v6335, %v6333
        %v6339 = vshll.u32 %v6240, 16
        %v6341 = vrot.slane %v6339, 1
        %v6342 = vsel %vm432, %v6337, %v6341
        %v6343 = vshrl.u32 %v6240, 16
        %v6345 = vor.u32 %v6343, %v6341
        %v6347 = vshll.u32 %v6241, 16
        %v6349 = vrot.slane %v6347, 1
        %v6350 = vsel %vm432, %v6345, %v6349
        %v6351 = vshrl.u32 %v6241, 16
        %v6353 = vor.u32 %v6351, %v6349
        %v6355 = vshll.u32 %v6242, 16
        %v6357 = vrot.slane %v6355, 1
        %v6358 = vsel %vm432, %v6353, %v6357
        %v6359 = vshrl.u32 %v6242, 16
        %v6361 = vor.u32 %v6359, %v6357
        %v6363 = vshll.u32 %v6243, 16
        %v6365 = vrot.slane %v6363, 1
        %v6366 = vsel %vm432, %v6361, %v6365
        %v6367 = vshrl.u32 %v6243, 16
        %v6369 = vor.u32 %v6367, %v6365
        %v6371 = vshll.u32 %v6244, 16
        %v6373 = vrot.slane %v6371, 1
        %v6374 = vsel %vm432, %v6369, %v6373
        %v6375 = vshrl.u32 %v6244, 16
        %v6377 = vor.u32 %v6375, %v6373
        %v6379 = vshll.u32 %v6245, 16
        %v6381 = vrot.slane %v6379, 1
        %v6382 = vsel %vm432, %v6377, %v6381
        %v6383 = vshrl.u32 %v6245, 16
        %v6385 = vor.u32 %v6383, %v6381
        %v6387 = vshll.u32 %v6246, 16
        %v6389 = vrot.slane %v6387, 1
        %v6390 = vsel %vm432, %v6385, %v6389
        %v6391 = vshrl.u32 %v6246, 16
        %v6393 = vor.u32 %v6391, %v6389
        %v6395 = vshll.u32 %v6247, 16
        %v6397 = vrot.slane %v6395, 1
        %v6398 = vsel %vm432, %v6393, %v6397
        %v6399 = vshrl.u32 %v6247, 16
        %v6401 = vor.u32 %v6399, %v6397
        %v6403 = vshll.u32 %v6248, 16
        %v6405 = vrot.slane %v6403, 1
        %v6406 = vsel %vm432, %v6401, %v6405
        %v6407 = vshrl.u32 %v6248, 16
        %v6409 = vor.u32 %v6407, %v6405
        %v6411 = vshll.u32 %v6249, 16
        %v6413 = vrot.slane %v6411, 1
        %v6414 = vsel %vm432, %v6409, %v6413
        %v6449 = vunpack.c.l.b16 %v6251
        %v6450 = vunpack.c.l.b16 %v6252
        %v6451 = vunpack.c.l.b16 %v6253
        %v6452 = vunpack.c.l.b16 %v6254
        %v6453 = vunpack.c.l.b16 %v6255
        %v6454 = vunpack.c.l.b16 %v6256
        %v6455 = vunpack.c.l.b16 %v6257
        %v6456 = vunpack.c.l.b16 %v6258
        %v6457 = vunpack.c.l.b16 %v6259
        %v6458 = vunpack.c.l.b16 %v6260
        %v6459 = vunpack.c.l.b16 %v6261
        %v6460 = vunpack.c.l.b16 %v6262
        %v6461 = vunpack.c.l.b16 %v6263
        %v6462 = vunpack.c.l.b16 %v6264
        %v6463 = vunpack.c.l.b16 %v6265
        %v6464 = vunpack.c.l.b16 %v6266
        %v6465 = vpack.c.b16 %v6450, %v6449
        %v6466 = vpack.c.b16 %v6452, %v6451
        %v6467 = vpack.c.b16 %v6454, %v6453
        %v6468 = vpack.c.b16 %v6456, %v6455
        %v6469 = vpack.c.b16 %v6458, %v6457
        %v6470 = vpack.c.b16 %v6460, %v6459
        %v6471 = vpack.c.b16 %v6462, %v6461
        %v6472 = vpack.c.b16 %v6464, %v6463
        %6481 = vmatprep.subr.bf16.mxu0 0
        %6482 = vmatpush1.bf16.msra.mxu0 %v6465
        %6483 = vmatprep.subr.bf16.mxu0 0
        %6484 = vmatpush1.bf16.msra.mxu0 %v6466
        %6485 = vmatprep.subr.bf16.mxu0 0
        %6486 = vmatpush1.bf16.msra.mxu0 %v6467
        %6487 = vmatprep.subr.bf16.mxu0 0
        %6488 = vmatpush1.bf16.msra.mxu0 %v6468
        %6489 = vmatprep.subr.bf16.mxu0 0
        %6490 = vmatpush1.bf16.msra.mxu0 %v6469
        %6491 = vmatprep.subr.bf16.mxu0 0
        %6492 = vmatpush1.bf16.msra.mxu0 %v6470
        %6493 = vmatprep.subr.bf16.mxu0 0
        %6494 = vmatpush1.bf16.msra.mxu0 %v6471
        %6495 = vmatprep.subr.bf16.mxu0 0
        %6496 = vmatpush1.bf16.msra.mxu0 %v6472
        %6497 = vmatprep.subr.bf16.mxu0 0
        %6498 = vmatpush1.bf16.msra.mxu0 0
        %6499 = vmatprep.subr.bf16.mxu0 0
        %6500 = vmatpush1.bf16.msra.mxu0 0
        %6501 = vmatprep.subr.bf16.mxu0 0
        %6502 = vmatpush1.bf16.msra.mxu0 0
        %6503 = vmatprep.subr.bf16.mxu0 0
        %6504 = vmatpush1.bf16.msra.mxu0 0
        %6505 = vmatprep.subr.bf16.mxu0 0
        %6506 = vmatpush1.bf16.msra.mxu0 0
        %6507 = vmatprep.subr.bf16.mxu0 0
        %6508 = vmatpush1.bf16.msra.mxu0 0
        %6509 = vmatprep.subr.bf16.mxu0 0
        %6510 = vmatpush1.bf16.msra.mxu0 0
        %6511 = vmatprep.subr.bf16.mxu0 0
        %6512 = vmatpush1.bf16.msra.mxu0 0
        %6513 = vmatprep.mubr.bf16.mxu0 0
        %6514 = vmatmul.mubr.bf16.gmra.mrb[0].mxu0 %v6278
        %v6515 = vpop.f32.mrb[0].mxu0
        %v6516 = vadd.f32 0.0, %v6515
        %v6517 = vpop.f32.mrb[0].mxu0
        %v6518 = vpop.f32.mrb[0].mxu0
        %v6519 = vadd.f32 0.0, %v6518
        %v6520 = vpop.f32.mrb[0].mxu0
        %6521 = vmatprep.mubr.bf16.mxu0 0
        %6522 = vmatmul.mubr.bf16.gmra.mrb[0].mxu0 %v6286
        %v6523 = vpop.f32.mrb[0].mxu0
        %v6524 = vadd.f32 0.0, %v6523
        %v6525 = vpop.f32.mrb[0].mxu0
        %v6526 = vpop.f32.mrb[0].mxu0
        %v6527 = vadd.f32 0.0, %v6526
        %v6528 = vpop.f32.mrb[0].mxu0
        %6529 = vmatprep.mubr.bf16.mxu0 0
        %6530 = vmatmul.mubr.bf16.gmra.mrb[0].mxu0 %v6294
        %v6531 = vpop.f32.mrb[0].mxu0
        %v6532 = vadd.f32 0.0, %v6531
        %v6533 = vpop.f32.mrb[0].mxu0
        %v6534 = vpop.f32.mrb[0].mxu0
        %v6535 = vadd.f32 0.0, %v6534
        %v6536 = vpop.f32.mrb[0].mxu0
        %6537 = vmatprep.mubr.bf16.mxu0 0
        %6538 = vmatmul.mubr.bf16.gmra.mrb[0].mxu0 %v6302
        %v6539 = vpop.f32.mrb[0].mxu0
        %v6540 = vadd.f32 0.0, %v6539
        %v6541 = vpop.f32.mrb[0].mxu0
        %v6542 = vpop.f32.mrb[0].mxu0
        %v6543 = vadd.f32 0.0, %v6542
        %v6544 = vpop.f32.mrb[0].mxu0
        %6545 = vmatprep.mubr.bf16.mxu0 0
        %6546 = vmatmul.mubr.bf16.gmra.mrb[0].mxu0 %v6310
        %v6547 = vpop.f32.mrb[0].mxu0
        %v6548 = vadd.f32 0.0, %v6547
        %v6549 = vpop.f32.mrb[0].mxu0
        %v6550 = vpop.f32.mrb[0].mxu0
        %v6551 = vadd.f32 0.0, %v6550
        %v6552 = vpop.f32.mrb[0].mxu0
        %6553 = vmatprep.mubr.bf16.mxu0 0
        %6554 = vmatmul.mubr.bf16.gmra.mrb[0].mxu0 %v6318
        %v6555 = vpop.f32.mrb[0].mxu0
        %v6556 = vadd.f32 0.0, %v6555
        %v6557 = vpop.f32.mrb[0].mxu0
        %v6558 = vpop.f32.mrb[0].mxu0
        %v6559 = vadd.f32 0.0, %v6558
        %v6560 = vpop.f32.mrb[0].mxu0
        %6561 = vmatprep.mubr.bf16.mxu0 0
        %6562 = vmatmul.mubr.bf16.gmra.mrb[0].mxu0 %v6326
        %v6563 = vpop.f32.mrb[0].mxu0
        %v6564 = vadd.f32 0.0, %v6563
        %v6565 = vpop.f32.mrb[0].mxu0
        %v6566 = vpop.f32.mrb[0].mxu0
        %v6567 = vadd.f32 0.0, %v6566
        %v6568 = vpop.f32.mrb[0].mxu0
        %6569 = vmatprep.mubr.bf16.mxu0 0
        %6570 = vmatmul.mubr.bf16.gmra.mrb[0].mxu0 %v6334
        %v6571 = vpop.f32.mrb[0].mxu0
        %v6572 = vadd.f32 0.0, %v6571
        %v6573 = vpop.f32.mrb[0].mxu0
        %v6574 = vpop.f32.mrb[0].mxu0
        %v6575 = vadd.f32 0.0, %v6574
        %v6576 = vpop.f32.mrb[0].mxu0
        %6577 = vmatprep.mubr.bf16.mxu0 0
        %6578 = vmatmul.mubr.bf16.gmra.mrb[0].mxu0 %v6342
        %v6579 = vpop.f32.mrb[0].mxu0
        %v6580 = vadd.f32 0.0, %v6579
        %v6581 = vpop.f32.mrb[0].mxu0
        %v6582 = vpop.f32.mrb[0].mxu0
        %v6583 = vadd.f32 0.0, %v6582
        %v6584 = vpop.f32.mrb[0].mxu0
        %6585 = vmatprep.mubr.bf16.mxu0 0
        %6586 = vmatmul.mubr.bf16.gmra.mrb[0].mxu0 %v6350
        %v6587 = vpop.f32.mrb[0].mxu0
        %v6588 = vadd.f32 0.0, %v6587
        %v6589 = vpop.f32.mrb[0].mxu0
        %v6590 = vpop.f32.mrb[0].mxu0
        %v6591 = vadd.f32 0.0, %v6590
        %v6592 = vpop.f32.mrb[0].mxu0
        %6593 = vmatprep.mubr.bf16.mxu0 0
        %6594 = vmatmul.mubr.bf16.gmra.mrb[0].mxu0 %v6358
        %v6595 = vpop.f32.mrb[0].mxu0
        %v6596 = vadd.f32 0.0, %v6595
        %v6597 = vpop.f32.mrb[0].mxu0
        %v6598 = vpop.f32.mrb[0].mxu0
        %v6599 = vadd.f32 0.0, %v6598
        %v6600 = vpop.f32.mrb[0].mxu0
        %6601 = vmatprep.mubr.bf16.mxu0 0
        %6602 = vmatmul.mubr.bf16.gmra.mrb[0].mxu0 %v6366
        %v6603 = vpop.f32.mrb[0].mxu0
        %v6604 = vadd.f32 0.0, %v6603
        %v6605 = vpop.f32.mrb[0].mxu0
        %v6606 = vpop.f32.mrb[0].mxu0
        %v6607 = vadd.f32 0.0, %v6606
        %v6608 = vpop.f32.mrb[0].mxu0
        %6609 = vmatprep.mubr.bf16.mxu0 0
        %6610 = vmatmul.mubr.bf16.gmra.mrb[0].mxu0 %v6374
        %v6611 = vpop.f32.mrb[0].mxu0
        %v6612 = vadd.f32 0.0, %v6611
        %v6613 = vpop.f32.mrb[0].mxu0
        %v6614 = vpop.f32.mrb[0].mxu0
        %v6615 = vadd.f32 0.0, %v6614
        %v6616 = vpop.f32.mrb[0].mxu0
        %6617 = vmatprep.mubr.bf16.mxu0 0
        %6618 = vmatmul.mubr.bf16.gmra.mrb[0].mxu0 %v6382
        %v6619 = vpop.f32.mrb[0].mxu0
        %v6620 = vadd.f32 0.0, %v6619
        %v6621 = vpop.f32.mrb[0].mxu0
        %v6622 = vpop.f32.mrb[0].mxu0
        %v6623 = vadd.f32 0.0, %v6622
        %v6624 = vpop.f32.mrb[0].mxu0
        %6625 = vmatprep.mubr.bf16.mxu0 0
        %6626 = vmatmul.mubr.bf16.gmra.mrb[0].mxu0 %v6390
        %v6627 = vpop.f32.mrb[0].mxu0
        %v6628 = vadd.f32 0.0, %v6627
        %v6629 = vpop.f32.mrb[0].mxu0
        %v6630 = vpop.f32.mrb[0].mxu0
        %v6631 = vadd.f32 0.0, %v6630
        %v6632 = vpop.f32.mrb[0].mxu0
        %6633 = vmatprep.mubr.bf16.mxu0 0
        %6634 = vmatmul.mubr.bf16.gmra.mrb[0].mxu0 %v6398
        %v6635 = vpop.f32.mrb[0].mxu0
        %v6636 = vadd.f32 0.0, %v6635
        %v6637 = vpop.f32.mrb[0].mxu0
        %v6638 = vpop.f32.mrb[0].mxu0
        %v6639 = vadd.f32 0.0, %v6638
        %v6640 = vpop.f32.mrb[0].mxu0
        %6641 = vmatprep.mubr.bf16.mxu0 0
        %6642 = vmatmul.mubr.bf16.gmra.mrb[0].mxu0 %v6406
        %v6643 = vpop.f32.mrb[0].mxu0
        %v6644 = vadd.f32 0.0, %v6643
        %v6645 = vpop.f32.mrb[0].mxu0
        %v6646 = vpop.f32.mrb[0].mxu0
        %v6647 = vadd.f32 0.0, %v6646
        %v6648 = vpop.f32.mrb[0].mxu0
        %6649 = vmatprep.mubr.bf16.mxu0 0
        %6650 = vmatmul.mubr.bf16.gmra.mrb[0].mxu0 %v6414
        %v6651 = vpop.f32.mrb[0].mxu0
        %v6652 = vadd.f32 0.0, %v6651
        %v6653 = vpop.f32.mrb[0].mxu0
        %v6654 = vpop.f32.mrb[0].mxu0
        %v6655 = vadd.f32 0.0, %v6654
        %v6656 = vpop.f32.mrb[0].mxu0
        %6657 = vdwg.mxu0
        %v6658 = vadd.f32 %v6195, %v6516
        %v6659 = vadd.f32 %v6196, %v6519
        %v6660 = vadd.f32 %v6197, %v6524
        %v6661 = vadd.f32 %v6198, %v6527
        %v6662 = vadd.f32 %v6199, %v6532
        %v6663 = vadd.f32 %v6200, %v6535
        %v6664 = vadd.f32 %v6201, %v6540
        %v6665 = vadd.f32 %v6202, %v6543
        %v6666 = vadd.f32 %v6203, %v6548
        %v6667 = vadd.f32 %v6204, %v6551
        %v6668 = vadd.f32 %v6205, %v6556
        %v6669 = vadd.f32 %v6206, %v6559
        %v6670 = vadd.f32 %v6207, %v6564
        %v6671 = vadd.f32 %v6208, %v6567
        %v6672 = vadd.f32 %v6209, %v6572
        %v6673 = vadd.f32 %v6210, %v6575
        %v6674 = vadd.f32 %v6211, %v6580
        %v6675 = vadd.f32 %v6212, %v6583
        %v6676 = vadd.f32 %v6213, %v6588
        %v6677 = vadd.f32 %v6214, %v6591
        %v6678 = vadd.f32 %v6215, %v6596
        %v6679 = vadd.f32 %v6216, %v6599
        %v6680 = vadd.f32 %v6217, %v6604
        %v6681 = vadd.f32 %v6218, %v6607
        %v6682 = vadd.f32 %v6219, %v6612
        %v6683 = vadd.f32 %v6220, %v6615
        %v6684 = vadd.f32 %v6221, %v6620
        %v6685 = vadd.f32 %v6222, %v6623
        %v6686 = vadd.f32 %v6223, %v6628
        %v6687 = vadd.f32 %v6224, %v6631
        %v6688 = vadd.f32 %v6225, %v6636
        %v6689 = vadd.f32 %v6226, %v6639
        %v6690 = vadd.f32 %v6227, %v6644
        %v6691 = vadd.f32 %v6228, %v6647
        %v6692 = vadd.f32 %v6229, %v6652
        %v6693 = vadd.f32 %v6230, %v6655
        %v6694 = vld [vmem:[#allocation2 + $0x18] sm:$0xfe]
        %s6695 = scalar_lea.vmem [#allocation3], 448
        %v6696 = vld [vmem:[%s6695] sm:$0xf]
        %v6697 = vld [vmem:[%s6695 + $0x4] sm:$0xf]
        %v6698 = vld [vmem:[%s6695 + $0x8] sm:$0xf]
        %v6699 = vld [vmem:[%s6695 + $0xc] sm:$0xf]
        %v6700 = vld [vmem:[%s6695 + $0x10] sm:$0xf]
        %v6701 = vld [vmem:[%s6695 + $0x14] sm:$0xf]
        %v6702 = vld [vmem:[%s6695 + $0x18] sm:$0xf]
        %v6703 = vld [vmem:[%s6695 + $0x1c] sm:$0xf]
        %v6704 = vld [vmem:[%s6695 + $0x20] sm:$0xf]
        %v6705 = vld [vmem:[%s6695 + $0x24] sm:$0xf]
        %v6706 = vld [vmem:[%s6695 + $0x28] sm:$0xf]
        %v6707 = vld [vmem:[%s6695 + $0x2c] sm:$0xf]
        %v6708 = vld [vmem:[%s6695 + $0x30] sm:$0xf]
        %v6709 = vld [vmem:[%s6695 + $0x34] sm:$0xf]
        %v6710 = vld [vmem:[%s6695 + $0x38] sm:$0xf]
        %v6711 = vld [vmem:[%s6695 + $0x3c] sm:$0xf]
        %v6731 = vrot.slane %v6694, 1
        %v6732 = vrot.slane %v6232, 1
        %v6733 = vsel %vm1035, %v6731, %v6732
        %v6734 = vrot.slane %v6233, 1
        %v6735 = vsel %vm1035, %v6732, %v6734
        %v6736 = vrot.slane %v6234, 1
        %v6737 = vsel %vm1035, %v6734, %v6736
        %v6738 = vrot.slane %v6235, 1
        %v6739 = vsel %vm1035, %v6736, %v6738
        %v6740 = vrot.slane %v6236, 1
        %v6741 = vsel %vm1035, %v6738, %v6740
        %v6742 = vrot.slane %v6237, 1
        %v6743 = vsel %vm1035, %v6740, %v6742
        %v6744 = vrot.slane %v6238, 1
        %v6745 = vsel %vm1035, %v6742, %v6744
        %v6746 = vrot.slane %v6239, 1
        %v6747 = vsel %vm1035, %v6744, %v6746
        %v6748 = vrot.slane %v6240, 1
        %v6749 = vsel %vm1035, %v6746, %v6748
        %v6750 = vrot.slane %v6241, 1
        %v6751 = vsel %vm1035, %v6748, %v6750
        %v6752 = vrot.slane %v6242, 1
        %v6753 = vsel %vm1035, %v6750, %v6752
        %v6754 = vrot.slane %v6243, 1
        %v6755 = vsel %vm1035, %v6752, %v6754
        %v6756 = vrot.slane %v6244, 1
        %v6757 = vsel %vm1035, %v6754, %v6756
        %v6758 = vrot.slane %v6245, 1
        %v6759 = vsel %vm1035, %v6756, %v6758
        %v6760 = vrot.slane %v6246, 1
        %v6761 = vsel %vm1035, %v6758, %v6760
        %v6762 = vrot.slane %v6247, 1
        %v6763 = vsel %vm1035, %v6760, %v6762
        %v6764 = vrot.slane %v6248, 1
        %v6765 = vsel %vm1035, %v6762, %v6764
        %v6766 = vrot.slane %v6249, 1
        %v6767 = vsel %vm1035, %v6764, %v6766
        %v6802 = vunpack.c.l.b16 %v6696
        %v6803 = vunpack.c.l.b16 %v6697
        %v6804 = vunpack.c.l.b16 %v6698
        %v6805 = vunpack.c.l.b16 %v6699
        %v6806 = vunpack.c.l.b16 %v6700
        %v6807 = vunpack.c.l.b16 %v6701
        %v6808 = vunpack.c.l.b16 %v6702
        %v6809 = vunpack.c.l.b16 %v6703
        %v6810 = vunpack.c.l.b16 %v6704
        %v6811 = vunpack.c.l.b16 %v6705
        %v6812 = vunpack.c.l.b16 %v6706
        %v6813 = vunpack.c.l.b16 %v6707
        %v6814 = vunpack.c.l.b16 %v6708
        %v6815 = vunpack.c.l.b16 %v6709
        %v6816 = vunpack.c.l.b16 %v6710
        %v6817 = vunpack.c.l.b16 %v6711
        %v6818 = vpack.c.b16 %v6803, %v6802
        %v6819 = vpack.c.b16 %v6805, %v6804
        %v6820 = vpack.c.b16 %v6807, %v6806
        %v6821 = vpack.c.b16 %v6809, %v6808
        %v6822 = vpack.c.b16 %v6811, %v6810
        %v6823 = vpack.c.b16 %v6813, %v6812
        %v6824 = vpack.c.b16 %v6815, %v6814
        %v6825 = vpack.c.b16 %v6817, %v6816
        %6834 = vmatprep.subr.bf16.mxu0 0
        %6835 = vmatpush1.bf16.msra.mxu0 %v6818
        %6836 = vmatprep.subr.bf16.mxu0 0
        %6837 = vmatpush1.bf16.msra.mxu0 %v6819
        %6838 = vmatprep.subr.bf16.mxu0 0
        %6839 = vmatpush1.bf16.msra.mxu0 %v6820
        %6840 = vmatprep.subr.bf16.mxu0 0
        %6841 = vmatpush1.bf16.msra.mxu0 %v6821
        %6842 = vmatprep.subr.bf16.mxu0 0
        %6843 = vmatpush1.bf16.msra.mxu0 %v6822
        %6844 = vmatprep.subr.bf16.mxu0 0
        %6845 = vmatpush1.bf16.msra.mxu0 %v6823
        %6846 = vmatprep.subr.bf16.mxu0 0
        %6847 = vmatpush1.bf16.msra.mxu0 %v6824
        %6848 = vmatprep.subr.bf16.mxu0 0
        %6849 = vmatpush1.bf16.msra.mxu0 %v6825
        %6850 = vmatprep.subr.bf16.mxu0 0
        %6851 = vmatpush1.bf16.msra.mxu0 0
        %6852 = vmatprep.subr.bf16.mxu0 0
        %6853 = vmatpush1.bf16.msra.mxu0 0
        %6854 = vmatprep.subr.bf16.mxu0 0
        %6855 = vmatpush1.bf16.msra.mxu0 0
        %6856 = vmatprep.subr.bf16.mxu0 0
        %6857 = vmatpush1.bf16.msra.mxu0 0
        %6858 = vmatprep.subr.bf16.mxu0 0
        %6859 = vmatpush1.bf16.msra.mxu0 0
        %6860 = vmatprep.subr.bf16.mxu0 0
        %6861 = vmatpush1.bf16.msra.mxu0 0
        %6862 = vmatprep.subr.bf16.mxu0 0
        %6863 = vmatpush1.bf16.msra.mxu0 0
        %6864 = vmatprep.subr.bf16.mxu0 0
        %6865 = vmatpush1.bf16.msra.mxu0 0
        %6866 = vmatprep.mubr.bf16.mxu0 0
        %6867 = vmatmul.mubr.bf16.gmra.mrb[0].mxu0 %v6733
        %v6868 = vpop.f32.mrb[0].mxu0
        %v6869 = vadd.f32 0.0, %v6868
        %v6870 = vpop.f32.mrb[0].mxu0
        %v6871 = vpop.f32.mrb[0].mxu0
        %v6872 = vadd.f32 0.0, %v6871
        %v6873 = vpop.f32.mrb[0].mxu0
        %6874 = vmatprep.mubr.bf16.mxu0 0
        %6875 = vmatmul.mubr.bf16.gmra.mrb[0].mxu0 %v6735
        %v6876 = vpop.f32.mrb[0].mxu0
        %v6877 = vadd.f32 0.0, %v6876
        %v6878 = vpop.f32.mrb[0].mxu0
        %v6879 = vpop.f32.mrb[0].mxu0
        %v6880 = vadd.f32 0.0, %v6879
        %v6881 = vpop.f32.mrb[0].mxu0
        %6882 = vmatprep.mubr.bf16.mxu0 0
        %6883 = vmatmul.mubr.bf16.gmra.mrb[0].mxu0 %v6737
        %v6884 = vpop.f32.mrb[0].mxu0
        %v6885 = vadd.f32 0.0, %v6884
        %v6886 = vpop.f32.mrb[0].mxu0
        %v6887 = vpop.f32.mrb[0].mxu0
        %v6888 = vadd.f32 0.0, %v6887
        %v6889 = vpop.f32.mrb[0].mxu0
        %6890 = vmatprep.mubr.bf16.mxu0 0
        %6891 = vmatmul.mubr.bf16.gmra.mrb[0].mxu0 %v6739
        %v6892 = vpop.f32.mrb[0].mxu0
        %v6893 = vadd.f32 0.0, %v6892
        %v6894 = vpop.f32.mrb[0].mxu0
        %v6895 = vpop.f32.mrb[0].mxu0
        %v6896 = vadd.f32 0.0, %v6895
        %v6897 = vpop.f32.mrb[0].mxu0
        %6898 = vmatprep.mubr.bf16.mxu0 0
        %6899 = vmatmul.mubr.bf16.gmra.mrb[0].mxu0 %v6741
        %v6900 = vpop.f32.mrb[0].mxu0
        %v6901 = vadd.f32 0.0, %v6900
        %v6902 = vpop.f32.mrb[0].mxu0
        %v6903 = vpop.f32.mrb[0].mxu0
        %v6904 = vadd.f32 0.0, %v6903
        %v6905 = vpop.f32.mrb[0].mxu0
        %6906 = vmatprep.mubr.bf16.mxu0 0
        %6907 = vmatmul.mubr.bf16.gmra.mrb[0].mxu0 %v6743
        %v6908 = vpop.f32.mrb[0].mxu0
        %v6909 = vadd.f32 0.0, %v6908
        %v6910 = vpop.f32.mrb[0].mxu0
        %v6911 = vpop.f32.mrb[0].mxu0
        %v6912 = vadd.f32 0.0, %v6911
        %v6913 = vpop.f32.mrb[0].mxu0
        %6914 = vmatprep.mubr.bf16.mxu0 0
        %6915 = vmatmul.mubr.bf16.gmra.mrb[0].mxu0 %v6745
        %v6916 = vpop.f32.mrb[0].mxu0
        %v6917 = vadd.f32 0.0, %v6916
        %v6918 = vpop.f32.mrb[0].mxu0
        %v6919 = vpop.f32.mrb[0].mxu0
        %v6920 = vadd.f32 0.0, %v6919
        %v6921 = vpop.f32.mrb[0].mxu0
        %6922 = vmatprep.mubr.bf16.mxu0 0
        %6923 = vmatmul.mubr.bf16.gmra.mrb[0].mxu0 %v6747
        %v6924 = vpop.f32.mrb[0].mxu0
        %v6925 = vadd.f32 0.0, %v6924
        %v6926 = vpop.f32.mrb[0].mxu0
        %v6927 = vpop.f32.mrb[0].mxu0
        %v6928 = vadd.f32 0.0, %v6927
        %v6929 = vpop.f32.mrb[0].mxu0
        %6930 = vmatprep.mubr.bf16.mxu0 0
        %6931 = vmatmul.mubr.bf16.gmra.mrb[0].mxu0 %v6749
        %v6932 = vpop.f32.mrb[0].mxu0
        %v6933 = vadd.f32 0.0, %v6932
        %v6934 = vpop.f32.mrb[0].mxu0
        %v6935 = vpop.f32.mrb[0].mxu0
        %v6936 = vadd.f32 0.0, %v6935
        %v6937 = vpop.f32.mrb[0].mxu0
        %6938 = vmatprep.mubr.bf16.mxu0 0
        %6939 = vmatmul.mubr.bf16.gmra.mrb[0].mxu0 %v6751
        %v6940 = vpop.f32.mrb[0].mxu0
        %v6941 = vadd.f32 0.0, %v6940
        %v6942 = vpop.f32.mrb[0].mxu0
        %v6943 = vpop.f32.mrb[0].mxu0
        %v6944 = vadd.f32 0.0, %v6943
        %v6945 = vpop.f32.mrb[0].mxu0
        %6946 = vmatprep.mubr.bf16.mxu0 0
        %6947 = vmatmul.mubr.bf16.gmra.mrb[0].mxu0 %v6753
        %v6948 = vpop.f32.mrb[0].mxu0
        %v6949 = vadd.f32 0.0, %v6948
        %v6950 = vpop.f32.mrb[0].mxu0
        %v6951 = vpop.f32.mrb[0].mxu0
        %v6952 = vadd.f32 0.0, %v6951
        %v6953 = vpop.f32.mrb[0].mxu0
        %6954 = vmatprep.mubr.bf16.mxu0 0
        %6955 = vmatmul.mubr.bf16.gmra.mrb[0].mxu0 %v6755
        %v6956 = vpop.f32.mrb[0].mxu0
        %v6957 = vadd.f32 0.0, %v6956
        %v6958 = vpop.f32.mrb[0].mxu0
        %v6959 = vpop.f32.mrb[0].mxu0
        %v6960 = vadd.f32 0.0, %v6959
        %v6961 = vpop.f32.mrb[0].mxu0
        %6962 = vmatprep.mubr.bf16.mxu0 0
        %6963 = vmatmul.mubr.bf16.gmra.mrb[0].mxu0 %v6757
        %v6964 = vpop.f32.mrb[0].mxu0
        %v6965 = vadd.f32 0.0, %v6964
        %v6966 = vpop.f32.mrb[0].mxu0
        %v6967 = vpop.f32.mrb[0].mxu0
        %v6968 = vadd.f32 0.0, %v6967
        %v6969 = vpop.f32.mrb[0].mxu0
        %6970 = vmatprep.mubr.bf16.mxu0 0
        %6971 = vmatmul.mubr.bf16.gmra.mrb[0].mxu0 %v6759
        %v6972 = vpop.f32.mrb[0].mxu0
        %v6973 = vadd.f32 0.0, %v6972
        %v6974 = vpop.f32.mrb[0].mxu0
        %v6975 = vpop.f32.mrb[0].mxu0
        %v6976 = vadd.f32 0.0, %v6975
        %v6977 = vpop.f32.mrb[0].mxu0
        %6978 = vmatprep.mubr.bf16.mxu0 0
        %6979 = vmatmul.mubr.bf16.gmra.mrb[0].mxu0 %v6761
        %v6980 = vpop.f32.mrb[0].mxu0
        %v6981 = vadd.f32 0.0, %v6980
        %v6982 = vpop.f32.mrb[0].mxu0
        %v6983 = vpop.f32.mrb[0].mxu0
        %v6984 = vadd.f32 0.0, %v6983
        %v6985 = vpop.f32.mrb[0].mxu0
        %6986 = vmatprep.mubr.bf16.mxu0 0
        %6987 = vmatmul.mubr.bf16.gmra.mrb[0].mxu0 %v6763
        %v6988 = vpop.f32.mrb[0].mxu0
        %v6989 = vadd.f32 0.0, %v6988
        %v6990 = vpop.f32.mrb[0].mxu0
        %v6991 = vpop.f32.mrb[0].mxu0
        %v6992 = vadd.f32 0.0, %v6991
        %v6993 = vpop.f32.mrb[0].mxu0
        %6994 = vmatprep.mubr.bf16.mxu0 0
        %6995 = vmatmul.mubr.bf16.gmra.mrb[0].mxu0 %v6765
        %v6996 = vpop.f32.mrb[0].mxu0
        %v6997 = vadd.f32 0.0, %v6996
        %v6998 = vpop.f32.mrb[0].mxu0
        %v6999 = vpop.f32.mrb[0].mxu0
        %v7000 = vadd.f32 0.0, %v6999
        %v7001 = vpop.f32.mrb[0].mxu0
        %7002 = vmatprep.mubr.bf16.mxu0 0
        %7003 = vmatmul.mubr.bf16.gmra.mrb[0].mxu0 %v6767
        %v7004 = vpop.f32.mrb[0].mxu0
        %v7005 = vadd.f32 0.0, %v7004
        %v7006 = vpop.f32.mrb[0].mxu0
        %v7007 = vpop.f32.mrb[0].mxu0
        %v7008 = vadd.f32 0.0, %v7007
        %v7009 = vpop.f32.mrb[0].mxu0
        %7010 = vdwg.mxu0
        %v7011 = vadd.f32 %v6658, %v6869
        %v7012 = vadd.f32 %v6659, %v6872
        %v7013 = vadd.f32 %v6660, %v6877
        %v7014 = vadd.f32 %v6661, %v6880
        %v7015 = vadd.f32 %v6662, %v6885
        %v7016 = vadd.f32 %v6663, %v6888
        %v7017 = vadd.f32 %v6664, %v6893
        %v7018 = vadd.f32 %v6665, %v6896
        %v7019 = vadd.f32 %v6666, %v6901
        %v7020 = vadd.f32 %v6667, %v6904
        %v7021 = vadd.f32 %v6668, %v6909
        %v7022 = vadd.f32 %v6669, %v6912
        %v7023 = vadd.f32 %v6670, %v6917
        %v7024 = vadd.f32 %v6671, %v6920
        %v7025 = vadd.f32 %v6672, %v6925
        %v7026 = vadd.f32 %v6673, %v6928
        %v7027 = vadd.f32 %v6674, %v6933
        %v7028 = vadd.f32 %v6675, %v6936
        %v7029 = vadd.f32 %v6676, %v6941
        %v7030 = vadd.f32 %v6677, %v6944
        %v7031 = vadd.f32 %v6678, %v6949
        %v7032 = vadd.f32 %v6679, %v6952
        %v7033 = vadd.f32 %v6680, %v6957
        %v7034 = vadd.f32 %v6681, %v6960
        %v7035 = vadd.f32 %v6682, %v6965
        %v7036 = vadd.f32 %v6683, %v6968
        %v7037 = vadd.f32 %v6684, %v6973
        %v7038 = vadd.f32 %v6685, %v6976
        %v7039 = vadd.f32 %v6686, %v6981
        %v7040 = vadd.f32 %v6687, %v6984
        %v7041 = vadd.f32 %v6688, %v6989
        %v7042 = vadd.f32 %v6689, %v6992
        %v7043 = vadd.f32 %v6690, %v6997
        %v7044 = vadd.f32 %v6691, %v7000
        %v7045 = vadd.f32 %v6692, %v7005
        %v7046 = vadd.f32 %v6693, %v7008
        %v7047 = vld [vmem:[#allocation2 + $0xa8] sm:$0x3]
        %s7048 = scalar_lea.vmem [#allocation3], 512
        %v7049 = vld [vmem:[%s7048] sm:$0xf]
        %v7050 = vld [vmem:[%s7048 + $0x4] sm:$0xf]
        %v7051 = vld [vmem:[%s7048 + $0x8] sm:$0xf]
        %v7052 = vld [vmem:[%s7048 + $0xc] sm:$0xf]
        %v7053 = vld [vmem:[%s7048 + $0x10] sm:$0xf]
        %v7054 = vld [vmem:[%s7048 + $0x14] sm:$0xf]
        %v7055 = vld [vmem:[%s7048 + $0x18] sm:$0xf]
        %v7056 = vld [vmem:[%s7048 + $0x1c] sm:$0xf]
        %v7057 = vld [vmem:[%s7048 + $0x20] sm:$0xf]
        %v7058 = vld [vmem:[%s7048 + $0x24] sm:$0xf]
        %v7059 = vld [vmem:[%s7048 + $0x28] sm:$0xf]
        %v7060 = vld [vmem:[%s7048 + $0x2c] sm:$0xf]
        %v7061 = vld [vmem:[%s7048 + $0x30] sm:$0xf]
        %v7062 = vld [vmem:[%s7048 + $0x34] sm:$0xf]
        %v7063 = vld [vmem:[%s7048 + $0x38] sm:$0xf]
        %v7064 = vld [vmem:[%s7048 + $0x3c] sm:$0xf]
        %v7066 = vshrl.u32 %v6694, 16
        %v7068 = vrot.slane %v7066, 1
        %v7069 = vshll.u32 %v6694, 16
        %v7071 = vrot.slane %v7069, 2
        %v7072 = vor.u32 %v7068, %v7071
        %v7073 = vrot.slane %v6279, 1
        %v7074 = vrot.slane %v6275, 2
        %v7075 = vor.u32 %v7073, %v7074
        %v7076 = vsel %vm1579, %v7072, %v7075
        %v7077 = vrot.slane %v6287, 1
        %v7078 = vrot.slane %v6283, 2
        %v7079 = vor.u32 %v7077, %v7078
        %v7080 = vsel %vm1579, %v7075, %v7079
        %v7081 = vrot.slane %v6295, 1
        %v7082 = vrot.slane %v6291, 2
        %v7083 = vor.u32 %v7081, %v7082
        %v7084 = vsel %vm1579, %v7079, %v7083
        %v7085 = vrot.slane %v6303, 1
        %v7086 = vrot.slane %v6299, 2
        %v7087 = vor.u32 %v7085, %v7086
        %v7088 = vsel %vm1579, %v7083, %v7087
        %v7089 = vrot.slane %v6311, 1
        %v7090 = vrot.slane %v6307, 2
        %v7091 = vor.u32 %v7089, %v7090
        %v7092 = vsel %vm1579, %v7087, %v7091
        %v7093 = vrot.slane %v6319, 1
        %v7094 = vrot.slane %v6315, 2
        %v7095 = vor.u32 %v7093, %v7094
        %v7096 = vsel %vm1579, %v7091, %v7095
        %v7097 = vrot.slane %v6327, 1
        %v7098 = vrot.slane %v6323, 2
        %v7099 = vor.u32 %v7097, %v7098
        %v7100 = vsel %vm1579, %v7095, %v7099
        %v7101 = vrot.slane %v6335, 1
        %v7102 = vrot.slane %v6331, 2
        %v7103 = vor.u32 %v7101, %v7102
        %v7104 = vsel %vm1579, %v7099, %v7103
        %v7105 = vrot.slane %v6343, 1
        %v7106 = vrot.slane %v6339, 2
        %v7107 = vor.u32 %v7105, %v7106
        %v7108 = vsel %vm1579, %v7103, %v7107
        %v7109 = vrot.slane %v6351, 1
        %v7110 = vrot.slane %v6347, 2
        %v7111 = vor.u32 %v7109, %v7110
        %v7112 = vsel %vm1579, %v7107, %v7111
        %v7113 = vrot.slane %v6359, 1
        %v7114 = vrot.slane %v6355, 2
        %v7115 = vor.u32 %v7113, %v7114
        %v7116 = vsel %vm1579, %v7111, %v7115
        %v7117 = vrot.slane %v6367, 1
        %v7118 = vrot.slane %v6363, 2
        %v7119 = vor.u32 %v7117, %v7118
        %v7120 = vsel %vm1579, %v7115, %v7119
        %v7121 = vrot.slane %v6375, 1
        %v7122 = vrot.slane %v6371, 2
        %v7123 = vor.u32 %v7121, %v7122
        %v7124 = vsel %vm1579, %v7119, %v7123
        %v7125 = vrot.slane %v6383, 1
        %v7126 = vrot.slane %v6379, 2
        %v7127 = vor.u32 %v7125, %v7126
        %v7128 = vsel %vm1579, %v7123, %v7127
        %v7129 = vrot.slane %v6391, 1
        %v7130 = vrot.slane %v6387, 2
        %v7131 = vor.u32 %v7129, %v7130
        %v7132 = vsel %vm1579, %v7127, %v7131
        %v7133 = vrot.slane %v6399, 1
        %v7134 = vrot.slane %v6395, 2
        %v7135 = vor.u32 %v7133, %v7134
        %v7136 = vsel %vm1579, %v7131, %v7135
        %v7137 = vrot.slane %v6407, 1
        %v7138 = vrot.slane %v6403, 2
        %v7139 = vor.u32 %v7137, %v7138
        %v7140 = vsel %vm1579, %v7135, %v7139
        %v7142 = vshrl.u32 %v7047, 16
        %v7144 = vrot.slane %v7142, 1
        %v7145 = vshll.u32 %v7047, 16
        %v7147 = vrot.slane %v7145, 2
        %v7148 = vor.u32 %v7144, %v7147
        %v7149 = vsel %vm1579, %v7139, %v7148
        %v7184 = vunpack.c.l.b16 %v7049
        %v7185 = vunpack.c.l.b16 %v7050
        %v7186 = vunpack.c.l.b16 %v7051
        %v7187 = vunpack.c.l.b16 %v7052
        %v7188 = vunpack.c.l.b16 %v7053
        %v7189 = vunpack.c.l.b16 %v7054
        %v7190 = vunpack.c.l.b16 %v7055
        %v7191 = vunpack.c.l.b16 %v7056
        %v7192 = vunpack.c.l.b16 %v7057
        %v7193 = vunpack.c.l.b16 %v7058
        %v7194 = vunpack.c.l.b16 %v7059
        %v7195 = vunpack.c.l.b16 %v7060
        %v7196 = vunpack.c.l.b16 %v7061
        %v7197 = vunpack.c.l.b16 %v7062
        %v7198 = vunpack.c.l.b16 %v7063
        %v7199 = vunpack.c.l.b16 %v7064
        %v7200 = vpack.c.b16 %v7185, %v7184
        %v7201 = vpack.c.b16 %v7187, %v7186
        %v7202 = vpack.c.b16 %v7189, %v7188
        %v7203 = vpack.c.b16 %v7191, %v7190
        %v7204 = vpack.c.b16 %v7193, %v7192
        %v7205 = vpack.c.b16 %v7195, %v7194
        %v7206 = vpack.c.b16 %v7197, %v7196
        %v7207 = vpack.c.b16 %v7199, %v7198
        %7216 = vmatprep.subr.bf16.mxu0 0
        %7217 = vmatpush1.bf16.msra.mxu0 %v7200
        %7218 = vmatprep.subr.bf16.mxu0 0
        %7219 = vmatpush1.bf16.msra.mxu0 %v7201
        %7220 = vmatprep.subr.bf16.mxu0 0
        %7221 = vmatpush1.bf16.msra.mxu0 %v7202
        %7222 = vmatprep.subr.bf16.mxu0 0
        %7223 = vmatpush1.bf16.msra.mxu0 %v7203
        %7224 = vmatprep.subr.bf16.mxu0 0
        %7225 = vmatpush1.bf16.msra.mxu0 %v7204
        %7226 = vmatprep.subr.bf16.mxu0 0
        %7227 = vmatpush1.bf16.msra.mxu0 %v7205
        %7228 = vmatprep.subr.bf16.mxu0 0
        %7229 = vmatpush1.bf16.msra.mxu0 %v7206
        %7230 = vmatprep.subr.bf16.mxu0 0
        %7231 = vmatpush1.bf16.msra.mxu0 %v7207
        %7232 = vmatprep.subr.bf16.mxu0 0
        %7233 = vmatpush1.bf16.msra.mxu0 0
        %7234 = vmatprep.subr.bf16.mxu0 0
        %7235 = vmatpush1.bf16.msra.mxu0 0
        %7236 = vmatprep.subr.bf16.mxu0 0
        %7237 = vmatpush1.bf16.msra.mxu0 0
        %7238 = vmatprep.subr.bf16.mxu0 0
        %7239 = vmatpush1.bf16.msra.mxu0 0
        %7240 = vmatprep.subr.bf16.mxu0 0
        %7241 = vmatpush1.bf16.msra.mxu0 0
        %7242 = vmatprep.subr.bf16.mxu0 0
        %7243 = vmatpush1.bf16.msra.mxu0 0
        %7244 = vmatprep.subr.bf16.mxu0 0
        %7245 = vmatpush1.bf16.msra.mxu0 0
        %7246 = vmatprep.subr.bf16.mxu0 0
        %7247 = vmatpush1.bf16.msra.mxu0 0
        %7248 = vmatprep.mubr.bf16.mxu0 0
        %7249 = vmatmul.mubr.bf16.gmra.mrb[0].mxu0 %v7076
        %v7250 = vpop.f32.mrb[0].mxu0
        %v7251 = vadd.f32 0.0, %v7250
        %v7252 = vpop.f32.mrb[0].mxu0
        %v7253 = vpop.f32.mrb[0].mxu0
        %v7254 = vadd.f32 0.0, %v7253
        %v7255 = vpop.f32.mrb[0].mxu0
        %7256 = vmatprep.mubr.bf16.mxu0 0
        %7257 = vmatmul.mubr.bf16.gmra.mrb[0].mxu0 %v7080
        %v7258 = vpop.f32.mrb[0].mxu0
        %v7259 = vadd.f32 0.0, %v7258
        %v7260 = vpop.f32.mrb[0].mxu0
        %v7261 = vpop.f32.mrb[0].mxu0
        %v7262 = vadd.f32 0.0, %v7261
        %v7263 = vpop.f32.mrb[0].mxu0
        %7264 = vmatprep.mubr.bf16.mxu0 0
        %7265 = vmatmul.mubr.bf16.gmra.mrb[0].mxu0 %v7084
        %v7266 = vpop.f32.mrb[0].mxu0
        %v7267 = vadd.f32 0.0, %v7266
        %v7268 = vpop.f32.mrb[0].mxu0
        %v7269 = vpop.f32.mrb[0].mxu0
        %v7270 = vadd.f32 0.0, %v7269
        %v7271 = vpop.f32.mrb[0].mxu0
        %7272 = vmatprep.mubr.bf16.mxu0 0
        %7273 = vmatmul.mubr.bf16.gmra.mrb[0].mxu0 %v7088
        %v7274 = vpop.f32.mrb[0].mxu0
        %v7275 = vadd.f32 0.0, %v7274
        %v7276 = vpop.f32.mrb[0].mxu0
        %v7277 = vpop.f32.mrb[0].mxu0
        %v7278 = vadd.f32 0.0, %v7277
        %v7279 = vpop.f32.mrb[0].mxu0
        %7280 = vmatprep.mubr.bf16.mxu0 0
        %7281 = vmatmul.mubr.bf16.gmra.mrb[0].mxu0 %v7092
        %v7282 = vpop.f32.mrb[0].mxu0
        %v7283 = vadd.f32 0.0, %v7282
        %v7284 = vpop.f32.mrb[0].mxu0
        %v7285 = vpop.f32.mrb[0].mxu0
        %v7286 = vadd.f32 0.0, %v7285
        %v7287 = vpop.f32.mrb[0].mxu0
        %7288 = vmatprep.mubr.bf16.mxu0 0
        %7289 = vmatmul.mubr.bf16.gmra.mrb[0].mxu0 %v7096
        %v7290 = vpop.f32.mrb[0].mxu0
        %v7291 = vadd.f32 0.0, %v7290
        %v7292 = vpop.f32.mrb[0].mxu0
        %v7293 = vpop.f32.mrb[0].mxu0
        %v7294 = vadd.f32 0.0, %v7293
        %v7295 = vpop.f32.mrb[0].mxu0
        %7296 = vmatprep.mubr.bf16.mxu0 0
        %7297 = vmatmul.mubr.bf16.gmra.mrb[0].mxu0 %v7100
        %v7298 = vpop.f32.mrb[0].mxu0
        %v7299 = vadd.f32 0.0, %v7298
        %v7300 = vpop.f32.mrb[0].mxu0
        %v7301 = vpop.f32.mrb[0].mxu0
        %v7302 = vadd.f32 0.0, %v7301
        %v7303 = vpop.f32.mrb[0].mxu0
        %7304 = vmatprep.mubr.bf16.mxu0 0
        %7305 = vmatmul.mubr.bf16.gmra.mrb[0].mxu0 %v7104
        %v7306 = vpop.f32.mrb[0].mxu0
        %v7307 = vadd.f32 0.0, %v7306
        %v7308 = vpop.f32.mrb[0].mxu0
        %v7309 = vpop.f32.mrb[0].mxu0
        %v7310 = vadd.f32 0.0, %v7309
        %v7311 = vpop.f32.mrb[0].mxu0
        %7312 = vmatprep.mubr.bf16.mxu0 0
        %7313 = vmatmul.mubr.bf16.gmra.mrb[0].mxu0 %v7108
        %v7314 = vpop.f32.mrb[0].mxu0
        %v7315 = vadd.f32 0.0, %v7314
        %v7316 = vpop.f32.mrb[0].mxu0
        %v7317 = vpop.f32.mrb[0].mxu0
        %v7318 = vadd.f32 0.0, %v7317
        %v7319 = vpop.f32.mrb[0].mxu0
        %7320 = vmatprep.mubr.bf16.mxu0 0
        %7321 = vmatmul.mubr.bf16.gmra.mrb[0].mxu0 %v7112
        %v7322 = vpop.f32.mrb[0].mxu0
        %v7323 = vadd.f32 0.0, %v7322
        %v7324 = vpop.f32.mrb[0].mxu0
        %v7325 = vpop.f32.mrb[0].mxu0
        %v7326 = vadd.f32 0.0, %v7325
        %v7327 = vpop.f32.mrb[0].mxu0
        %7328 = vmatprep.mubr.bf16.mxu0 0
        %7329 = vmatmul.mubr.bf16.gmra.mrb[0].mxu0 %v7116
        %v7330 = vpop.f32.mrb[0].mxu0
        %v7331 = vadd.f32 0.0, %v7330
        %v7332 = vpop.f32.mrb[0].mxu0
        %v7333 = vpop.f32.mrb[0].mxu0
        %v7334 = vadd.f32 0.0, %v7333
        %v7335 = vpop.f32.mrb[0].mxu0
        %7336 = vmatprep.mubr.bf16.mxu0 0
        %7337 = vmatmul.mubr.bf16.gmra.mrb[0].mxu0 %v7120
        %v7338 = vpop.f32.mrb[0].mxu0
        %v7339 = vadd.f32 0.0, %v7338
        %v7340 = vpop.f32.mrb[0].mxu0
        %v7341 = vpop.f32.mrb[0].mxu0
        %v7342 = vadd.f32 0.0, %v7341
        %v7343 = vpop.f32.mrb[0].mxu0
        %7344 = vmatprep.mubr.bf16.mxu0 0
        %7345 = vmatmul.mubr.bf16.gmra.mrb[0].mxu0 %v7124
        %v7346 = vpop.f32.mrb[0].mxu0
        %v7347 = vadd.f32 0.0, %v7346
        %v7348 = vpop.f32.mrb[0].mxu0
        %v7349 = vpop.f32.mrb[0].mxu0
        %v7350 = vadd.f32 0.0, %v7349
        %v7351 = vpop.f32.mrb[0].mxu0
        %7352 = vmatprep.mubr.bf16.mxu0 0
        %7353 = vmatmul.mubr.bf16.gmra.mrb[0].mxu0 %v7128
        %v7354 = vpop.f32.mrb[0].mxu0
        %v7355 = vadd.f32 0.0, %v7354
        %v7356 = vpop.f32.mrb[0].mxu0
        %v7357 = vpop.f32.mrb[0].mxu0
        %v7358 = vadd.f32 0.0, %v7357
        %v7359 = vpop.f32.mrb[0].mxu0
        %7360 = vmatprep.mubr.bf16.mxu0 0
        %7361 = vmatmul.mubr.bf16.gmra.mrb[0].mxu0 %v7132
        %v7362 = vpop.f32.mrb[0].mxu0
        %v7363 = vadd.f32 0.0, %v7362
        %v7364 = vpop.f32.mrb[0].mxu0
        %v7365 = vpop.f32.mrb[0].mxu0
        %v7366 = vadd.f32 0.0, %v7365
        %v7367 = vpop.f32.mrb[0].mxu0
        %7368 = vmatprep.mubr.bf16.mxu0 0
        %7369 = vmatmul.mubr.bf16.gmra.mrb[0].mxu0 %v7136
        %v7370 = vpop.f32.mrb[0].mxu0
        %v7371 = vadd.f32 0.0, %v7370
        %v7372 = vpop.f32.mrb[0].mxu0
        %v7373 = vpop.f32.mrb[0].mxu0
        %v7374 = vadd.f32 0.0, %v7373
        %v7375 = vpop.f32.mrb[0].mxu0
        %7376 = vmatprep.mubr.bf16.mxu0 0
        %7377 = vmatmul.mubr.bf16.gmra.mrb[0].mxu0 %v7140
        %v7378 = vpop.f32.mrb[0].mxu0
        %v7379 = vadd.f32 0.0, %v7378
        %v7380 = vpop.f32.mrb[0].mxu0
        %v7381 = vpop.f32.mrb[0].mxu0
        %v7382 = vadd.f32 0.0, %v7381
        %v7383 = vpop.f32.mrb[0].mxu0
        %7384 = vmatprep.mubr.bf16.mxu0 0
        %7385 = vmatmul.mubr.bf16.gmra.mrb[0].mxu0 %v7149
        %v7386 = vpop.f32.mrb[0].mxu0
        %v7387 = vadd.f32 0.0, %v7386
        %v7388 = vpop.f32.mrb[0].mxu0
        %v7389 = vpop.f32.mrb[0].mxu0
        %v7390 = vadd.f32 0.0, %v7389
        %v7391 = vpop.f32.mrb[0].mxu0
        %7392 = vdwg.mxu0
        %v7393 = vadd.f32 %v7011, %v7251
        %v7394 = vadd.f32 %v7012, %v7254
        %v7395 = vadd.f32 %v7013, %v7259
        %v7396 = vadd.f32 %v7014, %v7262
        %v7397 = vadd.f32 %v7015, %v7267
        %v7398 = vadd.f32 %v7016, %v7270
        %v7399 = vadd.f32 %v7017, %v7275
        %v7400 = vadd.f32 %v7018, %v7278
        %v7401 = vadd.f32 %v7019, %v7283
        %v7402 = vadd.f32 %v7020, %v7286
        %v7403 = vadd.f32 %v7021, %v7291
        %v7404 = vadd.f32 %v7022, %v7294
        %v7405 = vadd.f32 %v7023, %v7299
        %v7406 = vadd.f32 %v7024, %v7302
        %v7407 = vadd.f32 %v7025, %v7307
        %v7408 = vadd.f32 %v7026, %v7310
        %v7409 = vadd.f32 %v7027, %v7315
        %v7410 = vadd.f32 %v7028, %v7318
        %v7411 = vadd.f32 %v7029, %v7323
        %v7412 = vadd.f32 %v7030, %v7326
        %v7413 = vadd.f32 %v7031, %v7331
        %v7414 = vadd.f32 %v7032, %v7334
        %v7415 = vadd.f32 %v7033, %v7339
        %v7416 = vadd.f32 %v7034, %v7342
        %v7417 = vadd.f32 %v7035, %v7347
        %v7418 = vadd.f32 %v7036, %v7350
        %v7419 = vadd.f32 %v7037, %v7355
        %v7420 = vadd.f32 %v7038, %v7358
        %v7421 = vadd.f32 %v7039, %v7363
        %v7422 = vadd.f32 %v7040, %v7366
        %v7423 = vadd.f32 %v7041, %v7371
        %v7424 = vadd.f32 %v7042, %v7374
        %v7425 = vadd.f32 %v7043, %v7379
        %v7426 = vadd.f32 %v7044, %v7382
        %v7427 = vadd.f32 %v7045, %v7387
        %v7428 = vadd.f32 %v7046, %v7390
        %v7429 = vlaneseq
        %v7430 = vshrl.u32 %v7429, 7
        %v7431 = vsub.s32 0, %v7430
        %v7432 = vrot.slane %v298, %v7431
        %v7433 = vadd.f32 %v7393, %v7432
        %v7434 = vadd.f32 %v7394, %v7432
        %v7435 = vadd.f32 %v7395, %v7432
        %v7436 = vadd.f32 %v7396, %v7432
        %v7437 = vadd.f32 %v7397, %v7432
        %v7438 = vadd.f32 %v7398, %v7432
        %v7439 = vadd.f32 %v7399, %v7432
        %v7440 = vadd.f32 %v7400, %v7432
        %v7441 = vadd.f32 %v7401, %v7432
        %v7442 = vadd.f32 %v7402, %v7432
        %v7443 = vadd.f32 %v7403, %v7432
        %v7444 = vadd.f32 %v7404, %v7432
        %v7445 = vadd.f32 %v7405, %v7432
        %v7446 = vadd.f32 %v7406, %v7432
        %v7447 = vadd.f32 %v7407, %v7432
        %v7448 = vadd.f32 %v7408, %v7432
        %v7449 = vadd.f32 %v7409, %v7432
        %v7450 = vadd.f32 %v7410, %v7432
        %v7451 = vadd.f32 %v7411, %v7432
        %v7452 = vadd.f32 %v7412, %v7432
        %v7453 = vadd.f32 %v7413, %v7432
        %v7454 = vadd.f32 %v7414, %v7432
        %v7455 = vadd.f32 %v7415, %v7432
        %v7456 = vadd.f32 %v7416, %v7432
        %v7457 = vadd.f32 %v7417, %v7432
        %v7458 = vadd.f32 %v7418, %v7432
        %v7459 = vadd.f32 %v7419, %v7432
        %v7460 = vadd.f32 %v7420, %v7432
        %v7461 = vadd.f32 %v7421, %v7432
        %v7462 = vadd.f32 %v7422, %v7432
        %v7463 = vadd.f32 %v7423, %v7432
        %v7464 = vadd.f32 %v7424, %v7432
        %v7465 = vadd.f32 %v7425, %v7432
        %v7466 = vadd.f32 %v7426, %v7432
        %v7467 = vadd.f32 %v7427, %v7432
        %v7468 = vadd.f32 %v7428, %v7432
        %v7469 = vlaneseq
        %v7470 = vshrl.u32 %v7469, 7
        %v7471 = vsub.s32 1, %v7470
        %v7472 = vrot.slane %v298, %v7471
        %7473 = vset.pattern.permute.xlu0 6
        %7474 = vperm.xlu0 %7473, %v299
        %v7475 = vpop.permute.xlu0 %7474
        %7477 = vset.pattern.permute.xlu0 6
        %7478 = vperm.xlu0 %7477, %v300
        %v7479 = vpop.permute.xlu0 %7478
        %7481 = vset.pattern.permute.xlu0 6
        %7482 = vperm.xlu0 %7481, %v301
        %v7483 = vpop.permute.xlu0 %7482
        %7485 = vset.pattern.permute.xlu0 6
        %7486 = vperm.xlu0 %7485, %v302
        %v7487 = vpop.permute.xlu0 %7486
        %7489 = vset.pattern.permute.xlu0 6
        %7490 = vperm.xlu0 %7489, %v303
        %v7491 = vpop.permute.xlu0 %7490
        %7493 = vset.pattern.permute.xlu0 6
        %7494 = vperm.xlu0 %7493, %v304
        %v7495 = vpop.permute.xlu0 %7494
        %7497 = vset.pattern.permute.xlu0 6
        %7498 = vperm.xlu0 %7497, %v305
        %v7499 = vpop.permute.xlu0 %7498
        %7501 = vset.pattern.permute.xlu0 6
        %7502 = vperm.xlu0 %7501, %v306
        %v7503 = vpop.permute.xlu0 %7502
        %7505 = vset.pattern.permute.xlu0 6
        %7506 = vperm.xlu0 %7505, %v307
        %v7507 = vpop.permute.xlu0 %7506
        %7509 = vset.pattern.permute.xlu0 6
        %7510 = vperm.xlu0 %7509, %v308
        %v7511 = vpop.permute.xlu0 %7510
        %7513 = vset.pattern.permute.xlu0 6
        %7514 = vperm.xlu0 %7513, %v309
        %v7515 = vpop.permute.xlu0 %7514
        %7517 = vset.pattern.permute.xlu0 6
        %7518 = vperm.xlu0 %7517, %v310
        %v7519 = vpop.permute.xlu0 %7518
        %7521 = vset.pattern.permute.xlu0 6
        %7522 = vperm.xlu0 %7521, %v311
        %v7523 = vpop.permute.xlu0 %7522
        %7525 = vset.pattern.permute.xlu0 6
        %7526 = vperm.xlu0 %7525, %v312
        %v7527 = vpop.permute.xlu0 %7526
        %7529 = vset.pattern.permute.xlu0 6
        %7530 = vperm.xlu0 %7529, %v313
        %v7531 = vpop.permute.xlu0 %7530
        %7533 = vset.pattern.permute.xlu0 6
        %7534 = vperm.xlu0 %7533, %v314
        %v7535 = vpop.permute.xlu0 %7534
        %7537 = vset.pattern.permute.xlu0 6
        %7538 = vperm.xlu0 %7537, %v315
        %v7539 = vpop.permute.xlu0 %7538
        %7541 = vset.pattern.permute.xlu0 6
        %7542 = vperm.xlu0 %7541, %v316
        %v7543 = vpop.permute.xlu0 %7542
        %7545 = vset.pattern.permute.xlu0 6
        %7546 = vperm.xlu0 %7545, %v317
        %v7547 = vpop.permute.xlu0 %7546
        %7549 = vset.pattern.permute.xlu0 6
        %7550 = vperm.xlu0 %7549, %v318
        %v7551 = vpop.permute.xlu0 %7550
        %7553 = vset.pattern.permute.xlu0 6
        %7554 = vperm.xlu0 %7553, %v319
        %v7555 = vpop.permute.xlu0 %7554
        %7557 = vset.pattern.permute.xlu0 6
        %7558 = vperm.xlu0 %7557, %v320
        %v7559 = vpop.permute.xlu0 %7558
        %7561 = vset.pattern.permute.xlu0 6
        %7562 = vperm.xlu0 %7561, %v321
        %v7563 = vpop.permute.xlu0 %7562
        %7565 = vset.pattern.permute.xlu0 6
        %7566 = vperm.xlu0 %7565, %v322
        %v7567 = vpop.permute.xlu0 %7566
        %7569 = vset.pattern.permute.xlu0 6
        %7570 = vperm.xlu0 %7569, %v323
        %v7571 = vpop.permute.xlu0 %7570
        %7573 = vset.pattern.permute.xlu0 6
        %7574 = vperm.xlu0 %7573, %v324
        %v7575 = vpop.permute.xlu0 %7574
        %7577 = vset.pattern.permute.xlu0 6
        %7578 = vperm.xlu0 %7577, %v325
        %v7579 = vpop.permute.xlu0 %7578
        %7581 = vset.pattern.permute.xlu0 6
        %7582 = vperm.xlu0 %7581, %v326
        %v7583 = vpop.permute.xlu0 %7582
        %7585 = vset.pattern.permute.xlu0 6
        %7586 = vperm.xlu0 %7585, %v327
        %v7587 = vpop.permute.xlu0 %7586
        %7589 = vset.pattern.permute.xlu0 6
        %7590 = vperm.xlu0 %7589, %v328
        %v7591 = vpop.permute.xlu0 %7590
        %7593 = vset.pattern.permute.xlu0 6
        %7594 = vperm.xlu0 %7593, %v329
        %v7595 = vpop.permute.xlu0 %7594
        %7597 = vset.pattern.permute.xlu0 6
        %7598 = vperm.xlu0 %7597, %v330
        %v7599 = vpop.permute.xlu0 %7598
        %7601 = vset.pattern.permute.xlu0 6
        %7602 = vperm.xlu0 %7601, %v331
        %v7603 = vpop.permute.xlu0 %7602
        %7605 = vset.pattern.permute.xlu0 6
        %7606 = vperm.xlu0 %7605, %v332
        %v7607 = vpop.permute.xlu0 %7606
        %7609 = vset.pattern.permute.xlu0 6
        %7610 = vperm.xlu0 %7609, %v333
        %v7611 = vpop.permute.xlu0 %7610
        %7613 = vset.pattern.permute.xlu0 6
        %7614 = vperm.xlu0 %7613, %v334
        %v7615 = vpop.permute.xlu0 %7614
        %7617 = vset.pattern.permute.xlu0 6
        %7618 = vperm.xlu0 %7617, %v335
        %v7619 = vpop.permute.xlu0 %7618
        %v7621 = vmul.f32 %v7472, %v7475
        %v7622 = vmul.f32 %v7472, %v7479
        %v7623 = vmul.f32 %v7472, %v7483
        %v7624 = vmul.f32 %v7472, %v7487
        %v7625 = vmul.f32 %v7472, %v7491
        %v7626 = vmul.f32 %v7472, %v7495
        %v7627 = vmul.f32 %v7472, %v7499
        %v7628 = vmul.f32 %v7472, %v7503
        %v7629 = vmul.f32 %v7472, %v7507
        %v7630 = vmul.f32 %v7472, %v7511
        %v7631 = vmul.f32 %v7472, %v7515
        %v7632 = vmul.f32 %v7472, %v7519
        %v7633 = vmul.f32 %v7472, %v7523
        %v7634 = vmul.f32 %v7472, %v7527
        %v7635 = vmul.f32 %v7472, %v7531
        %v7636 = vmul.f32 %v7472, %v7535
        %v7637 = vmul.f32 %v7472, %v7539
        %v7638 = vmul.f32 %v7472, %v7543
        %v7639 = vmul.f32 %v7472, %v7547
        %v7640 = vmul.f32 %v7472, %v7551
        %v7641 = vmul.f32 %v7472, %v7555
        %v7642 = vmul.f32 %v7472, %v7559
        %v7643 = vmul.f32 %v7472, %v7563
        %v7644 = vmul.f32 %v7472, %v7567
        %v7645 = vmul.f32 %v7472, %v7571
        %v7646 = vmul.f32 %v7472, %v7575
        %v7647 = vmul.f32 %v7472, %v7579
        %v7648 = vmul.f32 %v7472, %v7583
        %v7649 = vmul.f32 %v7472, %v7587
        %v7650 = vmul.f32 %v7472, %v7591
        %v7651 = vmul.f32 %v7472, %v7595
        %v7652 = vmul.f32 %v7472, %v7599
        %v7653 = vmul.f32 %v7472, %v7603
        %v7654 = vmul.f32 %v7472, %v7607
        %v7655 = vmul.f32 %v7472, %v7611
        %v7656 = vmul.f32 %v7472, %v7615
        %v7657 = vmul.f32 %v7472, %v7619
        %v7695 = vrot.slane %v7621, 3
        %v7696 = vrot.slane %v7622, 3
        %v7697 = vsel %vm3367, %v7695, %v7696
        %v7698 = vrot.slane %v7623, 3
        %v7699 = vsel %vm3367, %v7696, %v7698
        %v7700 = vrot.slane %v7624, 3
        %v7701 = vsel %vm3367, %v7698, %v7700
        %v7702 = vrot.slane %v7625, 3
        %v7703 = vsel %vm3367, %v7700, %v7702
        %v7704 = vrot.slane %v7626, 3
        %v7705 = vsel %vm3367, %v7702, %v7704
        %v7706 = vrot.slane %v7627, 3
        %v7707 = vsel %vm3367, %v7704, %v7706
        %v7708 = vrot.slane %v7628, 3
        %v7709 = vsel %vm3367, %v7706, %v7708
        %v7710 = vrot.slane %v7629, 3
        %v7711 = vsel %vm3367, %v7708, %v7710
        %v7712 = vrot.slane %v7630, 3
        %v7713 = vsel %vm3367, %v7710, %v7712
        %v7714 = vrot.slane %v7631, 3
        %v7715 = vsel %vm3367, %v7712, %v7714
        %v7716 = vrot.slane %v7632, 3
        %v7717 = vsel %vm3367, %v7714, %v7716
        %v7718 = vrot.slane %v7633, 3
        %v7719 = vsel %vm3367, %v7716, %v7718
        %v7720 = vrot.slane %v7634, 3
        %v7721 = vsel %vm3367, %v7718, %v7720
        %v7722 = vrot.slane %v7635, 3
        %v7723 = vsel %vm3367, %v7720, %v7722
        %v7724 = vrot.slane %v7636, 3
        %v7725 = vsel %vm3367, %v7722, %v7724
        %v7726 = vrot.slane %v7637, 3
        %v7727 = vsel %vm3367, %v7724, %v7726
        %v7728 = vrot.slane %v7638, 3
        %v7729 = vsel %vm3367, %v7726, %v7728
        %v7730 = vrot.slane %v7639, 3
        %v7731 = vsel %vm3367, %v7728, %v7730
        %v7732 = vrot.slane %v7640, 3
        %v7733 = vsel %vm3367, %v7730, %v7732
        %v7734 = vrot.slane %v7641, 3
        %v7735 = vsel %vm3367, %v7732, %v7734
        %v7736 = vrot.slane %v7642, 3
        %v7737 = vsel %vm3367, %v7734, %v7736
        %v7738 = vrot.slane %v7643, 3
        %v7739 = vsel %vm3367, %v7736, %v7738
        %v7740 = vrot.slane %v7644, 3
        %v7741 = vsel %vm3367, %v7738, %v7740
        %v7742 = vrot.slane %v7645, 3
        %v7743 = vsel %vm3367, %v7740, %v7742
        %v7744 = vrot.slane %v7646, 3
        %v7745 = vsel %vm3367, %v7742, %v7744
        %v7746 = vrot.slane %v7647, 3
        %v7747 = vsel %vm3367, %v7744, %v7746
        %v7748 = vrot.slane %v7648, 3
        %v7749 = vsel %vm3367, %v7746, %v7748
        %v7750 = vrot.slane %v7649, 3
        %v7751 = vsel %vm3367, %v7748, %v7750
        %v7752 = vrot.slane %v7650, 3
        %v7753 = vsel %vm3367, %v7750, %v7752
        %v7754 = vrot.slane %v7651, 3
        %v7755 = vsel %vm3367, %v7752, %v7754
        %v7756 = vrot.slane %v7652, 3
        %v7757 = vsel %vm3367, %v7754, %v7756
        %v7758 = vrot.slane %v7653, 3
        %v7759 = vsel %vm3367, %v7756, %v7758
        %v7760 = vrot.slane %v7654, 3
        %v7761 = vsel %vm3367, %v7758, %v7760
        %v7762 = vrot.slane %v7655, 3
        %v7763 = vsel %vm3367, %v7760, %v7762
        %v7764 = vrot.slane %v7656, 3
        %v7765 = vsel %vm3367, %v7762, %v7764
        %v7766 = vrot.slane %v7657, 3
        %v7767 = vsel %vm3367, %v7764, %v7766
        %v7804 = vadd.f32 %v7433, %v7697
        %v7805 = vadd.f32 %v7434, %v7699
        %v7806 = vadd.f32 %v7435, %v7701
        %v7807 = vadd.f32 %v7436, %v7703
        %v7808 = vadd.f32 %v7437, %v7705
        %v7809 = vadd.f32 %v7438, %v7707
        %v7810 = vadd.f32 %v7439, %v7709
        %v7811 = vadd.f32 %v7440, %v7711
        %v7812 = vadd.f32 %v7441, %v7713
        %v7813 = vadd.f32 %v7442, %v7715
        %v7814 = vadd.f32 %v7443, %v7717
        %v7815 = vadd.f32 %v7444, %v7719
        %v7816 = vadd.f32 %v7445, %v7721
        %v7817 = vadd.f32 %v7446, %v7723
        %v7818 = vadd.f32 %v7447, %v7725
        %v7819 = vadd.f32 %v7448, %v7727
        %v7820 = vadd.f32 %v7449, %v7729
        %v7821 = vadd.f32 %v7450, %v7731
        %v7822 = vadd.f32 %v7451, %v7733
        %v7823 = vadd.f32 %v7452, %v7735
        %v7824 = vadd.f32 %v7453, %v7737
        %v7825 = vadd.f32 %v7454, %v7739
        %v7826 = vadd.f32 %v7455, %v7741
        %v7827 = vadd.f32 %v7456, %v7743
        %v7828 = vadd.f32 %v7457, %v7745
        %v7829 = vadd.f32 %v7458, %v7747
        %v7830 = vadd.f32 %v7459, %v7749
        %v7831 = vadd.f32 %v7460, %v7751
        %v7832 = vadd.f32 %v7461, %v7753
        %v7833 = vadd.f32 %v7462, %v7755
        %v7834 = vadd.f32 %v7463, %v7757
        %v7835 = vadd.f32 %v7464, %v7759
        %v7836 = vadd.f32 %v7465, %v7761
        %v7837 = vadd.f32 %v7466, %v7763
        %v7838 = vadd.f32 %v7467, %v7765
        %v7839 = vadd.f32 %v7468, %v7767
        %v7840 = vmul.f32 %v7804, 0.2
        %v7841 = vmul.f32 %v7805, 0.2
        %v7842 = vmul.f32 %v7806, 0.2
        %v7843 = vmul.f32 %v7807, 0.2
        %v7844 = vmul.f32 %v7808, 0.2
        %v7845 = vmul.f32 %v7809, 0.2
        %v7846 = vmul.f32 %v7810, 0.2
        %v7847 = vmul.f32 %v7811, 0.2
        %v7848 = vmul.f32 %v7812, 0.2
        %v7849 = vmul.f32 %v7813, 0.2
        %v7850 = vmul.f32 %v7814, 0.2
        %v7851 = vmul.f32 %v7815, 0.2
        %v7852 = vmul.f32 %v7816, 0.2
        %v7853 = vmul.f32 %v7817, 0.2
        %v7854 = vmul.f32 %v7818, 0.2
        %v7855 = vmul.f32 %v7819, 0.2
        %v7856 = vmul.f32 %v7820, 0.2
        %v7857 = vmul.f32 %v7821, 0.2
        %v7858 = vmul.f32 %v7822, 0.2
        %v7859 = vmul.f32 %v7823, 0.2
        %v7860 = vmul.f32 %v7824, 0.2
        %v7861 = vmul.f32 %v7825, 0.2
        %v7862 = vmul.f32 %v7826, 0.2
        %v7863 = vmul.f32 %v7827, 0.2
        %v7864 = vmul.f32 %v7828, 0.2
        %v7865 = vmul.f32 %v7829, 0.2
        %v7866 = vmul.f32 %v7830, 0.2
        %v7867 = vmul.f32 %v7831, 0.2
        %v7868 = vmul.f32 %v7832, 0.2
        %v7869 = vmul.f32 %v7833, 0.2
        %v7870 = vmul.f32 %v7834, 0.2
        %v7871 = vmul.f32 %v7835, 0.2
        %v7872 = vmul.f32 %v7836, 0.2
        %v7873 = vmul.f32 %v7837, 0.2
        %v7874 = vmul.f32 %v7838, 0.2
        %v7875 = vmul.f32 %v7839, 0.2
        %v7876 = vmax.f32 %v7804, %v7840
        %v7877 = vmax.f32 %v7805, %v7841
        %v7878 = vmax.f32 %v7806, %v7842
        %v7879 = vmax.f32 %v7807, %v7843
        %v7880 = vmax.f32 %v7808, %v7844
        %v7881 = vmax.f32 %v7809, %v7845
        %v7882 = vmax.f32 %v7810, %v7846
        %v7883 = vmax.f32 %v7811, %v7847
        %v7884 = vmax.f32 %v7812, %v7848
        %v7885 = vmax.f32 %v7813, %v7849
        %v7886 = vmax.f32 %v7814, %v7850
        %v7887 = vmax.f32 %v7815, %v7851
        %v7888 = vmax.f32 %v7816, %v7852
        %v7889 = vmax.f32 %v7817, %v7853
        %v7890 = vmax.f32 %v7818, %v7854
        %v7891 = vmax.f32 %v7819, %v7855
        %v7892 = vmax.f32 %v7820, %v7856
        %v7893 = vmax.f32 %v7821, %v7857
        %v7894 = vmax.f32 %v7822, %v7858
        %v7895 = vmax.f32 %v7823, %v7859
        %v7896 = vmax.f32 %v7824, %v7860
        %v7897 = vmax.f32 %v7825, %v7861
        %v7898 = vmax.f32 %v7826, %v7862
        %v7899 = vmax.f32 %v7827, %v7863
        %v7900 = vmax.f32 %v7828, %v7864
        %v7901 = vmax.f32 %v7829, %v7865
        %v7902 = vmax.f32 %v7830, %v7866
        %v7903 = vmax.f32 %v7831, %v7867
        %v7904 = vmax.f32 %v7832, %v7868
        %v7905 = vmax.f32 %v7833, %v7869
        %v7906 = vmax.f32 %v7834, %v7870
        %v7907 = vmax.f32 %v7835, %v7871
        %v7908 = vmax.f32 %v7836, %v7872
        %v7909 = vmax.f32 %v7837, %v7873
        %v7910 = vmax.f32 %v7838, %v7874
        %v7911 = vmax.f32 %v7839, %v7875
        %v7912 = vmul.f32 %v7876, %v3370
        %v7913 = vmul.f32 %v7877, %v3372
        %v7914 = vmul.f32 %v7878, %v3374
        %v7915 = vmul.f32 %v7879, %v3376
        %v7916 = vmul.f32 %v7880, %v3378
        %v7917 = vmul.f32 %v7881, %v3380
        %v7918 = vmul.f32 %v7882, %v3382
        %v7919 = vmul.f32 %v7883, %v3384
        %v7920 = vmul.f32 %v7884, %v3386
        %v7921 = vmul.f32 %v7885, %v3388
        %v7922 = vmul.f32 %v7886, %v3390
        %v7923 = vmul.f32 %v7887, %v3392
        %v7924 = vmul.f32 %v7888, %v3394
        %v7925 = vmul.f32 %v7889, %v3396
        %v7926 = vmul.f32 %v7890, %v3398
        %v7927 = vmul.f32 %v7891, %v3400
        %v7928 = vmul.f32 %v7892, %v3402
        %v7929 = vmul.f32 %v7893, %v3404
        %v7930 = vmul.f32 %v7894, %v3406
        %v7931 = vmul.f32 %v7895, %v3408
        %v7932 = vmul.f32 %v7896, %v3410
        %v7933 = vmul.f32 %v7897, %v3412
        %v7934 = vmul.f32 %v7898, %v3414
        %v7935 = vmul.f32 %v7899, %v3416
        %v7936 = vmul.f32 %v7900, %v3418
        %v7937 = vmul.f32 %v7901, %v3420
        %v7938 = vmul.f32 %v7902, %v3422
        %v7939 = vmul.f32 %v7903, %v3424
        %v7940 = vmul.f32 %v7904, %v3426
        %v7941 = vmul.f32 %v7905, %v3428
        %v7942 = vmul.f32 %v7906, %v3430
        %v7943 = vmul.f32 %v7907, %v3432
        %v7944 = vmul.f32 %v7908, %v3434
        %v7945 = vmul.f32 %v7909, %v3436
        %v7946 = vmul.f32 %v7910, %v3438
        %v7947 = vmul.f32 %v7911, %v3440
        %v7948 = vadd.f32 %v7912, %v7913
        %v7949 = vadd.f32 %v7948, %v7914
        %v7950 = vadd.f32 %v7949, %v7915
        %v7951 = vadd.f32 %v7950, %v7916
        %v7952 = vadd.f32 %v7951, %v7917
        %v7953 = vadd.f32 %v7952, %v7918
        %v7954 = vadd.f32 %v7953, %v7919
        %v7955 = vadd.f32 %v7954, %v7920
        %v7956 = vadd.f32 %v7955, %v7921
        %v7957 = vadd.f32 %v7956, %v7922
        %v7958 = vadd.f32 %v7957, %v7923
        %v7959 = vadd.f32 %v7958, %v7924
        %v7960 = vadd.f32 %v7959, %v7925
        %v7961 = vadd.f32 %v7960, %v7926
        %v7962 = vadd.f32 %v7961, %v7927
        %v7963 = vadd.f32 %v7962, %v7928
        %v7964 = vadd.f32 %v7963, %v7929
        %v7965 = vadd.f32 %v7964, %v7930
        %v7966 = vadd.f32 %v7965, %v7931
        %v7967 = vadd.f32 %v7966, %v7932
        %v7968 = vadd.f32 %v7967, %v7933
        %v7969 = vadd.f32 %v7968, %v7934
        %v7970 = vadd.f32 %v7969, %v7935
        %v7971 = vadd.f32 %v7970, %v7936
        %v7972 = vadd.f32 %v7971, %v7937
        %v7973 = vadd.f32 %v7972, %v7938
        %v7974 = vadd.f32 %v7973, %v7939
        %v7975 = vadd.f32 %v7974, %v7940
        %v7976 = vadd.f32 %v7975, %v7941
        %v7977 = vadd.f32 %v7976, %v7942
        %v7978 = vadd.f32 %v7977, %v7943
        %v7979 = vadd.f32 %v7978, %v7944
        %v7980 = vadd.f32 %v7979, %v7945
        %v7981 = vadd.f32 %v7980, %v7946
        %v7982 = vadd.f32 %v7981, %v7947
        %v7983 = vrot.slane %v7982, 4
        %v7984 = vadd.f32 %v7982, %v7983
        %v7985 = vrot.slane %v7984, 2
        %v7986 = vadd.f32 %v7984, %v7985
        %v7987 = vrot.slane %v7986, 1
        %v7988 = vadd.f32 %v7986, %v7987
        %v7989 = vmul.f32 %v7988, 0.00390625
        %v7990 = vsub.f32 %v7876, %v7989
        %v7991 = vsub.f32 %v7877, %v7989
        %v7992 = vsub.f32 %v7878, %v7989
        %v7993 = vsub.f32 %v7879, %v7989
        %v7994 = vsub.f32 %v7880, %v7989
        %v7995 = vsub.f32 %v7881, %v7989
        %v7996 = vsub.f32 %v7882, %v7989
        %v7997 = vsub.f32 %v7883, %v7989
        %v7998 = vsub.f32 %v7884, %v7989
        %v7999 = vsub.f32 %v7885, %v7989
        %v8000 = vsub.f32 %v7886, %v7989
        %v8001 = vsub.f32 %v7887, %v7989
        %v8002 = vsub.f32 %v7888, %v7989
        %v8003 = vsub.f32 %v7889, %v7989
        %v8004 = vsub.f32 %v7890, %v7989
        %v8005 = vsub.f32 %v7891, %v7989
        %v8006 = vsub.f32 %v7892, %v7989
        %v8007 = vsub.f32 %v7893, %v7989
        %v8008 = vsub.f32 %v7894, %v7989
        %v8009 = vsub.f32 %v7895, %v7989
        %v8010 = vsub.f32 %v7896, %v7989
        %v8011 = vsub.f32 %v7897, %v7989
        %v8012 = vsub.f32 %v7898, %v7989
        %v8013 = vsub.f32 %v7899, %v7989
        %v8014 = vsub.f32 %v7900, %v7989
        %v8015 = vsub.f32 %v7901, %v7989
        %v8016 = vsub.f32 %v7902, %v7989
        %v8017 = vsub.f32 %v7903, %v7989
        %v8018 = vsub.f32 %v7904, %v7989
        %v8019 = vsub.f32 %v7905, %v7989
        %v8020 = vsub.f32 %v7906, %v7989
        %v8021 = vsub.f32 %v7907, %v7989
        %v8022 = vsub.f32 %v7908, %v7989
        %v8023 = vsub.f32 %v7909, %v7989
        %v8024 = vsub.f32 %v7910, %v7989
        %v8025 = vsub.f32 %v7911, %v7989
        %v8026 = vmul.f32 %v7990, %v7990
        %v8027 = vmul.f32 %v7991, %v7991
        %v8028 = vmul.f32 %v7992, %v7992
        %v8029 = vmul.f32 %v7993, %v7993
        %v8030 = vmul.f32 %v7994, %v7994
        %v8031 = vmul.f32 %v7995, %v7995
        %v8032 = vmul.f32 %v7996, %v7996
        %v8033 = vmul.f32 %v7997, %v7997
        %v8034 = vmul.f32 %v7998, %v7998
        %v8035 = vmul.f32 %v7999, %v7999
        %v8036 = vmul.f32 %v8000, %v8000
        %v8037 = vmul.f32 %v8001, %v8001
        %v8038 = vmul.f32 %v8002, %v8002
        %v8039 = vmul.f32 %v8003, %v8003
        %v8040 = vmul.f32 %v8004, %v8004
        %v8041 = vmul.f32 %v8005, %v8005
        %v8042 = vmul.f32 %v8006, %v8006
        %v8043 = vmul.f32 %v8007, %v8007
        %v8044 = vmul.f32 %v8008, %v8008
        %v8045 = vmul.f32 %v8009, %v8009
        %v8046 = vmul.f32 %v8010, %v8010
        %v8047 = vmul.f32 %v8011, %v8011
        %v8048 = vmul.f32 %v8012, %v8012
        %v8049 = vmul.f32 %v8013, %v8013
        %v8050 = vmul.f32 %v8014, %v8014
        %v8051 = vmul.f32 %v8015, %v8015
        %v8052 = vmul.f32 %v8016, %v8016
        %v8053 = vmul.f32 %v8017, %v8017
        %v8054 = vmul.f32 %v8018, %v8018
        %v8055 = vmul.f32 %v8019, %v8019
        %v8056 = vmul.f32 %v8020, %v8020
        %v8057 = vmul.f32 %v8021, %v8021
        %v8058 = vmul.f32 %v8022, %v8022
        %v8059 = vmul.f32 %v8023, %v8023
        %v8060 = vmul.f32 %v8024, %v8024
        %v8061 = vmul.f32 %v8025, %v8025
        %v8062 = vmul.f32 %v8026, %v3370
        %v8063 = vmul.f32 %v8027, %v3372
        %v8064 = vmul.f32 %v8028, %v3374
        %v8065 = vmul.f32 %v8029, %v3376
        %v8066 = vmul.f32 %v8030, %v3378
        %v8067 = vmul.f32 %v8031, %v3380
        %v8068 = vmul.f32 %v8032, %v3382
        %v8069 = vmul.f32 %v8033, %v3384
        %v8070 = vmul.f32 %v8034, %v3386
        %v8071 = vmul.f32 %v8035, %v3388
        %v8072 = vmul.f32 %v8036, %v3390
        %v8073 = vmul.f32 %v8037, %v3392
        %v8074 = vmul.f32 %v8038, %v3394
        %v8075 = vmul.f32 %v8039, %v3396
        %v8076 = vmul.f32 %v8040, %v3398
        %v8077 = vmul.f32 %v8041, %v3400
        %v8078 = vmul.f32 %v8042, %v3402
        %v8079 = vmul.f32 %v8043, %v3404
        %v8080 = vmul.f32 %v8044, %v3406
        %v8081 = vmul.f32 %v8045, %v3408
        %v8082 = vmul.f32 %v8046, %v3410
        %v8083 = vmul.f32 %v8047, %v3412
        %v8084 = vmul.f32 %v8048, %v3414
        %v8085 = vmul.f32 %v8049, %v3416
        %v8086 = vmul.f32 %v8050, %v3418
        %v8087 = vmul.f32 %v8051, %v3420
        %v8088 = vmul.f32 %v8052, %v3422
        %v8089 = vmul.f32 %v8053, %v3424
        %v8090 = vmul.f32 %v8054, %v3426
        %v8091 = vmul.f32 %v8055, %v3428
        %v8092 = vmul.f32 %v8056, %v3430
        %v8093 = vmul.f32 %v8057, %v3432
        %v8094 = vmul.f32 %v8058, %v3434
        %v8095 = vmul.f32 %v8059, %v3436
        %v8096 = vmul.f32 %v8060, %v3438
        %v8097 = vmul.f32 %v8061, %v3440
        %v8098 = vadd.f32 %v8062, %v8063
        %v8099 = vadd.f32 %v8098, %v8064
        %v8100 = vadd.f32 %v8099, %v8065
        %v8101 = vadd.f32 %v8100, %v8066
        %v8102 = vadd.f32 %v8101, %v8067
        %v8103 = vadd.f32 %v8102, %v8068
        %v8104 = vadd.f32 %v8103, %v8069
        %v8105 = vadd.f32 %v8104, %v8070
        %v8106 = vadd.f32 %v8105, %v8071
        %v8107 = vadd.f32 %v8106, %v8072
        %v8108 = vadd.f32 %v8107, %v8073
        %v8109 = vadd.f32 %v8108, %v8074
        %v8110 = vadd.f32 %v8109, %v8075
        %v8111 = vadd.f32 %v8110, %v8076
        %v8112 = vadd.f32 %v8111, %v8077
        %v8113 = vadd.f32 %v8112, %v8078
        %v8114 = vadd.f32 %v8113, %v8079
        %v8115 = vadd.f32 %v8114, %v8080
        %v8116 = vadd.f32 %v8115, %v8081
        %v8117 = vadd.f32 %v8116, %v8082
        %v8118 = vadd.f32 %v8117, %v8083
        %v8119 = vadd.f32 %v8118, %v8084
        %v8120 = vadd.f32 %v8119, %v8085
        %v8121 = vadd.f32 %v8120, %v8086
        %v8122 = vadd.f32 %v8121, %v8087
        %v8123 = vadd.f32 %v8122, %v8088
        %v8124 = vadd.f32 %v8123, %v8089
        %v8125 = vadd.f32 %v8124, %v8090
        %v8126 = vadd.f32 %v8125, %v8091
        %v8127 = vadd.f32 %v8126, %v8092
        %v8128 = vadd.f32 %v8127, %v8093
        %v8129 = vadd.f32 %v8128, %v8094
        %v8130 = vadd.f32 %v8129, %v8095
        %v8131 = vadd.f32 %v8130, %v8096
        %v8132 = vadd.f32 %v8131, %v8097
        %v8133 = vrot.slane %v8132, 4
        %v8134 = vadd.f32 %v8132, %v8133
        %v8135 = vrot.slane %v8134, 2
        %v8136 = vadd.f32 %v8134, %v8135
        %v8137 = vrot.slane %v8136, 1
        %v8138 = vadd.f32 %v8136, %v8137
        %v8139 = vmul.f32 %v8138, 0.00390625
        %v8140 = vadd.f32 %v8139, 1e-05
        %v8141 = vrsqrt.pop %v8140
        %v8142 = vmul.f32 %v7990, %v8141
        %v8143 = vmul.f32 %v7991, %v8141
        %v8144 = vmul.f32 %v7992, %v8141
        %v8145 = vmul.f32 %v7993, %v8141
        %v8146 = vmul.f32 %v7994, %v8141
        %v8147 = vmul.f32 %v7995, %v8141
        %v8148 = vmul.f32 %v7996, %v8141
        %v8149 = vmul.f32 %v7997, %v8141
        %v8150 = vmul.f32 %v7998, %v8141
        %v8151 = vmul.f32 %v7999, %v8141
        %v8152 = vmul.f32 %v8000, %v8141
        %v8153 = vmul.f32 %v8001, %v8141
        %v8154 = vmul.f32 %v8002, %v8141
        %v8155 = vmul.f32 %v8003, %v8141
        %v8156 = vmul.f32 %v8004, %v8141
        %v8157 = vmul.f32 %v8005, %v8141
        %v8158 = vmul.f32 %v8006, %v8141
        %v8159 = vmul.f32 %v8007, %v8141
        %v8160 = vmul.f32 %v8008, %v8141
        %v8161 = vmul.f32 %v8009, %v8141
        %v8162 = vmul.f32 %v8010, %v8141
        %v8163 = vmul.f32 %v8011, %v8141
        %v8164 = vmul.f32 %v8012, %v8141
        %v8165 = vmul.f32 %v8013, %v8141
        %v8166 = vmul.f32 %v8014, %v8141
        %v8167 = vmul.f32 %v8015, %v8141
        %v8168 = vmul.f32 %v8016, %v8141
        %v8169 = vmul.f32 %v8017, %v8141
        %v8170 = vmul.f32 %v8018, %v8141
        %v8171 = vmul.f32 %v8019, %v8141
        %v8172 = vmul.f32 %v8020, %v8141
        %v8173 = vmul.f32 %v8021, %v8141
        %v8174 = vmul.f32 %v8022, %v8141
        %v8175 = vmul.f32 %v8023, %v8141
        %v8176 = vmul.f32 %v8024, %v8141
        %v8177 = vmul.f32 %v8025, %v8141
        %v8178 = vlaneseq
        %v8179 = vshrl.u32 %v8178, 7
        %v8180 = vsub.s32 2, %v8179
        %v8181 = vrot.slane %v297, %v8180
        %v8182 = vmul.f32 %v8181, %v8142
        %v8183 = vmul.f32 %v8181, %v8143
        %v8184 = vmul.f32 %v8181, %v8144
        %v8185 = vmul.f32 %v8181, %v8145
        %v8186 = vmul.f32 %v8181, %v8146
        %v8187 = vmul.f32 %v8181, %v8147
        %v8188 = vmul.f32 %v8181, %v8148
        %v8189 = vmul.f32 %v8181, %v8149
        %v8190 = vmul.f32 %v8181, %v8150
        %v8191 = vmul.f32 %v8181, %v8151
        %v8192 = vmul.f32 %v8181, %v8152
        %v8193 = vmul.f32 %v8181, %v8153
        %v8194 = vmul.f32 %v8181, %v8154
        %v8195 = vmul.f32 %v8181, %v8155
        %v8196 = vmul.f32 %v8181, %v8156
        %v8197 = vmul.f32 %v8181, %v8157
        %v8198 = vmul.f32 %v8181, %v8158
        %v8199 = vmul.f32 %v8181, %v8159
        %v8200 = vmul.f32 %v8181, %v8160
        %v8201 = vmul.f32 %v8181, %v8161
        %v8202 = vmul.f32 %v8181, %v8162
        %v8203 = vmul.f32 %v8181, %v8163
        %v8204 = vmul.f32 %v8181, %v8164
        %v8205 = vmul.f32 %v8181, %v8165
        %v8206 = vmul.f32 %v8181, %v8166
        %v8207 = vmul.f32 %v8181, %v8167
        %v8208 = vmul.f32 %v8181, %v8168
        %v8209 = vmul.f32 %v8181, %v8169
        %v8210 = vmul.f32 %v8181, %v8170
        %v8211 = vmul.f32 %v8181, %v8171
        %v8212 = vmul.f32 %v8181, %v8172
        %v8213 = vmul.f32 %v8181, %v8173
        %v8214 = vmul.f32 %v8181, %v8174
        %v8215 = vmul.f32 %v8181, %v8175
        %v8216 = vmul.f32 %v8181, %v8176
        %v8217 = vmul.f32 %v8181, %v8177
        %v8218 = vlaneseq
        %v8219 = vshrl.u32 %v8218, 7
        %v8220 = vsub.s32 3, %v8219
        %v8221 = vrot.slane %v297, %v8220
        %v8222 = vadd.f32 %v8182, %v8221
        %v8223 = vadd.f32 %v8183, %v8221
        %v8224 = vadd.f32 %v8184, %v8221
        %v8225 = vadd.f32 %v8185, %v8221
        %v8226 = vadd.f32 %v8186, %v8221
        %v8227 = vadd.f32 %v8187, %v8221
        %v8228 = vadd.f32 %v8188, %v8221
        %v8229 = vadd.f32 %v8189, %v8221
        %v8230 = vadd.f32 %v8190, %v8221
        %v8231 = vadd.f32 %v8191, %v8221
        %v8232 = vadd.f32 %v8192, %v8221
        %v8233 = vadd.f32 %v8193, %v8221
        %v8234 = vadd.f32 %v8194, %v8221
        %v8235 = vadd.f32 %v8195, %v8221
        %v8236 = vadd.f32 %v8196, %v8221
        %v8237 = vadd.f32 %v8197, %v8221
        %v8238 = vadd.f32 %v8198, %v8221
        %v8239 = vadd.f32 %v8199, %v8221
        %v8240 = vadd.f32 %v8200, %v8221
        %v8241 = vadd.f32 %v8201, %v8221
        %v8242 = vadd.f32 %v8202, %v8221
        %v8243 = vadd.f32 %v8203, %v8221
        %v8244 = vadd.f32 %v8204, %v8221
        %v8245 = vadd.f32 %v8205, %v8221
        %v8246 = vadd.f32 %v8206, %v8221
        %v8247 = vadd.f32 %v8207, %v8221
        %v8248 = vadd.f32 %v8208, %v8221
        %v8249 = vadd.f32 %v8209, %v8221
        %v8250 = vadd.f32 %v8210, %v8221
        %v8251 = vadd.f32 %v8211, %v8221
        %v8252 = vadd.f32 %v8212, %v8221
        %v8253 = vadd.f32 %v8213, %v8221
        %v8254 = vadd.f32 %v8214, %v8221
        %v8255 = vadd.f32 %v8215, %v8221
        %v8256 = vadd.f32 %v8216, %v8221
        %v8257 = vadd.f32 %v8217, %v8221
        %8258 = vst [vmem:[%s245] sm:$0xff] %v8222
        %8259 = vst [vmem:[%s245 + $0x8] sm:$0xff] %v8223
        %8260 = vst [vmem:[%s245 + $0x10] sm:$0xff] %v8224
        %8261 = vst [vmem:[%s245 + $0x18] sm:$0xff] %v8225
        %8262 = vst [vmem:[%s245 + $0x20] sm:$0xff] %v8226
        %8263 = vst [vmem:[%s245 + $0x28] sm:$0xff] %v8227
        %8264 = vst [vmem:[%s245 + $0x30] sm:$0xff] %v8228
        %8265 = vst [vmem:[%s245 + $0x38] sm:$0xff] %v8229
        %8266 = vst [vmem:[%s245 + $0x40] sm:$0xff] %v8230
        %8267 = vst [vmem:[%s245 + $0x48] sm:$0xff] %v8231
        %8268 = vst [vmem:[%s245 + $0x50] sm:$0xff] %v8232
        %8269 = vst [vmem:[%s245 + $0x58] sm:$0xff] %v8233
        %8270 = vst [vmem:[%s245 + $0x60] sm:$0xff] %v8234
        %8271 = vst [vmem:[%s245 + $0x68] sm:$0xff] %v8235
        %8272 = vst [vmem:[%s245 + $0x70] sm:$0xff] %v8236
        %8273 = vst [vmem:[%s245 + $0x78] sm:$0xff] %v8237
        %8274 = vst [vmem:[%s245 + $0x80] sm:$0xff] %v8238
        %8275 = vst [vmem:[%s245 + $0x88] sm:$0xff] %v8239
        %8276 = vst [vmem:[%s245 + $0x90] sm:$0xff] %v8240
        %8277 = vst [vmem:[%s245 + $0x98] sm:$0xff] %v8241
        %8278 = vst [vmem:[%s245 + $0xa0] sm:$0xff] %v8242
        %8279 = vst [vmem:[%s245 + $0xa8] sm:$0xff] %v8243
        %8280 = vst [vmem:[%s245 + $0xb0] sm:$0xff] %v8244
        %8281 = vst [vmem:[%s245 + $0xb8] sm:$0xff] %v8245
        %8282 = vst [vmem:[%s245 + $0xc0] sm:$0xff] %v8246
        %8283 = vst [vmem:[%s245 + $0xc8] sm:$0xff] %v8247
        %8284 = vst [vmem:[%s245 + $0xd0] sm:$0xff] %v8248
        %8285 = vst [vmem:[%s245 + $0xd8] sm:$0xff] %v8249
        %8286 = vst [vmem:[%s245 + $0xe0] sm:$0xff] %v8250
        %8287 = vst [vmem:[%s245 + $0xe8] sm:$0xff] %v8251
        %8288 = vst [vmem:[%s245 + $0xf0] sm:$0xff] %v8252
        %8289 = vst [vmem:[%s245 + $0xf8] sm:$0xff] %v8253
        %8290 = vst [vmem:[%s245 + $0x100] sm:$0xff] %v8254
        %8291 = vst [vmem:[%s245 + $0x108] sm:$0xff] %v8255
        %8292 = vst [vmem:[%s245 + $0x110] sm:$0xff] %v8256
        %8293 = vst [vmem:[%s245 + $0x118] sm:$0xff] %v8257
        %s8294 = sand.u32 %s143, 1
        %s8295 = scalar_lea.sflag [#allocation5], %s8294
        %s8296 = sand.u32 %s143, 1
        %s8297 = smul.addr %s8296, 288
        %s8298 = scalar_lea.vmem [#allocation6], %s8297
        // Predicated region
        $region45: #{tpu_custom_call.1} parent=39 // pred_check
          %p8299 = pneg %p153
        $region46: #{tpu_custom_call.1} parent=39 // pred_check_branch
          %8301 = sbr.rel (%p8299) target = $region48
        $region47: #{tpu_custom_call.1} parent=39 // pred_region
          %s8303 = ssub.s32 4608, 4608
          %8304 = vsyncadd %s8295, %s8303
          %s8305 = smul.addr %s20, 36
          %s8306 = smul.addr %s8305, 128
          %s8307 = scalar_lea.hbm %s5, %s8306
          %s8308 = sshll.u32 %s8298, 4
          %s8309 = int_to_ptr.vmem [resolvable:$true] %s8308
          %8314 = dma.vmem_to_hbm [thread:$0]  %s8309, 4608, %s8307, %s8295, 128, 128, 8
        $region48: #{tpu_custom_call.1} parent=39 // pred_fallthru
          _
      $region40: #{tpu_custom_call.1} parent=5 // pred_fallthru
        _
      %p8315 = scmp.le.s32.totalorder 2, %s15
      // Predicated region
      $region49: #{tpu_custom_call.1} parent=5 // pred_check
        %p8316 = pneg %p8315
      $region50: #{tpu_custom_call.1} parent=5 // pred_check_branch
        %8318 = sbr.rel (%p8316) target = $region52
      $region51: #{tpu_custom_call.1} parent=5 // pred_region
        %s8319 = ssub.s32 %s15, 2
        // Predicated region
        $region53: #{tpu_custom_call.1} parent=51 // pred_check
          %p8320 = pneg %p159
        $region54: #{tpu_custom_call.1} parent=51 // pred_check_branch
          %8322 = sbr.rel (%p8320) target = $region56
        $region55: #{tpu_custom_call.1} parent=51 // pred_region
          %s8323 = sand.u32 %s144, 1
          %s8324 = scalar_lea.sflag [#allocation5], %s8323
          %s8325 = sand.u32 %s144, 1
          %s8326 = smul.addr %s8325, 288
          %s8327 = scalar_lea.vmem [#allocation6], %s8326
          %8328 = dma.done %s8324, 4608
        $region56: #{tpu_custom_call.1} parent=51 // pred_fallthru
          _
      $region52: #{tpu_custom_call.1} parent=5 // pred_fallthru
        _
    $region6: #{tpu_custom_call.1} parent=1 // loop_footer
      %s19 = sadd.s32 1, %s15
    $region7: #{tpu_custom_call.1} parent=1 // loop_footer_branch
      %14 = sbr.rel target = $region3
    $region8: #{tpu_custom_call.1} parent=1 // loop_exit
      _
    %8329 = vsyncpa [#allocation4], 1
    %s8330 = scalar_lea.sflag [#allocation4], 1
    %8331 = vsyncpa %s8330, 1
    %8332 = vsyncpa [#allocation5], 1
    %s8333 = scalar_lea.sflag [#allocation5], 1
    %8334 = vsyncpa %s8333, 1

</llo_original>
